<compile_context>
chip_gen: v5e
topology: v5e:2x2
jax: 0.10.0
libtpu: 0.0.40
codegen_flags: <defaults>
</compile_context>

<pallas_src>
import jax
import jax.numpy as jnp
from jax.experimental import pallas as pl
from jax.experimental.pallas import tpu as pltpu  # noqa: F401  (TPU backend)


# ----------------------------- model dims ----------------------------------
B = 4            # batch_size
MAX_LEN = 8      # TCR max_len
INPUT_DIM = 8    # TCR one-hot dim
ENCODING_DIM = 32
EMBED_DIM = 16   # embedding_dim
LSTM_DIM = ENCODING_DIM
T = 8            # peptide sequence length
MLP_DIM = LSTM_DIM + ENCODING_DIM
HID_DIM = MLP_DIM // 2
VOCAB = 21       # 20 amino acids + padding idx 0

B_PAD = 8        # sublane height
OUT_LANES = 128  # lane-dense output slab width


# --------------------------- elementwise helpers ---------------------------
def _elu(x):
    # nn.ELU(alpha=1.0); clamp the exp argument so the dead branch stays finite.
    return jnp.where(x > 0, x, jnp.exp(jnp.minimum(x, 0.0)) - 1.0)


def _sigmoid_fast(x):
    # exp (EUP) + approx reciprocal (EUP) -> no VPU divide in the recurrence.
    return pl.reciprocal(1.0 + jnp.exp(-x), approx=True)


def _sigmoid_exact(x):
    return 1.0 / (1.0 + jnp.exp(-x))


# --------------------------- fused forward kernel ---------------------------
def fused_kernel(x_ref, peps_ref, lens_ref,
                 ew1, eb1, ew2, eb2, ew3, eb3,
                 emb_ref,
                 wih0, whh0, b0,
                 wih1, whh1, b1,
                 hw_enc, hw_pep, hb, ow, ob,
                 o_ref):
    # ---- 1) autoencoder encoder: Linear-ELU-Linear-ELU-Linear ----
    x = x_ref[...]                                                    # (Bp, L*D)
    h = _elu(jnp.dot(x, ew1[...], preferred_element_type=jnp.float32) + eb1[...])
    h = _elu(jnp.dot(h, ew2[...], preferred_element_type=jnp.float32) + eb2[...])
    enc = jnp.dot(h, ew3[...], preferred_element_type=jnp.float32) + eb3[...]  # (Bp, 32)

    # ---- 2) embedding + 2-layer LSTM, unrolled over T in-kernel ----
    peps = peps_ref[...]                                              # (Bp, T) int32
    lens = lens_ref[...]                                              # (Bp, 1) int32
    emb = emb_ref[...]                                                # (VOCAB, E)

    Bp = x.shape[0]
    Hd = ENCODING_DIM
    lane_ids = jax.lax.broadcasted_iota(jnp.int32, (Bp, VOCAB), 1)

    def cell(x_t, h_prev, c_prev, wih_r, whh_r, b_r):
        # per-gate (lane-aligned) matmuls; PyTorch gate order i, f, g, o
        def gate(idx):
            return (jnp.dot(x_t, wih_r[idx], preferred_element_type=jnp.float32)
                    + jnp.dot(h_prev, whh_r[idx], preferred_element_type=jnp.float32)
                    + b_r[idx])
        i_g = _sigmoid_fast(gate(0))
        f_g = _sigmoid_fast(gate(1))
        g_g = jnp.tanh(gate(2))
        o_g = _sigmoid_fast(gate(3))
        c_new = f_g * c_prev + i_g * g_g
        h_new = o_g * jnp.tanh(c_new)
        return h_new, c_new

    zeros = jnp.zeros((Bp, Hd), jnp.float32)
    h0, c0, h1, c1, h_last = zeros, zeros, zeros, zeros, zeros

    for t in range(T):                     # static unroll (T == 8)
        tok = peps[:, t:t + 1]                                        # (Bp, 1)
        onehot = (lane_ids == tok).astype(jnp.float32)                # (Bp, VOCAB)
        x_t = jnp.dot(onehot, emb, preferred_element_type=jnp.float32)  # (Bp, E)
        h0, c0 = cell(x_t, h0, c0, wih0, whh0, b0)
        # inter-layer dropout(0.1) is identity in eval mode
        h1, c1 = cell(h0, h1, c1, wih1, whh1, b1)
        # keep the layer-2 hidden state at the last valid step (t == len-1)
        h_last = jnp.where(lens == (t + 1), h1, h_last)

    # ---- 3) MLP head: concat folded into a split hidden weight ----
    hidden = (jnp.dot(enc, hw_enc[...], preferred_element_type=jnp.float32)
              + jnp.dot(h_last, hw_pep[...], preferred_element_type=jnp.float32)
              + hb[...])
    hidden = jnp.where(hidden > 0, hidden, 0.01 * hidden)   # nn.LeakyReLU default
    # dropout(0.1) identity in eval mode
    logit = jnp.dot(hidden, ow[...], preferred_element_type=jnp.float32) + ob[...]
    prob = _sigmoid_exact(logit)                                       # (Bp, 1)

    # lane-dense (Bp, 128) write -> unmasked stores; wrapper slices [:, :1]
    o_ref[...] = jnp.broadcast_to(prob, o_ref.shape)


# ------------------------------ full forward --------------------------------
def forward(params, padded_tcrs, peps, pep_lens):
    x_flat = padded_tcrs.reshape(B, MAX_LEN * INPUT_DIM)

    # pad batch to sublane height (8); padded rows use token 0 / len 1
    pad_b = B_PAD - B
    x_flat = jnp.pad(x_flat, ((0, pad_b), (0, 0)))
    peps_p = jnp.pad(peps.astype(jnp.int32), ((0, pad_b), (0, 0)))
    lens_p = jnp.pad(pep_lens.astype(jnp.int32), (0, pad_b), constant_values=1)[:, None]

    out = pl.pallas_call(
        fused_kernel,
        out_shape=jax.ShapeDtypeStruct((B_PAD, OUT_LANES), jnp.float32),
    )(x_flat, peps_p, lens_p,
      params["enc_w1"], params["enc_b1"],
      params["enc_w2"], params["enc_b2"],
      params["enc_w3"], params["enc_b3"],
      params["embedding"],
      params["lstm_wih0"], params["lstm_whh0"], params["lstm_b0"],
      params["lstm_wih1"], params["lstm_whh1"], params["lstm_b1"],
      params["hid_w_enc"], params["hid_w_pep"], params["hid_b"],
      params["out_w"], params["out_b"])

    return out[:B, :1]


# --------------------------- deterministic params ---------------------------
def init_params(key):
    def dense(key, fan_in, fan_out):
        kw, kb = jax.random.split(key)
        scale = 1.0 / jnp.sqrt(fan_in)
        # stored already transposed: (in, out), bias as (1, out)
        w = jax.random.uniform(kw, (fan_in, fan_out), jnp.float32, -scale, scale)
        b = jax.random.uniform(kb, (1, fan_out), jnp.float32, -scale, scale)
        return w, b

    keys = jax.random.split(key, 16)
    p = {}
    # autoencoder encoder: Linear(L*D,300) ELU Linear(300,100) ELU Linear(100,enc)
    p["enc_w1"], p["enc_b1"] = dense(keys[0], MAX_LEN * INPUT_DIM, 300)
    p["enc_w2"], p["enc_b2"] = dense(keys[1], 300, 100)
    p["enc_w3"], p["enc_b3"] = dense(keys[2], 100, ENCODING_DIM)

    # embedding: (21, EMBED_DIM), padding_idx=0 -> zero row
    emb = jax.random.normal(keys[3], (VOCAB, EMBED_DIM), jnp.float32)
    p["embedding"] = emb.at[0].set(0.0)

    # LSTM weights pre-split per gate (gate order i, f, g, o), stacked on axis 0
    def lstm_layer(key, in_dim, hid_dim):
        k1, k2, k3, k4 = jax.random.split(key, 4)
        scale = 1.0 / jnp.sqrt(hid_dim)
        wih = jax.random.uniform(k1, (4, in_dim, hid_dim), jnp.float32, -scale, scale)
        whh = jax.random.uniform(k2, (4, hid_dim, hid_dim), jnp.float32, -scale, scale)
        bih = jax.random.uniform(k3, (4, 1, hid_dim), jnp.float32, -scale, scale)
        bhh = jax.random.uniform(k4, (4, 1, hid_dim), jnp.float32, -scale, scale)
        return wih, whh, bih + bhh

    p["lstm_wih0"], p["lstm_whh0"], p["lstm_b0"] = lstm_layer(keys[4], EMBED_DIM, LSTM_DIM)
    p["lstm_wih1"], p["lstm_whh1"], p["lstm_b1"] = lstm_layer(keys[5], LSTM_DIM, LSTM_DIM)

    # MLP head; hidden weight pre-split so the kernel avoids a lane-concat
    hid_w, hid_b = dense(keys[6], MLP_DIM, HID_DIM)
    p["hid_w_enc"] = hid_w[:ENCODING_DIM]        # multiplies encoded_tcrs
    p["hid_w_pep"] = hid_w[ENCODING_DIM:]        # multiplies pep_last_cell
    p["hid_b"] = hid_b
    p["out_w"], p["out_b"] = dense(keys[7], HID_DIM, 1)
    return p


# ---------------------------------- main ------------------------------------
if __name__ == "__main__":
    key = jax.random.PRNGKey(0)
    kp, kt, ks, kl = jax.random.split(key, 4)

    params = init_params(kp)

    # padded one-hot-ish TCRs (B, MAX_LEN, INPUT_DIM)
    padded_tcrs = jax.random.uniform(kt, (B, MAX_LEN, INPUT_DIM), jnp.float32)

    # peptide lengths in [2, T] and token ids in [1, 20], 0-padded past length
    pep_lens = jax.random.randint(kl, (B,), 2, T + 1)
    tokens = jax.random.randint(ks, (B, T), 1, VOCAB)
    pos = jnp.arange(T)[None, :]
    peps = jnp.where(pos < pep_lens[:, None], tokens, 0).astype(jnp.int32)

    out = forward(params, padded_tcrs, peps, pep_lens)
    out = jax.block_until_ready(out)

    assert out.shape == (B, 1)
    assert bool(jnp.all(jnp.isfinite(out)))
    assert bool(jnp.all((out >= 0.0) & (out <= 1.0)))
    print("KERNEL_OK")
</pallas_src>

<mosaic_0001>
module attributes {stable_mosaic.version = 11 : i64} {
  func.func @fused_kernel(%arg0: memref<8x64xf32, #tpu.memory_space<vmem>>, %arg1: memref<8x8xi32, #tpu.memory_space<vmem>>, %arg2: memref<8x1xi32, #tpu.memory_space<vmem>>, %arg3: memref<64x300xf32, #tpu.memory_space<vmem>>, %arg4: memref<1x300xf32, #tpu.memory_space<vmem>>, %arg5: memref<300x100xf32, #tpu.memory_space<vmem>>, %arg6: memref<1x100xf32, #tpu.memory_space<vmem>>, %arg7: memref<100x32xf32, #tpu.memory_space<vmem>>, %arg8: memref<1x32xf32, #tpu.memory_space<vmem>>, %arg9: memref<21x16xf32, #tpu.memory_space<vmem>>, %arg10: memref<4x16x32xf32, #tpu.memory_space<vmem>>, %arg11: memref<4x32x32xf32, #tpu.memory_space<vmem>>, %arg12: memref<4x1x32xf32, #tpu.memory_space<vmem>>, %arg13: memref<4x32x32xf32, #tpu.memory_space<vmem>>, %arg14: memref<4x32x32xf32, #tpu.memory_space<vmem>>, %arg15: memref<4x1x32xf32, #tpu.memory_space<vmem>>, %arg16: memref<32x32xf32, #tpu.memory_space<vmem>>, %arg17: memref<32x32xf32, #tpu.memory_space<vmem>>, %arg18: memref<1x32xf32, #tpu.memory_space<vmem>>, %arg19: memref<32x1xf32, #tpu.memory_space<vmem>>, %arg20: memref<1x1xf32, #tpu.memory_space<vmem>>, %arg21: memref<8x128xf32, #tpu.memory_space<vmem>>) attributes {dimension_semantics = [], scalar_prefetch = 0 : i64, scratch_operands = 0 : i64, tpu.core_type = #tpu.core_type<tc>} {
    %c0 = arith.constant 0 : index
    %c0_0 = arith.constant 0 : index
    %0 = vector.load %arg0[%c0, %c0_0] : memref<8x64xf32, #tpu.memory_space<vmem>>, vector<8x64xf32>
    %c0_1 = arith.constant 0 : index
    %c0_2 = arith.constant 0 : index
    %1 = vector.load %arg3[%c0_1, %c0_2] : memref<64x300xf32, #tpu.memory_space<vmem>>, vector<64x300xf32>
    %cst = arith.constant dense<0.000000e+00> : vector<8x300xf32>
    %2 = tpu.matmul %0, %1, %cst {dimension_numbers = #tpu.dot_dimension_numbers<[1], [0], [0], [1], [0, 0, 1, 1], [], []>} : vector<8x64xf32>, vector<64x300xf32>, vector<8x300xf32> -> vector<8x300xf32>
    %c0_3 = arith.constant 0 : index
    %c0_4 = arith.constant 0 : index
    %3 = vector.load %arg4[%c0_3, %c0_4] : memref<1x300xf32, #tpu.memory_space<vmem>>, vector<1x300xf32>
    %4 = vector.broadcast %3 : vector<1x300xf32> to vector<8x300xf32>
    %5 = arith.addf %2, %4 : vector<8x300xf32>
    %cst_5 = arith.constant 0.000000e+00 : f32
    %6 = vector.broadcast %cst_5 : f32 to vector<8x300xf32>
    %7 = arith.cmpf ogt, %5, %6 : vector<8x300xf32>
    %cst_6 = arith.constant 0.000000e+00 : f32
    %8 = vector.broadcast %cst_6 : f32 to vector<8x300xf32>
    %9 = arith.minimumf %5, %8 : vector<8x300xf32>
    %10 = math.exp %9 : vector<8x300xf32>
    %cst_7 = arith.constant 1.000000e+00 : f32
    %11 = vector.broadcast %cst_7 : f32 to vector<8x300xf32>
    %12 = arith.subf %10, %11 : vector<8x300xf32>
    %13 = arith.select %7, %5, %12 : vector<8x300xi1>, vector<8x300xf32>
    %c0_8 = arith.constant 0 : index
    %c0_9 = arith.constant 0 : index
    %14 = vector.load %arg5[%c0_8, %c0_9] : memref<300x100xf32, #tpu.memory_space<vmem>>, vector<300x100xf32>
    %cst_10 = arith.constant dense<0.000000e+00> : vector<8x100xf32>
    %15 = tpu.matmul %13, %14, %cst_10 {dimension_numbers = #tpu.dot_dimension_numbers<[1], [0], [0], [1], [0, 0, 1, 1], [], []>} : vector<8x300xf32>, vector<300x100xf32>, vector<8x100xf32> -> vector<8x100xf32>
    %c0_11 = arith.constant 0 : index
    %c0_12 = arith.constant 0 : index
    %16 = vector.load %arg6[%c0_11, %c0_12] : memref<1x100xf32, #tpu.memory_space<vmem>>, vector<1x100xf32>
    %17 = vector.broadcast %16 : vector<1x100xf32> to vector<8x100xf32>
    %18 = arith.addf %15, %17 : vector<8x100xf32>
    %cst_13 = arith.constant 0.000000e+00 : f32
    %19 = vector.broadcast %cst_13 : f32 to vector<8x100xf32>
    %20 = arith.cmpf ogt, %18, %19 : vector<8x100xf32>
    %cst_14 = arith.constant 0.000000e+00 : f32
    %21 = vector.broadcast %cst_14 : f32 to vector<8x100xf32>
    %22 = arith.minimumf %18, %21 : vector<8x100xf32>
    %23 = math.exp %22 : vector<8x100xf32>
    %cst_15 = arith.constant 1.000000e+00 : f32
    %24 = vector.broadcast %cst_15 : f32 to vector<8x100xf32>
    %25 = arith.subf %23, %24 : vector<8x100xf32>
    %26 = arith.select %20, %18, %25 : vector<8x100xi1>, vector<8x100xf32>
    %c0_16 = arith.constant 0 : index
    %c0_17 = arith.constant 0 : index
    %27 = vector.load %arg7[%c0_16, %c0_17] : memref<100x32xf32, #tpu.memory_space<vmem>>, vector<100x32xf32>
    %cst_18 = arith.constant dense<0.000000e+00> : vector<8x32xf32>
    %28 = tpu.matmul %26, %27, %cst_18 {dimension_numbers = #tpu.dot_dimension_numbers<[1], [0], [0], [1], [0, 0, 1, 1], [], []>} : vector<8x100xf32>, vector<100x32xf32>, vector<8x32xf32> -> vector<8x32xf32>
    %c0_19 = arith.constant 0 : index
    %c0_20 = arith.constant 0 : index
    %29 = vector.load %arg8[%c0_19, %c0_20] : memref<1x32xf32, #tpu.memory_space<vmem>>, vector<1x32xf32>
    %30 = vector.broadcast %29 : vector<1x32xf32> to vector<8x32xf32>
    %31 = arith.addf %28, %30 : vector<8x32xf32>
    %c0_21 = arith.constant 0 : index
    %c0_22 = arith.constant 0 : index
    %32 = vector.load %arg1[%c0_21, %c0_22] : memref<8x8xi32, #tpu.memory_space<vmem>>, vector<8x8xi32>
    %c0_23 = arith.constant 0 : index
    %c0_24 = arith.constant 0 : index
    %33 = vector.load %arg2[%c0_23, %c0_24] : memref<8x1xi32, #tpu.memory_space<vmem>>, vector<8x1xi32>
    %c0_25 = arith.constant 0 : index
    %c0_26 = arith.constant 0 : index
    %34 = vector.load %arg9[%c0_25, %c0_26] : memref<21x16xf32, #tpu.memory_space<vmem>>, vector<21x16xf32>
    %35 = tpu.iota {dimensions = array<i32: 1>} : vector<8x21xi32>
    %cst_27 = arith.constant 0.000000e+00 : f32
    %36 = vector.broadcast %cst_27 : f32 to vector<8x32xf32>
    %37 = vector.extract_strided_slice %32 {offsets = [0, 0], sizes = [8, 1], strides = [1, 1]} : vector<8x8xi32> to vector<8x1xi32>
    %38 = vector.broadcast %37 : vector<8x1xi32> to vector<8x21xi32>
    %39 = arith.cmpi eq, %35, %38 : vector<8x21xi32>
    %40 = arith.extui %39 : vector<8x21xi1> to vector<8x21xi32>
    %41 = arith.sitofp %40 : vector<8x21xi32> to vector<8x21xf32>
    %cst_28 = arith.constant dense<0.000000e+00> : vector<8x16xf32>
    %42 = tpu.matmul %41, %34, %cst_28 {dimension_numbers = #tpu.dot_dimension_numbers<[1], [0], [0], [1], [0, 0, 1, 1], [], []>} : vector<8x21xf32>, vector<21x16xf32>, vector<8x16xf32> -> vector<8x16xf32>
    %c0_29 = arith.constant 0 : index
    %c0_30 = arith.constant 0 : index
    %c0_31 = arith.constant 0 : index
    %43 = vector.load %arg10[%c0_29, %c0_30, %c0_31] : memref<4x16x32xf32, #tpu.memory_space<vmem>>, vector<1x16x32xf32>
    %44 = vector.shape_cast %43 : vector<1x16x32xf32> to vector<16x32xf32>
    %cst_32 = arith.constant dense<0.000000e+00> : vector<8x32xf32>
    %45 = tpu.matmul %42, %44, %cst_32 {dimension_numbers = #tpu.dot_dimension_numbers<[1], [0], [0], [1], [0, 0, 1, 1], [], []>} : vector<8x16xf32>, vector<16x32xf32>, vector<8x32xf32> -> vector<8x32xf32>
    %c0_33 = arith.constant 0 : index
    %c0_34 = arith.constant 0 : index
    %c0_35 = arith.constant 0 : index
    %46 = vector.load %arg11[%c0_33, %c0_34, %c0_35] : memref<4x32x32xf32, #tpu.memory_space<vmem>>, vector<1x32x32xf32>
    %47 = vector.shape_cast %46 : vector<1x32x32xf32> to vector<32x32xf32>
    %cst_36 = arith.constant dense<0.000000e+00> : vector<8x32xf32>
    %48 = tpu.matmul %36, %47, %cst_36 {dimension_numbers = #tpu.dot_dimension_numbers<[1], [0], [0], [1], [0, 0, 1, 1], [], []>} : vector<8x32xf32>, vector<32x32xf32>, vector<8x32xf32> -> vector<8x32xf32>
    %49 = arith.addf %45, %48 : vector<8x32xf32>
    %c0_37 = arith.constant 0 : index
    %c0_38 = arith.constant 0 : index
    %c0_39 = arith.constant 0 : index
    %50 = vector.load %arg12[%c0_37, %c0_38, %c0_39] : memref<4x1x32xf32, #tpu.memory_space<vmem>>, vector<1x1x32xf32>
    %51 = vector.shape_cast %50 : vector<1x1x32xf32> to vector<1x32xf32>
    %52 = vector.broadcast %51 : vector<1x32xf32> to vector<8x32xf32>
    %53 = arith.addf %49, %52 : vector<8x32xf32>
    %cst_40 = arith.constant 0.000000e+00 : f32
    %54 = vector.broadcast %cst_40 : f32 to vector<8x32xf32>
    %55 = arith.subf %54, %53 : vector<8x32xf32>
    %56 = math.exp %55 : vector<8x32xf32>
    %cst_41 = arith.constant 1.000000e+00 : f32
    %57 = vector.broadcast %cst_41 : f32 to vector<8x32xf32>
    %58 = arith.addf %57, %56 : vector<8x32xf32>
    %59 = tpu.reciprocal %58 {approx = true} : vector<8x32xf32> -> vector<8x32xf32>
    %c1 = arith.constant 1 : index
    %c0_42 = arith.constant 0 : index
    %c0_43 = arith.constant 0 : index
    %60 = vector.load %arg10[%c1, %c0_42, %c0_43] : memref<4x16x32xf32, #tpu.memory_space<vmem>>, vector<1x16x32xf32>
    %61 = vector.shape_cast %60 : vector<1x16x32xf32> to vector<16x32xf32>
    %cst_44 = arith.constant dense<0.000000e+00> : vector<8x32xf32>
    %62 = tpu.matmul %42, %61, %cst_44 {dimension_numbers = #tpu.dot_dimension_numbers<[1], [0], [0], [1], [0, 0, 1, 1], [], []>} : vector<8x16xf32>, vector<16x32xf32>, vector<8x32xf32> -> vector<8x32xf32>
    %c1_45 = arith.constant 1 : index
    %c0_46 = arith.constant 0 : index
    %c0_47 = arith.constant 0 : index
    %63 = vector.load %arg11[%c1_45, %c0_46, %c0_47] : memref<4x32x32xf32, #tpu.memory_space<vmem>>, vector<1x32x32xf32>
    %64 = vector.shape_cast %63 : vector<1x32x32xf32> to vector<32x32xf32>
    %cst_48 = arith.constant dense<0.000000e+00> : vector<8x32xf32>
    %65 = tpu.matmul %36, %64, %cst_48 {dimension_numbers = #tpu.dot_dimension_numbers<[1], [0], [0], [1], [0, 0, 1, 1], [], []>} : vector<8x32xf32>, vector<32x32xf32>, vector<8x32xf32> -> vector<8x32xf32>
    %66 = arith.addf %62, %65 : vector<8x32xf32>
    %c1_49 = arith.constant 1 : index
    %c0_50 = arith.constant 0 : index
    %c0_51 = arith.constant 0 : index
    %67 = vector.load %arg12[%c1_49, %c0_50, %c0_51] : memref<4x1x32xf32, #tpu.memory_space<vmem>>, vector<1x1x32xf32>
    %68 = vector.shape_cast %67 : vector<1x1x32xf32> to vector<1x32xf32>
    %69 = vector.broadcast %68 : vector<1x32xf32> to vector<8x32xf32>
    %70 = arith.addf %66, %69 : vector<8x32xf32>
    %cst_52 = arith.constant 0.000000e+00 : f32
    %71 = vector.broadcast %cst_52 : f32 to vector<8x32xf32>
    %72 = arith.subf %71, %70 : vector<8x32xf32>
    %73 = math.exp %72 : vector<8x32xf32>
    %cst_53 = arith.constant 1.000000e+00 : f32
    %74 = vector.broadcast %cst_53 : f32 to vector<8x32xf32>
    %75 = arith.addf %74, %73 : vector<8x32xf32>
    %76 = tpu.reciprocal %75 {approx = true} : vector<8x32xf32> -> vector<8x32xf32>
    %c2 = arith.constant 2 : index
    %c0_54 = arith.constant 0 : index
    %c0_55 = arith.constant 0 : index
    %77 = vector.load %arg10[%c2, %c0_54, %c0_55] : memref<4x16x32xf32, #tpu.memory_space<vmem>>, vector<1x16x32xf32>
    %78 = vector.shape_cast %77 : vector<1x16x32xf32> to vector<16x32xf32>
    %cst_56 = arith.constant dense<0.000000e+00> : vector<8x32xf32>
    %79 = tpu.matmul %42, %78, %cst_56 {dimension_numbers = #tpu.dot_dimension_numbers<[1], [0], [0], [1], [0, 0, 1, 1], [], []>} : vector<8x16xf32>, vector<16x32xf32>, vector<8x32xf32> -> vector<8x32xf32>
    %c2_57 = arith.constant 2 : index
    %c0_58 = arith.constant 0 : index
    %c0_59 = arith.constant 0 : index
    %80 = vector.load %arg11[%c2_57, %c0_58, %c0_59] : memref<4x32x32xf32, #tpu.memory_space<vmem>>, vector<1x32x32xf32>
    %81 = vector.shape_cast %80 : vector<1x32x32xf32> to vector<32x32xf32>
    %cst_60 = arith.constant dense<0.000000e+00> : vector<8x32xf32>
    %82 = tpu.matmul %36, %81, %cst_60 {dimension_numbers = #tpu.dot_dimension_numbers<[1], [0], [0], [1], [0, 0, 1, 1], [], []>} : vector<8x32xf32>, vector<32x32xf32>, vector<8x32xf32> -> vector<8x32xf32>
    %83 = arith.addf %79, %82 : vector<8x32xf32>
    %c2_61 = arith.constant 2 : index
    %c0_62 = arith.constant 0 : index
    %c0_63 = arith.constant 0 : index
    %84 = vector.load %arg12[%c2_61, %c0_62, %c0_63] : memref<4x1x32xf32, #tpu.memory_space<vmem>>, vector<1x1x32xf32>
    %85 = vector.shape_cast %84 : vector<1x1x32xf32> to vector<1x32xf32>
    %86 = vector.broadcast %85 : vector<1x32xf32> to vector<8x32xf32>
    %87 = arith.addf %83, %86 : vector<8x32xf32>
    %88 = math.tanh %87 : vector<8x32xf32>
    %c3 = arith.constant 3 : index
    %c0_64 = arith.constant 0 : index
    %c0_65 = arith.constant 0 : index
    %89 = vector.load %arg10[%c3, %c0_64, %c0_65] : memref<4x16x32xf32, #tpu.memory_space<vmem>>, vector<1x16x32xf32>
    %90 = vector.shape_cast %89 : vector<1x16x32xf32> to vector<16x32xf32>
    %cst_66 = arith.constant dense<0.000000e+00> : vector<8x32xf32>
    %91 = tpu.matmul %42, %90, %cst_66 {dimension_numbers = #tpu.dot_dimension_numbers<[1], [0], [0], [1], [0, 0, 1, 1], [], []>} : vector<8x16xf32>, vector<16x32xf32>, vector<8x32xf32> -> vector<8x32xf32>
    %c3_67 = arith.constant 3 : index
    %c0_68 = arith.constant 0 : index
    %c0_69 = arith.constant 0 : index
    %92 = vector.load %arg11[%c3_67, %c0_68, %c0_69] : memref<4x32x32xf32, #tpu.memory_space<vmem>>, vector<1x32x32xf32>
    %93 = vector.shape_cast %92 : vector<1x32x32xf32> to vector<32x32xf32>
    %cst_70 = arith.constant dense<0.000000e+00> : vector<8x32xf32>
    %94 = tpu.matmul %36, %93, %cst_70 {dimension_numbers = #tpu.dot_dimension_numbers<[1], [0], [0], [1], [0, 0, 1, 1], [], []>} : vector<8x32xf32>, vector<32x32xf32>, vector<8x32xf32> -> vector<8x32xf32>
    %95 = arith.addf %91, %94 : vector<8x32xf32>
    %c3_71 = arith.constant 3 : index
    %c0_72 = arith.constant 0 : index
    %c0_73 = arith.constant 0 : index
    %96 = vector.load %arg12[%c3_71, %c0_72, %c0_73] : memref<4x1x32xf32, #tpu.memory_space<vmem>>, vector<1x1x32xf32>
    %97 = vector.shape_cast %96 : vector<1x1x32xf32> to vector<1x32xf32>
    %98 = vector.broadcast %97 : vector<1x32xf32> to vector<8x32xf32>
    %99 = arith.addf %95, %98 : vector<8x32xf32>
    %cst_74 = arith.constant 0.000000e+00 : f32
    %100 = vector.broadcast %cst_74 : f32 to vector<8x32xf32>
    %101 = arith.subf %100, %99 : vector<8x32xf32>
    %102 = math.exp %101 : vector<8x32xf32>
    %cst_75 = arith.constant 1.000000e+00 : f32
    %103 = vector.broadcast %cst_75 : f32 to vector<8x32xf32>
    %104 = arith.addf %103, %102 : vector<8x32xf32>
    %105 = tpu.reciprocal %104 {approx = true} : vector<8x32xf32> -> vector<8x32xf32>
    %106 = arith.mulf %76, %36 : vector<8x32xf32>
    %107 = arith.mulf %59, %88 : vector<8x32xf32>
    %108 = arith.addf %106, %107 : vector<8x32xf32>
    %109 = math.tanh %108 : vector<8x32xf32>
    %110 = arith.mulf %105, %109 : vector<8x32xf32>
    %c0_76 = arith.constant 0 : index
    %c0_77 = arith.constant 0 : index
    %c0_78 = arith.constant 0 : index
    %111 = vector.load %arg13[%c0_76, %c0_77, %c0_78] : memref<4x32x32xf32, #tpu.memory_space<vmem>>, vector<1x32x32xf32>
    %112 = vector.shape_cast %111 : vector<1x32x32xf32> to vector<32x32xf32>
    %cst_79 = arith.constant dense<0.000000e+00> : vector<8x32xf32>
    %113 = tpu.matmul %110, %112, %cst_79 {dimension_numbers = #tpu.dot_dimension_numbers<[1], [0], [0], [1], [0, 0, 1, 1], [], []>} : vector<8x32xf32>, vector<32x32xf32>, vector<8x32xf32> -> vector<8x32xf32>
    %c0_80 = arith.constant 0 : index
    %c0_81 = arith.constant 0 : index
    %c0_82 = arith.constant 0 : index
    %114 = vector.load %arg14[%c0_80, %c0_81, %c0_82] : memref<4x32x32xf32, #tpu.memory_space<vmem>>, vector<1x32x32xf32>
    %115 = vector.shape_cast %114 : vector<1x32x32xf32> to vector<32x32xf32>
    %cst_83 = arith.constant dense<0.000000e+00> : vector<8x32xf32>
    %116 = tpu.matmul %36, %115, %cst_83 {dimension_numbers = #tpu.dot_dimension_numbers<[1], [0], [0], [1], [0, 0, 1, 1], [], []>} : vector<8x32xf32>, vector<32x32xf32>, vector<8x32xf32> -> vector<8x32xf32>
    %117 = arith.addf %113, %116 : vector<8x32xf32>
    %c0_84 = arith.constant 0 : index
    %c0_85 = arith.constant 0 : index
    %c0_86 = arith.constant 0 : index
    %118 = vector.load %arg15[%c0_84, %c0_85, %c0_86] : memref<4x1x32xf32, #tpu.memory_space<vmem>>, vector<1x1x32xf32>
    %119 = vector.shape_cast %118 : vector<1x1x32xf32> to vector<1x32xf32>
    %120 = vector.broadcast %119 : vector<1x32xf32> to vector<8x32xf32>
    %121 = arith.addf %117, %120 : vector<8x32xf32>
    %cst_87 = arith.constant 0.000000e+00 : f32
    %122 = vector.broadcast %cst_87 : f32 to vector<8x32xf32>
    %123 = arith.subf %122, %121 : vector<8x32xf32>
    %124 = math.exp %123 : vector<8x32xf32>
    %cst_88 = arith.constant 1.000000e+00 : f32
    %125 = vector.broadcast %cst_88 : f32 to vector<8x32xf32>
    %126 = arith.addf %125, %124 : vector<8x32xf32>
    %127 = tpu.reciprocal %126 {approx = true} : vector<8x32xf32> -> vector<8x32xf32>
    %c1_89 = arith.constant 1 : index
    %c0_90 = arith.constant 0 : index
    %c0_91 = arith.constant 0 : index
    %128 = vector.load %arg13[%c1_89, %c0_90, %c0_91] : memref<4x32x32xf32, #tpu.memory_space<vmem>>, vector<1x32x32xf32>
    %129 = vector.shape_cast %128 : vector<1x32x32xf32> to vector<32x32xf32>
    %cst_92 = arith.constant dense<0.000000e+00> : vector<8x32xf32>
    %130 = tpu.matmul %110, %129, %cst_92 {dimension_numbers = #tpu.dot_dimension_numbers<[1], [0], [0], [1], [0, 0, 1, 1], [], []>} : vector<8x32xf32>, vector<32x32xf32>, vector<8x32xf32> -> vector<8x32xf32>
    %c1_93 = arith.constant 1 : index
    %c0_94 = arith.constant 0 : index
    %c0_95 = arith.constant 0 : index
    %131 = vector.load %arg14[%c1_93, %c0_94, %c0_95] : memref<4x32x32xf32, #tpu.memory_space<vmem>>, vector<1x32x32xf32>
    %132 = vector.shape_cast %131 : vector<1x32x32xf32> to vector<32x32xf32>
    %cst_96 = arith.constant dense<0.000000e+00> : vector<8x32xf32>
    %133 = tpu.matmul %36, %132, %cst_96 {dimension_numbers = #tpu.dot_dimension_numbers<[1], [0], [0], [1], [0, 0, 1, 1], [], []>} : vector<8x32xf32>, vector<32x32xf32>, vector<8x32xf32> -> vector<8x32xf32>
    %134 = arith.addf %130, %133 : vector<8x32xf32>
    %c1_97 = arith.constant 1 : index
    %c0_98 = arith.constant 0 : index
    %c0_99 = arith.constant 0 : index
    %135 = vector.load %arg15[%c1_97, %c0_98, %c0_99] : memref<4x1x32xf32, #tpu.memory_space<vmem>>, vector<1x1x32xf32>
    %136 = vector.shape_cast %135 : vector<1x1x32xf32> to vector<1x32xf32>
    %137 = vector.broadcast %136 : vector<1x32xf32> to vector<8x32xf32>
    %138 = arith.addf %134, %137 : vector<8x32xf32>
    %cst_100 = arith.constant 0.000000e+00 : f32
    %139 = vector.broadcast %cst_100 : f32 to vector<8x32xf32>
    %140 = arith.subf %139, %138 : vector<8x32xf32>
    %141 = math.exp %140 : vector<8x32xf32>
    %cst_101 = arith.constant 1.000000e+00 : f32
    %142 = vector.broadcast %cst_101 : f32 to vector<8x32xf32>
    %143 = arith.addf %142, %141 : vector<8x32xf32>
    %144 = tpu.reciprocal %143 {approx = true} : vector<8x32xf32> -> vector<8x32xf32>
    %c2_102 = arith.constant 2 : index
    %c0_103 = arith.constant 0 : index
    %c0_104 = arith.constant 0 : index
    %145 = vector.load %arg13[%c2_102, %c0_103, %c0_104] : memref<4x32x32xf32, #tpu.memory_space<vmem>>, vector<1x32x32xf32>
    %146 = vector.shape_cast %145 : vector<1x32x32xf32> to vector<32x32xf32>
    %cst_105 = arith.constant dense<0.000000e+00> : vector<8x32xf32>
    %147 = tpu.matmul %110, %146, %cst_105 {dimension_numbers = #tpu.dot_dimension_numbers<[1], [0], [0], [1], [0, 0, 1, 1], [], []>} : vector<8x32xf32>, vector<32x32xf32>, vector<8x32xf32> -> vector<8x32xf32>
    %c2_106 = arith.constant 2 : index
    %c0_107 = arith.constant 0 : index
    %c0_108 = arith.constant 0 : index
    %148 = vector.load %arg14[%c2_106, %c0_107, %c0_108] : memref<4x32x32xf32, #tpu.memory_space<vmem>>, vector<1x32x32xf32>
    %149 = vector.shape_cast %148 : vector<1x32x32xf32> to vector<32x32xf32>
    %cst_109 = arith.constant dense<0.000000e+00> : vector<8x32xf32>
    %150 = tpu.matmul %36, %149, %cst_109 {dimension_numbers = #tpu.dot_dimension_numbers<[1], [0], [0], [1], [0, 0, 1, 1], [], []>} : vector<8x32xf32>, vector<32x32xf32>, vector<8x32xf32> -> vector<8x32xf32>
    %151 = arith.addf %147, %150 : vector<8x32xf32>
    %c2_110 = arith.constant 2 : index
    %c0_111 = arith.constant 0 : index
    %c0_112 = arith.constant 0 : index
    %152 = vector.load %arg15[%c2_110, %c0_111, %c0_112] : memref<4x1x32xf32, #tpu.memory_space<vmem>>, vector<1x1x32xf32>
    %153 = vector.shape_cast %152 : vector<1x1x32xf32> to vector<1x32xf32>
    %154 = vector.broadcast %153 : vector<1x32xf32> to vector<8x32xf32>
    %155 = arith.addf %151, %154 : vector<8x32xf32>
    %156 = math.tanh %155 : vector<8x32xf32>
    %c3_113 = arith.constant 3 : index
    %c0_114 = arith.constant 0 : index
    %c0_115 = arith.constant 0 : index
    %157 = vector.load %arg13[%c3_113, %c0_114, %c0_115] : memref<4x32x32xf32, #tpu.memory_space<vmem>>, vector<1x32x32xf32>
    %158 = vector.shape_cast %157 : vector<1x32x32xf32> to vector<32x32xf32>
    %cst_116 = arith.constant dense<0.000000e+00> : vector<8x32xf32>
    %159 = tpu.matmul %110, %158, %cst_116 {dimension_numbers = #tpu.dot_dimension_numbers<[1], [0], [0], [1], [0, 0, 1, 1], [], []>} : vector<8x32xf32>, vector<32x32xf32>, vector<8x32xf32> -> vector<8x32xf32>
    %c3_117 = arith.constant 3 : index
    %c0_118 = arith.constant 0 : index
    %c0_119 = arith.constant 0 : index
    %160 = vector.load %arg14[%c3_117, %c0_118, %c0_119] : memref<4x32x32xf32, #tpu.memory_space<vmem>>, vector<1x32x32xf32>
    %161 = vector.shape_cast %160 : vector<1x32x32xf32> to vector<32x32xf32>
    %cst_120 = arith.constant dense<0.000000e+00> : vector<8x32xf32>
    %162 = tpu.matmul %36, %161, %cst_120 {dimension_numbers = #tpu.dot_dimension_numbers<[1], [0], [0], [1], [0, 0, 1, 1], [], []>} : vector<8x32xf32>, vector<32x32xf32>, vector<8x32xf32> -> vector<8x32xf32>
    %163 = arith.addf %159, %162 : vector<8x32xf32>
    %c3_121 = arith.constant 3 : index
    %c0_122 = arith.constant 0 : index
    %c0_123 = arith.constant 0 : index
    %164 = vector.load %arg15[%c3_121, %c0_122, %c0_123] : memref<4x1x32xf32, #tpu.memory_space<vmem>>, vector<1x1x32xf32>
    %165 = vector.shape_cast %164 : vector<1x1x32xf32> to vector<1x32xf32>
    %166 = vector.broadcast %165 : vector<1x32xf32> to vector<8x32xf32>
    %167 = arith.addf %163, %166 : vector<8x32xf32>
    %cst_124 = arith.constant 0.000000e+00 : f32
    %168 = vector.broadcast %cst_124 : f32 to vector<8x32xf32>
    %169 = arith.subf %168, %167 : vector<8x32xf32>
    %170 = math.exp %169 : vector<8x32xf32>
    %cst_125 = arith.constant 1.000000e+00 : f32
    %171 = vector.broadcast %cst_125 : f32 to vector<8x32xf32>
    %172 = arith.addf %171, %170 : vector<8x32xf32>
    %173 = tpu.reciprocal %172 {approx = true} : vector<8x32xf32> -> vector<8x32xf32>
    %174 = arith.mulf %144, %36 : vector<8x32xf32>
    %175 = arith.mulf %127, %156 : vector<8x32xf32>
    %176 = arith.addf %174, %175 : vector<8x32xf32>
    %177 = math.tanh %176 : vector<8x32xf32>
    %178 = arith.mulf %173, %177 : vector<8x32xf32>
    %c1_i32 = arith.constant 1 : i32
    %179 = vector.broadcast %c1_i32 : i32 to vector<8x1xi32>
    %180 = arith.cmpi eq, %33, %179 : vector<8x1xi32>
    %181 = vector.shape_cast %180 : vector<8x1xi1> to vector<8x1xi1>
    %182 = vector.broadcast %181 : vector<8x1xi1> to vector<8x32xi1>
    %183 = arith.select %182, %178, %36 : vector<8x32xi1>, vector<8x32xf32>
    %184 = vector.extract_strided_slice %32 {offsets = [0, 1], sizes = [8, 1], strides = [1, 1]} : vector<8x8xi32> to vector<8x1xi32>
    %185 = vector.broadcast %184 : vector<8x1xi32> to vector<8x21xi32>
    %186 = arith.cmpi eq, %35, %185 : vector<8x21xi32>
    %187 = arith.extui %186 : vector<8x21xi1> to vector<8x21xi32>
    %188 = arith.sitofp %187 : vector<8x21xi32> to vector<8x21xf32>
    %cst_126 = arith.constant dense<0.000000e+00> : vector<8x16xf32>
    %189 = tpu.matmul %188, %34, %cst_126 {dimension_numbers = #tpu.dot_dimension_numbers<[1], [0], [0], [1], [0, 0, 1, 1], [], []>} : vector<8x21xf32>, vector<21x16xf32>, vector<8x16xf32> -> vector<8x16xf32>
    %c0_127 = arith.constant 0 : index
    %c0_128 = arith.constant 0 : index
    %c0_129 = arith.constant 0 : index
    %190 = vector.load %arg10[%c0_127, %c0_128, %c0_129] : memref<4x16x32xf32, #tpu.memory_space<vmem>>, vector<1x16x32xf32>
    %191 = vector.shape_cast %190 : vector<1x16x32xf32> to vector<16x32xf32>
    %cst_130 = arith.constant dense<0.000000e+00> : vector<8x32xf32>
    %192 = tpu.matmul %189, %191, %cst_130 {dimension_numbers = #tpu.dot_dimension_numbers<[1], [0], [0], [1], [0, 0, 1, 1], [], []>} : vector<8x16xf32>, vector<16x32xf32>, vector<8x32xf32> -> vector<8x32xf32>
    %c0_131 = arith.constant 0 : index
    %c0_132 = arith.constant 0 : index
    %c0_133 = arith.constant 0 : index
    %193 = vector.load %arg11[%c0_131, %c0_132, %c0_133] : memref<4x32x32xf32, #tpu.memory_space<vmem>>, vector<1x32x32xf32>
    %194 = vector.shape_cast %193 : vector<1x32x32xf32> to vector<32x32xf32>
    %cst_134 = arith.constant dense<0.000000e+00> : vector<8x32xf32>
    %195 = tpu.matmul %110, %194, %cst_134 {dimension_numbers = #tpu.dot_dimension_numbers<[1], [0], [0], [1], [0, 0, 1, 1], [], []>} : vector<8x32xf32>, vector<32x32xf32>, vector<8x32xf32> -> vector<8x32xf32>
    %196 = arith.addf %192, %195 : vector<8x32xf32>
    %c0_135 = arith.constant 0 : index
    %c0_136 = arith.constant 0 : index
    %c0_137 = arith.constant 0 : index
    %197 = vector.load %arg12[%c0_135, %c0_136, %c0_137] : memref<4x1x32xf32, #tpu.memory_space<vmem>>, vector<1x1x32xf32>
    %198 = vector.shape_cast %197 : vector<1x1x32xf32> to vector<1x32xf32>
    %199 = vector.broadcast %198 : vector<1x32xf32> to vector<8x32xf32>
    %200 = arith.addf %196, %199 : vector<8x32xf32>
    %cst_138 = arith.constant 0.000000e+00 : f32
    %201 = vector.broadcast %cst_138 : f32 to vector<8x32xf32>
    %202 = arith.subf %201, %200 : vector<8x32xf32>
    %203 = math.exp %202 : vector<8x32xf32>
    %cst_139 = arith.constant 1.000000e+00 : f32
    %204 = vector.broadcast %cst_139 : f32 to vector<8x32xf32>
    %205 = arith.addf %204, %203 : vector<8x32xf32>
    %206 = tpu.reciprocal %205 {approx = true} : vector<8x32xf32> -> vector<8x32xf32>
    %c1_140 = arith.constant 1 : index
    %c0_141 = arith.constant 0 : index
    %c0_142 = arith.constant 0 : index
    %207 = vector.load %arg10[%c1_140, %c0_141, %c0_142] : memref<4x16x32xf32, #tpu.memory_space<vmem>>, vector<1x16x32xf32>
    %208 = vector.shape_cast %207 : vector<1x16x32xf32> to vector<16x32xf32>
    %cst_143 = arith.constant dense<0.000000e+00> : vector<8x32xf32>
    %209 = tpu.matmul %189, %208, %cst_143 {dimension_numbers = #tpu.dot_dimension_numbers<[1], [0], [0], [1], [0, 0, 1, 1], [], []>} : vector<8x16xf32>, vector<16x32xf32>, vector<8x32xf32> -> vector<8x32xf32>
    %c1_144 = arith.constant 1 : index
    %c0_145 = arith.constant 0 : index
    %c0_146 = arith.constant 0 : index
    %210 = vector.load %arg11[%c1_144, %c0_145, %c0_146] : memref<4x32x32xf32, #tpu.memory_space<vmem>>, vector<1x32x32xf32>
    %211 = vector.shape_cast %210 : vector<1x32x32xf32> to vector<32x32xf32>
    %cst_147 = arith.constant dense<0.000000e+00> : vector<8x32xf32>
    %212 = tpu.matmul %110, %211, %cst_147 {dimension_numbers = #tpu.dot_dimension_numbers<[1], [0], [0], [1], [0, 0, 1, 1], [], []>} : vector<8x32xf32>, vector<32x32xf32>, vector<8x32xf32> -> vector<8x32xf32>
    %213 = arith.addf %209, %212 : vector<8x32xf32>
    %c1_148 = arith.constant 1 : index
    %c0_149 = arith.constant 0 : index
    %c0_150 = arith.constant 0 : index
    %214 = vector.load %arg12[%c1_148, %c0_149, %c0_150] : memref<4x1x32xf32, #tpu.memory_space<vmem>>, vector<1x1x32xf32>
    %215 = vector.shape_cast %214 : vector<1x1x32xf32> to vector<1x32xf32>
    %216 = vector.broadcast %215 : vector<1x32xf32> to vector<8x32xf32>
    %217 = arith.addf %213, %216 : vector<8x32xf32>
    %cst_151 = arith.constant 0.000000e+00 : f32
    %218 = vector.broadcast %cst_151 : f32 to vector<8x32xf32>
    %219 = arith.subf %218, %217 : vector<8x32xf32>
    %220 = math.exp %219 : vector<8x32xf32>
    %cst_152 = arith.constant 1.000000e+00 : f32
    %221 = vector.broadcast %cst_152 : f32 to vector<8x32xf32>
    %222 = arith.addf %221, %220 : vector<8x32xf32>
    %223 = tpu.reciprocal %222 {approx = true} : vector<8x32xf32> -> vector<8x32xf32>
    %c2_153 = arith.constant 2 : index
    %c0_154 = arith.constant 0 : index
    %c0_155 = arith.constant 0 : index
    %224 = vector.load %arg10[%c2_153, %c0_154, %c0_155] : memref<4x16x32xf32, #tpu.memory_space<vmem>>, vector<1x16x32xf32>
    %225 = vector.shape_cast %224 : vector<1x16x32xf32> to vector<16x32xf32>
    %cst_156 = arith.constant dense<0.000000e+00> : vector<8x32xf32>
    %226 = tpu.matmul %189, %225, %cst_156 {dimension_numbers = #tpu.dot_dimension_numbers<[1], [0], [0], [1], [0, 0, 1, 1], [], []>} : vector<8x16xf32>, vector<16x32xf32>, vector<8x32xf32> -> vector<8x32xf32>
    %c2_157 = arith.constant 2 : index
    %c0_158 = arith.constant 0 : index
    %c0_159 = arith.constant 0 : index
    %227 = vector.load %arg11[%c2_157, %c0_158, %c0_159] : memref<4x32x32xf32, #tpu.memory_space<vmem>>, vector<1x32x32xf32>
    %228 = vector.shape_cast %227 : vector<1x32x32xf32> to vector<32x32xf32>
    %cst_160 = arith.constant dense<0.000000e+00> : vector<8x32xf32>
    %229 = tpu.matmul %110, %228, %cst_160 {dimension_numbers = #tpu.dot_dimension_numbers<[1], [0], [0], [1], [0, 0, 1, 1], [], []>} : vector<8x32xf32>, vector<32x32xf32>, vector<8x32xf32> -> vector<8x32xf32>
    %230 = arith.addf %226, %229 : vector<8x32xf32>
    %c2_161 = arith.constant 2 : index
    %c0_162 = arith.constant 0 : index
    %c0_163 = arith.constant 0 : index
    %231 = vector.load %arg12[%c2_161, %c0_162, %c0_163] : memref<4x1x32xf32, #tpu.memory_space<vmem>>, vector<1x1x32xf32>
    %232 = vector.shape_cast %231 : vector<1x1x32xf32> to vector<1x32xf32>
    %233 = vector.broadcast %232 : vector<1x32xf32> to vector<8x32xf32>
    %234 = arith.addf %230, %233 : vector<8x32xf32>
    %235 = math.tanh %234 : vector<8x32xf32>
    %c3_164 = arith.constant 3 : index
    %c0_165 = arith.constant 0 : index
    %c0_166 = arith.constant 0 : index
    %236 = vector.load %arg10[%c3_164, %c0_165, %c0_166] : memref<4x16x32xf32, #tpu.memory_space<vmem>>, vector<1x16x32xf32>
    %237 = vector.shape_cast %236 : vector<1x16x32xf32> to vector<16x32xf32>
    %cst_167 = arith.constant dense<0.000000e+00> : vector<8x32xf32>
    %238 = tpu.matmul %189, %237, %cst_167 {dimension_numbers = #tpu.dot_dimension_numbers<[1], [0], [0], [1], [0, 0, 1, 1], [], []>} : vector<8x16xf32>, vector<16x32xf32>, vector<8x32xf32> -> vector<8x32xf32>
    %c3_168 = arith.constant 3 : index
    %c0_169 = arith.constant 0 : index
    %c0_170 = arith.constant 0 : index
    %239 = vector.load %arg11[%c3_168, %c0_169, %c0_170] : memref<4x32x32xf32, #tpu.memory_space<vmem>>, vector<1x32x32xf32>
    %240 = vector.shape_cast %239 : vector<1x32x32xf32> to vector<32x32xf32>
    %cst_171 = arith.constant dense<0.000000e+00> : vector<8x32xf32>
    %241 = tpu.matmul %110, %240, %cst_171 {dimension_numbers = #tpu.dot_dimension_numbers<[1], [0], [0], [1], [0, 0, 1, 1], [], []>} : vector<8x32xf32>, vector<32x32xf32>, vector<8x32xf32> -> vector<8x32xf32>
    %242 = arith.addf %238, %241 : vector<8x32xf32>
    %c3_172 = arith.constant 3 : index
    %c0_173 = arith.constant 0 : index
    %c0_174 = arith.constant 0 : index
    %243 = vector.load %arg12[%c3_172, %c0_173, %c0_174] : memref<4x1x32xf32, #tpu.memory_space<vmem>>, vector<1x1x32xf32>
    %244 = vector.shape_cast %243 : vector<1x1x32xf32> to vector<1x32xf32>
    %245 = vector.broadcast %244 : vector<1x32xf32> to vector<8x32xf32>
    %246 = arith.addf %242, %245 : vector<8x32xf32>
    %cst_175 = arith.constant 0.000000e+00 : f32
    %247 = vector.broadcast %cst_175 : f32 to vector<8x32xf32>
    %248 = arith.subf %247, %246 : vector<8x32xf32>
    %249 = math.exp %248 : vector<8x32xf32>
    %cst_176 = arith.constant 1.000000e+00 : f32
    %250 = vector.broadcast %cst_176 : f32 to vector<8x32xf32>
    %251 = arith.addf %250, %249 : vector<8x32xf32>
    %252 = tpu.reciprocal %251 {approx = true} : vector<8x32xf32> -> vector<8x32xf32>
    %253 = arith.mulf %223, %108 : vector<8x32xf32>
    %254 = arith.mulf %206, %235 : vector<8x32xf32>
    %255 = arith.addf %253, %254 : vector<8x32xf32>
    %256 = math.tanh %255 : vector<8x32xf32>
    %257 = arith.mulf %252, %256 : vector<8x32xf32>
    %c0_177 = arith.constant 0 : index
    %c0_178 = arith.constant 0 : index
    %c0_179 = arith.constant 0 : index
    %258 = vector.load %arg13[%c0_177, %c0_178, %c0_179] : memref<4x32x32xf32, #tpu.memory_space<vmem>>, vector<1x32x32xf32>
    %259 = vector.shape_cast %258 : vector<1x32x32xf32> to vector<32x32xf32>
    %cst_180 = arith.constant dense<0.000000e+00> : vector<8x32xf32>
    %260 = tpu.matmul %257, %259, %cst_180 {dimension_numbers = #tpu.dot_dimension_numbers<[1], [0], [0], [1], [0, 0, 1, 1], [], []>} : vector<8x32xf32>, vector<32x32xf32>, vector<8x32xf32> -> vector<8x32xf32>
    %c0_181 = arith.constant 0 : index
    %c0_182 = arith.constant 0 : index
    %c0_183 = arith.constant 0 : index
    %261 = vector.load %arg14[%c0_181, %c0_182, %c0_183] : memref<4x32x32xf32, #tpu.memory_space<vmem>>, vector<1x32x32xf32>
    %262 = vector.shape_cast %261 : vector<1x32x32xf32> to vector<32x32xf32>
    %cst_184 = arith.constant dense<0.000000e+00> : vector<8x32xf32>
    %263 = tpu.matmul %178, %262, %cst_184 {dimension_numbers = #tpu.dot_dimension_numbers<[1], [0], [0], [1], [0, 0, 1, 1], [], []>} : vector<8x32xf32>, vector<32x32xf32>, vector<8x32xf32> -> vector<8x32xf32>
    %264 = arith.addf %260, %263 : vector<8x32xf32>
    %c0_185 = arith.constant 0 : index
    %c0_186 = arith.constant 0 : index
    %c0_187 = arith.constant 0 : index
    %265 = vector.load %arg15[%c0_185, %c0_186, %c0_187] : memref<4x1x32xf32, #tpu.memory_space<vmem>>, vector<1x1x32xf32>
    %266 = vector.shape_cast %265 : vector<1x1x32xf32> to vector<1x32xf32>
    %267 = vector.broadcast %266 : vector<1x32xf32> to vector<8x32xf32>
    %268 = arith.addf %264, %267 : vector<8x32xf32>
    %cst_188 = arith.constant 0.000000e+00 : f32
    %269 = vector.broadcast %cst_188 : f32 to vector<8x32xf32>
    %270 = arith.subf %269, %268 : vector<8x32xf32>
    %271 = math.exp %270 : vector<8x32xf32>
    %cst_189 = arith.constant 1.000000e+00 : f32
    %272 = vector.broadcast %cst_189 : f32 to vector<8x32xf32>
    %273 = arith.addf %272, %271 : vector<8x32xf32>
    %274 = tpu.reciprocal %273 {approx = true} : vector<8x32xf32> -> vector<8x32xf32>
    %c1_190 = arith.constant 1 : index
    %c0_191 = arith.constant 0 : index
    %c0_192 = arith.constant 0 : index
    %275 = vector.load %arg13[%c1_190, %c0_191, %c0_192] : memref<4x32x32xf32, #tpu.memory_space<vmem>>, vector<1x32x32xf32>
    %276 = vector.shape_cast %275 : vector<1x32x32xf32> to vector<32x32xf32>
    %cst_193 = arith.constant dense<0.000000e+00> : vector<8x32xf32>
    %277 = tpu.matmul %257, %276, %cst_193 {dimension_numbers = #tpu.dot_dimension_numbers<[1], [0], [0], [1], [0, 0, 1, 1], [], []>} : vector<8x32xf32>, vector<32x32xf32>, vector<8x32xf32> -> vector<8x32xf32>
    %c1_194 = arith.constant 1 : index
    %c0_195 = arith.constant 0 : index
    %c0_196 = arith.constant 0 : index
    %278 = vector.load %arg14[%c1_194, %c0_195, %c0_196] : memref<4x32x32xf32, #tpu.memory_space<vmem>>, vector<1x32x32xf32>
    %279 = vector.shape_cast %278 : vector<1x32x32xf32> to vector<32x32xf32>
    %cst_197 = arith.constant dense<0.000000e+00> : vector<8x32xf32>
    %280 = tpu.matmul %178, %279, %cst_197 {dimension_numbers = #tpu.dot_dimension_numbers<[1], [0], [0], [1], [0, 0, 1, 1], [], []>} : vector<8x32xf32>, vector<32x32xf32>, vector<8x32xf32> -> vector<8x32xf32>
    %281 = arith.addf %277, %280 : vector<8x32xf32>
    %c1_198 = arith.constant 1 : index
    %c0_199 = arith.constant 0 : index
    %c0_200 = arith.constant 0 : index
    %282 = vector.load %arg15[%c1_198, %c0_199, %c0_200] : memref<4x1x32xf32, #tpu.memory_space<vmem>>, vector<1x1x32xf32>
    %283 = vector.shape_cast %282 : vector<1x1x32xf32> to vector<1x32xf32>
    %284 = vector.broadcast %283 : vector<1x32xf32> to vector<8x32xf32>
    %285 = arith.addf %281, %284 : vector<8x32xf32>
    %cst_201 = arith.constant 0.000000e+00 : f32
    %286 = vector.broadcast %cst_201 : f32 to vector<8x32xf32>
    %287 = arith.subf %286, %285 : vector<8x32xf32>
    %288 = math.exp %287 : vector<8x32xf32>
    %cst_202 = arith.constant 1.000000e+00 : f32
    %289 = vector.broadcast %cst_202 : f32 to vector<8x32xf32>
    %290 = arith.addf %289, %288 : vector<8x32xf32>
    %291 = tpu.reciprocal %290 {approx = true} : vector<8x32xf32> -> vector<8x32xf32>
    %c2_203 = arith.constant 2 : index
    %c0_204 = arith.constant 0 : index
    %c0_205 = arith.constant 0 : index
    %292 = vector.load %arg13[%c2_203, %c0_204, %c0_205] : memref<4x32x32xf32, #tpu.memory_space<vmem>>, vector<1x32x32xf32>
    %293 = vector.shape_cast %292 : vector<1x32x32xf32> to vector<32x32xf32>
    %cst_206 = arith.constant dense<0.000000e+00> : vector<8x32xf32>
    %294 = tpu.matmul %257, %293, %cst_206 {dimension_numbers = #tpu.dot_dimension_numbers<[1], [0], [0], [1], [0, 0, 1, 1], [], []>} : vector<8x32xf32>, vector<32x32xf32>, vector<8x32xf32> -> vector<8x32xf32>
    %c2_207 = arith.constant 2 : index
    %c0_208 = arith.constant 0 : index
    %c0_209 = arith.constant 0 : index
    %295 = vector.load %arg14[%c2_207, %c0_208, %c0_209] : memref<4x32x32xf32, #tpu.memory_space<vmem>>, vector<1x32x32xf32>
    %296 = vector.shape_cast %295 : vector<1x32x32xf32> to vector<32x32xf32>
    %cst_210 = arith.constant dense<0.000000e+00> : vector<8x32xf32>
    %297 = tpu.matmul %178, %296, %cst_210 {dimension_numbers = #tpu.dot_dimension_numbers<[1], [0], [0], [1], [0, 0, 1, 1], [], []>} : vector<8x32xf32>, vector<32x32xf32>, vector<8x32xf32> -> vector<8x32xf32>
    %298 = arith.addf %294, %297 : vector<8x32xf32>
    %c2_211 = arith.constant 2 : index
    %c0_212 = arith.constant 0 : index
    %c0_213 = arith.constant 0 : index
    %299 = vector.load %arg15[%c2_211, %c0_212, %c0_213] : memref<4x1x32xf32, #tpu.memory_space<vmem>>, vector<1x1x32xf32>
    %300 = vector.shape_cast %299 : vector<1x1x32xf32> to vector<1x32xf32>
    %301 = vector.broadcast %300 : vector<1x32xf32> to vector<8x32xf32>
    %302 = arith.addf %298, %301 : vector<8x32xf32>
    %303 = math.tanh %302 : vector<8x32xf32>
    %c3_214 = arith.constant 3 : index
    %c0_215 = arith.constant 0 : index
    %c0_216 = arith.constant 0 : index
    %304 = vector.load %arg13[%c3_214, %c0_215, %c0_216] : memref<4x32x32xf32, #tpu.memory_space<vmem>>, vector<1x32x32xf32>
    %305 = vector.shape_cast %304 : vector<1x32x32xf32> to vector<32x32xf32>
    %cst_217 = arith.constant dense<0.000000e+00> : vector<8x32xf32>
    %306 = tpu.matmul %257, %305, %cst_217 {dimension_numbers = #tpu.dot_dimension_numbers<[1], [0], [0], [1], [0, 0, 1, 1], [], []>} : vector<8x32xf32>, vector<32x32xf32>, vector<8x32xf32> -> vector<8x32xf32>
    %c3_218 = arith.constant 3 : index
    %c0_219 = arith.constant 0 : index
    %c0_220 = arith.constant 0 : index
    %307 = vector.load %arg14[%c3_218, %c0_219, %c0_220] : memref<4x32x32xf32, #tpu.memory_space<vmem>>, vector<1x32x32xf32>
    %308 = vector.shape_cast %307 : vector<1x32x32xf32> to vector<32x32xf32>
    %cst_221 = arith.constant dense<0.000000e+00> : vector<8x32xf32>
    %309 = tpu.matmul %178, %308, %cst_221 {dimension_numbers = #tpu.dot_dimension_numbers<[1], [0], [0], [1], [0, 0, 1, 1], [], []>} : vector<8x32xf32>, vector<32x32xf32>, vector<8x32xf32> -> vector<8x32xf32>
    %310 = arith.addf %306, %309 : vector<8x32xf32>
    %c3_222 = arith.constant 3 : index
    %c0_223 = arith.constant 0 : index
    %c0_224 = arith.constant 0 : index
    %311 = vector.load %arg15[%c3_222, %c0_223, %c0_224] : memref<4x1x32xf32, #tpu.memory_space<vmem>>, vector<1x1x32xf32>
    %312 = vector.shape_cast %311 : vector<1x1x32xf32> to vector<1x32xf32>
    %313 = vector.broadcast %312 : vector<1x32xf32> to vector<8x32xf32>
    %314 = arith.addf %310, %313 : vector<8x32xf32>
    %cst_225 = arith.constant 0.000000e+00 : f32
    %315 = vector.broadcast %cst_225 : f32 to vector<8x32xf32>
    %316 = arith.subf %315, %314 : vector<8x32xf32>
    %317 = math.exp %316 : vector<8x32xf32>
    %cst_226 = arith.constant 1.000000e+00 : f32
    %318 = vector.broadcast %cst_226 : f32 to vector<8x32xf32>
    %319 = arith.addf %318, %317 : vector<8x32xf32>
    %320 = tpu.reciprocal %319 {approx = true} : vector<8x32xf32> -> vector<8x32xf32>
    %321 = arith.mulf %291, %176 : vector<8x32xf32>
    %322 = arith.mulf %274, %303 : vector<8x32xf32>
    %323 = arith.addf %321, %322 : vector<8x32xf32>
    %324 = math.tanh %323 : vector<8x32xf32>
    %325 = arith.mulf %320, %324 : vector<8x32xf32>
    %c2_i32 = arith.constant 2 : i32
    %326 = vector.broadcast %c2_i32 : i32 to vector<8x1xi32>
    %327 = arith.cmpi eq, %33, %326 : vector<8x1xi32>
    %328 = vector.shape_cast %327 : vector<8x1xi1> to vector<8x1xi1>
    %329 = vector.broadcast %328 : vector<8x1xi1> to vector<8x32xi1>
    %330 = arith.select %329, %325, %183 : vector<8x32xi1>, vector<8x32xf32>
    %331 = vector.extract_strided_slice %32 {offsets = [0, 2], sizes = [8, 1], strides = [1, 1]} : vector<8x8xi32> to vector<8x1xi32>
    %332 = vector.broadcast %331 : vector<8x1xi32> to vector<8x21xi32>
    %333 = arith.cmpi eq, %35, %332 : vector<8x21xi32>
    %334 = arith.extui %333 : vector<8x21xi1> to vector<8x21xi32>
    %335 = arith.sitofp %334 : vector<8x21xi32> to vector<8x21xf32>
    %cst_227 = arith.constant dense<0.000000e+00> : vector<8x16xf32>
    %336 = tpu.matmul %335, %34, %cst_227 {dimension_numbers = #tpu.dot_dimension_numbers<[1], [0], [0], [1], [0, 0, 1, 1], [], []>} : vector<8x21xf32>, vector<21x16xf32>, vector<8x16xf32> -> vector<8x16xf32>
    %c0_228 = arith.constant 0 : index
    %c0_229 = arith.constant 0 : index
    %c0_230 = arith.constant 0 : index
    %337 = vector.load %arg10[%c0_228, %c0_229, %c0_230] : memref<4x16x32xf32, #tpu.memory_space<vmem>>, vector<1x16x32xf32>
    %338 = vector.shape_cast %337 : vector<1x16x32xf32> to vector<16x32xf32>
    %cst_231 = arith.constant dense<0.000000e+00> : vector<8x32xf32>
    %339 = tpu.matmul %336, %338, %cst_231 {dimension_numbers = #tpu.dot_dimension_numbers<[1], [0], [0], [1], [0, 0, 1, 1], [], []>} : vector<8x16xf32>, vector<16x32xf32>, vector<8x32xf32> -> vector<8x32xf32>
    %c0_232 = arith.constant 0 : index
    %c0_233 = arith.constant 0 : index
    %c0_234 = arith.constant 0 : index
    %340 = vector.load %arg11[%c0_232, %c0_233, %c0_234] : memref<4x32x32xf32, #tpu.memory_space<vmem>>, vector<1x32x32xf32>
    %341 = vector.shape_cast %340 : vector<1x32x32xf32> to vector<32x32xf32>
    %cst_235 = arith.constant dense<0.000000e+00> : vector<8x32xf32>
    %342 = tpu.matmul %257, %341, %cst_235 {dimension_numbers = #tpu.dot_dimension_numbers<[1], [0], [0], [1], [0, 0, 1, 1], [], []>} : vector<8x32xf32>, vector<32x32xf32>, vector<8x32xf32> -> vector<8x32xf32>
    %343 = arith.addf %339, %342 : vector<8x32xf32>
    %c0_236 = arith.constant 0 : index
    %c0_237 = arith.constant 0 : index
    %c0_238 = arith.constant 0 : index
    %344 = vector.load %arg12[%c0_236, %c0_237, %c0_238] : memref<4x1x32xf32, #tpu.memory_space<vmem>>, vector<1x1x32xf32>
    %345 = vector.shape_cast %344 : vector<1x1x32xf32> to vector<1x32xf32>
    %346 = vector.broadcast %345 : vector<1x32xf32> to vector<8x32xf32>
    %347 = arith.addf %343, %346 : vector<8x32xf32>
    %cst_239 = arith.constant 0.000000e+00 : f32
    %348 = vector.broadcast %cst_239 : f32 to vector<8x32xf32>
    %349 = arith.subf %348, %347 : vector<8x32xf32>
    %350 = math.exp %349 : vector<8x32xf32>
    %cst_240 = arith.constant 1.000000e+00 : f32
    %351 = vector.broadcast %cst_240 : f32 to vector<8x32xf32>
    %352 = arith.addf %351, %350 : vector<8x32xf32>
    %353 = tpu.reciprocal %352 {approx = true} : vector<8x32xf32> -> vector<8x32xf32>
    %c1_241 = arith.constant 1 : index
    %c0_242 = arith.constant 0 : index
    %c0_243 = arith.constant 0 : index
    %354 = vector.load %arg10[%c1_241, %c0_242, %c0_243] : memref<4x16x32xf32, #tpu.memory_space<vmem>>, vector<1x16x32xf32>
    %355 = vector.shape_cast %354 : vector<1x16x32xf32> to vector<16x32xf32>
    %cst_244 = arith.constant dense<0.000000e+00> : vector<8x32xf32>
    %356 = tpu.matmul %336, %355, %cst_244 {dimension_numbers = #tpu.dot_dimension_numbers<[1], [0], [0], [1], [0, 0, 1, 1], [], []>} : vector<8x16xf32>, vector<16x32xf32>, vector<8x32xf32> -> vector<8x32xf32>
    %c1_245 = arith.constant 1 : index
    %c0_246 = arith.constant 0 : index
    %c0_247 = arith.constant 0 : index
    %357 = vector.load %arg11[%c1_245, %c0_246, %c0_247] : memref<4x32x32xf32, #tpu.memory_space<vmem>>, vector<1x32x32xf32>
    %358 = vector.shape_cast %357 : vector<1x32x32xf32> to vector<32x32xf32>
    %cst_248 = arith.constant dense<0.000000e+00> : vector<8x32xf32>
    %359 = tpu.matmul %257, %358, %cst_248 {dimension_numbers = #tpu.dot_dimension_numbers<[1], [0], [0], [1], [0, 0, 1, 1], [], []>} : vector<8x32xf32>, vector<32x32xf32>, vector<8x32xf32> -> vector<8x32xf32>
    %360 = arith.addf %356, %359 : vector<8x32xf32>
    %c1_249 = arith.constant 1 : index
    %c0_250 = arith.constant 0 : index
    %c0_251 = arith.constant 0 : index
    %361 = vector.load %arg12[%c1_249, %c0_250, %c0_251] : memref<4x1x32xf32, #tpu.memory_space<vmem>>, vector<1x1x32xf32>
    %362 = vector.shape_cast %361 : vector<1x1x32xf32> to vector<1x32xf32>
    %363 = vector.broadcast %362 : vector<1x32xf32> to vector<8x32xf32>
    %364 = arith.addf %360, %363 : vector<8x32xf32>
    %cst_252 = arith.constant 0.000000e+00 : f32
    %365 = vector.broadcast %cst_252 : f32 to vector<8x32xf32>
    %366 = arith.subf %365, %364 : vector<8x32xf32>
    %367 = math.exp %366 : vector<8x32xf32>
    %cst_253 = arith.constant 1.000000e+00 : f32
    %368 = vector.broadcast %cst_253 : f32 to vector<8x32xf32>
    %369 = arith.addf %368, %367 : vector<8x32xf32>
    %370 = tpu.reciprocal %369 {approx = true} : vector<8x32xf32> -> vector<8x32xf32>
    %c2_254 = arith.constant 2 : index
    %c0_255 = arith.constant 0 : index
    %c0_256 = arith.constant 0 : index
    %371 = vector.load %arg10[%c2_254, %c0_255, %c0_256] : memref<4x16x32xf32, #tpu.memory_space<vmem>>, vector<1x16x32xf32>
    %372 = vector.shape_cast %371 : vector<1x16x32xf32> to vector<16x32xf32>
    %cst_257 = arith.constant dense<0.000000e+00> : vector<8x32xf32>
    %373 = tpu.matmul %336, %372, %cst_257 {dimension_numbers = #tpu.dot_dimension_numbers<[1], [0], [0], [1], [0, 0, 1, 1], [], []>} : vector<8x16xf32>, vector<16x32xf32>, vector<8x32xf32> -> vector<8x32xf32>
    %c2_258 = arith.constant 2 : index
    %c0_259 = arith.constant 0 : index
    %c0_260 = arith.constant 0 : index
    %374 = vector.load %arg11[%c2_258, %c0_259, %c0_260] : memref<4x32x32xf32, #tpu.memory_space<vmem>>, vector<1x32x32xf32>
    %375 = vector.shape_cast %374 : vector<1x32x32xf32> to vector<32x32xf32>
    %cst_261 = arith.constant dense<0.000000e+00> : vector<8x32xf32>
    %376 = tpu.matmul %257, %375, %cst_261 {dimension_numbers = #tpu.dot_dimension_numbers<[1], [0], [0], [1], [0, 0, 1, 1], [], []>} : vector<8x32xf32>, vector<32x32xf32>, vector<8x32xf32> -> vector<8x32xf32>
    %377 = arith.addf %373, %376 : vector<8x32xf32>
    %c2_262 = arith.constant 2 : index
    %c0_263 = arith.constant 0 : index
    %c0_264 = arith.constant 0 : index
    %378 = vector.load %arg12[%c2_262, %c0_263, %c0_264] : memref<4x1x32xf32, #tpu.memory_space<vmem>>, vector<1x1x32xf32>
    %379 = vector.shape_cast %378 : vector<1x1x32xf32> to vector<1x32xf32>
    %380 = vector.broadcast %379 : vector<1x32xf32> to vector<8x32xf32>
    %381 = arith.addf %377, %380 : vector<8x32xf32>
    %382 = math.tanh %381 : vector<8x32xf32>
    %c3_265 = arith.constant 3 : index
    %c0_266 = arith.constant 0 : index
    %c0_267 = arith.constant 0 : index
    %383 = vector.load %arg10[%c3_265, %c0_266, %c0_267] : memref<4x16x32xf32, #tpu.memory_space<vmem>>, vector<1x16x32xf32>
    %384 = vector.shape_cast %383 : vector<1x16x32xf32> to vector<16x32xf32>
    %cst_268 = arith.constant dense<0.000000e+00> : vector<8x32xf32>
    %385 = tpu.matmul %336, %384, %cst_268 {dimension_numbers = #tpu.dot_dimension_numbers<[1], [0], [0], [1], [0, 0, 1, 1], [], []>} : vector<8x16xf32>, vector<16x32xf32>, vector<8x32xf32> -> vector<8x32xf32>
    %c3_269 = arith.constant 3 : index
    %c0_270 = arith.constant 0 : index
    %c0_271 = arith.constant 0 : index
    %386 = vector.load %arg11[%c3_269, %c0_270, %c0_271] : memref<4x32x32xf32, #tpu.memory_space<vmem>>, vector<1x32x32xf32>
    %387 = vector.shape_cast %386 : vector<1x32x32xf32> to vector<32x32xf32>
    %cst_272 = arith.constant dense<0.000000e+00> : vector<8x32xf32>
    %388 = tpu.matmul %257, %387, %cst_272 {dimension_numbers = #tpu.dot_dimension_numbers<[1], [0], [0], [1], [0, 0, 1, 1], [], []>} : vector<8x32xf32>, vector<32x32xf32>, vector<8x32xf32> -> vector<8x32xf32>
    %389 = arith.addf %385, %388 : vector<8x32xf32>
    %c3_273 = arith.constant 3 : index
    %c0_274 = arith.constant 0 : index
    %c0_275 = arith.constant 0 : index
    %390 = vector.load %arg12[%c3_273, %c0_274, %c0_275] : memref<4x1x32xf32, #tpu.memory_space<vmem>>, vector<1x1x32xf32>
    %391 = vector.shape_cast %390 : vector<1x1x32xf32> to vector<1x32xf32>
    %392 = vector.broadcast %391 : vector<1x32xf32> to vector<8x32xf32>
    %393 = arith.addf %389, %392 : vector<8x32xf32>
    %cst_276 = arith.constant 0.000000e+00 : f32
    %394 = vector.broadcast %cst_276 : f32 to vector<8x32xf32>
    %395 = arith.subf %394, %393 : vector<8x32xf32>
    %396 = math.exp %395 : vector<8x32xf32>
    %cst_277 = arith.constant 1.000000e+00 : f32
    %397 = vector.broadcast %cst_277 : f32 to vector<8x32xf32>
    %398 = arith.addf %397, %396 : vector<8x32xf32>
    %399 = tpu.reciprocal %398 {approx = true} : vector<8x32xf32> -> vector<8x32xf32>
    %400 = arith.mulf %370, %255 : vector<8x32xf32>
    %401 = arith.mulf %353, %382 : vector<8x32xf32>
    %402 = arith.addf %400, %401 : vector<8x32xf32>
    %403 = math.tanh %402 : vector<8x32xf32>
    %404 = arith.mulf %399, %403 : vector<8x32xf32>
    %c0_278 = arith.constant 0 : index
    %c0_279 = arith.constant 0 : index
    %c0_280 = arith.constant 0 : index
    %405 = vector.load %arg13[%c0_278, %c0_279, %c0_280] : memref<4x32x32xf32, #tpu.memory_space<vmem>>, vector<1x32x32xf32>
    %406 = vector.shape_cast %405 : vector<1x32x32xf32> to vector<32x32xf32>
    %cst_281 = arith.constant dense<0.000000e+00> : vector<8x32xf32>
    %407 = tpu.matmul %404, %406, %cst_281 {dimension_numbers = #tpu.dot_dimension_numbers<[1], [0], [0], [1], [0, 0, 1, 1], [], []>} : vector<8x32xf32>, vector<32x32xf32>, vector<8x32xf32> -> vector<8x32xf32>
    %c0_282 = arith.constant 0 : index
    %c0_283 = arith.constant 0 : index
    %c0_284 = arith.constant 0 : index
    %408 = vector.load %arg14[%c0_282, %c0_283, %c0_284] : memref<4x32x32xf32, #tpu.memory_space<vmem>>, vector<1x32x32xf32>
    %409 = vector.shape_cast %408 : vector<1x32x32xf32> to vector<32x32xf32>
    %cst_285 = arith.constant dense<0.000000e+00> : vector<8x32xf32>
    %410 = tpu.matmul %325, %409, %cst_285 {dimension_numbers = #tpu.dot_dimension_numbers<[1], [0], [0], [1], [0, 0, 1, 1], [], []>} : vector<8x32xf32>, vector<32x32xf32>, vector<8x32xf32> -> vector<8x32xf32>
    %411 = arith.addf %407, %410 : vector<8x32xf32>
    %c0_286 = arith.constant 0 : index
    %c0_287 = arith.constant 0 : index
    %c0_288 = arith.constant 0 : index
    %412 = vector.load %arg15[%c0_286, %c0_287, %c0_288] : memref<4x1x32xf32, #tpu.memory_space<vmem>>, vector<1x1x32xf32>
    %413 = vector.shape_cast %412 : vector<1x1x32xf32> to vector<1x32xf32>
    %414 = vector.broadcast %413 : vector<1x32xf32> to vector<8x32xf32>
    %415 = arith.addf %411, %414 : vector<8x32xf32>
    %cst_289 = arith.constant 0.000000e+00 : f32
    %416 = vector.broadcast %cst_289 : f32 to vector<8x32xf32>
    %417 = arith.subf %416, %415 : vector<8x32xf32>
    %418 = math.exp %417 : vector<8x32xf32>
    %cst_290 = arith.constant 1.000000e+00 : f32
    %419 = vector.broadcast %cst_290 : f32 to vector<8x32xf32>
    %420 = arith.addf %419, %418 : vector<8x32xf32>
    %421 = tpu.reciprocal %420 {approx = true} : vector<8x32xf32> -> vector<8x32xf32>
    %c1_291 = arith.constant 1 : index
    %c0_292 = arith.constant 0 : index
    %c0_293 = arith.constant 0 : index
    %422 = vector.load %arg13[%c1_291, %c0_292, %c0_293] : memref<4x32x32xf32, #tpu.memory_space<vmem>>, vector<1x32x32xf32>
    %423 = vector.shape_cast %422 : vector<1x32x32xf32> to vector<32x32xf32>
    %cst_294 = arith.constant dense<0.000000e+00> : vector<8x32xf32>
    %424 = tpu.matmul %404, %423, %cst_294 {dimension_numbers = #tpu.dot_dimension_numbers<[1], [0], [0], [1], [0, 0, 1, 1], [], []>} : vector<8x32xf32>, vector<32x32xf32>, vector<8x32xf32> -> vector<8x32xf32>
    %c1_295 = arith.constant 1 : index
    %c0_296 = arith.constant 0 : index
    %c0_297 = arith.constant 0 : index
    %425 = vector.load %arg14[%c1_295, %c0_296, %c0_297] : memref<4x32x32xf32, #tpu.memory_space<vmem>>, vector<1x32x32xf32>
    %426 = vector.shape_cast %425 : vector<1x32x32xf32> to vector<32x32xf32>
    %cst_298 = arith.constant dense<0.000000e+00> : vector<8x32xf32>
    %427 = tpu.matmul %325, %426, %cst_298 {dimension_numbers = #tpu.dot_dimension_numbers<[1], [0], [0], [1], [0, 0, 1, 1], [], []>} : vector<8x32xf32>, vector<32x32xf32>, vector<8x32xf32> -> vector<8x32xf32>
    %428 = arith.addf %424, %427 : vector<8x32xf32>
    %c1_299 = arith.constant 1 : index
    %c0_300 = arith.constant 0 : index
    %c0_301 = arith.constant 0 : index
    %429 = vector.load %arg15[%c1_299, %c0_300, %c0_301] : memref<4x1x32xf32, #tpu.memory_space<vmem>>, vector<1x1x32xf32>
    %430 = vector.shape_cast %429 : vector<1x1x32xf32> to vector<1x32xf32>
    %431 = vector.broadcast %430 : vector<1x32xf32> to vector<8x32xf32>
    %432 = arith.addf %428, %431 : vector<8x32xf32>
    %cst_302 = arith.constant 0.000000e+00 : f32
    %433 = vector.broadcast %cst_302 : f32 to vector<8x32xf32>
    %434 = arith.subf %433, %432 : vector<8x32xf32>
    %435 = math.exp %434 : vector<8x32xf32>
    %cst_303 = arith.constant 1.000000e+00 : f32
    %436 = vector.broadcast %cst_303 : f32 to vector<8x32xf32>
    %437 = arith.addf %436, %435 : vector<8x32xf32>
    %438 = tpu.reciprocal %437 {approx = true} : vector<8x32xf32> -> vector<8x32xf32>
    %c2_304 = arith.constant 2 : index
    %c0_305 = arith.constant 0 : index
    %c0_306 = arith.constant 0 : index
    %439 = vector.load %arg13[%c2_304, %c0_305, %c0_306] : memref<4x32x32xf32, #tpu.memory_space<vmem>>, vector<1x32x32xf32>
    %440 = vector.shape_cast %439 : vector<1x32x32xf32> to vector<32x32xf32>
    %cst_307 = arith.constant dense<0.000000e+00> : vector<8x32xf32>
    %441 = tpu.matmul %404, %440, %cst_307 {dimension_numbers = #tpu.dot_dimension_numbers<[1], [0], [0], [1], [0, 0, 1, 1], [], []>} : vector<8x32xf32>, vector<32x32xf32>, vector<8x32xf32> -> vector<8x32xf32>
    %c2_308 = arith.constant 2 : index
    %c0_309 = arith.constant 0 : index
    %c0_310 = arith.constant 0 : index
    %442 = vector.load %arg14[%c2_308, %c0_309, %c0_310] : memref<4x32x32xf32, #tpu.memory_space<vmem>>, vector<1x32x32xf32>
    %443 = vector.shape_cast %442 : vector<1x32x32xf32> to vector<32x32xf32>
    %cst_311 = arith.constant dense<0.000000e+00> : vector<8x32xf32>
    %444 = tpu.matmul %325, %443, %cst_311 {dimension_numbers = #tpu.dot_dimension_numbers<[1], [0], [0], [1], [0, 0, 1, 1], [], []>} : vector<8x32xf32>, vector<32x32xf32>, vector<8x32xf32> -> vector<8x32xf32>
    %445 = arith.addf %441, %444 : vector<8x32xf32>
    %c2_312 = arith.constant 2 : index
    %c0_313 = arith.constant 0 : index
    %c0_314 = arith.constant 0 : index
    %446 = vector.load %arg15[%c2_312, %c0_313, %c0_314] : memref<4x1x32xf32, #tpu.memory_space<vmem>>, vector<1x1x32xf32>
    %447 = vector.shape_cast %446 : vector<1x1x32xf32> to vector<1x32xf32>
    %448 = vector.broadcast %447 : vector<1x32xf32> to vector<8x32xf32>
    %449 = arith.addf %445, %448 : vector<8x32xf32>
    %450 = math.tanh %449 : vector<8x32xf32>
    %c3_315 = arith.constant 3 : index
    %c0_316 = arith.constant 0 : index
    %c0_317 = arith.constant 0 : index
    %451 = vector.load %arg13[%c3_315, %c0_316, %c0_317] : memref<4x32x32xf32, #tpu.memory_space<vmem>>, vector<1x32x32xf32>
    %452 = vector.shape_cast %451 : vector<1x32x32xf32> to vector<32x32xf32>
    %cst_318 = arith.constant dense<0.000000e+00> : vector<8x32xf32>
    %453 = tpu.matmul %404, %452, %cst_318 {dimension_numbers = #tpu.dot_dimension_numbers<[1], [0], [0], [1], [0, 0, 1, 1], [], []>} : vector<8x32xf32>, vector<32x32xf32>, vector<8x32xf32> -> vector<8x32xf32>
    %c3_319 = arith.constant 3 : index
    %c0_320 = arith.constant 0 : index
    %c0_321 = arith.constant 0 : index
    %454 = vector.load %arg14[%c3_319, %c0_320, %c0_321] : memref<4x32x32xf32, #tpu.memory_space<vmem>>, vector<1x32x32xf32>
    %455 = vector.shape_cast %454 : vector<1x32x32xf32> to vector<32x32xf32>
    %cst_322 = arith.constant dense<0.000000e+00> : vector<8x32xf32>
    %456 = tpu.matmul %325, %455, %cst_322 {dimension_numbers = #tpu.dot_dimension_numbers<[1], [0], [0], [1], [0, 0, 1, 1], [], []>} : vector<8x32xf32>, vector<32x32xf32>, vector<8x32xf32> -> vector<8x32xf32>
    %457 = arith.addf %453, %456 : vector<8x32xf32>
    %c3_323 = arith.constant 3 : index
    %c0_324 = arith.constant 0 : index
    %c0_325 = arith.constant 0 : index
    %458 = vector.load %arg15[%c3_323, %c0_324, %c0_325] : memref<4x1x32xf32, #tpu.memory_space<vmem>>, vector<1x1x32xf32>
    %459 = vector.shape_cast %458 : vector<1x1x32xf32> to vector<1x32xf32>
    %460 = vector.broadcast %459 : vector<1x32xf32> to vector<8x32xf32>
    %461 = arith.addf %457, %460 : vector<8x32xf32>
    %cst_326 = arith.constant 0.000000e+00 : f32
    %462 = vector.broadcast %cst_326 : f32 to vector<8x32xf32>
    %463 = arith.subf %462, %461 : vector<8x32xf32>
    %464 = math.exp %463 : vector<8x32xf32>
    %cst_327 = arith.constant 1.000000e+00 : f32
    %465 = vector.broadcast %cst_327 : f32 to vector<8x32xf32>
    %466 = arith.addf %465, %464 : vector<8x32xf32>
    %467 = tpu.reciprocal %466 {approx = true} : vector<8x32xf32> -> vector<8x32xf32>
    %468 = arith.mulf %438, %323 : vector<8x32xf32>
    %469 = arith.mulf %421, %450 : vector<8x32xf32>
    %470 = arith.addf %468, %469 : vector<8x32xf32>
    %471 = math.tanh %470 : vector<8x32xf32>
    %472 = arith.mulf %467, %471 : vector<8x32xf32>
    %c3_i32 = arith.constant 3 : i32
    %473 = vector.broadcast %c3_i32 : i32 to vector<8x1xi32>
    %474 = arith.cmpi eq, %33, %473 : vector<8x1xi32>
    %475 = vector.shape_cast %474 : vector<8x1xi1> to vector<8x1xi1>
    %476 = vector.broadcast %475 : vector<8x1xi1> to vector<8x32xi1>
    %477 = arith.select %476, %472, %330 : vector<8x32xi1>, vector<8x32xf32>
    %478 = vector.extract_strided_slice %32 {offsets = [0, 3], sizes = [8, 1], strides = [1, 1]} : vector<8x8xi32> to vector<8x1xi32>
    %479 = vector.broadcast %478 : vector<8x1xi32> to vector<8x21xi32>
    %480 = arith.cmpi eq, %35, %479 : vector<8x21xi32>
    %481 = arith.extui %480 : vector<8x21xi1> to vector<8x21xi32>
    %482 = arith.sitofp %481 : vector<8x21xi32> to vector<8x21xf32>
    %cst_328 = arith.constant dense<0.000000e+00> : vector<8x16xf32>
    %483 = tpu.matmul %482, %34, %cst_328 {dimension_numbers = #tpu.dot_dimension_numbers<[1], [0], [0], [1], [0, 0, 1, 1], [], []>} : vector<8x21xf32>, vector<21x16xf32>, vector<8x16xf32> -> vector<8x16xf32>
    %c0_329 = arith.constant 0 : index
    %c0_330 = arith.constant 0 : index
    %c0_331 = arith.constant 0 : index
    %484 = vector.load %arg10[%c0_329, %c0_330, %c0_331] : memref<4x16x32xf32, #tpu.memory_space<vmem>>, vector<1x16x32xf32>
    %485 = vector.shape_cast %484 : vector<1x16x32xf32> to vector<16x32xf32>
    %cst_332 = arith.constant dense<0.000000e+00> : vector<8x32xf32>
    %486 = tpu.matmul %483, %485, %cst_332 {dimension_numbers = #tpu.dot_dimension_numbers<[1], [0], [0], [1], [0, 0, 1, 1], [], []>} : vector<8x16xf32>, vector<16x32xf32>, vector<8x32xf32> -> vector<8x32xf32>
    %c0_333 = arith.constant 0 : index
    %c0_334 = arith.constant 0 : index
    %c0_335 = arith.constant 0 : index
    %487 = vector.load %arg11[%c0_333, %c0_334, %c0_335] : memref<4x32x32xf32, #tpu.memory_space<vmem>>, vector<1x32x32xf32>
    %488 = vector.shape_cast %487 : vector<1x32x32xf32> to vector<32x32xf32>
    %cst_336 = arith.constant dense<0.000000e+00> : vector<8x32xf32>
    %489 = tpu.matmul %404, %488, %cst_336 {dimension_numbers = #tpu.dot_dimension_numbers<[1], [0], [0], [1], [0, 0, 1, 1], [], []>} : vector<8x32xf32>, vector<32x32xf32>, vector<8x32xf32> -> vector<8x32xf32>
    %490 = arith.addf %486, %489 : vector<8x32xf32>
    %c0_337 = arith.constant 0 : index
    %c0_338 = arith.constant 0 : index
    %c0_339 = arith.constant 0 : index
    %491 = vector.load %arg12[%c0_337, %c0_338, %c0_339] : memref<4x1x32xf32, #tpu.memory_space<vmem>>, vector<1x1x32xf32>
    %492 = vector.shape_cast %491 : vector<1x1x32xf32> to vector<1x32xf32>
    %493 = vector.broadcast %492 : vector<1x32xf32> to vector<8x32xf32>
    %494 = arith.addf %490, %493 : vector<8x32xf32>
    %cst_340 = arith.constant 0.000000e+00 : f32
    %495 = vector.broadcast %cst_340 : f32 to vector<8x32xf32>
    %496 = arith.subf %495, %494 : vector<8x32xf32>
    %497 = math.exp %496 : vector<8x32xf32>
    %cst_341 = arith.constant 1.000000e+00 : f32
    %498 = vector.broadcast %cst_341 : f32 to vector<8x32xf32>
    %499 = arith.addf %498, %497 : vector<8x32xf32>
    %500 = tpu.reciprocal %499 {approx = true} : vector<8x32xf32> -> vector<8x32xf32>
    %c1_342 = arith.constant 1 : index
    %c0_343 = arith.constant 0 : index
    %c0_344 = arith.constant 0 : index
    %501 = vector.load %arg10[%c1_342, %c0_343, %c0_344] : memref<4x16x32xf32, #tpu.memory_space<vmem>>, vector<1x16x32xf32>
    %502 = vector.shape_cast %501 : vector<1x16x32xf32> to vector<16x32xf32>
    %cst_345 = arith.constant dense<0.000000e+00> : vector<8x32xf32>
    %503 = tpu.matmul %483, %502, %cst_345 {dimension_numbers = #tpu.dot_dimension_numbers<[1], [0], [0], [1], [0, 0, 1, 1], [], []>} : vector<8x16xf32>, vector<16x32xf32>, vector<8x32xf32> -> vector<8x32xf32>
    %c1_346 = arith.constant 1 : index
    %c0_347 = arith.constant 0 : index
    %c0_348 = arith.constant 0 : index
    %504 = vector.load %arg11[%c1_346, %c0_347, %c0_348] : memref<4x32x32xf32, #tpu.memory_space<vmem>>, vector<1x32x32xf32>
    %505 = vector.shape_cast %504 : vector<1x32x32xf32> to vector<32x32xf32>
    %cst_349 = arith.constant dense<0.000000e+00> : vector<8x32xf32>
    %506 = tpu.matmul %404, %505, %cst_349 {dimension_numbers = #tpu.dot_dimension_numbers<[1], [0], [0], [1], [0, 0, 1, 1], [], []>} : vector<8x32xf32>, vector<32x32xf32>, vector<8x32xf32> -> vector<8x32xf32>
    %507 = arith.addf %503, %506 : vector<8x32xf32>
    %c1_350 = arith.constant 1 : index
    %c0_351 = arith.constant 0 : index
    %c0_352 = arith.constant 0 : index
    %508 = vector.load %arg12[%c1_350, %c0_351, %c0_352] : memref<4x1x32xf32, #tpu.memory_space<vmem>>, vector<1x1x32xf32>
    %509 = vector.shape_cast %508 : vector<1x1x32xf32> to vector<1x32xf32>
    %510 = vector.broadcast %509 : vector<1x32xf32> to vector<8x32xf32>
    %511 = arith.addf %507, %510 : vector<8x32xf32>
    %cst_353 = arith.constant 0.000000e+00 : f32
    %512 = vector.broadcast %cst_353 : f32 to vector<8x32xf32>
    %513 = arith.subf %512, %511 : vector<8x32xf32>
    %514 = math.exp %513 : vector<8x32xf32>
    %cst_354 = arith.constant 1.000000e+00 : f32
    %515 = vector.broadcast %cst_354 : f32 to vector<8x32xf32>
    %516 = arith.addf %515, %514 : vector<8x32xf32>
    %517 = tpu.reciprocal %516 {approx = true} : vector<8x32xf32> -> vector<8x32xf32>
    %c2_355 = arith.constant 2 : index
    %c0_356 = arith.constant 0 : index
    %c0_357 = arith.constant 0 : index
    %518 = vector.load %arg10[%c2_355, %c0_356, %c0_357] : memref<4x16x32xf32, #tpu.memory_space<vmem>>, vector<1x16x32xf32>
    %519 = vector.shape_cast %518 : vector<1x16x32xf32> to vector<16x32xf32>
    %cst_358 = arith.constant dense<0.000000e+00> : vector<8x32xf32>
    %520 = tpu.matmul %483, %519, %cst_358 {dimension_numbers = #tpu.dot_dimension_numbers<[1], [0], [0], [1], [0, 0, 1, 1], [], []>} : vector<8x16xf32>, vector<16x32xf32>, vector<8x32xf32> -> vector<8x32xf32>
    %c2_359 = arith.constant 2 : index
    %c0_360 = arith.constant 0 : index
    %c0_361 = arith.constant 0 : index
    %521 = vector.load %arg11[%c2_359, %c0_360, %c0_361] : memref<4x32x32xf32, #tpu.memory_space<vmem>>, vector<1x32x32xf32>
    %522 = vector.shape_cast %521 : vector<1x32x32xf32> to vector<32x32xf32>
    %cst_362 = arith.constant dense<0.000000e+00> : vector<8x32xf32>
    %523 = tpu.matmul %404, %522, %cst_362 {dimension_numbers = #tpu.dot_dimension_numbers<[1], [0], [0], [1], [0, 0, 1, 1], [], []>} : vector<8x32xf32>, vector<32x32xf32>, vector<8x32xf32> -> vector<8x32xf32>
    %524 = arith.addf %520, %523 : vector<8x32xf32>
    %c2_363 = arith.constant 2 : index
    %c0_364 = arith.constant 0 : index
    %c0_365 = arith.constant 0 : index
    %525 = vector.load %arg12[%c2_363, %c0_364, %c0_365] : memref<4x1x32xf32, #tpu.memory_space<vmem>>, vector<1x1x32xf32>
    %526 = vector.shape_cast %525 : vector<1x1x32xf32> to vector<1x32xf32>
    %527 = vector.broadcast %526 : vector<1x32xf32> to vector<8x32xf32>
    %528 = arith.addf %524, %527 : vector<8x32xf32>
    %529 = math.tanh %528 : vector<8x32xf32>
    %c3_366 = arith.constant 3 : index
    %c0_367 = arith.constant 0 : index
    %c0_368 = arith.constant 0 : index
    %530 = vector.load %arg10[%c3_366, %c0_367, %c0_368] : memref<4x16x32xf32, #tpu.memory_space<vmem>>, vector<1x16x32xf32>
    %531 = vector.shape_cast %530 : vector<1x16x32xf32> to vector<16x32xf32>
    %cst_369 = arith.constant dense<0.000000e+00> : vector<8x32xf32>
    %532 = tpu.matmul %483, %531, %cst_369 {dimension_numbers = #tpu.dot_dimension_numbers<[1], [0], [0], [1], [0, 0, 1, 1], [], []>} : vector<8x16xf32>, vector<16x32xf32>, vector<8x32xf32> -> vector<8x32xf32>
    %c3_370 = arith.constant 3 : index
    %c0_371 = arith.constant 0 : index
    %c0_372 = arith.constant 0 : index
    %533 = vector.load %arg11[%c3_370, %c0_371, %c0_372] : memref<4x32x32xf32, #tpu.memory_space<vmem>>, vector<1x32x32xf32>
    %534 = vector.shape_cast %533 : vector<1x32x32xf32> to vector<32x32xf32>
    %cst_373 = arith.constant dense<0.000000e+00> : vector<8x32xf32>
    %535 = tpu.matmul %404, %534, %cst_373 {dimension_numbers = #tpu.dot_dimension_numbers<[1], [0], [0], [1], [0, 0, 1, 1], [], []>} : vector<8x32xf32>, vector<32x32xf32>, vector<8x32xf32> -> vector<8x32xf32>
    %536 = arith.addf %532, %535 : vector<8x32xf32>
    %c3_374 = arith.constant 3 : index
    %c0_375 = arith.constant 0 : index
    %c0_376 = arith.constant 0 : index
    %537 = vector.load %arg12[%c3_374, %c0_375, %c0_376] : memref<4x1x32xf32, #tpu.memory_space<vmem>>, vector<1x1x32xf32>
    %538 = vector.shape_cast %537 : vector<1x1x32xf32> to vector<1x32xf32>
    %539 = vector.broadcast %538 : vector<1x32xf32> to vector<8x32xf32>
    %540 = arith.addf %536, %539 : vector<8x32xf32>
    %cst_377 = arith.constant 0.000000e+00 : f32
    %541 = vector.broadcast %cst_377 : f32 to vector<8x32xf32>
    %542 = arith.subf %541, %540 : vector<8x32xf32>
    %543 = math.exp %542 : vector<8x32xf32>
    %cst_378 = arith.constant 1.000000e+00 : f32
    %544 = vector.broadcast %cst_378 : f32 to vector<8x32xf32>
    %545 = arith.addf %544, %543 : vector<8x32xf32>
    %546 = tpu.reciprocal %545 {approx = true} : vector<8x32xf32> -> vector<8x32xf32>
    %547 = arith.mulf %517, %402 : vector<8x32xf32>
    %548 = arith.mulf %500, %529 : vector<8x32xf32>
    %549 = arith.addf %547, %548 : vector<8x32xf32>
    %550 = math.tanh %549 : vector<8x32xf32>
    %551 = arith.mulf %546, %550 : vector<8x32xf32>
    %c0_379 = arith.constant 0 : index
    %c0_380 = arith.constant 0 : index
    %c0_381 = arith.constant 0 : index
    %552 = vector.load %arg13[%c0_379, %c0_380, %c0_381] : memref<4x32x32xf32, #tpu.memory_space<vmem>>, vector<1x32x32xf32>
    %553 = vector.shape_cast %552 : vector<1x32x32xf32> to vector<32x32xf32>
    %cst_382 = arith.constant dense<0.000000e+00> : vector<8x32xf32>
    %554 = tpu.matmul %551, %553, %cst_382 {dimension_numbers = #tpu.dot_dimension_numbers<[1], [0], [0], [1], [0, 0, 1, 1], [], []>} : vector<8x32xf32>, vector<32x32xf32>, vector<8x32xf32> -> vector<8x32xf32>
    %c0_383 = arith.constant 0 : index
    %c0_384 = arith.constant 0 : index
    %c0_385 = arith.constant 0 : index
    %555 = vector.load %arg14[%c0_383, %c0_384, %c0_385] : memref<4x32x32xf32, #tpu.memory_space<vmem>>, vector<1x32x32xf32>
    %556 = vector.shape_cast %555 : vector<1x32x32xf32> to vector<32x32xf32>
    %cst_386 = arith.constant dense<0.000000e+00> : vector<8x32xf32>
    %557 = tpu.matmul %472, %556, %cst_386 {dimension_numbers = #tpu.dot_dimension_numbers<[1], [0], [0], [1], [0, 0, 1, 1], [], []>} : vector<8x32xf32>, vector<32x32xf32>, vector<8x32xf32> -> vector<8x32xf32>
    %558 = arith.addf %554, %557 : vector<8x32xf32>
    %c0_387 = arith.constant 0 : index
    %c0_388 = arith.constant 0 : index
    %c0_389 = arith.constant 0 : index
    %559 = vector.load %arg15[%c0_387, %c0_388, %c0_389] : memref<4x1x32xf32, #tpu.memory_space<vmem>>, vector<1x1x32xf32>
    %560 = vector.shape_cast %559 : vector<1x1x32xf32> to vector<1x32xf32>
    %561 = vector.broadcast %560 : vector<1x32xf32> to vector<8x32xf32>
    %562 = arith.addf %558, %561 : vector<8x32xf32>
    %cst_390 = arith.constant 0.000000e+00 : f32
    %563 = vector.broadcast %cst_390 : f32 to vector<8x32xf32>
    %564 = arith.subf %563, %562 : vector<8x32xf32>
    %565 = math.exp %564 : vector<8x32xf32>
    %cst_391 = arith.constant 1.000000e+00 : f32
    %566 = vector.broadcast %cst_391 : f32 to vector<8x32xf32>
    %567 = arith.addf %566, %565 : vector<8x32xf32>
    %568 = tpu.reciprocal %567 {approx = true} : vector<8x32xf32> -> vector<8x32xf32>
    %c1_392 = arith.constant 1 : index
    %c0_393 = arith.constant 0 : index
    %c0_394 = arith.constant 0 : index
    %569 = vector.load %arg13[%c1_392, %c0_393, %c0_394] : memref<4x32x32xf32, #tpu.memory_space<vmem>>, vector<1x32x32xf32>
    %570 = vector.shape_cast %569 : vector<1x32x32xf32> to vector<32x32xf32>
    %cst_395 = arith.constant dense<0.000000e+00> : vector<8x32xf32>
    %571 = tpu.matmul %551, %570, %cst_395 {dimension_numbers = #tpu.dot_dimension_numbers<[1], [0], [0], [1], [0, 0, 1, 1], [], []>} : vector<8x32xf32>, vector<32x32xf32>, vector<8x32xf32> -> vector<8x32xf32>
    %c1_396 = arith.constant 1 : index
    %c0_397 = arith.constant 0 : index
    %c0_398 = arith.constant 0 : index
    %572 = vector.load %arg14[%c1_396, %c0_397, %c0_398] : memref<4x32x32xf32, #tpu.memory_space<vmem>>, vector<1x32x32xf32>
    %573 = vector.shape_cast %572 : vector<1x32x32xf32> to vector<32x32xf32>
    %cst_399 = arith.constant dense<0.000000e+00> : vector<8x32xf32>
    %574 = tpu.matmul %472, %573, %cst_399 {dimension_numbers = #tpu.dot_dimension_numbers<[1], [0], [0], [1], [0, 0, 1, 1], [], []>} : vector<8x32xf32>, vector<32x32xf32>, vector<8x32xf32> -> vector<8x32xf32>
    %575 = arith.addf %571, %574 : vector<8x32xf32>
    %c1_400 = arith.constant 1 : index
    %c0_401 = arith.constant 0 : index
    %c0_402 = arith.constant 0 : index
    %576 = vector.load %arg15[%c1_400, %c0_401, %c0_402] : memref<4x1x32xf32, #tpu.memory_space<vmem>>, vector<1x1x32xf32>
    %577 = vector.shape_cast %576 : vector<1x1x32xf32> to vector<1x32xf32>
    %578 = vector.broadcast %577 : vector<1x32xf32> to vector<8x32xf32>
    %579 = arith.addf %575, %578 : vector<8x32xf32>
    %cst_403 = arith.constant 0.000000e+00 : f32
    %580 = vector.broadcast %cst_403 : f32 to vector<8x32xf32>
    %581 = arith.subf %580, %579 : vector<8x32xf32>
    %582 = math.exp %581 : vector<8x32xf32>
    %cst_404 = arith.constant 1.000000e+00 : f32
    %583 = vector.broadcast %cst_404 : f32 to vector<8x32xf32>
    %584 = arith.addf %583, %582 : vector<8x32xf32>
    %585 = tpu.reciprocal %584 {approx = true} : vector<8x32xf32> -> vector<8x32xf32>
    %c2_405 = arith.constant 2 : index
    %c0_406 = arith.constant 0 : index
    %c0_407 = arith.constant 0 : index
    %586 = vector.load %arg13[%c2_405, %c0_406, %c0_407] : memref<4x32x32xf32, #tpu.memory_space<vmem>>, vector<1x32x32xf32>
    %587 = vector.shape_cast %586 : vector<1x32x32xf32> to vector<32x32xf32>
    %cst_408 = arith.constant dense<0.000000e+00> : vector<8x32xf32>
    %588 = tpu.matmul %551, %587, %cst_408 {dimension_numbers = #tpu.dot_dimension_numbers<[1], [0], [0], [1], [0, 0, 1, 1], [], []>} : vector<8x32xf32>, vector<32x32xf32>, vector<8x32xf32> -> vector<8x32xf32>
    %c2_409 = arith.constant 2 : index
    %c0_410 = arith.constant 0 : index
    %c0_411 = arith.constant 0 : index
    %589 = vector.load %arg14[%c2_409, %c0_410, %c0_411] : memref<4x32x32xf32, #tpu.memory_space<vmem>>, vector<1x32x32xf32>
    %590 = vector.shape_cast %589 : vector<1x32x32xf32> to vector<32x32xf32>
    %cst_412 = arith.constant dense<0.000000e+00> : vector<8x32xf32>
    %591 = tpu.matmul %472, %590, %cst_412 {dimension_numbers = #tpu.dot_dimension_numbers<[1], [0], [0], [1], [0, 0, 1, 1], [], []>} : vector<8x32xf32>, vector<32x32xf32>, vector<8x32xf32> -> vector<8x32xf32>
    %592 = arith.addf %588, %591 : vector<8x32xf32>
    %c2_413 = arith.constant 2 : index
    %c0_414 = arith.constant 0 : index
    %c0_415 = arith.constant 0 : index
    %593 = vector.load %arg15[%c2_413, %c0_414, %c0_415] : memref<4x1x32xf32, #tpu.memory_space<vmem>>, vector<1x1x32xf32>
    %594 = vector.shape_cast %593 : vector<1x1x32xf32> to vector<1x32xf32>
    %595 = vector.broadcast %594 : vector<1x32xf32> to vector<8x32xf32>
    %596 = arith.addf %592, %595 : vector<8x32xf32>
    %597 = math.tanh %596 : vector<8x32xf32>
    %c3_416 = arith.constant 3 : index
    %c0_417 = arith.constant 0 : index
    %c0_418 = arith.constant 0 : index
    %598 = vector.load %arg13[%c3_416, %c0_417, %c0_418] : memref<4x32x32xf32, #tpu.memory_space<vmem>>, vector<1x32x32xf32>
    %599 = vector.shape_cast %598 : vector<1x32x32xf32> to vector<32x32xf32>
    %cst_419 = arith.constant dense<0.000000e+00> : vector<8x32xf32>
    %600 = tpu.matmul %551, %599, %cst_419 {dimension_numbers = #tpu.dot_dimension_numbers<[1], [0], [0], [1], [0, 0, 1, 1], [], []>} : vector<8x32xf32>, vector<32x32xf32>, vector<8x32xf32> -> vector<8x32xf32>
    %c3_420 = arith.constant 3 : index
    %c0_421 = arith.constant 0 : index
    %c0_422 = arith.constant 0 : index
    %601 = vector.load %arg14[%c3_420, %c0_421, %c0_422] : memref<4x32x32xf32, #tpu.memory_space<vmem>>, vector<1x32x32xf32>
    %602 = vector.shape_cast %601 : vector<1x32x32xf32> to vector<32x32xf32>
    %cst_423 = arith.constant dense<0.000000e+00> : vector<8x32xf32>
    %603 = tpu.matmul %472, %602, %cst_423 {dimension_numbers = #tpu.dot_dimension_numbers<[1], [0], [0], [1], [0, 0, 1, 1], [], []>} : vector<8x32xf32>, vector<32x32xf32>, vector<8x32xf32> -> vector<8x32xf32>
    %604 = arith.addf %600, %603 : vector<8x32xf32>
    %c3_424 = arith.constant 3 : index
    %c0_425 = arith.constant 0 : index
    %c0_426 = arith.constant 0 : index
    %605 = vector.load %arg15[%c3_424, %c0_425, %c0_426] : memref<4x1x32xf32, #tpu.memory_space<vmem>>, vector<1x1x32xf32>
    %606 = vector.shape_cast %605 : vector<1x1x32xf32> to vector<1x32xf32>
    %607 = vector.broadcast %606 : vector<1x32xf32> to vector<8x32xf32>
    %608 = arith.addf %604, %607 : vector<8x32xf32>
    %cst_427 = arith.constant 0.000000e+00 : f32
    %609 = vector.broadcast %cst_427 : f32 to vector<8x32xf32>
    %610 = arith.subf %609, %608 : vector<8x32xf32>
    %611 = math.exp %610 : vector<8x32xf32>
    %cst_428 = arith.constant 1.000000e+00 : f32
    %612 = vector.broadcast %cst_428 : f32 to vector<8x32xf32>
    %613 = arith.addf %612, %611 : vector<8x32xf32>
    %614 = tpu.reciprocal %613 {approx = true} : vector<8x32xf32> -> vector<8x32xf32>
    %615 = arith.mulf %585, %470 : vector<8x32xf32>
    %616 = arith.mulf %568, %597 : vector<8x32xf32>
    %617 = arith.addf %615, %616 : vector<8x32xf32>
    %618 = math.tanh %617 : vector<8x32xf32>
    %619 = arith.mulf %614, %618 : vector<8x32xf32>
    %c4_i32 = arith.constant 4 : i32
    %620 = vector.broadcast %c4_i32 : i32 to vector<8x1xi32>
    %621 = arith.cmpi eq, %33, %620 : vector<8x1xi32>
    %622 = vector.shape_cast %621 : vector<8x1xi1> to vector<8x1xi1>
    %623 = vector.broadcast %622 : vector<8x1xi1> to vector<8x32xi1>
    %624 = arith.select %623, %619, %477 : vector<8x32xi1>, vector<8x32xf32>
    %625 = vector.extract_strided_slice %32 {offsets = [0, 4], sizes = [8, 1], strides = [1, 1]} : vector<8x8xi32> to vector<8x1xi32>
    %626 = vector.broadcast %625 : vector<8x1xi32> to vector<8x21xi32>
    %627 = arith.cmpi eq, %35, %626 : vector<8x21xi32>
    %628 = arith.extui %627 : vector<8x21xi1> to vector<8x21xi32>
    %629 = arith.sitofp %628 : vector<8x21xi32> to vector<8x21xf32>
    %cst_429 = arith.constant dense<0.000000e+00> : vector<8x16xf32>
    %630 = tpu.matmul %629, %34, %cst_429 {dimension_numbers = #tpu.dot_dimension_numbers<[1], [0], [0], [1], [0, 0, 1, 1], [], []>} : vector<8x21xf32>, vector<21x16xf32>, vector<8x16xf32> -> vector<8x16xf32>
    %c0_430 = arith.constant 0 : index
    %c0_431 = arith.constant 0 : index
    %c0_432 = arith.constant 0 : index
    %631 = vector.load %arg10[%c0_430, %c0_431, %c0_432] : memref<4x16x32xf32, #tpu.memory_space<vmem>>, vector<1x16x32xf32>
    %632 = vector.shape_cast %631 : vector<1x16x32xf32> to vector<16x32xf32>
    %cst_433 = arith.constant dense<0.000000e+00> : vector<8x32xf32>
    %633 = tpu.matmul %630, %632, %cst_433 {dimension_numbers = #tpu.dot_dimension_numbers<[1], [0], [0], [1], [0, 0, 1, 1], [], []>} : vector<8x16xf32>, vector<16x32xf32>, vector<8x32xf32> -> vector<8x32xf32>
    %c0_434 = arith.constant 0 : index
    %c0_435 = arith.constant 0 : index
    %c0_436 = arith.constant 0 : index
    %634 = vector.load %arg11[%c0_434, %c0_435, %c0_436] : memref<4x32x32xf32, #tpu.memory_space<vmem>>, vector<1x32x32xf32>
    %635 = vector.shape_cast %634 : vector<1x32x32xf32> to vector<32x32xf32>
    %cst_437 = arith.constant dense<0.000000e+00> : vector<8x32xf32>
    %636 = tpu.matmul %551, %635, %cst_437 {dimension_numbers = #tpu.dot_dimension_numbers<[1], [0], [0], [1], [0, 0, 1, 1], [], []>} : vector<8x32xf32>, vector<32x32xf32>, vector<8x32xf32> -> vector<8x32xf32>
    %637 = arith.addf %633, %636 : vector<8x32xf32>
    %c0_438 = arith.constant 0 : index
    %c0_439 = arith.constant 0 : index
    %c0_440 = arith.constant 0 : index
    %638 = vector.load %arg12[%c0_438, %c0_439, %c0_440] : memref<4x1x32xf32, #tpu.memory_space<vmem>>, vector<1x1x32xf32>
    %639 = vector.shape_cast %638 : vector<1x1x32xf32> to vector<1x32xf32>
    %640 = vector.broadcast %639 : vector<1x32xf32> to vector<8x32xf32>
    %641 = arith.addf %637, %640 : vector<8x32xf32>
    %cst_441 = arith.constant 0.000000e+00 : f32
    %642 = vector.broadcast %cst_441 : f32 to vector<8x32xf32>
    %643 = arith.subf %642, %641 : vector<8x32xf32>
    %644 = math.exp %643 : vector<8x32xf32>
    %cst_442 = arith.constant 1.000000e+00 : f32
    %645 = vector.broadcast %cst_442 : f32 to vector<8x32xf32>
    %646 = arith.addf %645, %644 : vector<8x32xf32>
    %647 = tpu.reciprocal %646 {approx = true} : vector<8x32xf32> -> vector<8x32xf32>
    %c1_443 = arith.constant 1 : index
    %c0_444 = arith.constant 0 : index
    %c0_445 = arith.constant 0 : index
    %648 = vector.load %arg10[%c1_443, %c0_444, %c0_445] : memref<4x16x32xf32, #tpu.memory_space<vmem>>, vector<1x16x32xf32>
    %649 = vector.shape_cast %648 : vector<1x16x32xf32> to vector<16x32xf32>
    %cst_446 = arith.constant dense<0.000000e+00> : vector<8x32xf32>
    %650 = tpu.matmul %630, %649, %cst_446 {dimension_numbers = #tpu.dot_dimension_numbers<[1], [0], [0], [1], [0, 0, 1, 1], [], []>} : vector<8x16xf32>, vector<16x32xf32>, vector<8x32xf32> -> vector<8x32xf32>
    %c1_447 = arith.constant 1 : index
    %c0_448 = arith.constant 0 : index
    %c0_449 = arith.constant 0 : index
    %651 = vector.load %arg11[%c1_447, %c0_448, %c0_449] : memref<4x32x32xf32, #tpu.memory_space<vmem>>, vector<1x32x32xf32>
    %652 = vector.shape_cast %651 : vector<1x32x32xf32> to vector<32x32xf32>
    %cst_450 = arith.constant dense<0.000000e+00> : vector<8x32xf32>
    %653 = tpu.matmul %551, %652, %cst_450 {dimension_numbers = #tpu.dot_dimension_numbers<[1], [0], [0], [1], [0, 0, 1, 1], [], []>} : vector<8x32xf32>, vector<32x32xf32>, vector<8x32xf32> -> vector<8x32xf32>
    %654 = arith.addf %650, %653 : vector<8x32xf32>
    %c1_451 = arith.constant 1 : index
    %c0_452 = arith.constant 0 : index
    %c0_453 = arith.constant 0 : index
    %655 = vector.load %arg12[%c1_451, %c0_452, %c0_453] : memref<4x1x32xf32, #tpu.memory_space<vmem>>, vector<1x1x32xf32>
    %656 = vector.shape_cast %655 : vector<1x1x32xf32> to vector<1x32xf32>
    %657 = vector.broadcast %656 : vector<1x32xf32> to vector<8x32xf32>
    %658 = arith.addf %654, %657 : vector<8x32xf32>
    %cst_454 = arith.constant 0.000000e+00 : f32
    %659 = vector.broadcast %cst_454 : f32 to vector<8x32xf32>
    %660 = arith.subf %659, %658 : vector<8x32xf32>
    %661 = math.exp %660 : vector<8x32xf32>
    %cst_455 = arith.constant 1.000000e+00 : f32
    %662 = vector.broadcast %cst_455 : f32 to vector<8x32xf32>
    %663 = arith.addf %662, %661 : vector<8x32xf32>
    %664 = tpu.reciprocal %663 {approx = true} : vector<8x32xf32> -> vector<8x32xf32>
    %c2_456 = arith.constant 2 : index
    %c0_457 = arith.constant 0 : index
    %c0_458 = arith.constant 0 : index
    %665 = vector.load %arg10[%c2_456, %c0_457, %c0_458] : memref<4x16x32xf32, #tpu.memory_space<vmem>>, vector<1x16x32xf32>
    %666 = vector.shape_cast %665 : vector<1x16x32xf32> to vector<16x32xf32>
    %cst_459 = arith.constant dense<0.000000e+00> : vector<8x32xf32>
    %667 = tpu.matmul %630, %666, %cst_459 {dimension_numbers = #tpu.dot_dimension_numbers<[1], [0], [0], [1], [0, 0, 1, 1], [], []>} : vector<8x16xf32>, vector<16x32xf32>, vector<8x32xf32> -> vector<8x32xf32>
    %c2_460 = arith.constant 2 : index
    %c0_461 = arith.constant 0 : index
    %c0_462 = arith.constant 0 : index
    %668 = vector.load %arg11[%c2_460, %c0_461, %c0_462] : memref<4x32x32xf32, #tpu.memory_space<vmem>>, vector<1x32x32xf32>
    %669 = vector.shape_cast %668 : vector<1x32x32xf32> to vector<32x32xf32>
    %cst_463 = arith.constant dense<0.000000e+00> : vector<8x32xf32>
    %670 = tpu.matmul %551, %669, %cst_463 {dimension_numbers = #tpu.dot_dimension_numbers<[1], [0], [0], [1], [0, 0, 1, 1], [], []>} : vector<8x32xf32>, vector<32x32xf32>, vector<8x32xf32> -> vector<8x32xf32>
    %671 = arith.addf %667, %670 : vector<8x32xf32>
    %c2_464 = arith.constant 2 : index
    %c0_465 = arith.constant 0 : index
    %c0_466 = arith.constant 0 : index
    %672 = vector.load %arg12[%c2_464, %c0_465, %c0_466] : memref<4x1x32xf32, #tpu.memory_space<vmem>>, vector<1x1x32xf32>
    %673 = vector.shape_cast %672 : vector<1x1x32xf32> to vector<1x32xf32>
    %674 = vector.broadcast %673 : vector<1x32xf32> to vector<8x32xf32>
    %675 = arith.addf %671, %674 : vector<8x32xf32>
    %676 = math.tanh %675 : vector<8x32xf32>
    %c3_467 = arith.constant 3 : index
    %c0_468 = arith.constant 0 : index
    %c0_469 = arith.constant 0 : index
    %677 = vector.load %arg10[%c3_467, %c0_468, %c0_469] : memref<4x16x32xf32, #tpu.memory_space<vmem>>, vector<1x16x32xf32>
    %678 = vector.shape_cast %677 : vector<1x16x32xf32> to vector<16x32xf32>
    %cst_470 = arith.constant dense<0.000000e+00> : vector<8x32xf32>
    %679 = tpu.matmul %630, %678, %cst_470 {dimension_numbers = #tpu.dot_dimension_numbers<[1], [0], [0], [1], [0, 0, 1, 1], [], []>} : vector<8x16xf32>, vector<16x32xf32>, vector<8x32xf32> -> vector<8x32xf32>
    %c3_471 = arith.constant 3 : index
    %c0_472 = arith.constant 0 : index
    %c0_473 = arith.constant 0 : index
    %680 = vector.load %arg11[%c3_471, %c0_472, %c0_473] : memref<4x32x32xf32, #tpu.memory_space<vmem>>, vector<1x32x32xf32>
    %681 = vector.shape_cast %680 : vector<1x32x32xf32> to vector<32x32xf32>
    %cst_474 = arith.constant dense<0.000000e+00> : vector<8x32xf32>
    %682 = tpu.matmul %551, %681, %cst_474 {dimension_numbers = #tpu.dot_dimension_numbers<[1], [0], [0], [1], [0, 0, 1, 1], [], []>} : vector<8x32xf32>, vector<32x32xf32>, vector<8x32xf32> -> vector<8x32xf32>
    %683 = arith.addf %679, %682 : vector<8x32xf32>
    %c3_475 = arith.constant 3 : index
    %c0_476 = arith.constant 0 : index
    %c0_477 = arith.constant 0 : index
    %684 = vector.load %arg12[%c3_475, %c0_476, %c0_477] : memref<4x1x32xf32, #tpu.memory_space<vmem>>, vector<1x1x32xf32>
    %685 = vector.shape_cast %684 : vector<1x1x32xf32> to vector<1x32xf32>
    %686 = vector.broadcast %685 : vector<1x32xf32> to vector<8x32xf32>
    %687 = arith.addf %683, %686 : vector<8x32xf32>
    %cst_478 = arith.constant 0.000000e+00 : f32
    %688 = vector.broadcast %cst_478 : f32 to vector<8x32xf32>
    %689 = arith.subf %688, %687 : vector<8x32xf32>
    %690 = math.exp %689 : vector<8x32xf32>
    %cst_479 = arith.constant 1.000000e+00 : f32
    %691 = vector.broadcast %cst_479 : f32 to vector<8x32xf32>
    %692 = arith.addf %691, %690 : vector<8x32xf32>
    %693 = tpu.reciprocal %692 {approx = true} : vector<8x32xf32> -> vector<8x32xf32>
    %694 = arith.mulf %664, %549 : vector<8x32xf32>
    %695 = arith.mulf %647, %676 : vector<8x32xf32>
    %696 = arith.addf %694, %695 : vector<8x32xf32>
    %697 = math.tanh %696 : vector<8x32xf32>
    %698 = arith.mulf %693, %697 : vector<8x32xf32>
    %c0_480 = arith.constant 0 : index
    %c0_481 = arith.constant 0 : index
    %c0_482 = arith.constant 0 : index
    %699 = vector.load %arg13[%c0_480, %c0_481, %c0_482] : memref<4x32x32xf32, #tpu.memory_space<vmem>>, vector<1x32x32xf32>
    %700 = vector.shape_cast %699 : vector<1x32x32xf32> to vector<32x32xf32>
    %cst_483 = arith.constant dense<0.000000e+00> : vector<8x32xf32>
    %701 = tpu.matmul %698, %700, %cst_483 {dimension_numbers = #tpu.dot_dimension_numbers<[1], [0], [0], [1], [0, 0, 1, 1], [], []>} : vector<8x32xf32>, vector<32x32xf32>, vector<8x32xf32> -> vector<8x32xf32>
    %c0_484 = arith.constant 0 : index
    %c0_485 = arith.constant 0 : index
    %c0_486 = arith.constant 0 : index
    %702 = vector.load %arg14[%c0_484, %c0_485, %c0_486] : memref<4x32x32xf32, #tpu.memory_space<vmem>>, vector<1x32x32xf32>
    %703 = vector.shape_cast %702 : vector<1x32x32xf32> to vector<32x32xf32>
    %cst_487 = arith.constant dense<0.000000e+00> : vector<8x32xf32>
    %704 = tpu.matmul %619, %703, %cst_487 {dimension_numbers = #tpu.dot_dimension_numbers<[1], [0], [0], [1], [0, 0, 1, 1], [], []>} : vector<8x32xf32>, vector<32x32xf32>, vector<8x32xf32> -> vector<8x32xf32>
    %705 = arith.addf %701, %704 : vector<8x32xf32>
    %c0_488 = arith.constant 0 : index
    %c0_489 = arith.constant 0 : index
    %c0_490 = arith.constant 0 : index
    %706 = vector.load %arg15[%c0_488, %c0_489, %c0_490] : memref<4x1x32xf32, #tpu.memory_space<vmem>>, vector<1x1x32xf32>
    %707 = vector.shape_cast %706 : vector<1x1x32xf32> to vector<1x32xf32>
    %708 = vector.broadcast %707 : vector<1x32xf32> to vector<8x32xf32>
    %709 = arith.addf %705, %708 : vector<8x32xf32>
    %cst_491 = arith.constant 0.000000e+00 : f32
    %710 = vector.broadcast %cst_491 : f32 to vector<8x32xf32>
    %711 = arith.subf %710, %709 : vector<8x32xf32>
    %712 = math.exp %711 : vector<8x32xf32>
    %cst_492 = arith.constant 1.000000e+00 : f32
    %713 = vector.broadcast %cst_492 : f32 to vector<8x32xf32>
    %714 = arith.addf %713, %712 : vector<8x32xf32>
    %715 = tpu.reciprocal %714 {approx = true} : vector<8x32xf32> -> vector<8x32xf32>
    %c1_493 = arith.constant 1 : index
    %c0_494 = arith.constant 0 : index
    %c0_495 = arith.constant 0 : index
    %716 = vector.load %arg13[%c1_493, %c0_494, %c0_495] : memref<4x32x32xf32, #tpu.memory_space<vmem>>, vector<1x32x32xf32>
    %717 = vector.shape_cast %716 : vector<1x32x32xf32> to vector<32x32xf32>
    %cst_496 = arith.constant dense<0.000000e+00> : vector<8x32xf32>
    %718 = tpu.matmul %698, %717, %cst_496 {dimension_numbers = #tpu.dot_dimension_numbers<[1], [0], [0], [1], [0, 0, 1, 1], [], []>} : vector<8x32xf32>, vector<32x32xf32>, vector<8x32xf32> -> vector<8x32xf32>
    %c1_497 = arith.constant 1 : index
    %c0_498 = arith.constant 0 : index
    %c0_499 = arith.constant 0 : index
    %719 = vector.load %arg14[%c1_497, %c0_498, %c0_499] : memref<4x32x32xf32, #tpu.memory_space<vmem>>, vector<1x32x32xf32>
    %720 = vector.shape_cast %719 : vector<1x32x32xf32> to vector<32x32xf32>
    %cst_500 = arith.constant dense<0.000000e+00> : vector<8x32xf32>
    %721 = tpu.matmul %619, %720, %cst_500 {dimension_numbers = #tpu.dot_dimension_numbers<[1], [0], [0], [1], [0, 0, 1, 1], [], []>} : vector<8x32xf32>, vector<32x32xf32>, vector<8x32xf32> -> vector<8x32xf32>
    %722 = arith.addf %718, %721 : vector<8x32xf32>
    %c1_501 = arith.constant 1 : index
    %c0_502 = arith.constant 0 : index
    %c0_503 = arith.constant 0 : index
    %723 = vector.load %arg15[%c1_501, %c0_502, %c0_503] : memref<4x1x32xf32, #tpu.memory_space<vmem>>, vector<1x1x32xf32>
    %724 = vector.shape_cast %723 : vector<1x1x32xf32> to vector<1x32xf32>
    %725 = vector.broadcast %724 : vector<1x32xf32> to vector<8x32xf32>
    %726 = arith.addf %722, %725 : vector<8x32xf32>
    %cst_504 = arith.constant 0.000000e+00 : f32
    %727 = vector.broadcast %cst_504 : f32 to vector<8x32xf32>
    %728 = arith.subf %727, %726 : vector<8x32xf32>
    %729 = math.exp %728 : vector<8x32xf32>
    %cst_505 = arith.constant 1.000000e+00 : f32
    %730 = vector.broadcast %cst_505 : f32 to vector<8x32xf32>
    %731 = arith.addf %730, %729 : vector<8x32xf32>
    %732 = tpu.reciprocal %731 {approx = true} : vector<8x32xf32> -> vector<8x32xf32>
    %c2_506 = arith.constant 2 : index
    %c0_507 = arith.constant 0 : index
    %c0_508 = arith.constant 0 : index
    %733 = vector.load %arg13[%c2_506, %c0_507, %c0_508] : memref<4x32x32xf32, #tpu.memory_space<vmem>>, vector<1x32x32xf32>
    %734 = vector.shape_cast %733 : vector<1x32x32xf32> to vector<32x32xf32>
    %cst_509 = arith.constant dense<0.000000e+00> : vector<8x32xf32>
    %735 = tpu.matmul %698, %734, %cst_509 {dimension_numbers = #tpu.dot_dimension_numbers<[1], [0], [0], [1], [0, 0, 1, 1], [], []>} : vector<8x32xf32>, vector<32x32xf32>, vector<8x32xf32> -> vector<8x32xf32>
    %c2_510 = arith.constant 2 : index
    %c0_511 = arith.constant 0 : index
    %c0_512 = arith.constant 0 : index
    %736 = vector.load %arg14[%c2_510, %c0_511, %c0_512] : memref<4x32x32xf32, #tpu.memory_space<vmem>>, vector<1x32x32xf32>
    %737 = vector.shape_cast %736 : vector<1x32x32xf32> to vector<32x32xf32>
    %cst_513 = arith.constant dense<0.000000e+00> : vector<8x32xf32>
    %738 = tpu.matmul %619, %737, %cst_513 {dimension_numbers = #tpu.dot_dimension_numbers<[1], [0], [0], [1], [0, 0, 1, 1], [], []>} : vector<8x32xf32>, vector<32x32xf32>, vector<8x32xf32> -> vector<8x32xf32>
    %739 = arith.addf %735, %738 : vector<8x32xf32>
    %c2_514 = arith.constant 2 : index
    %c0_515 = arith.constant 0 : index
    %c0_516 = arith.constant 0 : index
    %740 = vector.load %arg15[%c2_514, %c0_515, %c0_516] : memref<4x1x32xf32, #tpu.memory_space<vmem>>, vector<1x1x32xf32>
    %741 = vector.shape_cast %740 : vector<1x1x32xf32> to vector<1x32xf32>
    %742 = vector.broadcast %741 : vector<1x32xf32> to vector<8x32xf32>
    %743 = arith.addf %739, %742 : vector<8x32xf32>
    %744 = math.tanh %743 : vector<8x32xf32>
    %c3_517 = arith.constant 3 : index
    %c0_518 = arith.constant 0 : index
    %c0_519 = arith.constant 0 : index
    %745 = vector.load %arg13[%c3_517, %c0_518, %c0_519] : memref<4x32x32xf32, #tpu.memory_space<vmem>>, vector<1x32x32xf32>
    %746 = vector.shape_cast %745 : vector<1x32x32xf32> to vector<32x32xf32>
    %cst_520 = arith.constant dense<0.000000e+00> : vector<8x32xf32>
    %747 = tpu.matmul %698, %746, %cst_520 {dimension_numbers = #tpu.dot_dimension_numbers<[1], [0], [0], [1], [0, 0, 1, 1], [], []>} : vector<8x32xf32>, vector<32x32xf32>, vector<8x32xf32> -> vector<8x32xf32>
    %c3_521 = arith.constant 3 : index
    %c0_522 = arith.constant 0 : index
    %c0_523 = arith.constant 0 : index
    %748 = vector.load %arg14[%c3_521, %c0_522, %c0_523] : memref<4x32x32xf32, #tpu.memory_space<vmem>>, vector<1x32x32xf32>
    %749 = vector.shape_cast %748 : vector<1x32x32xf32> to vector<32x32xf32>
    %cst_524 = arith.constant dense<0.000000e+00> : vector<8x32xf32>
    %750 = tpu.matmul %619, %749, %cst_524 {dimension_numbers = #tpu.dot_dimension_numbers<[1], [0], [0], [1], [0, 0, 1, 1], [], []>} : vector<8x32xf32>, vector<32x32xf32>, vector<8x32xf32> -> vector<8x32xf32>
    %751 = arith.addf %747, %750 : vector<8x32xf32>
    %c3_525 = arith.constant 3 : index
    %c0_526 = arith.constant 0 : index
    %c0_527 = arith.constant 0 : index
    %752 = vector.load %arg15[%c3_525, %c0_526, %c0_527] : memref<4x1x32xf32, #tpu.memory_space<vmem>>, vector<1x1x32xf32>
    %753 = vector.shape_cast %752 : vector<1x1x32xf32> to vector<1x32xf32>
    %754 = vector.broadcast %753 : vector<1x32xf32> to vector<8x32xf32>
    %755 = arith.addf %751, %754 : vector<8x32xf32>
    %cst_528 = arith.constant 0.000000e+00 : f32
    %756 = vector.broadcast %cst_528 : f32 to vector<8x32xf32>
    %757 = arith.subf %756, %755 : vector<8x32xf32>
    %758 = math.exp %757 : vector<8x32xf32>
    %cst_529 = arith.constant 1.000000e+00 : f32
    %759 = vector.broadcast %cst_529 : f32 to vector<8x32xf32>
    %760 = arith.addf %759, %758 : vector<8x32xf32>
    %761 = tpu.reciprocal %760 {approx = true} : vector<8x32xf32> -> vector<8x32xf32>
    %762 = arith.mulf %732, %617 : vector<8x32xf32>
    %763 = arith.mulf %715, %744 : vector<8x32xf32>
    %764 = arith.addf %762, %763 : vector<8x32xf32>
    %765 = math.tanh %764 : vector<8x32xf32>
    %766 = arith.mulf %761, %765 : vector<8x32xf32>
    %c5_i32 = arith.constant 5 : i32
    %767 = vector.broadcast %c5_i32 : i32 to vector<8x1xi32>
    %768 = arith.cmpi eq, %33, %767 : vector<8x1xi32>
    %769 = vector.shape_cast %768 : vector<8x1xi1> to vector<8x1xi1>
    %770 = vector.broadcast %769 : vector<8x1xi1> to vector<8x32xi1>
    %771 = arith.select %770, %766, %624 : vector<8x32xi1>, vector<8x32xf32>
    %772 = vector.extract_strided_slice %32 {offsets = [0, 5], sizes = [8, 1], strides = [1, 1]} : vector<8x8xi32> to vector<8x1xi32>
    %773 = vector.broadcast %772 : vector<8x1xi32> to vector<8x21xi32>
    %774 = arith.cmpi eq, %35, %773 : vector<8x21xi32>
    %775 = arith.extui %774 : vector<8x21xi1> to vector<8x21xi32>
    %776 = arith.sitofp %775 : vector<8x21xi32> to vector<8x21xf32>
    %cst_530 = arith.constant dense<0.000000e+00> : vector<8x16xf32>
    %777 = tpu.matmul %776, %34, %cst_530 {dimension_numbers = #tpu.dot_dimension_numbers<[1], [0], [0], [1], [0, 0, 1, 1], [], []>} : vector<8x21xf32>, vector<21x16xf32>, vector<8x16xf32> -> vector<8x16xf32>
    %c0_531 = arith.constant 0 : index
    %c0_532 = arith.constant 0 : index
    %c0_533 = arith.constant 0 : index
    %778 = vector.load %arg10[%c0_531, %c0_532, %c0_533] : memref<4x16x32xf32, #tpu.memory_space<vmem>>, vector<1x16x32xf32>
    %779 = vector.shape_cast %778 : vector<1x16x32xf32> to vector<16x32xf32>
    %cst_534 = arith.constant dense<0.000000e+00> : vector<8x32xf32>
    %780 = tpu.matmul %777, %779, %cst_534 {dimension_numbers = #tpu.dot_dimension_numbers<[1], [0], [0], [1], [0, 0, 1, 1], [], []>} : vector<8x16xf32>, vector<16x32xf32>, vector<8x32xf32> -> vector<8x32xf32>
    %c0_535 = arith.constant 0 : index
    %c0_536 = arith.constant 0 : index
    %c0_537 = arith.constant 0 : index
    %781 = vector.load %arg11[%c0_535, %c0_536, %c0_537] : memref<4x32x32xf32, #tpu.memory_space<vmem>>, vector<1x32x32xf32>
    %782 = vector.shape_cast %781 : vector<1x32x32xf32> to vector<32x32xf32>
    %cst_538 = arith.constant dense<0.000000e+00> : vector<8x32xf32>
    %783 = tpu.matmul %698, %782, %cst_538 {dimension_numbers = #tpu.dot_dimension_numbers<[1], [0], [0], [1], [0, 0, 1, 1], [], []>} : vector<8x32xf32>, vector<32x32xf32>, vector<8x32xf32> -> vector<8x32xf32>
    %784 = arith.addf %780, %783 : vector<8x32xf32>
    %c0_539 = arith.constant 0 : index
    %c0_540 = arith.constant 0 : index
    %c0_541 = arith.constant 0 : index
    %785 = vector.load %arg12[%c0_539, %c0_540, %c0_541] : memref<4x1x32xf32, #tpu.memory_space<vmem>>, vector<1x1x32xf32>
    %786 = vector.shape_cast %785 : vector<1x1x32xf32> to vector<1x32xf32>
    %787 = vector.broadcast %786 : vector<1x32xf32> to vector<8x32xf32>
    %788 = arith.addf %784, %787 : vector<8x32xf32>
    %cst_542 = arith.constant 0.000000e+00 : f32
    %789 = vector.broadcast %cst_542 : f32 to vector<8x32xf32>
    %790 = arith.subf %789, %788 : vector<8x32xf32>
    %791 = math.exp %790 : vector<8x32xf32>
    %cst_543 = arith.constant 1.000000e+00 : f32
    %792 = vector.broadcast %cst_543 : f32 to vector<8x32xf32>
    %793 = arith.addf %792, %791 : vector<8x32xf32>
    %794 = tpu.reciprocal %793 {approx = true} : vector<8x32xf32> -> vector<8x32xf32>
    %c1_544 = arith.constant 1 : index
    %c0_545 = arith.constant 0 : index
    %c0_546 = arith.constant 0 : index
    %795 = vector.load %arg10[%c1_544, %c0_545, %c0_546] : memref<4x16x32xf32, #tpu.memory_space<vmem>>, vector<1x16x32xf32>
    %796 = vector.shape_cast %795 : vector<1x16x32xf32> to vector<16x32xf32>
    %cst_547 = arith.constant dense<0.000000e+00> : vector<8x32xf32>
    %797 = tpu.matmul %777, %796, %cst_547 {dimension_numbers = #tpu.dot_dimension_numbers<[1], [0], [0], [1], [0, 0, 1, 1], [], []>} : vector<8x16xf32>, vector<16x32xf32>, vector<8x32xf32> -> vector<8x32xf32>
    %c1_548 = arith.constant 1 : index
    %c0_549 = arith.constant 0 : index
    %c0_550 = arith.constant 0 : index
    %798 = vector.load %arg11[%c1_548, %c0_549, %c0_550] : memref<4x32x32xf32, #tpu.memory_space<vmem>>, vector<1x32x32xf32>
    %799 = vector.shape_cast %798 : vector<1x32x32xf32> to vector<32x32xf32>
    %cst_551 = arith.constant dense<0.000000e+00> : vector<8x32xf32>
    %800 = tpu.matmul %698, %799, %cst_551 {dimension_numbers = #tpu.dot_dimension_numbers<[1], [0], [0], [1], [0, 0, 1, 1], [], []>} : vector<8x32xf32>, vector<32x32xf32>, vector<8x32xf32> -> vector<8x32xf32>
    %801 = arith.addf %797, %800 : vector<8x32xf32>
    %c1_552 = arith.constant 1 : index
    %c0_553 = arith.constant 0 : index
    %c0_554 = arith.constant 0 : index
    %802 = vector.load %arg12[%c1_552, %c0_553, %c0_554] : memref<4x1x32xf32, #tpu.memory_space<vmem>>, vector<1x1x32xf32>
    %803 = vector.shape_cast %802 : vector<1x1x32xf32> to vector<1x32xf32>
    %804 = vector.broadcast %803 : vector<1x32xf32> to vector<8x32xf32>
    %805 = arith.addf %801, %804 : vector<8x32xf32>
    %cst_555 = arith.constant 0.000000e+00 : f32
    %806 = vector.broadcast %cst_555 : f32 to vector<8x32xf32>
    %807 = arith.subf %806, %805 : vector<8x32xf32>
    %808 = math.exp %807 : vector<8x32xf32>
    %cst_556 = arith.constant 1.000000e+00 : f32
    %809 = vector.broadcast %cst_556 : f32 to vector<8x32xf32>
    %810 = arith.addf %809, %808 : vector<8x32xf32>
    %811 = tpu.reciprocal %810 {approx = true} : vector<8x32xf32> -> vector<8x32xf32>
    %c2_557 = arith.constant 2 : index
    %c0_558 = arith.constant 0 : index
    %c0_559 = arith.constant 0 : index
    %812 = vector.load %arg10[%c2_557, %c0_558, %c0_559] : memref<4x16x32xf32, #tpu.memory_space<vmem>>, vector<1x16x32xf32>
    %813 = vector.shape_cast %812 : vector<1x16x32xf32> to vector<16x32xf32>
    %cst_560 = arith.constant dense<0.000000e+00> : vector<8x32xf32>
    %814 = tpu.matmul %777, %813, %cst_560 {dimension_numbers = #tpu.dot_dimension_numbers<[1], [0], [0], [1], [0, 0, 1, 1], [], []>} : vector<8x16xf32>, vector<16x32xf32>, vector<8x32xf32> -> vector<8x32xf32>
    %c2_561 = arith.constant 2 : index
    %c0_562 = arith.constant 0 : index
    %c0_563 = arith.constant 0 : index
    %815 = vector.load %arg11[%c2_561, %c0_562, %c0_563] : memref<4x32x32xf32, #tpu.memory_space<vmem>>, vector<1x32x32xf32>
    %816 = vector.shape_cast %815 : vector<1x32x32xf32> to vector<32x32xf32>
    %cst_564 = arith.constant dense<0.000000e+00> : vector<8x32xf32>
    %817 = tpu.matmul %698, %816, %cst_564 {dimension_numbers = #tpu.dot_dimension_numbers<[1], [0], [0], [1], [0, 0, 1, 1], [], []>} : vector<8x32xf32>, vector<32x32xf32>, vector<8x32xf32> -> vector<8x32xf32>
    %818 = arith.addf %814, %817 : vector<8x32xf32>
    %c2_565 = arith.constant 2 : index
    %c0_566 = arith.constant 0 : index
    %c0_567 = arith.constant 0 : index
    %819 = vector.load %arg12[%c2_565, %c0_566, %c0_567] : memref<4x1x32xf32, #tpu.memory_space<vmem>>, vector<1x1x32xf32>
    %820 = vector.shape_cast %819 : vector<1x1x32xf32> to vector<1x32xf32>
    %821 = vector.broadcast %820 : vector<1x32xf32> to vector<8x32xf32>
    %822 = arith.addf %818, %821 : vector<8x32xf32>
    %823 = math.tanh %822 : vector<8x32xf32>
    %c3_568 = arith.constant 3 : index
    %c0_569 = arith.constant 0 : index
    %c0_570 = arith.constant 0 : index
    %824 = vector.load %arg10[%c3_568, %c0_569, %c0_570] : memref<4x16x32xf32, #tpu.memory_space<vmem>>, vector<1x16x32xf32>
    %825 = vector.shape_cast %824 : vector<1x16x32xf32> to vector<16x32xf32>
    %cst_571 = arith.constant dense<0.000000e+00> : vector<8x32xf32>
    %826 = tpu.matmul %777, %825, %cst_571 {dimension_numbers = #tpu.dot_dimension_numbers<[1], [0], [0], [1], [0, 0, 1, 1], [], []>} : vector<8x16xf32>, vector<16x32xf32>, vector<8x32xf32> -> vector<8x32xf32>
    %c3_572 = arith.constant 3 : index
    %c0_573 = arith.constant 0 : index
    %c0_574 = arith.constant 0 : index
    %827 = vector.load %arg11[%c3_572, %c0_573, %c0_574] : memref<4x32x32xf32, #tpu.memory_space<vmem>>, vector<1x32x32xf32>
    %828 = vector.shape_cast %827 : vector<1x32x32xf32> to vector<32x32xf32>
    %cst_575 = arith.constant dense<0.000000e+00> : vector<8x32xf32>
    %829 = tpu.matmul %698, %828, %cst_575 {dimension_numbers = #tpu.dot_dimension_numbers<[1], [0], [0], [1], [0, 0, 1, 1], [], []>} : vector<8x32xf32>, vector<32x32xf32>, vector<8x32xf32> -> vector<8x32xf32>
    %830 = arith.addf %826, %829 : vector<8x32xf32>
    %c3_576 = arith.constant 3 : index
    %c0_577 = arith.constant 0 : index
    %c0_578 = arith.constant 0 : index
    %831 = vector.load %arg12[%c3_576, %c0_577, %c0_578] : memref<4x1x32xf32, #tpu.memory_space<vmem>>, vector<1x1x32xf32>
    %832 = vector.shape_cast %831 : vector<1x1x32xf32> to vector<1x32xf32>
    %833 = vector.broadcast %832 : vector<1x32xf32> to vector<8x32xf32>
    %834 = arith.addf %830, %833 : vector<8x32xf32>
    %cst_579 = arith.constant 0.000000e+00 : f32
    %835 = vector.broadcast %cst_579 : f32 to vector<8x32xf32>
    %836 = arith.subf %835, %834 : vector<8x32xf32>
    %837 = math.exp %836 : vector<8x32xf32>
    %cst_580 = arith.constant 1.000000e+00 : f32
    %838 = vector.broadcast %cst_580 : f32 to vector<8x32xf32>
    %839 = arith.addf %838, %837 : vector<8x32xf32>
    %840 = tpu.reciprocal %839 {approx = true} : vector<8x32xf32> -> vector<8x32xf32>
    %841 = arith.mulf %811, %696 : vector<8x32xf32>
    %842 = arith.mulf %794, %823 : vector<8x32xf32>
    %843 = arith.addf %841, %842 : vector<8x32xf32>
    %844 = math.tanh %843 : vector<8x32xf32>
    %845 = arith.mulf %840, %844 : vector<8x32xf32>
    %c0_581 = arith.constant 0 : index
    %c0_582 = arith.constant 0 : index
    %c0_583 = arith.constant 0 : index
    %846 = vector.load %arg13[%c0_581, %c0_582, %c0_583] : memref<4x32x32xf32, #tpu.memory_space<vmem>>, vector<1x32x32xf32>
    %847 = vector.shape_cast %846 : vector<1x32x32xf32> to vector<32x32xf32>
    %cst_584 = arith.constant dense<0.000000e+00> : vector<8x32xf32>
    %848 = tpu.matmul %845, %847, %cst_584 {dimension_numbers = #tpu.dot_dimension_numbers<[1], [0], [0], [1], [0, 0, 1, 1], [], []>} : vector<8x32xf32>, vector<32x32xf32>, vector<8x32xf32> -> vector<8x32xf32>
    %c0_585 = arith.constant 0 : index
    %c0_586 = arith.constant 0 : index
    %c0_587 = arith.constant 0 : index
    %849 = vector.load %arg14[%c0_585, %c0_586, %c0_587] : memref<4x32x32xf32, #tpu.memory_space<vmem>>, vector<1x32x32xf32>
    %850 = vector.shape_cast %849 : vector<1x32x32xf32> to vector<32x32xf32>
    %cst_588 = arith.constant dense<0.000000e+00> : vector<8x32xf32>
    %851 = tpu.matmul %766, %850, %cst_588 {dimension_numbers = #tpu.dot_dimension_numbers<[1], [0], [0], [1], [0, 0, 1, 1], [], []>} : vector<8x32xf32>, vector<32x32xf32>, vector<8x32xf32> -> vector<8x32xf32>
    %852 = arith.addf %848, %851 : vector<8x32xf32>
    %c0_589 = arith.constant 0 : index
    %c0_590 = arith.constant 0 : index
    %c0_591 = arith.constant 0 : index
    %853 = vector.load %arg15[%c0_589, %c0_590, %c0_591] : memref<4x1x32xf32, #tpu.memory_space<vmem>>, vector<1x1x32xf32>
    %854 = vector.shape_cast %853 : vector<1x1x32xf32> to vector<1x32xf32>
    %855 = vector.broadcast %854 : vector<1x32xf32> to vector<8x32xf32>
    %856 = arith.addf %852, %855 : vector<8x32xf32>
    %cst_592 = arith.constant 0.000000e+00 : f32
    %857 = vector.broadcast %cst_592 : f32 to vector<8x32xf32>
    %858 = arith.subf %857, %856 : vector<8x32xf32>
    %859 = math.exp %858 : vector<8x32xf32>
    %cst_593 = arith.constant 1.000000e+00 : f32
    %860 = vector.broadcast %cst_593 : f32 to vector<8x32xf32>
    %861 = arith.addf %860, %859 : vector<8x32xf32>
    %862 = tpu.reciprocal %861 {approx = true} : vector<8x32xf32> -> vector<8x32xf32>
    %c1_594 = arith.constant 1 : index
    %c0_595 = arith.constant 0 : index
    %c0_596 = arith.constant 0 : index
    %863 = vector.load %arg13[%c1_594, %c0_595, %c0_596] : memref<4x32x32xf32, #tpu.memory_space<vmem>>, vector<1x32x32xf32>
    %864 = vector.shape_cast %863 : vector<1x32x32xf32> to vector<32x32xf32>
    %cst_597 = arith.constant dense<0.000000e+00> : vector<8x32xf32>
    %865 = tpu.matmul %845, %864, %cst_597 {dimension_numbers = #tpu.dot_dimension_numbers<[1], [0], [0], [1], [0, 0, 1, 1], [], []>} : vector<8x32xf32>, vector<32x32xf32>, vector<8x32xf32> -> vector<8x32xf32>
    %c1_598 = arith.constant 1 : index
    %c0_599 = arith.constant 0 : index
    %c0_600 = arith.constant 0 : index
    %866 = vector.load %arg14[%c1_598, %c0_599, %c0_600] : memref<4x32x32xf32, #tpu.memory_space<vmem>>, vector<1x32x32xf32>
    %867 = vector.shape_cast %866 : vector<1x32x32xf32> to vector<32x32xf32>
    %cst_601 = arith.constant dense<0.000000e+00> : vector<8x32xf32>
    %868 = tpu.matmul %766, %867, %cst_601 {dimension_numbers = #tpu.dot_dimension_numbers<[1], [0], [0], [1], [0, 0, 1, 1], [], []>} : vector<8x32xf32>, vector<32x32xf32>, vector<8x32xf32> -> vector<8x32xf32>
    %869 = arith.addf %865, %868 : vector<8x32xf32>
    %c1_602 = arith.constant 1 : index
    %c0_603 = arith.constant 0 : index
    %c0_604 = arith.constant 0 : index
    %870 = vector.load %arg15[%c1_602, %c0_603, %c0_604] : memref<4x1x32xf32, #tpu.memory_space<vmem>>, vector<1x1x32xf32>
    %871 = vector.shape_cast %870 : vector<1x1x32xf32> to vector<1x32xf32>
    %872 = vector.broadcast %871 : vector<1x32xf32> to vector<8x32xf32>
    %873 = arith.addf %869, %872 : vector<8x32xf32>
    %cst_605 = arith.constant 0.000000e+00 : f32
    %874 = vector.broadcast %cst_605 : f32 to vector<8x32xf32>
    %875 = arith.subf %874, %873 : vector<8x32xf32>
    %876 = math.exp %875 : vector<8x32xf32>
    %cst_606 = arith.constant 1.000000e+00 : f32
    %877 = vector.broadcast %cst_606 : f32 to vector<8x32xf32>
    %878 = arith.addf %877, %876 : vector<8x32xf32>
    %879 = tpu.reciprocal %878 {approx = true} : vector<8x32xf32> -> vector<8x32xf32>
    %c2_607 = arith.constant 2 : index
    %c0_608 = arith.constant 0 : index
    %c0_609 = arith.constant 0 : index
    %880 = vector.load %arg13[%c2_607, %c0_608, %c0_609] : memref<4x32x32xf32, #tpu.memory_space<vmem>>, vector<1x32x32xf32>
    %881 = vector.shape_cast %880 : vector<1x32x32xf32> to vector<32x32xf32>
    %cst_610 = arith.constant dense<0.000000e+00> : vector<8x32xf32>
    %882 = tpu.matmul %845, %881, %cst_610 {dimension_numbers = #tpu.dot_dimension_numbers<[1], [0], [0], [1], [0, 0, 1, 1], [], []>} : vector<8x32xf32>, vector<32x32xf32>, vector<8x32xf32> -> vector<8x32xf32>
    %c2_611 = arith.constant 2 : index
    %c0_612 = arith.constant 0 : index
    %c0_613 = arith.constant 0 : index
    %883 = vector.load %arg14[%c2_611, %c0_612, %c0_613] : memref<4x32x32xf32, #tpu.memory_space<vmem>>, vector<1x32x32xf32>
    %884 = vector.shape_cast %883 : vector<1x32x32xf32> to vector<32x32xf32>
    %cst_614 = arith.constant dense<0.000000e+00> : vector<8x32xf32>
    %885 = tpu.matmul %766, %884, %cst_614 {dimension_numbers = #tpu.dot_dimension_numbers<[1], [0], [0], [1], [0, 0, 1, 1], [], []>} : vector<8x32xf32>, vector<32x32xf32>, vector<8x32xf32> -> vector<8x32xf32>
    %886 = arith.addf %882, %885 : vector<8x32xf32>
    %c2_615 = arith.constant 2 : index
    %c0_616 = arith.constant 0 : index
    %c0_617 = arith.constant 0 : index
    %887 = vector.load %arg15[%c2_615, %c0_616, %c0_617] : memref<4x1x32xf32, #tpu.memory_space<vmem>>, vector<1x1x32xf32>
    %888 = vector.shape_cast %887 : vector<1x1x32xf32> to vector<1x32xf32>
    %889 = vector.broadcast %888 : vector<1x32xf32> to vector<8x32xf32>
    %890 = arith.addf %886, %889 : vector<8x32xf32>
    %891 = math.tanh %890 : vector<8x32xf32>
    %c3_618 = arith.constant 3 : index
    %c0_619 = arith.constant 0 : index
    %c0_620 = arith.constant 0 : index
    %892 = vector.load %arg13[%c3_618, %c0_619, %c0_620] : memref<4x32x32xf32, #tpu.memory_space<vmem>>, vector<1x32x32xf32>
    %893 = vector.shape_cast %892 : vector<1x32x32xf32> to vector<32x32xf32>
    %cst_621 = arith.constant dense<0.000000e+00> : vector<8x32xf32>
    %894 = tpu.matmul %845, %893, %cst_621 {dimension_numbers = #tpu.dot_dimension_numbers<[1], [0], [0], [1], [0, 0, 1, 1], [], []>} : vector<8x32xf32>, vector<32x32xf32>, vector<8x32xf32> -> vector<8x32xf32>
    %c3_622 = arith.constant 3 : index
    %c0_623 = arith.constant 0 : index
    %c0_624 = arith.constant 0 : index
    %895 = vector.load %arg14[%c3_622, %c0_623, %c0_624] : memref<4x32x32xf32, #tpu.memory_space<vmem>>, vector<1x32x32xf32>
    %896 = vector.shape_cast %895 : vector<1x32x32xf32> to vector<32x32xf32>
    %cst_625 = arith.constant dense<0.000000e+00> : vector<8x32xf32>
    %897 = tpu.matmul %766, %896, %cst_625 {dimension_numbers = #tpu.dot_dimension_numbers<[1], [0], [0], [1], [0, 0, 1, 1], [], []>} : vector<8x32xf32>, vector<32x32xf32>, vector<8x32xf32> -> vector<8x32xf32>
    %898 = arith.addf %894, %897 : vector<8x32xf32>
    %c3_626 = arith.constant 3 : index
    %c0_627 = arith.constant 0 : index
    %c0_628 = arith.constant 0 : index
    %899 = vector.load %arg15[%c3_626, %c0_627, %c0_628] : memref<4x1x32xf32, #tpu.memory_space<vmem>>, vector<1x1x32xf32>
    %900 = vector.shape_cast %899 : vector<1x1x32xf32> to vector<1x32xf32>
    %901 = vector.broadcast %900 : vector<1x32xf32> to vector<8x32xf32>
    %902 = arith.addf %898, %901 : vector<8x32xf32>
    %cst_629 = arith.constant 0.000000e+00 : f32
    %903 = vector.broadcast %cst_629 : f32 to vector<8x32xf32>
    %904 = arith.subf %903, %902 : vector<8x32xf32>
    %905 = math.exp %904 : vector<8x32xf32>
    %cst_630 = arith.constant 1.000000e+00 : f32
    %906 = vector.broadcast %cst_630 : f32 to vector<8x32xf32>
    %907 = arith.addf %906, %905 : vector<8x32xf32>
    %908 = tpu.reciprocal %907 {approx = true} : vector<8x32xf32> -> vector<8x32xf32>
    %909 = arith.mulf %879, %764 : vector<8x32xf32>
    %910 = arith.mulf %862, %891 : vector<8x32xf32>
    %911 = arith.addf %909, %910 : vector<8x32xf32>
    %912 = math.tanh %911 : vector<8x32xf32>
    %913 = arith.mulf %908, %912 : vector<8x32xf32>
    %c6_i32 = arith.constant 6 : i32
    %914 = vector.broadcast %c6_i32 : i32 to vector<8x1xi32>
    %915 = arith.cmpi eq, %33, %914 : vector<8x1xi32>
    %916 = vector.shape_cast %915 : vector<8x1xi1> to vector<8x1xi1>
    %917 = vector.broadcast %916 : vector<8x1xi1> to vector<8x32xi1>
    %918 = arith.select %917, %913, %771 : vector<8x32xi1>, vector<8x32xf32>
    %919 = vector.extract_strided_slice %32 {offsets = [0, 6], sizes = [8, 1], strides = [1, 1]} : vector<8x8xi32> to vector<8x1xi32>
    %920 = vector.broadcast %919 : vector<8x1xi32> to vector<8x21xi32>
    %921 = arith.cmpi eq, %35, %920 : vector<8x21xi32>
    %922 = arith.extui %921 : vector<8x21xi1> to vector<8x21xi32>
    %923 = arith.sitofp %922 : vector<8x21xi32> to vector<8x21xf32>
    %cst_631 = arith.constant dense<0.000000e+00> : vector<8x16xf32>
    %924 = tpu.matmul %923, %34, %cst_631 {dimension_numbers = #tpu.dot_dimension_numbers<[1], [0], [0], [1], [0, 0, 1, 1], [], []>} : vector<8x21xf32>, vector<21x16xf32>, vector<8x16xf32> -> vector<8x16xf32>
    %c0_632 = arith.constant 0 : index
    %c0_633 = arith.constant 0 : index
    %c0_634 = arith.constant 0 : index
    %925 = vector.load %arg10[%c0_632, %c0_633, %c0_634] : memref<4x16x32xf32, #tpu.memory_space<vmem>>, vector<1x16x32xf32>
    %926 = vector.shape_cast %925 : vector<1x16x32xf32> to vector<16x32xf32>
    %cst_635 = arith.constant dense<0.000000e+00> : vector<8x32xf32>
    %927 = tpu.matmul %924, %926, %cst_635 {dimension_numbers = #tpu.dot_dimension_numbers<[1], [0], [0], [1], [0, 0, 1, 1], [], []>} : vector<8x16xf32>, vector<16x32xf32>, vector<8x32xf32> -> vector<8x32xf32>
    %c0_636 = arith.constant 0 : index
    %c0_637 = arith.constant 0 : index
    %c0_638 = arith.constant 0 : index
    %928 = vector.load %arg11[%c0_636, %c0_637, %c0_638] : memref<4x32x32xf32, #tpu.memory_space<vmem>>, vector<1x32x32xf32>
    %929 = vector.shape_cast %928 : vector<1x32x32xf32> to vector<32x32xf32>
    %cst_639 = arith.constant dense<0.000000e+00> : vector<8x32xf32>
    %930 = tpu.matmul %845, %929, %cst_639 {dimension_numbers = #tpu.dot_dimension_numbers<[1], [0], [0], [1], [0, 0, 1, 1], [], []>} : vector<8x32xf32>, vector<32x32xf32>, vector<8x32xf32> -> vector<8x32xf32>
    %931 = arith.addf %927, %930 : vector<8x32xf32>
    %c0_640 = arith.constant 0 : index
    %c0_641 = arith.constant 0 : index
    %c0_642 = arith.constant 0 : index
    %932 = vector.load %arg12[%c0_640, %c0_641, %c0_642] : memref<4x1x32xf32, #tpu.memory_space<vmem>>, vector<1x1x32xf32>
    %933 = vector.shape_cast %932 : vector<1x1x32xf32> to vector<1x32xf32>
    %934 = vector.broadcast %933 : vector<1x32xf32> to vector<8x32xf32>
    %935 = arith.addf %931, %934 : vector<8x32xf32>
    %cst_643 = arith.constant 0.000000e+00 : f32
    %936 = vector.broadcast %cst_643 : f32 to vector<8x32xf32>
    %937 = arith.subf %936, %935 : vector<8x32xf32>
    %938 = math.exp %937 : vector<8x32xf32>
    %cst_644 = arith.constant 1.000000e+00 : f32
    %939 = vector.broadcast %cst_644 : f32 to vector<8x32xf32>
    %940 = arith.addf %939, %938 : vector<8x32xf32>
    %941 = tpu.reciprocal %940 {approx = true} : vector<8x32xf32> -> vector<8x32xf32>
    %c1_645 = arith.constant 1 : index
    %c0_646 = arith.constant 0 : index
    %c0_647 = arith.constant 0 : index
    %942 = vector.load %arg10[%c1_645, %c0_646, %c0_647] : memref<4x16x32xf32, #tpu.memory_space<vmem>>, vector<1x16x32xf32>
    %943 = vector.shape_cast %942 : vector<1x16x32xf32> to vector<16x32xf32>
    %cst_648 = arith.constant dense<0.000000e+00> : vector<8x32xf32>
    %944 = tpu.matmul %924, %943, %cst_648 {dimension_numbers = #tpu.dot_dimension_numbers<[1], [0], [0], [1], [0, 0, 1, 1], [], []>} : vector<8x16xf32>, vector<16x32xf32>, vector<8x32xf32> -> vector<8x32xf32>
    %c1_649 = arith.constant 1 : index
    %c0_650 = arith.constant 0 : index
    %c0_651 = arith.constant 0 : index
    %945 = vector.load %arg11[%c1_649, %c0_650, %c0_651] : memref<4x32x32xf32, #tpu.memory_space<vmem>>, vector<1x32x32xf32>
    %946 = vector.shape_cast %945 : vector<1x32x32xf32> to vector<32x32xf32>
    %cst_652 = arith.constant dense<0.000000e+00> : vector<8x32xf32>
    %947 = tpu.matmul %845, %946, %cst_652 {dimension_numbers = #tpu.dot_dimension_numbers<[1], [0], [0], [1], [0, 0, 1, 1], [], []>} : vector<8x32xf32>, vector<32x32xf32>, vector<8x32xf32> -> vector<8x32xf32>
    %948 = arith.addf %944, %947 : vector<8x32xf32>
    %c1_653 = arith.constant 1 : index
    %c0_654 = arith.constant 0 : index
    %c0_655 = arith.constant 0 : index
    %949 = vector.load %arg12[%c1_653, %c0_654, %c0_655] : memref<4x1x32xf32, #tpu.memory_space<vmem>>, vector<1x1x32xf32>
    %950 = vector.shape_cast %949 : vector<1x1x32xf32> to vector<1x32xf32>
    %951 = vector.broadcast %950 : vector<1x32xf32> to vector<8x32xf32>
    %952 = arith.addf %948, %951 : vector<8x32xf32>
    %cst_656 = arith.constant 0.000000e+00 : f32
    %953 = vector.broadcast %cst_656 : f32 to vector<8x32xf32>
    %954 = arith.subf %953, %952 : vector<8x32xf32>
    %955 = math.exp %954 : vector<8x32xf32>
    %cst_657 = arith.constant 1.000000e+00 : f32
    %956 = vector.broadcast %cst_657 : f32 to vector<8x32xf32>
    %957 = arith.addf %956, %955 : vector<8x32xf32>
    %958 = tpu.reciprocal %957 {approx = true} : vector<8x32xf32> -> vector<8x32xf32>
    %c2_658 = arith.constant 2 : index
    %c0_659 = arith.constant 0 : index
    %c0_660 = arith.constant 0 : index
    %959 = vector.load %arg10[%c2_658, %c0_659, %c0_660] : memref<4x16x32xf32, #tpu.memory_space<vmem>>, vector<1x16x32xf32>
    %960 = vector.shape_cast %959 : vector<1x16x32xf32> to vector<16x32xf32>
    %cst_661 = arith.constant dense<0.000000e+00> : vector<8x32xf32>
    %961 = tpu.matmul %924, %960, %cst_661 {dimension_numbers = #tpu.dot_dimension_numbers<[1], [0], [0], [1], [0, 0, 1, 1], [], []>} : vector<8x16xf32>, vector<16x32xf32>, vector<8x32xf32> -> vector<8x32xf32>
    %c2_662 = arith.constant 2 : index
    %c0_663 = arith.constant 0 : index
    %c0_664 = arith.constant 0 : index
    %962 = vector.load %arg11[%c2_662, %c0_663, %c0_664] : memref<4x32x32xf32, #tpu.memory_space<vmem>>, vector<1x32x32xf32>
    %963 = vector.shape_cast %962 : vector<1x32x32xf32> to vector<32x32xf32>
    %cst_665 = arith.constant dense<0.000000e+00> : vector<8x32xf32>
    %964 = tpu.matmul %845, %963, %cst_665 {dimension_numbers = #tpu.dot_dimension_numbers<[1], [0], [0], [1], [0, 0, 1, 1], [], []>} : vector<8x32xf32>, vector<32x32xf32>, vector<8x32xf32> -> vector<8x32xf32>
    %965 = arith.addf %961, %964 : vector<8x32xf32>
    %c2_666 = arith.constant 2 : index
    %c0_667 = arith.constant 0 : index
    %c0_668 = arith.constant 0 : index
    %966 = vector.load %arg12[%c2_666, %c0_667, %c0_668] : memref<4x1x32xf32, #tpu.memory_space<vmem>>, vector<1x1x32xf32>
    %967 = vector.shape_cast %966 : vector<1x1x32xf32> to vector<1x32xf32>
    %968 = vector.broadcast %967 : vector<1x32xf32> to vector<8x32xf32>
    %969 = arith.addf %965, %968 : vector<8x32xf32>
    %970 = math.tanh %969 : vector<8x32xf32>
    %c3_669 = arith.constant 3 : index
    %c0_670 = arith.constant 0 : index
    %c0_671 = arith.constant 0 : index
    %971 = vector.load %arg10[%c3_669, %c0_670, %c0_671] : memref<4x16x32xf32, #tpu.memory_space<vmem>>, vector<1x16x32xf32>
    %972 = vector.shape_cast %971 : vector<1x16x32xf32> to vector<16x32xf32>
    %cst_672 = arith.constant dense<0.000000e+00> : vector<8x32xf32>
    %973 = tpu.matmul %924, %972, %cst_672 {dimension_numbers = #tpu.dot_dimension_numbers<[1], [0], [0], [1], [0, 0, 1, 1], [], []>} : vector<8x16xf32>, vector<16x32xf32>, vector<8x32xf32> -> vector<8x32xf32>
    %c3_673 = arith.constant 3 : index
    %c0_674 = arith.constant 0 : index
    %c0_675 = arith.constant 0 : index
    %974 = vector.load %arg11[%c3_673, %c0_674, %c0_675] : memref<4x32x32xf32, #tpu.memory_space<vmem>>, vector<1x32x32xf32>
    %975 = vector.shape_cast %974 : vector<1x32x32xf32> to vector<32x32xf32>
    %cst_676 = arith.constant dense<0.000000e+00> : vector<8x32xf32>
    %976 = tpu.matmul %845, %975, %cst_676 {dimension_numbers = #tpu.dot_dimension_numbers<[1], [0], [0], [1], [0, 0, 1, 1], [], []>} : vector<8x32xf32>, vector<32x32xf32>, vector<8x32xf32> -> vector<8x32xf32>
    %977 = arith.addf %973, %976 : vector<8x32xf32>
    %c3_677 = arith.constant 3 : index
    %c0_678 = arith.constant 0 : index
    %c0_679 = arith.constant 0 : index
    %978 = vector.load %arg12[%c3_677, %c0_678, %c0_679] : memref<4x1x32xf32, #tpu.memory_space<vmem>>, vector<1x1x32xf32>
    %979 = vector.shape_cast %978 : vector<1x1x32xf32> to vector<1x32xf32>
    %980 = vector.broadcast %979 : vector<1x32xf32> to vector<8x32xf32>
    %981 = arith.addf %977, %980 : vector<8x32xf32>
    %cst_680 = arith.constant 0.000000e+00 : f32
    %982 = vector.broadcast %cst_680 : f32 to vector<8x32xf32>
    %983 = arith.subf %982, %981 : vector<8x32xf32>
    %984 = math.exp %983 : vector<8x32xf32>
    %cst_681 = arith.constant 1.000000e+00 : f32
    %985 = vector.broadcast %cst_681 : f32 to vector<8x32xf32>
    %986 = arith.addf %985, %984 : vector<8x32xf32>
    %987 = tpu.reciprocal %986 {approx = true} : vector<8x32xf32> -> vector<8x32xf32>
    %988 = arith.mulf %958, %843 : vector<8x32xf32>
    %989 = arith.mulf %941, %970 : vector<8x32xf32>
    %990 = arith.addf %988, %989 : vector<8x32xf32>
    %991 = math.tanh %990 : vector<8x32xf32>
    %992 = arith.mulf %987, %991 : vector<8x32xf32>
    %c0_682 = arith.constant 0 : index
    %c0_683 = arith.constant 0 : index
    %c0_684 = arith.constant 0 : index
    %993 = vector.load %arg13[%c0_682, %c0_683, %c0_684] : memref<4x32x32xf32, #tpu.memory_space<vmem>>, vector<1x32x32xf32>
    %994 = vector.shape_cast %993 : vector<1x32x32xf32> to vector<32x32xf32>
    %cst_685 = arith.constant dense<0.000000e+00> : vector<8x32xf32>
    %995 = tpu.matmul %992, %994, %cst_685 {dimension_numbers = #tpu.dot_dimension_numbers<[1], [0], [0], [1], [0, 0, 1, 1], [], []>} : vector<8x32xf32>, vector<32x32xf32>, vector<8x32xf32> -> vector<8x32xf32>
    %c0_686 = arith.constant 0 : index
    %c0_687 = arith.constant 0 : index
    %c0_688 = arith.constant 0 : index
    %996 = vector.load %arg14[%c0_686, %c0_687, %c0_688] : memref<4x32x32xf32, #tpu.memory_space<vmem>>, vector<1x32x32xf32>
    %997 = vector.shape_cast %996 : vector<1x32x32xf32> to vector<32x32xf32>
    %cst_689 = arith.constant dense<0.000000e+00> : vector<8x32xf32>
    %998 = tpu.matmul %913, %997, %cst_689 {dimension_numbers = #tpu.dot_dimension_numbers<[1], [0], [0], [1], [0, 0, 1, 1], [], []>} : vector<8x32xf32>, vector<32x32xf32>, vector<8x32xf32> -> vector<8x32xf32>
    %999 = arith.addf %995, %998 : vector<8x32xf32>
    %c0_690 = arith.constant 0 : index
    %c0_691 = arith.constant 0 : index
    %c0_692 = arith.constant 0 : index
    %1000 = vector.load %arg15[%c0_690, %c0_691, %c0_692] : memref<4x1x32xf32, #tpu.memory_space<vmem>>, vector<1x1x32xf32>
    %1001 = vector.shape_cast %1000 : vector<1x1x32xf32> to vector<1x32xf32>
    %1002 = vector.broadcast %1001 : vector<1x32xf32> to vector<8x32xf32>
    %1003 = arith.addf %999, %1002 : vector<8x32xf32>
    %cst_693 = arith.constant 0.000000e+00 : f32
    %1004 = vector.broadcast %cst_693 : f32 to vector<8x32xf32>
    %1005 = arith.subf %1004, %1003 : vector<8x32xf32>
    %1006 = math.exp %1005 : vector<8x32xf32>
    %cst_694 = arith.constant 1.000000e+00 : f32
    %1007 = vector.broadcast %cst_694 : f32 to vector<8x32xf32>
    %1008 = arith.addf %1007, %1006 : vector<8x32xf32>
    %1009 = tpu.reciprocal %1008 {approx = true} : vector<8x32xf32> -> vector<8x32xf32>
    %c1_695 = arith.constant 1 : index
    %c0_696 = arith.constant 0 : index
    %c0_697 = arith.constant 0 : index
    %1010 = vector.load %arg13[%c1_695, %c0_696, %c0_697] : memref<4x32x32xf32, #tpu.memory_space<vmem>>, vector<1x32x32xf32>
    %1011 = vector.shape_cast %1010 : vector<1x32x32xf32> to vector<32x32xf32>
    %cst_698 = arith.constant dense<0.000000e+00> : vector<8x32xf32>
    %1012 = tpu.matmul %992, %1011, %cst_698 {dimension_numbers = #tpu.dot_dimension_numbers<[1], [0], [0], [1], [0, 0, 1, 1], [], []>} : vector<8x32xf32>, vector<32x32xf32>, vector<8x32xf32> -> vector<8x32xf32>
    %c1_699 = arith.constant 1 : index
    %c0_700 = arith.constant 0 : index
    %c0_701 = arith.constant 0 : index
    %1013 = vector.load %arg14[%c1_699, %c0_700, %c0_701] : memref<4x32x32xf32, #tpu.memory_space<vmem>>, vector<1x32x32xf32>
    %1014 = vector.shape_cast %1013 : vector<1x32x32xf32> to vector<32x32xf32>
    %cst_702 = arith.constant dense<0.000000e+00> : vector<8x32xf32>
    %1015 = tpu.matmul %913, %1014, %cst_702 {dimension_numbers = #tpu.dot_dimension_numbers<[1], [0], [0], [1], [0, 0, 1, 1], [], []>} : vector<8x32xf32>, vector<32x32xf32>, vector<8x32xf32> -> vector<8x32xf32>
    %1016 = arith.addf %1012, %1015 : vector<8x32xf32>
    %c1_703 = arith.constant 1 : index
    %c0_704 = arith.constant 0 : index
    %c0_705 = arith.constant 0 : index
    %1017 = vector.load %arg15[%c1_703, %c0_704, %c0_705] : memref<4x1x32xf32, #tpu.memory_space<vmem>>, vector<1x1x32xf32>
    %1018 = vector.shape_cast %1017 : vector<1x1x32xf32> to vector<1x32xf32>
    %1019 = vector.broadcast %1018 : vector<1x32xf32> to vector<8x32xf32>
    %1020 = arith.addf %1016, %1019 : vector<8x32xf32>
    %cst_706 = arith.constant 0.000000e+00 : f32
    %1021 = vector.broadcast %cst_706 : f32 to vector<8x32xf32>
    %1022 = arith.subf %1021, %1020 : vector<8x32xf32>
    %1023 = math.exp %1022 : vector<8x32xf32>
    %cst_707 = arith.constant 1.000000e+00 : f32
    %1024 = vector.broadcast %cst_707 : f32 to vector<8x32xf32>
    %1025 = arith.addf %1024, %1023 : vector<8x32xf32>
    %1026 = tpu.reciprocal %1025 {approx = true} : vector<8x32xf32> -> vector<8x32xf32>
    %c2_708 = arith.constant 2 : index
    %c0_709 = arith.constant 0 : index
    %c0_710 = arith.constant 0 : index
    %1027 = vector.load %arg13[%c2_708, %c0_709, %c0_710] : memref<4x32x32xf32, #tpu.memory_space<vmem>>, vector<1x32x32xf32>
    %1028 = vector.shape_cast %1027 : vector<1x32x32xf32> to vector<32x32xf32>
    %cst_711 = arith.constant dense<0.000000e+00> : vector<8x32xf32>
    %1029 = tpu.matmul %992, %1028, %cst_711 {dimension_numbers = #tpu.dot_dimension_numbers<[1], [0], [0], [1], [0, 0, 1, 1], [], []>} : vector<8x32xf32>, vector<32x32xf32>, vector<8x32xf32> -> vector<8x32xf32>
    %c2_712 = arith.constant 2 : index
    %c0_713 = arith.constant 0 : index
    %c0_714 = arith.constant 0 : index
    %1030 = vector.load %arg14[%c2_712, %c0_713, %c0_714] : memref<4x32x32xf32, #tpu.memory_space<vmem>>, vector<1x32x32xf32>
    %1031 = vector.shape_cast %1030 : vector<1x32x32xf32> to vector<32x32xf32>
    %cst_715 = arith.constant dense<0.000000e+00> : vector<8x32xf32>
    %1032 = tpu.matmul %913, %1031, %cst_715 {dimension_numbers = #tpu.dot_dimension_numbers<[1], [0], [0], [1], [0, 0, 1, 1], [], []>} : vector<8x32xf32>, vector<32x32xf32>, vector<8x32xf32> -> vector<8x32xf32>
    %1033 = arith.addf %1029, %1032 : vector<8x32xf32>
    %c2_716 = arith.constant 2 : index
    %c0_717 = arith.constant 0 : index
    %c0_718 = arith.constant 0 : index
    %1034 = vector.load %arg15[%c2_716, %c0_717, %c0_718] : memref<4x1x32xf32, #tpu.memory_space<vmem>>, vector<1x1x32xf32>
    %1035 = vector.shape_cast %1034 : vector<1x1x32xf32> to vector<1x32xf32>
    %1036 = vector.broadcast %1035 : vector<1x32xf32> to vector<8x32xf32>
    %1037 = arith.addf %1033, %1036 : vector<8x32xf32>
    %1038 = math.tanh %1037 : vector<8x32xf32>
    %c3_719 = arith.constant 3 : index
    %c0_720 = arith.constant 0 : index
    %c0_721 = arith.constant 0 : index
    %1039 = vector.load %arg13[%c3_719, %c0_720, %c0_721] : memref<4x32x32xf32, #tpu.memory_space<vmem>>, vector<1x32x32xf32>
    %1040 = vector.shape_cast %1039 : vector<1x32x32xf32> to vector<32x32xf32>
    %cst_722 = arith.constant dense<0.000000e+00> : vector<8x32xf32>
    %1041 = tpu.matmul %992, %1040, %cst_722 {dimension_numbers = #tpu.dot_dimension_numbers<[1], [0], [0], [1], [0, 0, 1, 1], [], []>} : vector<8x32xf32>, vector<32x32xf32>, vector<8x32xf32> -> vector<8x32xf32>
    %c3_723 = arith.constant 3 : index
    %c0_724 = arith.constant 0 : index
    %c0_725 = arith.constant 0 : index
    %1042 = vector.load %arg14[%c3_723, %c0_724, %c0_725] : memref<4x32x32xf32, #tpu.memory_space<vmem>>, vector<1x32x32xf32>
    %1043 = vector.shape_cast %1042 : vector<1x32x32xf32> to vector<32x32xf32>
    %cst_726 = arith.constant dense<0.000000e+00> : vector<8x32xf32>
    %1044 = tpu.matmul %913, %1043, %cst_726 {dimension_numbers = #tpu.dot_dimension_numbers<[1], [0], [0], [1], [0, 0, 1, 1], [], []>} : vector<8x32xf32>, vector<32x32xf32>, vector<8x32xf32> -> vector<8x32xf32>
    %1045 = arith.addf %1041, %1044 : vector<8x32xf32>
    %c3_727 = arith.constant 3 : index
    %c0_728 = arith.constant 0 : index
    %c0_729 = arith.constant 0 : index
    %1046 = vector.load %arg15[%c3_727, %c0_728, %c0_729] : memref<4x1x32xf32, #tpu.memory_space<vmem>>, vector<1x1x32xf32>
    %1047 = vector.shape_cast %1046 : vector<1x1x32xf32> to vector<1x32xf32>
    %1048 = vector.broadcast %1047 : vector<1x32xf32> to vector<8x32xf32>
    %1049 = arith.addf %1045, %1048 : vector<8x32xf32>
    %cst_730 = arith.constant 0.000000e+00 : f32
    %1050 = vector.broadcast %cst_730 : f32 to vector<8x32xf32>
    %1051 = arith.subf %1050, %1049 : vector<8x32xf32>
    %1052 = math.exp %1051 : vector<8x32xf32>
    %cst_731 = arith.constant 1.000000e+00 : f32
    %1053 = vector.broadcast %cst_731 : f32 to vector<8x32xf32>
    %1054 = arith.addf %1053, %1052 : vector<8x32xf32>
    %1055 = tpu.reciprocal %1054 {approx = true} : vector<8x32xf32> -> vector<8x32xf32>
    %1056 = arith.mulf %1026, %911 : vector<8x32xf32>
    %1057 = arith.mulf %1009, %1038 : vector<8x32xf32>
    %1058 = arith.addf %1056, %1057 : vector<8x32xf32>
    %1059 = math.tanh %1058 : vector<8x32xf32>
    %1060 = arith.mulf %1055, %1059 : vector<8x32xf32>
    %c7_i32 = arith.constant 7 : i32
    %1061 = vector.broadcast %c7_i32 : i32 to vector<8x1xi32>
    %1062 = arith.cmpi eq, %33, %1061 : vector<8x1xi32>
    %1063 = vector.shape_cast %1062 : vector<8x1xi1> to vector<8x1xi1>
    %1064 = vector.broadcast %1063 : vector<8x1xi1> to vector<8x32xi1>
    %1065 = arith.select %1064, %1060, %918 : vector<8x32xi1>, vector<8x32xf32>
    %1066 = vector.extract_strided_slice %32 {offsets = [0, 7], sizes = [8, 1], strides = [1, 1]} : vector<8x8xi32> to vector<8x1xi32>
    %1067 = vector.broadcast %1066 : vector<8x1xi32> to vector<8x21xi32>
    %1068 = arith.cmpi eq, %35, %1067 : vector<8x21xi32>
    %1069 = arith.extui %1068 : vector<8x21xi1> to vector<8x21xi32>
    %1070 = arith.sitofp %1069 : vector<8x21xi32> to vector<8x21xf32>
    %cst_732 = arith.constant dense<0.000000e+00> : vector<8x16xf32>
    %1071 = tpu.matmul %1070, %34, %cst_732 {dimension_numbers = #tpu.dot_dimension_numbers<[1], [0], [0], [1], [0, 0, 1, 1], [], []>} : vector<8x21xf32>, vector<21x16xf32>, vector<8x16xf32> -> vector<8x16xf32>
    %c0_733 = arith.constant 0 : index
    %c0_734 = arith.constant 0 : index
    %c0_735 = arith.constant 0 : index
    %1072 = vector.load %arg10[%c0_733, %c0_734, %c0_735] : memref<4x16x32xf32, #tpu.memory_space<vmem>>, vector<1x16x32xf32>
    %1073 = vector.shape_cast %1072 : vector<1x16x32xf32> to vector<16x32xf32>
    %cst_736 = arith.constant dense<0.000000e+00> : vector<8x32xf32>
    %1074 = tpu.matmul %1071, %1073, %cst_736 {dimension_numbers = #tpu.dot_dimension_numbers<[1], [0], [0], [1], [0, 0, 1, 1], [], []>} : vector<8x16xf32>, vector<16x32xf32>, vector<8x32xf32> -> vector<8x32xf32>
    %c0_737 = arith.constant 0 : index
    %c0_738 = arith.constant 0 : index
    %c0_739 = arith.constant 0 : index
    %1075 = vector.load %arg11[%c0_737, %c0_738, %c0_739] : memref<4x32x32xf32, #tpu.memory_space<vmem>>, vector<1x32x32xf32>
    %1076 = vector.shape_cast %1075 : vector<1x32x32xf32> to vector<32x32xf32>
    %cst_740 = arith.constant dense<0.000000e+00> : vector<8x32xf32>
    %1077 = tpu.matmul %992, %1076, %cst_740 {dimension_numbers = #tpu.dot_dimension_numbers<[1], [0], [0], [1], [0, 0, 1, 1], [], []>} : vector<8x32xf32>, vector<32x32xf32>, vector<8x32xf32> -> vector<8x32xf32>
    %1078 = arith.addf %1074, %1077 : vector<8x32xf32>
    %c0_741 = arith.constant 0 : index
    %c0_742 = arith.constant 0 : index
    %c0_743 = arith.constant 0 : index
    %1079 = vector.load %arg12[%c0_741, %c0_742, %c0_743] : memref<4x1x32xf32, #tpu.memory_space<vmem>>, vector<1x1x32xf32>
    %1080 = vector.shape_cast %1079 : vector<1x1x32xf32> to vector<1x32xf32>
    %1081 = vector.broadcast %1080 : vector<1x32xf32> to vector<8x32xf32>
    %1082 = arith.addf %1078, %1081 : vector<8x32xf32>
    %cst_744 = arith.constant 0.000000e+00 : f32
    %1083 = vector.broadcast %cst_744 : f32 to vector<8x32xf32>
    %1084 = arith.subf %1083, %1082 : vector<8x32xf32>
    %1085 = math.exp %1084 : vector<8x32xf32>
    %cst_745 = arith.constant 1.000000e+00 : f32
    %1086 = vector.broadcast %cst_745 : f32 to vector<8x32xf32>
    %1087 = arith.addf %1086, %1085 : vector<8x32xf32>
    %1088 = tpu.reciprocal %1087 {approx = true} : vector<8x32xf32> -> vector<8x32xf32>
    %c1_746 = arith.constant 1 : index
    %c0_747 = arith.constant 0 : index
    %c0_748 = arith.constant 0 : index
    %1089 = vector.load %arg10[%c1_746, %c0_747, %c0_748] : memref<4x16x32xf32, #tpu.memory_space<vmem>>, vector<1x16x32xf32>
    %1090 = vector.shape_cast %1089 : vector<1x16x32xf32> to vector<16x32xf32>
    %cst_749 = arith.constant dense<0.000000e+00> : vector<8x32xf32>
    %1091 = tpu.matmul %1071, %1090, %cst_749 {dimension_numbers = #tpu.dot_dimension_numbers<[1], [0], [0], [1], [0, 0, 1, 1], [], []>} : vector<8x16xf32>, vector<16x32xf32>, vector<8x32xf32> -> vector<8x32xf32>
    %c1_750 = arith.constant 1 : index
    %c0_751 = arith.constant 0 : index
    %c0_752 = arith.constant 0 : index
    %1092 = vector.load %arg11[%c1_750, %c0_751, %c0_752] : memref<4x32x32xf32, #tpu.memory_space<vmem>>, vector<1x32x32xf32>
    %1093 = vector.shape_cast %1092 : vector<1x32x32xf32> to vector<32x32xf32>
    %cst_753 = arith.constant dense<0.000000e+00> : vector<8x32xf32>
    %1094 = tpu.matmul %992, %1093, %cst_753 {dimension_numbers = #tpu.dot_dimension_numbers<[1], [0], [0], [1], [0, 0, 1, 1], [], []>} : vector<8x32xf32>, vector<32x32xf32>, vector<8x32xf32> -> vector<8x32xf32>
    %1095 = arith.addf %1091, %1094 : vector<8x32xf32>
    %c1_754 = arith.constant 1 : index
    %c0_755 = arith.constant 0 : index
    %c0_756 = arith.constant 0 : index
    %1096 = vector.load %arg12[%c1_754, %c0_755, %c0_756] : memref<4x1x32xf32, #tpu.memory_space<vmem>>, vector<1x1x32xf32>
    %1097 = vector.shape_cast %1096 : vector<1x1x32xf32> to vector<1x32xf32>
    %1098 = vector.broadcast %1097 : vector<1x32xf32> to vector<8x32xf32>
    %1099 = arith.addf %1095, %1098 : vector<8x32xf32>
    %cst_757 = arith.constant 0.000000e+00 : f32
    %1100 = vector.broadcast %cst_757 : f32 to vector<8x32xf32>
    %1101 = arith.subf %1100, %1099 : vector<8x32xf32>
    %1102 = math.exp %1101 : vector<8x32xf32>
    %cst_758 = arith.constant 1.000000e+00 : f32
    %1103 = vector.broadcast %cst_758 : f32 to vector<8x32xf32>
    %1104 = arith.addf %1103, %1102 : vector<8x32xf32>
    %1105 = tpu.reciprocal %1104 {approx = true} : vector<8x32xf32> -> vector<8x32xf32>
    %c2_759 = arith.constant 2 : index
    %c0_760 = arith.constant 0 : index
    %c0_761 = arith.constant 0 : index
    %1106 = vector.load %arg10[%c2_759, %c0_760, %c0_761] : memref<4x16x32xf32, #tpu.memory_space<vmem>>, vector<1x16x32xf32>
    %1107 = vector.shape_cast %1106 : vector<1x16x32xf32> to vector<16x32xf32>
    %cst_762 = arith.constant dense<0.000000e+00> : vector<8x32xf32>
    %1108 = tpu.matmul %1071, %1107, %cst_762 {dimension_numbers = #tpu.dot_dimension_numbers<[1], [0], [0], [1], [0, 0, 1, 1], [], []>} : vector<8x16xf32>, vector<16x32xf32>, vector<8x32xf32> -> vector<8x32xf32>
    %c2_763 = arith.constant 2 : index
    %c0_764 = arith.constant 0 : index
    %c0_765 = arith.constant 0 : index
    %1109 = vector.load %arg11[%c2_763, %c0_764, %c0_765] : memref<4x32x32xf32, #tpu.memory_space<vmem>>, vector<1x32x32xf32>
    %1110 = vector.shape_cast %1109 : vector<1x32x32xf32> to vector<32x32xf32>
    %cst_766 = arith.constant dense<0.000000e+00> : vector<8x32xf32>
    %1111 = tpu.matmul %992, %1110, %cst_766 {dimension_numbers = #tpu.dot_dimension_numbers<[1], [0], [0], [1], [0, 0, 1, 1], [], []>} : vector<8x32xf32>, vector<32x32xf32>, vector<8x32xf32> -> vector<8x32xf32>
    %1112 = arith.addf %1108, %1111 : vector<8x32xf32>
    %c2_767 = arith.constant 2 : index
    %c0_768 = arith.constant 0 : index
    %c0_769 = arith.constant 0 : index
    %1113 = vector.load %arg12[%c2_767, %c0_768, %c0_769] : memref<4x1x32xf32, #tpu.memory_space<vmem>>, vector<1x1x32xf32>
    %1114 = vector.shape_cast %1113 : vector<1x1x32xf32> to vector<1x32xf32>
    %1115 = vector.broadcast %1114 : vector<1x32xf32> to vector<8x32xf32>
    %1116 = arith.addf %1112, %1115 : vector<8x32xf32>
    %1117 = math.tanh %1116 : vector<8x32xf32>
    %c3_770 = arith.constant 3 : index
    %c0_771 = arith.constant 0 : index
    %c0_772 = arith.constant 0 : index
    %1118 = vector.load %arg10[%c3_770, %c0_771, %c0_772] : memref<4x16x32xf32, #tpu.memory_space<vmem>>, vector<1x16x32xf32>
    %1119 = vector.shape_cast %1118 : vector<1x16x32xf32> to vector<16x32xf32>
    %cst_773 = arith.constant dense<0.000000e+00> : vector<8x32xf32>
    %1120 = tpu.matmul %1071, %1119, %cst_773 {dimension_numbers = #tpu.dot_dimension_numbers<[1], [0], [0], [1], [0, 0, 1, 1], [], []>} : vector<8x16xf32>, vector<16x32xf32>, vector<8x32xf32> -> vector<8x32xf32>
    %c3_774 = arith.constant 3 : index
    %c0_775 = arith.constant 0 : index
    %c0_776 = arith.constant 0 : index
    %1121 = vector.load %arg11[%c3_774, %c0_775, %c0_776] : memref<4x32x32xf32, #tpu.memory_space<vmem>>, vector<1x32x32xf32>
    %1122 = vector.shape_cast %1121 : vector<1x32x32xf32> to vector<32x32xf32>
    %cst_777 = arith.constant dense<0.000000e+00> : vector<8x32xf32>
    %1123 = tpu.matmul %992, %1122, %cst_777 {dimension_numbers = #tpu.dot_dimension_numbers<[1], [0], [0], [1], [0, 0, 1, 1], [], []>} : vector<8x32xf32>, vector<32x32xf32>, vector<8x32xf32> -> vector<8x32xf32>
    %1124 = arith.addf %1120, %1123 : vector<8x32xf32>
    %c3_778 = arith.constant 3 : index
    %c0_779 = arith.constant 0 : index
    %c0_780 = arith.constant 0 : index
    %1125 = vector.load %arg12[%c3_778, %c0_779, %c0_780] : memref<4x1x32xf32, #tpu.memory_space<vmem>>, vector<1x1x32xf32>
    %1126 = vector.shape_cast %1125 : vector<1x1x32xf32> to vector<1x32xf32>
    %1127 = vector.broadcast %1126 : vector<1x32xf32> to vector<8x32xf32>
    %1128 = arith.addf %1124, %1127 : vector<8x32xf32>
    %cst_781 = arith.constant 0.000000e+00 : f32
    %1129 = vector.broadcast %cst_781 : f32 to vector<8x32xf32>
    %1130 = arith.subf %1129, %1128 : vector<8x32xf32>
    %1131 = math.exp %1130 : vector<8x32xf32>
    %cst_782 = arith.constant 1.000000e+00 : f32
    %1132 = vector.broadcast %cst_782 : f32 to vector<8x32xf32>
    %1133 = arith.addf %1132, %1131 : vector<8x32xf32>
    %1134 = tpu.reciprocal %1133 {approx = true} : vector<8x32xf32> -> vector<8x32xf32>
    %1135 = arith.mulf %1105, %990 : vector<8x32xf32>
    %1136 = arith.mulf %1088, %1117 : vector<8x32xf32>
    %1137 = arith.addf %1135, %1136 : vector<8x32xf32>
    %1138 = math.tanh %1137 : vector<8x32xf32>
    %1139 = arith.mulf %1134, %1138 : vector<8x32xf32>
    %c0_783 = arith.constant 0 : index
    %c0_784 = arith.constant 0 : index
    %c0_785 = arith.constant 0 : index
    %1140 = vector.load %arg13[%c0_783, %c0_784, %c0_785] : memref<4x32x32xf32, #tpu.memory_space<vmem>>, vector<1x32x32xf32>
    %1141 = vector.shape_cast %1140 : vector<1x32x32xf32> to vector<32x32xf32>
    %cst_786 = arith.constant dense<0.000000e+00> : vector<8x32xf32>
    %1142 = tpu.matmul %1139, %1141, %cst_786 {dimension_numbers = #tpu.dot_dimension_numbers<[1], [0], [0], [1], [0, 0, 1, 1], [], []>} : vector<8x32xf32>, vector<32x32xf32>, vector<8x32xf32> -> vector<8x32xf32>
    %c0_787 = arith.constant 0 : index
    %c0_788 = arith.constant 0 : index
    %c0_789 = arith.constant 0 : index
    %1143 = vector.load %arg14[%c0_787, %c0_788, %c0_789] : memref<4x32x32xf32, #tpu.memory_space<vmem>>, vector<1x32x32xf32>
    %1144 = vector.shape_cast %1143 : vector<1x32x32xf32> to vector<32x32xf32>
    %cst_790 = arith.constant dense<0.000000e+00> : vector<8x32xf32>
    %1145 = tpu.matmul %1060, %1144, %cst_790 {dimension_numbers = #tpu.dot_dimension_numbers<[1], [0], [0], [1], [0, 0, 1, 1], [], []>} : vector<8x32xf32>, vector<32x32xf32>, vector<8x32xf32> -> vector<8x32xf32>
    %1146 = arith.addf %1142, %1145 : vector<8x32xf32>
    %c0_791 = arith.constant 0 : index
    %c0_792 = arith.constant 0 : index
    %c0_793 = arith.constant 0 : index
    %1147 = vector.load %arg15[%c0_791, %c0_792, %c0_793] : memref<4x1x32xf32, #tpu.memory_space<vmem>>, vector<1x1x32xf32>
    %1148 = vector.shape_cast %1147 : vector<1x1x32xf32> to vector<1x32xf32>
    %1149 = vector.broadcast %1148 : vector<1x32xf32> to vector<8x32xf32>
    %1150 = arith.addf %1146, %1149 : vector<8x32xf32>
    %cst_794 = arith.constant 0.000000e+00 : f32
    %1151 = vector.broadcast %cst_794 : f32 to vector<8x32xf32>
    %1152 = arith.subf %1151, %1150 : vector<8x32xf32>
    %1153 = math.exp %1152 : vector<8x32xf32>
    %cst_795 = arith.constant 1.000000e+00 : f32
    %1154 = vector.broadcast %cst_795 : f32 to vector<8x32xf32>
    %1155 = arith.addf %1154, %1153 : vector<8x32xf32>
    %1156 = tpu.reciprocal %1155 {approx = true} : vector<8x32xf32> -> vector<8x32xf32>
    %c1_796 = arith.constant 1 : index
    %c0_797 = arith.constant 0 : index
    %c0_798 = arith.constant 0 : index
    %1157 = vector.load %arg13[%c1_796, %c0_797, %c0_798] : memref<4x32x32xf32, #tpu.memory_space<vmem>>, vector<1x32x32xf32>
    %1158 = vector.shape_cast %1157 : vector<1x32x32xf32> to vector<32x32xf32>
    %cst_799 = arith.constant dense<0.000000e+00> : vector<8x32xf32>
    %1159 = tpu.matmul %1139, %1158, %cst_799 {dimension_numbers = #tpu.dot_dimension_numbers<[1], [0], [0], [1], [0, 0, 1, 1], [], []>} : vector<8x32xf32>, vector<32x32xf32>, vector<8x32xf32> -> vector<8x32xf32>
    %c1_800 = arith.constant 1 : index
    %c0_801 = arith.constant 0 : index
    %c0_802 = arith.constant 0 : index
    %1160 = vector.load %arg14[%c1_800, %c0_801, %c0_802] : memref<4x32x32xf32, #tpu.memory_space<vmem>>, vector<1x32x32xf32>
    %1161 = vector.shape_cast %1160 : vector<1x32x32xf32> to vector<32x32xf32>
    %cst_803 = arith.constant dense<0.000000e+00> : vector<8x32xf32>
    %1162 = tpu.matmul %1060, %1161, %cst_803 {dimension_numbers = #tpu.dot_dimension_numbers<[1], [0], [0], [1], [0, 0, 1, 1], [], []>} : vector<8x32xf32>, vector<32x32xf32>, vector<8x32xf32> -> vector<8x32xf32>
    %1163 = arith.addf %1159, %1162 : vector<8x32xf32>
    %c1_804 = arith.constant 1 : index
    %c0_805 = arith.constant 0 : index
    %c0_806 = arith.constant 0 : index
    %1164 = vector.load %arg15[%c1_804, %c0_805, %c0_806] : memref<4x1x32xf32, #tpu.memory_space<vmem>>, vector<1x1x32xf32>
    %1165 = vector.shape_cast %1164 : vector<1x1x32xf32> to vector<1x32xf32>
    %1166 = vector.broadcast %1165 : vector<1x32xf32> to vector<8x32xf32>
    %1167 = arith.addf %1163, %1166 : vector<8x32xf32>
    %cst_807 = arith.constant 0.000000e+00 : f32
    %1168 = vector.broadcast %cst_807 : f32 to vector<8x32xf32>
    %1169 = arith.subf %1168, %1167 : vector<8x32xf32>
    %1170 = math.exp %1169 : vector<8x32xf32>
    %cst_808 = arith.constant 1.000000e+00 : f32
    %1171 = vector.broadcast %cst_808 : f32 to vector<8x32xf32>
    %1172 = arith.addf %1171, %1170 : vector<8x32xf32>
    %1173 = tpu.reciprocal %1172 {approx = true} : vector<8x32xf32> -> vector<8x32xf32>
    %c2_809 = arith.constant 2 : index
    %c0_810 = arith.constant 0 : index
    %c0_811 = arith.constant 0 : index
    %1174 = vector.load %arg13[%c2_809, %c0_810, %c0_811] : memref<4x32x32xf32, #tpu.memory_space<vmem>>, vector<1x32x32xf32>
    %1175 = vector.shape_cast %1174 : vector<1x32x32xf32> to vector<32x32xf32>
    %cst_812 = arith.constant dense<0.000000e+00> : vector<8x32xf32>
    %1176 = tpu.matmul %1139, %1175, %cst_812 {dimension_numbers = #tpu.dot_dimension_numbers<[1], [0], [0], [1], [0, 0, 1, 1], [], []>} : vector<8x32xf32>, vector<32x32xf32>, vector<8x32xf32> -> vector<8x32xf32>
    %c2_813 = arith.constant 2 : index
    %c0_814 = arith.constant 0 : index
    %c0_815 = arith.constant 0 : index
    %1177 = vector.load %arg14[%c2_813, %c0_814, %c0_815] : memref<4x32x32xf32, #tpu.memory_space<vmem>>, vector<1x32x32xf32>
    %1178 = vector.shape_cast %1177 : vector<1x32x32xf32> to vector<32x32xf32>
    %cst_816 = arith.constant dense<0.000000e+00> : vector<8x32xf32>
    %1179 = tpu.matmul %1060, %1178, %cst_816 {dimension_numbers = #tpu.dot_dimension_numbers<[1], [0], [0], [1], [0, 0, 1, 1], [], []>} : vector<8x32xf32>, vector<32x32xf32>, vector<8x32xf32> -> vector<8x32xf32>
    %1180 = arith.addf %1176, %1179 : vector<8x32xf32>
    %c2_817 = arith.constant 2 : index
    %c0_818 = arith.constant 0 : index
    %c0_819 = arith.constant 0 : index
    %1181 = vector.load %arg15[%c2_817, %c0_818, %c0_819] : memref<4x1x32xf32, #tpu.memory_space<vmem>>, vector<1x1x32xf32>
    %1182 = vector.shape_cast %1181 : vector<1x1x32xf32> to vector<1x32xf32>
    %1183 = vector.broadcast %1182 : vector<1x32xf32> to vector<8x32xf32>
    %1184 = arith.addf %1180, %1183 : vector<8x32xf32>
    %1185 = math.tanh %1184 : vector<8x32xf32>
    %c3_820 = arith.constant 3 : index
    %c0_821 = arith.constant 0 : index
    %c0_822 = arith.constant 0 : index
    %1186 = vector.load %arg13[%c3_820, %c0_821, %c0_822] : memref<4x32x32xf32, #tpu.memory_space<vmem>>, vector<1x32x32xf32>
    %1187 = vector.shape_cast %1186 : vector<1x32x32xf32> to vector<32x32xf32>
    %cst_823 = arith.constant dense<0.000000e+00> : vector<8x32xf32>
    %1188 = tpu.matmul %1139, %1187, %cst_823 {dimension_numbers = #tpu.dot_dimension_numbers<[1], [0], [0], [1], [0, 0, 1, 1], [], []>} : vector<8x32xf32>, vector<32x32xf32>, vector<8x32xf32> -> vector<8x32xf32>
    %c3_824 = arith.constant 3 : index
    %c0_825 = arith.constant 0 : index
    %c0_826 = arith.constant 0 : index
    %1189 = vector.load %arg14[%c3_824, %c0_825, %c0_826] : memref<4x32x32xf32, #tpu.memory_space<vmem>>, vector<1x32x32xf32>
    %1190 = vector.shape_cast %1189 : vector<1x32x32xf32> to vector<32x32xf32>
    %cst_827 = arith.constant dense<0.000000e+00> : vector<8x32xf32>
    %1191 = tpu.matmul %1060, %1190, %cst_827 {dimension_numbers = #tpu.dot_dimension_numbers<[1], [0], [0], [1], [0, 0, 1, 1], [], []>} : vector<8x32xf32>, vector<32x32xf32>, vector<8x32xf32> -> vector<8x32xf32>
    %1192 = arith.addf %1188, %1191 : vector<8x32xf32>
    %c3_828 = arith.constant 3 : index
    %c0_829 = arith.constant 0 : index
    %c0_830 = arith.constant 0 : index
    %1193 = vector.load %arg15[%c3_828, %c0_829, %c0_830] : memref<4x1x32xf32, #tpu.memory_space<vmem>>, vector<1x1x32xf32>
    %1194 = vector.shape_cast %1193 : vector<1x1x32xf32> to vector<1x32xf32>
    %1195 = vector.broadcast %1194 : vector<1x32xf32> to vector<8x32xf32>
    %1196 = arith.addf %1192, %1195 : vector<8x32xf32>
    %cst_831 = arith.constant 0.000000e+00 : f32
    %1197 = vector.broadcast %cst_831 : f32 to vector<8x32xf32>
    %1198 = arith.subf %1197, %1196 : vector<8x32xf32>
    %1199 = math.exp %1198 : vector<8x32xf32>
    %cst_832 = arith.constant 1.000000e+00 : f32
    %1200 = vector.broadcast %cst_832 : f32 to vector<8x32xf32>
    %1201 = arith.addf %1200, %1199 : vector<8x32xf32>
    %1202 = tpu.reciprocal %1201 {approx = true} : vector<8x32xf32> -> vector<8x32xf32>
    %1203 = arith.mulf %1173, %1058 : vector<8x32xf32>
    %1204 = arith.mulf %1156, %1185 : vector<8x32xf32>
    %1205 = arith.addf %1203, %1204 : vector<8x32xf32>
    %1206 = math.tanh %1205 : vector<8x32xf32>
    %1207 = arith.mulf %1202, %1206 : vector<8x32xf32>
    %c8_i32 = arith.constant 8 : i32
    %1208 = vector.broadcast %c8_i32 : i32 to vector<8x1xi32>
    %1209 = arith.cmpi eq, %33, %1208 : vector<8x1xi32>
    %1210 = vector.shape_cast %1209 : vector<8x1xi1> to vector<8x1xi1>
    %1211 = vector.broadcast %1210 : vector<8x1xi1> to vector<8x32xi1>
    %1212 = arith.select %1211, %1207, %1065 : vector<8x32xi1>, vector<8x32xf32>
    %c0_833 = arith.constant 0 : index
    %c0_834 = arith.constant 0 : index
    %1213 = vector.load %arg16[%c0_833, %c0_834] : memref<32x32xf32, #tpu.memory_space<vmem>>, vector<32x32xf32>
    %cst_835 = arith.constant dense<0.000000e+00> : vector<8x32xf32>
    %1214 = tpu.matmul %31, %1213, %cst_835 {dimension_numbers = #tpu.dot_dimension_numbers<[1], [0], [0], [1], [0, 0, 1, 1], [], []>} : vector<8x32xf32>, vector<32x32xf32>, vector<8x32xf32> -> vector<8x32xf32>
    %c0_836 = arith.constant 0 : index
    %c0_837 = arith.constant 0 : index
    %1215 = vector.load %arg17[%c0_836, %c0_837] : memref<32x32xf32, #tpu.memory_space<vmem>>, vector<32x32xf32>
    %cst_838 = arith.constant dense<0.000000e+00> : vector<8x32xf32>
    %1216 = tpu.matmul %1212, %1215, %cst_838 {dimension_numbers = #tpu.dot_dimension_numbers<[1], [0], [0], [1], [0, 0, 1, 1], [], []>} : vector<8x32xf32>, vector<32x32xf32>, vector<8x32xf32> -> vector<8x32xf32>
    %1217 = arith.addf %1214, %1216 : vector<8x32xf32>
    %c0_839 = arith.constant 0 : index
    %c0_840 = arith.constant 0 : index
    %1218 = vector.load %arg18[%c0_839, %c0_840] : memref<1x32xf32, #tpu.memory_space<vmem>>, vector<1x32xf32>
    %1219 = vector.broadcast %1218 : vector<1x32xf32> to vector<8x32xf32>
    %1220 = arith.addf %1217, %1219 : vector<8x32xf32>
    %cst_841 = arith.constant 0.000000e+00 : f32
    %1221 = vector.broadcast %cst_841 : f32 to vector<8x32xf32>
    %1222 = arith.cmpf ogt, %1220, %1221 : vector<8x32xf32>
    %cst_842 = arith.constant 0.00999999977 : f32
    %1223 = vector.broadcast %cst_842 : f32 to vector<8x32xf32>
    %1224 = arith.mulf %1223, %1220 : vector<8x32xf32>
    %1225 = arith.select %1222, %1220, %1224 : vector<8x32xi1>, vector<8x32xf32>
    %c0_843 = arith.constant 0 : index
    %c0_844 = arith.constant 0 : index
    %1226 = vector.load %arg19[%c0_843, %c0_844] : memref<32x1xf32, #tpu.memory_space<vmem>>, vector<32x1xf32>
    %cst_845 = arith.constant dense<0.000000e+00> : vector<8x1xf32>
    %1227 = tpu.matmul %1225, %1226, %cst_845 {dimension_numbers = #tpu.dot_dimension_numbers<[1], [0], [0], [1], [0, 0, 1, 1], [], []>} : vector<8x32xf32>, vector<32x1xf32>, vector<8x1xf32> -> vector<8x1xf32>
    %c0_846 = arith.constant 0 : index
    %c0_847 = arith.constant 0 : index
    %1228 = vector.load %arg20[%c0_846, %c0_847] : memref<1x1xf32, #tpu.memory_space<vmem>>, vector<1x1xf32>
    %1229 = vector.broadcast %1228 : vector<1x1xf32> to vector<8x1xf32>
    %1230 = arith.addf %1227, %1229 : vector<8x1xf32>
    %cst_848 = arith.constant 0.000000e+00 : f32
    %1231 = vector.broadcast %cst_848 : f32 to vector<8x1xf32>
    %1232 = arith.subf %1231, %1230 : vector<8x1xf32>
    %1233 = math.exp %1232 : vector<8x1xf32>
    %cst_849 = arith.constant 1.000000e+00 : f32
    %1234 = vector.broadcast %cst_849 : f32 to vector<8x1xf32>
    %1235 = arith.addf %1234, %1233 : vector<8x1xf32>
    %cst_850 = arith.constant 1.000000e+00 : f32
    %1236 = vector.broadcast %cst_850 : f32 to vector<8x1xf32>
    %1237 = arith.divf %1236, %1235 : vector<8x1xf32>
    %1238 = vector.shape_cast %1237 : vector<8x1xf32> to vector<8x1xf32>
    %1239 = vector.broadcast %1238 : vector<8x1xf32> to vector<8x128xf32>
    %c0_851 = arith.constant 0 : index
    %c0_852 = arith.constant 0 : index
    %1240 = vector.load %arg21[%c0_851, %c0_852] : memref<8x128xf32, #tpu.memory_space<vmem>>, vector<8x128xf32>
    tpu.vector_store %arg21[%c0_851, %c0_852], %1239 {strides = array<i32>} : memref<8x128xf32, #tpu.memory_space<vmem>>, vector<8x128xf32>,
    return
  }
}

</mosaic_0001>

<llo_original>
// kernel: tpu_custom_call.1
$region0: #{tpu_custom_call.1}
  #allocation0 [shape = 'u32[]', space=smem, size = 0x4, offset = 0x4, fixed_abs, tag = 'smem constant byte address 0x4 - core index']
  #allocation1 [shape = 'u32[72,128]{1,0:T(1,128)}', space=vmem, size = 0x9000, scoped, tag = 'internal scratch']
  #allocation2 [shape = 'f32[1,1]{1,0:T(1,128)S(1)}', space=vmem, size = 0x200, scoped, tag = 'scoped memory for tpu_custom_call.1']
  %s0 = inlined_call_operand.vmem [shape: f32[8,64], index: 0, kind: input, shape index: {}]
  %s1 = inlined_call_operand.vmem [shape: s32[8,8], index: 1, kind: input, shape index: {}]
  %s2 = inlined_call_operand.vmem [shape: s32[8,1], index: 2, kind: input, shape index: {}]
  %s3 = inlined_call_operand.hbm [shape: f32[64,300], index: 3, kind: input, shape index: {}]
  %s4 = inlined_call_operand.hbm [shape: f32[1,300], index: 4, kind: input, shape index: {}]
  %s5 = inlined_call_operand.hbm [shape: f32[300,100], index: 5, kind: input, shape index: {}]
  %s6 = inlined_call_operand.hbm [shape: f32[1,100], index: 6, kind: input, shape index: {}]
  %s7 = inlined_call_operand.vmem [shape: f32[100,32], index: 7, kind: input, shape index: {}]
  %s8 = inlined_call_operand.hbm [shape: f32[1,32], index: 8, kind: input, shape index: {}]
  %s9 = inlined_call_operand.vmem [shape: f32[21,16], index: 9, kind: input, shape index: {}]
  %s10 = inlined_call_operand.hbm [shape: f32[4,16,32], index: 10, kind: input, shape index: {}]
  %s11 = inlined_call_operand.vmem [shape: f32[4,32,32], index: 11, kind: input, shape index: {}]
  %s12 = inlined_call_operand.vmem [shape: f32[4,1,32], index: 12, kind: input, shape index: {}]
  %s13 = inlined_call_operand.hbm [shape: f32[4,32,32], index: 13, kind: input, shape index: {}]
  %s14 = inlined_call_operand.hbm [shape: f32[4,32,32], index: 14, kind: input, shape index: {}]
  %s15 = inlined_call_operand.hbm [shape: f32[4,1,32], index: 15, kind: input, shape index: {}]
  %s16 = inlined_call_operand.vmem [shape: f32[32,32], index: 16, kind: input, shape index: {}]
  %s17 = inlined_call_operand.hbm [shape: f32[32,32], index: 17, kind: input, shape index: {}]
  %s18 = inlined_call_operand.vmem [shape: f32[1,32], index: 18, kind: input, shape index: {}]
  %s19 = inlined_call_operand.vmem [shape: f32[32,1], index: 19, kind: input, shape index: {}]
  %s20 = inlined_call_operand.<no memory space> [shape: f32[1,1], index: 20, kind: input, shape index: {}]
  %s21 = inlined_call_operand.hbm [shape: f32[8,128], index: 21, kind: output, shape index: {}]
  %s22 = sld [smem:[#allocation0]]
  $region134: #{tpu_custom_call.1} parent=0
    _
  %s24 = ssub.s32 1, %s22
  %s25 = scalar_select 0, %s24, %s22
  %v26 = vstv %s20
  %27 = vst [vmem:[#allocation2] sm:$0x1] %v26
  $region1: #{tpu_custom_call.1} parent=0
    #allocation3 [shape = 'u8[98304]{0}', space=vmem, size = 0x18000, scoped, tag = 'input window, operand 3, single buffered']
    #allocation4 [shape = 's32[1]{0}', space=sflag, size = 0x4, scoped, tag = 'scoped memory for tpu_custom_call.1']
    #allocation5 [shape = 's32[1]{0}', space=sflag, size = 0x4, scoped, tag = 'scoped memory for tpu_custom_call.1']
    #allocation6 [shape = 'u8[1536]{0}', space=vmem, size = 0x800, scoped, tag = 'input window, operand 4, single buffered']
    #allocation7 [shape = 's32[1]{0}', space=sflag, size = 0x4, scoped, tag = 'scoped memory for tpu_custom_call.1']
    #allocation8 [shape = 'u8[155648]{0}', space=vmem, size = 0x26000, scoped, tag = 'input window, operand 5, single buffered']
    #allocation9 [shape = 'u8[512]{0}', space=vmem, size = 0x400, scoped, tag = 'input window, operand 6, single buffered']
    #allocation10 [shape = 's32[1]{0}', space=sflag, size = 0x4, scoped, tag = 'scoped memory for tpu_custom_call.1']
    #allocation11 [shape = 'u8[512]{0}', space=vmem, size = 0x400, scoped, tag = 'input window, operand 8, single buffered']
    #allocation12 [shape = 'u8[32768]{0}', space=vmem, size = 0x8000, scoped, tag = 'input window, operand 10, single buffered']
    #allocation13 [shape = 's32[1]{0}', space=sflag, size = 0x4, scoped, tag = 'scoped memory for tpu_custom_call.1']
    #allocation14 [shape = 'u8[65536]{0}', space=vmem, size = 0x10000, scoped, tag = 'input window, operand 13, single buffered']
    #allocation15 [shape = 'u8[65536]{0}', space=vmem, size = 0x10000, scoped, tag = 'input window, operand 14, single buffered']
    #allocation16 [shape = 's32[1]{0}', space=sflag, size = 0x4, scoped, tag = 'scoped memory for tpu_custom_call.1']
    #allocation17 [shape = 'u8[2048]{0}', space=vmem, size = 0x800, scoped, tag = 'input window, operand 15, single buffered']
    #allocation18 [shape = 'u8[16384]{0}', space=vmem, size = 0x4000, scoped, tag = 'input window, operand 17, single buffered']
    #allocation19 [shape = 's32[1]{0}', space=sflag, size = 0x4, scoped, tag = 'scoped memory for tpu_custom_call.1']
    #allocation20 [shape = 'u8[4096]{0}', space=vmem, size = 0x1000, scoped, tag = 'output window, operand 0, single buffered']
    %28 = vsyncpa [#allocation4], 0
    %29 = vsyncpa [#allocation7], 0
    %30 = vsyncpa [#allocation10], 0
    %31 = vsyncpa [#allocation13], 0
    %32 = vsyncpa [#allocation16], 0
    %33 = vsyncpa [#allocation19], 0
    %34 = vsyncpa [#allocation5], 0
    // Predicated region
    $region2: #{tpu_custom_call.1} parent=1 // pred_check
      _
    $region3: #{tpu_custom_call.1} parent=1 // pred_check_branch
      %36 = sbr.rel (0) target = $region5
    $region4: #{tpu_custom_call.1} parent=1 // pred_region
      _
    $region5: #{tpu_custom_call.1} parent=1 // pred_fallthru
      _
    // Predicated region
    $region6: #{tpu_custom_call.1} parent=1 // pred_check
      _
    $region7: #{tpu_custom_call.1} parent=1 // pred_check_branch
      %38 = sbr.rel (0) target = $region9
    $region8: #{tpu_custom_call.1} parent=1 // pred_region
      _
    $region9: #{tpu_custom_call.1} parent=1 // pred_fallthru
      _
    // Predicated region
    $region10: #{tpu_custom_call.1} parent=1 // pred_check
      _
    $region11: #{tpu_custom_call.1} parent=1 // pred_check_branch
      %40 = sbr.rel (0) target = $region13
    $region12: #{tpu_custom_call.1} parent=1 // pred_region
      _
    $region13: #{tpu_custom_call.1} parent=1 // pred_fallthru
      _
    // Predicated region
    $region14: #{tpu_custom_call.1} parent=1 // pred_check
      _
    $region15: #{tpu_custom_call.1} parent=1 // pred_check_branch
      %42 = sbr.rel (0) target = $region17
    $region16: #{tpu_custom_call.1} parent=1 // pred_region
      %44 = vsyncadd [#allocation4], 0
      %s45 = sshll.u32 %s3, 4
      %s46 = int_to_ptr.hbm [resolvable:$true] %s45
      %s47 = sshll.u32 [#allocation3], 4
      %s48 = int_to_ptr.vmem [resolvable:$true] %s47
      %53 = dma.hbm_to_vmem [thread:$0]  %s46, 3072, %s48, [#allocation4], 384, 384, 24
    $region17: #{tpu_custom_call.1} parent=1 // pred_fallthru
      _
    // Predicated region
    $region18: #{tpu_custom_call.1} parent=1 // pred_check
      _
    $region19: #{tpu_custom_call.1} parent=1 // pred_check_branch
      %55 = sbr.rel (0) target = $region21
    $region20: #{tpu_custom_call.1} parent=1 // pred_region
      %57 = vsyncadd [#allocation7], 0
      %s59 = sshll.u32 %s4, 4
      %s60 = int_to_ptr.hbm [resolvable:$true] %s59
      %s61 = sshll.u32 [#allocation6], 4
      %s62 = int_to_ptr.vmem [resolvable:$true] %s61
      %64 = dma.hbm_to_vmem [thread:$0]  %s60, 48, %s62, [#allocation7]
    $region21: #{tpu_custom_call.1} parent=1 // pred_fallthru
      _
    // Predicated region
    $region22: #{tpu_custom_call.1} parent=1 // pred_check
      _
    $region23: #{tpu_custom_call.1} parent=1 // pred_check_branch
      %66 = sbr.rel (0) target = $region25
    $region24: #{tpu_custom_call.1} parent=1 // pred_region
      %68 = vsyncadd [#allocation7], 0
      %s69 = sshll.u32 %s5, 4
      %s70 = int_to_ptr.hbm [resolvable:$true] %s69
      %s71 = sshll.u32 [#allocation8], 4
      %s72 = int_to_ptr.vmem [resolvable:$true] %s71
      %77 = dma.hbm_to_vmem [thread:$0]  %s70, 4864, %s72, [#allocation7], 128, 128, 8
    $region25: #{tpu_custom_call.1} parent=1 // pred_fallthru
      _
    // Predicated region
    $region26: #{tpu_custom_call.1} parent=1 // pred_check
      _
    $region27: #{tpu_custom_call.1} parent=1 // pred_check_branch
      %79 = sbr.rel (0) target = $region29
    $region28: #{tpu_custom_call.1} parent=1 // pred_region
      %81 = vsyncadd [#allocation10], 0
      %s83 = sshll.u32 %s6, 4
      %s84 = int_to_ptr.hbm [resolvable:$true] %s83
      %s85 = sshll.u32 [#allocation9], 4
      %s86 = int_to_ptr.vmem [resolvable:$true] %s85
      %88 = dma.hbm_to_vmem [thread:$0]  %s84, 16, %s86, [#allocation10]
    $region29: #{tpu_custom_call.1} parent=1 // pred_fallthru
      _
    // Predicated region
    $region30: #{tpu_custom_call.1} parent=1 // pred_check
      _
    $region31: #{tpu_custom_call.1} parent=1 // pred_check_branch
      %90 = sbr.rel (0) target = $region33
    $region32: #{tpu_custom_call.1} parent=1 // pred_region
      _
    $region33: #{tpu_custom_call.1} parent=1 // pred_fallthru
      _
    // Predicated region
    $region34: #{tpu_custom_call.1} parent=1 // pred_check
      _
    $region35: #{tpu_custom_call.1} parent=1 // pred_check_branch
      %92 = sbr.rel (0) target = $region37
    $region36: #{tpu_custom_call.1} parent=1 // pred_region
      %94 = vsyncadd [#allocation10], 0
      %s96 = sshll.u32 %s8, 4
      %s97 = int_to_ptr.hbm [resolvable:$true] %s96
      %s98 = sshll.u32 [#allocation11], 4
      %s99 = int_to_ptr.vmem [resolvable:$true] %s98
      %101 = dma.hbm_to_vmem [thread:$0]  %s97, 16, %s99, [#allocation10]
    $region37: #{tpu_custom_call.1} parent=1 // pred_fallthru
      _
    // Predicated region
    $region38: #{tpu_custom_call.1} parent=1 // pred_check
      _
    $region39: #{tpu_custom_call.1} parent=1 // pred_check_branch
      %103 = sbr.rel (0) target = $region41
    $region40: #{tpu_custom_call.1} parent=1 // pred_region
      _
    $region41: #{tpu_custom_call.1} parent=1 // pred_fallthru
      _
    // Predicated region
    $region42: #{tpu_custom_call.1} parent=1 // pred_check
      _
    $region43: #{tpu_custom_call.1} parent=1 // pred_check_branch
      %105 = sbr.rel (0) target = $region45
    $region44: #{tpu_custom_call.1} parent=1 // pred_region
      %107 = vsyncadd [#allocation13], 0
      %s108 = sshll.u32 %s10, 4
      %s109 = int_to_ptr.hbm [resolvable:$true] %s108
      %s110 = sshll.u32 [#allocation12], 4
      %s111 = int_to_ptr.vmem [resolvable:$true] %s110
      %116 = dma.hbm_to_vmem [thread:$0]  %s109, 1024, %s111, [#allocation13], 128, 128, 8
    $region45: #{tpu_custom_call.1} parent=1 // pred_fallthru
      _
    // Predicated region
    $region46: #{tpu_custom_call.1} parent=1 // pred_check
      _
    $region47: #{tpu_custom_call.1} parent=1 // pred_check_branch
      %118 = sbr.rel (0) target = $region49
    $region48: #{tpu_custom_call.1} parent=1 // pred_region
      _
    $region49: #{tpu_custom_call.1} parent=1 // pred_fallthru
      _
    // Predicated region
    $region50: #{tpu_custom_call.1} parent=1 // pred_check
      _
    $region51: #{tpu_custom_call.1} parent=1 // pred_check_branch
      %120 = sbr.rel (0) target = $region53
    $region52: #{tpu_custom_call.1} parent=1 // pred_region
      _
    $region53: #{tpu_custom_call.1} parent=1 // pred_fallthru
      _
    // Predicated region
    $region54: #{tpu_custom_call.1} parent=1 // pred_check
      _
    $region55: #{tpu_custom_call.1} parent=1 // pred_check_branch
      %122 = sbr.rel (0) target = $region57
    $region56: #{tpu_custom_call.1} parent=1 // pred_region
      %124 = vsyncadd [#allocation13], 0
      %s125 = sshll.u32 %s13, 4
      %s126 = int_to_ptr.hbm [resolvable:$true] %s125
      %s127 = sshll.u32 [#allocation14], 4
      %s128 = int_to_ptr.vmem [resolvable:$true] %s127
      %133 = dma.hbm_to_vmem [thread:$0]  %s126, 2048, %s128, [#allocation13], 128, 128, 8
    $region57: #{tpu_custom_call.1} parent=1 // pred_fallthru
      _
    // Predicated region
    $region58: #{tpu_custom_call.1} parent=1 // pred_check
      _
    $region59: #{tpu_custom_call.1} parent=1 // pred_check_branch
      %135 = sbr.rel (0) target = $region61
    $region60: #{tpu_custom_call.1} parent=1 // pred_region
      %137 = vsyncadd [#allocation16], 0
      %s138 = sshll.u32 %s14, 4
      %s139 = int_to_ptr.hbm [resolvable:$true] %s138
      %s140 = sshll.u32 [#allocation15], 4
      %s141 = int_to_ptr.vmem [resolvable:$true] %s140
      %146 = dma.hbm_to_vmem [thread:$0]  %s139, 2048, %s141, [#allocation16], 128, 128, 8
    $region61: #{tpu_custom_call.1} parent=1 // pred_fallthru
      _
    // Predicated region
    $region62: #{tpu_custom_call.1} parent=1 // pred_check
      _
    $region63: #{tpu_custom_call.1} parent=1 // pred_check_branch
      %148 = sbr.rel (0) target = $region65
    $region64: #{tpu_custom_call.1} parent=1 // pred_region
      %150 = vsyncadd [#allocation16], 0
      %s151 = sshll.u32 %s15, 4
      %s152 = int_to_ptr.hbm [resolvable:$true] %s151
      %s153 = sshll.u32 [#allocation17], 4
      %s154 = int_to_ptr.vmem [resolvable:$true] %s153
      %159 = dma.hbm_to_vmem [thread:$0]  %s152, 64, %s154, [#allocation16], 16, 16, 1
    $region65: #{tpu_custom_call.1} parent=1 // pred_fallthru
      _
    // Predicated region
    $region66: #{tpu_custom_call.1} parent=1 // pred_check
      _
    $region67: #{tpu_custom_call.1} parent=1 // pred_check_branch
      %161 = sbr.rel (0) target = $region69
    $region68: #{tpu_custom_call.1} parent=1 // pred_region
      _
    $region69: #{tpu_custom_call.1} parent=1 // pred_fallthru
      _
    // Predicated region
    $region70: #{tpu_custom_call.1} parent=1 // pred_check
      _
    $region71: #{tpu_custom_call.1} parent=1 // pred_check_branch
      %163 = sbr.rel (0) target = $region73
    $region72: #{tpu_custom_call.1} parent=1 // pred_region
      %165 = vsyncadd [#allocation19], 0
      %s166 = sshll.u32 %s17, 4
      %s167 = int_to_ptr.hbm [resolvable:$true] %s166
      %s168 = sshll.u32 [#allocation18], 4
      %s169 = int_to_ptr.vmem [resolvable:$true] %s168
      %174 = dma.hbm_to_vmem [thread:$0]  %s167, 512, %s169, [#allocation19], 128, 128, 8
    $region73: #{tpu_custom_call.1} parent=1 // pred_fallthru
      _
    // Predicated region
    $region74: #{tpu_custom_call.1} parent=1 // pred_check
      _
    $region75: #{tpu_custom_call.1} parent=1 // pred_check_branch
      %176 = sbr.rel (0) target = $region77
    $region76: #{tpu_custom_call.1} parent=1 // pred_region
      _
    $region77: #{tpu_custom_call.1} parent=1 // pred_fallthru
      _
    // Predicated region
    $region78: #{tpu_custom_call.1} parent=1 // pred_check
      _
    $region79: #{tpu_custom_call.1} parent=1 // pred_check_branch
      %178 = sbr.rel (0) target = $region81
    $region80: #{tpu_custom_call.1} parent=1 // pred_region
      _
    $region81: #{tpu_custom_call.1} parent=1 // pred_fallthru
      _
    // Predicated region
    $region82: #{tpu_custom_call.1} parent=1 // pred_check
      _
    $region83: #{tpu_custom_call.1} parent=1 // pred_check_branch
      %180 = sbr.rel (0) target = $region85
    $region84: #{tpu_custom_call.1} parent=1 // pred_region
      _
    $region85: #{tpu_custom_call.1} parent=1 // pred_fallthru
      _
    // Predicated region
    $region86: #{tpu_custom_call.1} parent=1 // pred_check
      _
    $region87: #{tpu_custom_call.1} parent=1 // pred_check_branch
      %182 = sbr.rel (0) target = $region89
    $region88: #{tpu_custom_call.1} parent=1 // pred_region
      %184 = dma.done [#allocation4], 3072
    $region89: #{tpu_custom_call.1} parent=1 // pred_fallthru
      _
    // Predicated region
    $region90: #{tpu_custom_call.1} parent=1 // pred_check
      _
    $region91: #{tpu_custom_call.1} parent=1 // pred_check_branch
      %186 = sbr.rel (0) target = $region93
    $region92: #{tpu_custom_call.1} parent=1 // pred_region
      %188 = dma.done [#allocation7], 48
    $region93: #{tpu_custom_call.1} parent=1 // pred_fallthru
      _
    // Predicated region
    $region94: #{tpu_custom_call.1} parent=1 // pred_check
      _
    $region95: #{tpu_custom_call.1} parent=1 // pred_check_branch
      %190 = sbr.rel (0) target = $region97
    $region96: #{tpu_custom_call.1} parent=1 // pred_region
      %192 = dma.done [#allocation7], 4864
    $region97: #{tpu_custom_call.1} parent=1 // pred_fallthru
      _
    // Predicated region
    $region98: #{tpu_custom_call.1} parent=1 // pred_check
      _
    $region99: #{tpu_custom_call.1} parent=1 // pred_check_branch
      %194 = sbr.rel (0) target = $region101
    $region100: #{tpu_custom_call.1} parent=1 // pred_region
      %196 = dma.done [#allocation10], 16
    $region101: #{tpu_custom_call.1} parent=1 // pred_fallthru
      _
    // Predicated region
    $region102: #{tpu_custom_call.1} parent=1 // pred_check
      _
    $region103: #{tpu_custom_call.1} parent=1 // pred_check_branch
      %198 = sbr.rel (0) target = $region105
    $region104: #{tpu_custom_call.1} parent=1 // pred_region
      %200 = dma.done [#allocation10], 16
    $region105: #{tpu_custom_call.1} parent=1 // pred_fallthru
      _
    // Predicated region
    $region106: #{tpu_custom_call.1} parent=1 // pred_check
      _
    $region107: #{tpu_custom_call.1} parent=1 // pred_check_branch
      %202 = sbr.rel (0) target = $region109
    $region108: #{tpu_custom_call.1} parent=1 // pred_region
      %204 = dma.done [#allocation13], 1024
    $region109: #{tpu_custom_call.1} parent=1 // pred_fallthru
      _
    // Predicated region
    $region110: #{tpu_custom_call.1} parent=1 // pred_check
      _
    $region111: #{tpu_custom_call.1} parent=1 // pred_check_branch
      %206 = sbr.rel (0) target = $region113
    $region112: #{tpu_custom_call.1} parent=1 // pred_region
      %208 = dma.done [#allocation13], 2048
    $region113: #{tpu_custom_call.1} parent=1 // pred_fallthru
      _
    // Predicated region
    $region114: #{tpu_custom_call.1} parent=1 // pred_check
      _
    $region115: #{tpu_custom_call.1} parent=1 // pred_check_branch
      %210 = sbr.rel (0) target = $region117
    $region116: #{tpu_custom_call.1} parent=1 // pred_region
      %212 = dma.done [#allocation16], 2048
    $region117: #{tpu_custom_call.1} parent=1 // pred_fallthru
      _
    // Predicated region
    $region118: #{tpu_custom_call.1} parent=1 // pred_check
      _
    $region119: #{tpu_custom_call.1} parent=1 // pred_check_branch
      %214 = sbr.rel (0) target = $region121
    $region120: #{tpu_custom_call.1} parent=1 // pred_region
      %216 = dma.done [#allocation16], 64
    $region121: #{tpu_custom_call.1} parent=1 // pred_fallthru
      _
    // Predicated region
    $region122: #{tpu_custom_call.1} parent=1 // pred_check
      _
    $region123: #{tpu_custom_call.1} parent=1 // pred_check_branch
      %218 = sbr.rel (0) target = $region125
    $region124: #{tpu_custom_call.1} parent=1 // pred_region
      %220 = dma.done [#allocation19], 512
    $region125: #{tpu_custom_call.1} parent=1 // pred_fallthru
      _
    %v221 = vld [vmem:[%s0] sm:$0xff]
    %v222 = vld [vmem:[#allocation3] sm:$0xff]
    %v223 = vld [vmem:[#allocation3 + $0x8] sm:$0xff]
    %v224 = vld [vmem:[#allocation3 + $0x10] sm:$0xff]
    %v225 = vld [vmem:[#allocation3 + $0x18] sm:$0xff]
    %v226 = vld [vmem:[#allocation3 + $0x20] sm:$0xff]
    %v227 = vld [vmem:[#allocation3 + $0x28] sm:$0xff]
    %v228 = vld [vmem:[#allocation3 + $0x30] sm:$0xff]
    %v229 = vld [vmem:[#allocation3 + $0x38] sm:$0xff]
    %v230 = vld [vmem:[#allocation3 + $0x40] sm:$0xff]
    %v231 = vld [vmem:[#allocation3 + $0x48] sm:$0xff]
    %v232 = vld [vmem:[#allocation3 + $0x50] sm:$0xff]
    %v233 = vld [vmem:[#allocation3 + $0x58] sm:$0xff]
    %v234 = vld [vmem:[#allocation3 + $0x60] sm:$0xff]
    %v235 = vld [vmem:[#allocation3 + $0x68] sm:$0xff]
    %v236 = vld [vmem:[#allocation3 + $0x70] sm:$0xff]
    %v237 = vld [vmem:[#allocation3 + $0x78] sm:$0xff]
    %v238 = vld [vmem:[#allocation3 + $0x80] sm:$0xff]
    %v239 = vld [vmem:[#allocation3 + $0x88] sm:$0xff]
    %v240 = vld [vmem:[#allocation3 + $0x90] sm:$0xff]
    %v241 = vld [vmem:[#allocation3 + $0x98] sm:$0xff]
    %v242 = vld [vmem:[#allocation3 + $0xa0] sm:$0xff]
    %v243 = vld [vmem:[#allocation3 + $0xa8] sm:$0xff]
    %v244 = vld [vmem:[#allocation3 + $0xb0] sm:$0xff]
    %v245 = vld [vmem:[#allocation3 + $0xb8] sm:$0xff]
    %v246 = vld [vmem:[#allocation6] sm:$0x7]
    %v248 = vperm.slane %v246, 0
    %v249 = vperm.slane %v246, 1
    %v250 = vperm.slane %v246, 2
    %vm254 = vcmask 523264
    %v256 = vsel %vm254, %v221, 0
    %258 = vmatpush.msra.mxu0 0.0
    %259 = vmatpush.msra.mxu0 0.0
    %260 = vmatpush.msra.mxu0 0.0
    %261 = vmatpush.msra.mxu0 0.0
    %262 = vmatpush.msra.mxu0 0.0
    %263 = vmatpush.msra.mxu0 0.0
    %264 = vmatpush.msra.mxu0 0.0
    %265 = vmatpush.msra.mxu0 0.0
    %266 = vmatpush.msra.mxu0 %v243
    %267 = vmatpush.msra.mxu0 %v240
    %268 = vmatpush.msra.mxu0 %v237
    %269 = vmatpush.msra.mxu0 %v234
    %270 = vmatpush.msra.mxu0 %v231
    %271 = vmatpush.msra.mxu0 %v228
    %272 = vmatpush.msra.mxu0 %v225
    %273 = vmatpush.msra.mxu0 %v222
    %274 = vmatmul.f32.gmra.mxu0 %v256
    %v275 = vpop.f32.mrf.mxu0
    %v276 = vadd.f32 %v248, %v275
    %277 = vdwg.mxu0
    %278 = vmatpush.msra.mxu0 0.0
    %279 = vmatpush.msra.mxu0 0.0
    %280 = vmatpush.msra.mxu0 0.0
    %281 = vmatpush.msra.mxu0 0.0
    %282 = vmatpush.msra.mxu0 0.0
    %283 = vmatpush.msra.mxu0 0.0
    %284 = vmatpush.msra.mxu0 0.0
    %285 = vmatpush.msra.mxu0 0.0
    %286 = vmatpush.msra.mxu0 %v244
    %287 = vmatpush.msra.mxu0 %v241
    %288 = vmatpush.msra.mxu0 %v238
    %289 = vmatpush.msra.mxu0 %v235
    %290 = vmatpush.msra.mxu0 %v232
    %291 = vmatpush.msra.mxu0 %v229
    %292 = vmatpush.msra.mxu0 %v226
    %293 = vmatpush.msra.mxu0 %v223
    %294 = vmatmul.f32.gmra.mxu0 %v256
    %v295 = vpop.f32.mrf.mxu0
    %v296 = vadd.f32 %v249, %v295
    %297 = vdwg.mxu0
    %298 = vmatpush.msra.mxu0 0.0
    %299 = vmatpush.msra.mxu0 0.0
    %300 = vmatpush.msra.mxu0 0.0
    %301 = vmatpush.msra.mxu0 0.0
    %302 = vmatpush.msra.mxu0 0.0
    %303 = vmatpush.msra.mxu0 0.0
    %304 = vmatpush.msra.mxu0 0.0
    %305 = vmatpush.msra.mxu0 0.0
    %306 = vmatpush.msra.mxu0 %v245
    %307 = vmatpush.msra.mxu0 %v242
    %308 = vmatpush.msra.mxu0 %v239
    %309 = vmatpush.msra.mxu0 %v236
    %310 = vmatpush.msra.mxu0 %v233
    %311 = vmatpush.msra.mxu0 %v230
    %312 = vmatpush.msra.mxu0 %v227
    %313 = vmatpush.msra.mxu0 %v224
    %314 = vmatmul.f32.gmra.mxu0 %v256
    %v315 = vpop.f32.mrf.mxu0
    %v316 = vadd.f32 %v250, %v315
    %317 = vdwg.mxu0
    %vm318 = vcmp.gt.f32.partialorder %v276, 0.0
    %vm319 = vcmp.gt.f32.partialorder %v296, 0.0
    %vm320 = vcmp.gt.f32.partialorder %v316, 0.0
    %v321 = vmin.f32 %v276, 0.0
    %v322 = vmin.f32 %v296, 0.0
    %v323 = vmin.f32 %v316, 0.0
    %v324 = vmul.f32 %v321, 1.442695
    %v325 = vpow.pop %v324
    %v326 = vmul.f32 %v322, 1.442695
    %v327 = vpow.pop %v326
    %v328 = vmul.f32 %v323, 1.442695
    %v329 = vpow.pop %v328
    %v330 = vsub.f32 %v325, 1.0
    %v331 = vsub.f32 %v327, 1.0
    %v332 = vsub.f32 %v329, 1.0
    %v333 = vsel %vm318, %v276, %v330
    %v334 = vsel %vm319, %v296, %v331
    %v335 = vsel %vm320, %v316, %v332
    %v336 = vld [vmem:[#allocation8] sm:$0xff]
    %v337 = vld [vmem:[#allocation8 + $0x8] sm:$0xff]
    %v338 = vld [vmem:[#allocation8 + $0x10] sm:$0xff]
    %v339 = vld [vmem:[#allocation8 + $0x18] sm:$0xff]
    %v340 = vld [vmem:[#allocation8 + $0x20] sm:$0xff]
    %v341 = vld [vmem:[#allocation8 + $0x28] sm:$0xff]
    %v342 = vld [vmem:[#allocation8 + $0x30] sm:$0xff]
    %v343 = vld [vmem:[#allocation8 + $0x38] sm:$0xff]
    %v344 = vld [vmem:[#allocation8 + $0x40] sm:$0xff]
    %v345 = vld [vmem:[#allocation8 + $0x48] sm:$0xff]
    %v346 = vld [vmem:[#allocation8 + $0x50] sm:$0xff]
    %v347 = vld [vmem:[#allocation8 + $0x58] sm:$0xff]
    %v348 = vld [vmem:[#allocation8 + $0x60] sm:$0xff]
    %v349 = vld [vmem:[#allocation8 + $0x68] sm:$0xff]
    %v350 = vld [vmem:[#allocation8 + $0x70] sm:$0xff]
    %v351 = vld [vmem:[#allocation8 + $0x78] sm:$0xff]
    %v352 = vld [vmem:[#allocation8 + $0x80] sm:$0xff]
    %v353 = vld [vmem:[#allocation8 + $0x88] sm:$0xff]
    %v354 = vld [vmem:[#allocation8 + $0x90] sm:$0xff]
    %v355 = vld [vmem:[#allocation8 + $0x98] sm:$0xff]
    %v356 = vld [vmem:[#allocation8 + $0xa0] sm:$0xff]
    %v357 = vld [vmem:[#allocation8 + $0xa8] sm:$0xff]
    %v358 = vld [vmem:[#allocation8 + $0xb0] sm:$0xff]
    %v359 = vld [vmem:[#allocation8 + $0xb8] sm:$0xff]
    %v360 = vld [vmem:[#allocation8 + $0xc0] sm:$0xff]
    %v361 = vld [vmem:[#allocation8 + $0xc8] sm:$0xff]
    %v362 = vld [vmem:[#allocation8 + $0xd0] sm:$0xff]
    %v363 = vld [vmem:[#allocation8 + $0xd8] sm:$0xff]
    %v364 = vld [vmem:[#allocation8 + $0xe0] sm:$0xff]
    %v365 = vld [vmem:[#allocation8 + $0xe8] sm:$0xff]
    %v366 = vld [vmem:[#allocation8 + $0xf0] sm:$0xff]
    %v367 = vld [vmem:[#allocation8 + $0xf8] sm:$0xff]
    %v368 = vld [vmem:[#allocation8 + $0x100] sm:$0xff]
    %v369 = vld [vmem:[#allocation8 + $0x108] sm:$0xff]
    %v370 = vld [vmem:[#allocation8 + $0x110] sm:$0xff]
    %v371 = vld [vmem:[#allocation8 + $0x118] sm:$0xff]
    %v372 = vld [vmem:[#allocation8 + $0x120] sm:$0xff]
    %v373 = vld [vmem:[#allocation8 + $0x128] sm:$0xf]
    %v374 = vld [vmem:[#allocation9] sm:$0x1]
    %v376 = vperm.slane %v374, 0
    %vm378 = vcmask 359424
    %v380 = vsel %vm378, %v335, 0
    %vm382 = vcmask 1043456
    %v384 = vsel %vm382, %v373, 0
    %386 = vmatpush.msra.mxu0 %v351
    %387 = vmatpush.msra.mxu0 %v350
    %388 = vmatpush.msra.mxu0 %v349
    %389 = vmatpush.msra.mxu0 %v348
    %390 = vmatpush.msra.mxu0 %v347
    %391 = vmatpush.msra.mxu0 %v346
    %392 = vmatpush.msra.mxu0 %v345
    %393 = vmatpush.msra.mxu0 %v344
    %394 = vmatpush.msra.mxu0 %v343
    %395 = vmatpush.msra.mxu0 %v342
    %396 = vmatpush.msra.mxu0 %v341
    %397 = vmatpush.msra.mxu0 %v340
    %398 = vmatpush.msra.mxu0 %v339
    %399 = vmatpush.msra.mxu0 %v338
    %400 = vmatpush.msra.mxu0 %v337
    %401 = vmatpush.msra.mxu0 %v336
    %402 = vmatmul.f32.gmra.mxu0 %v333
    %v403 = vpop.f32.mrf.mxu0
    %v404 = vadd.f32 %v376, %v403
    %405 = vdwg.mxu0
    %406 = vmatpush.msra.mxu0 %v367
    %407 = vmatpush.msra.mxu0 %v366
    %408 = vmatpush.msra.mxu0 %v365
    %409 = vmatpush.msra.mxu0 %v364
    %410 = vmatpush.msra.mxu0 %v363
    %411 = vmatpush.msra.mxu0 %v362
    %412 = vmatpush.msra.mxu0 %v361
    %413 = vmatpush.msra.mxu0 %v360
    %414 = vmatpush.msra.mxu0 %v359
    %415 = vmatpush.msra.mxu0 %v358
    %416 = vmatpush.msra.mxu0 %v357
    %417 = vmatpush.msra.mxu0 %v356
    %418 = vmatpush.msra.mxu0 %v355
    %419 = vmatpush.msra.mxu0 %v354
    %420 = vmatpush.msra.mxu0 %v353
    %421 = vmatpush.msra.mxu0 %v352
    %422 = vmatmul.f32.gmra.mxu0 %v334
    %v423 = vpop.f32.mrf.mxu0
    %v424 = vadd.f32 %v404, %v423
    %425 = vdwg.mxu0
    %426 = vmatpush.msra.mxu0 0.0
    %427 = vmatpush.msra.mxu0 0.0
    %428 = vmatpush.msra.mxu0 0.0
    %429 = vmatpush.msra.mxu0 0.0
    %430 = vmatpush.msra.mxu0 0.0
    %431 = vmatpush.msra.mxu0 0.0
    %432 = vmatpush.msra.mxu0 0.0
    %433 = vmatpush.msra.mxu0 0.0
    %434 = vmatpush.msra.mxu0 0.0
    %435 = vmatpush.msra.mxu0 0.0
    %436 = vmatpush.msra.mxu0 %v384
    %437 = vmatpush.msra.mxu0 %v372
    %438 = vmatpush.msra.mxu0 %v371
    %439 = vmatpush.msra.mxu0 %v370
    %440 = vmatpush.msra.mxu0 %v369
    %441 = vmatpush.msra.mxu0 %v368
    %442 = vmatmul.f32.gmra.mxu0 %v380
    %v443 = vpop.f32.mrf.mxu0
    %v444 = vadd.f32 %v424, %v443
    %445 = vdwg.mxu0
    %vm446 = vcmp.gt.f32.partialorder %v444, 0.0
    %v447 = vmin.f32 %v444, 0.0
    %v448 = vmul.f32 %v447, 1.442695
    %v449 = vpow.pop %v448
    %v450 = vsub.f32 %v449, 1.0
    %v451 = vsel %vm446, %v444, %v450
    %v452 = vld [vmem:[%s7] sm:$0xff]
    %v453 = vld [vmem:[%s7 + $0x8] sm:$0xff]
    %v454 = vld [vmem:[%s7 + $0x10] sm:$0xff]
    %v455 = vld [vmem:[%s7 + $0x18] sm:$0xff]
    %v456 = vld [vmem:[%s7 + $0x20] sm:$0xff]
    %v457 = vld [vmem:[%s7 + $0x28] sm:$0xff]
    %v458 = vld [vmem:[%s7 + $0x30] sm:$0xff]
    %v459 = vld [vmem:[%s7 + $0x38] sm:$0xff]
    %v460 = vld [vmem:[%s7 + $0x40] sm:$0xff]
    %v461 = vld [vmem:[%s7 + $0x48] sm:$0xff]
    %v462 = vld [vmem:[%s7 + $0x50] sm:$0xff]
    %v463 = vld [vmem:[%s7 + $0x58] sm:$0xff]
    %v464 = vld [vmem:[%s7 + $0x60] sm:$0xf]
    %v465 = vld [vmem:[#allocation11] sm:$0x1]
    %v467 = vperm.slane %v465, 0
    %vm469 = vcmask 818176
    %v471 = vsel %vm469, %v451, 0
    %v474 = vsel %vm382, %v464, 0
    %476 = vmatpush.msra.mxu0 0.0
    %477 = vmatpush.msra.mxu0 0.0
    %478 = vmatpush.msra.mxu0 0.0
    %479 = vmatpush.msra.mxu0 %v474
    %480 = vmatpush.msra.mxu0 %v463
    %481 = vmatpush.msra.mxu0 %v462
    %482 = vmatpush.msra.mxu0 %v461
    %483 = vmatpush.msra.mxu0 %v460
    %484 = vmatpush.msra.mxu0 %v459
    %485 = vmatpush.msra.mxu0 %v458
    %486 = vmatpush.msra.mxu0 %v457
    %487 = vmatpush.msra.mxu0 %v456
    %488 = vmatpush.msra.mxu0 %v455
    %489 = vmatpush.msra.mxu0 %v454
    %490 = vmatpush.msra.mxu0 %v453
    %491 = vmatpush.msra.mxu0 %v452
    %492 = vmatmul.f32.gmra.mxu0 %v471
    %v493 = vpop.f32.mrf.mxu0
    %v494 = vadd.f32 %v467, %v493
    %495 = vdwg.mxu0
    %v496 = vld [vmem:[%s1] sm:$0xff]
    %v497 = vld [vmem:[%s2] sm:$0xff]
    %v498 = vld [vmem:[%s9] sm:$0xff]
    %v499 = vld [vmem:[%s9 + $0x8] sm:$0xff]
    %v500 = vld [vmem:[%s9 + $0x10] sm:$0x1f]
    %v501 = vlaneseq
    %v502 = vand.u32 %v501, 127
    %503 = vset.pattern.permute.xlu0 0
    %504 = vperm.xlu0 %503, %v496
    %v505 = vpop.permute.xlu0 %504
    %vm506 = vcmp.eq.s32.totalorder %v502, %v505
    %v507 = vsel %vm506, 1, 0
    %v508 = vcvt.s32.f32 %v507
    %vm509 = vcmask 171008
    %v511 = vsel %vm509, %v508, 0
    %vm513 = vcmask 1044480
    %v515 = vsel %vm513, %v500, 0
    %517 = vmatpush.msra.mxu0 0.0
    %518 = vmatpush.msra.mxu0 0.0
    %519 = vmatpush.msra.mxu0 0.0
    %520 = vmatpush.msra.mxu0 0.0
    %521 = vmatpush.msra.mxu0 0.0
    %522 = vmatpush.msra.mxu0 0.0
    %523 = vmatpush.msra.mxu0 0.0
    %524 = vmatpush.msra.mxu0 0.0
    %525 = vmatpush.msra.mxu0 0.0
    %526 = vmatpush.msra.mxu0 0.0
    %527 = vmatpush.msra.mxu0 0.0
    %528 = vmatpush.msra.mxu0 0.0
    %529 = vmatpush.msra.mxu0 0.0
    %530 = vmatpush.msra.mxu0 %v515
    %531 = vmatpush.msra.mxu0 %v499
    %532 = vmatpush.msra.mxu0 %v498
    %533 = vmatmul.f32.gmra.mxu0 %v511
    %v534 = vpop.f32.mrf.mxu0
    %v535 = vadd.f32 0.0, %v534
    %536 = vdwg.mxu0
    %v537 = vld [vmem:[#allocation12] sm:$0xff]
    %v538 = vld [vmem:[#allocation12 + $0x8] sm:$0xff]
    %v539 = vld [vmem:[%s11] sm:$0xff]
    %v540 = vld [vmem:[%s11 + $0x8] sm:$0xff]
    %v541 = vld [vmem:[%s11 + $0x10] sm:$0xff]
    %v542 = vld [vmem:[%s11 + $0x18] sm:$0xff]
    %vm543 = vcmask 261120
    %v545 = vsel %vm543, 0.0, 0
    %547 = vmatpush.msra.mxu0 0.0
    %548 = vmatpush.msra.mxu0 0.0
    %549 = vmatpush.msra.mxu0 0.0
    %550 = vmatpush.msra.mxu0 0.0
    %551 = vmatpush.msra.mxu0 0.0
    %552 = vmatpush.msra.mxu0 0.0
    %553 = vmatpush.msra.mxu0 0.0
    %554 = vmatpush.msra.mxu0 0.0
    %555 = vmatpush.msra.mxu0 0.0
    %556 = vmatpush.msra.mxu0 0.0
    %557 = vmatpush.msra.mxu0 0.0
    %558 = vmatpush.msra.mxu0 0.0
    %559 = vmatpush.msra.mxu0 %v542
    %560 = vmatpush.msra.mxu0 %v541
    %561 = vmatpush.msra.mxu0 %v540
    %562 = vmatpush.msra.mxu0 %v539
    %563 = vmatmul.f32.gmra.mxu0 %v545
    %v564 = vpop.f32.mrf.mxu0
    %v565 = vadd.f32 0.0, %v564
    %566 = vdwg.mxu0
    %vm567 = vcmask 130048
    %v569 = vsel %vm567, %v535, 0
    %571 = vmatpush.msra.mxu0 0.0
    %572 = vmatpush.msra.mxu0 0.0
    %573 = vmatpush.msra.mxu0 0.0
    %574 = vmatpush.msra.mxu0 0.0
    %575 = vmatpush.msra.mxu0 0.0
    %576 = vmatpush.msra.mxu0 0.0
    %577 = vmatpush.msra.mxu0 0.0
    %578 = vmatpush.msra.mxu0 0.0
    %579 = vmatpush.msra.mxu0 0.0
    %580 = vmatpush.msra.mxu0 0.0
    %581 = vmatpush.msra.mxu0 0.0
    %582 = vmatpush.msra.mxu0 0.0
    %583 = vmatpush.msra.mxu0 0.0
    %584 = vmatpush.msra.mxu0 0.0
    %585 = vmatpush.msra.mxu0 %v538
    %586 = vmatpush.msra.mxu0 %v537
    %587 = vmatmul.f32.gmra.mxu0 %v569
    %v588 = vpop.f32.mrf.mxu0
    %v589 = vadd.f32 %v565, %v588
    %590 = vdwg.mxu0
    %v591 = vld [vmem:[%s12] sm:$0x1]
    %v593 = vperm.slane %v591, 0
    %v595 = vadd.f32 %v589, %v593
    %v596 = vsub.f32 0.0, %v595
    %v597 = vmul.f32 %v596, 1.442695
    %v598 = vpow.pop %v597
    %v599 = vadd.f32 %v598, 1.0
    %v600 = vrcp.pop %v599
    %s601 = scalar_lea.vmem [#allocation12], 16
    %v602 = vld [vmem:[%s601] sm:$0xff]
    %v603 = vld [vmem:[%s601 + $0x8] sm:$0xff]
    %s604 = scalar_lea.vmem %s11, 32
    %v605 = vld [vmem:[%s604] sm:$0xff]
    %v606 = vld [vmem:[%s604 + $0x8] sm:$0xff]
    %v607 = vld [vmem:[%s604 + $0x10] sm:$0xff]
    %v608 = vld [vmem:[%s604 + $0x18] sm:$0xff]
    %609 = vmatpush.msra.mxu0 0.0
    %610 = vmatpush.msra.mxu0 0.0
    %611 = vmatpush.msra.mxu0 0.0
    %612 = vmatpush.msra.mxu0 0.0
    %613 = vmatpush.msra.mxu0 0.0
    %614 = vmatpush.msra.mxu0 0.0
    %615 = vmatpush.msra.mxu0 0.0
    %616 = vmatpush.msra.mxu0 0.0
    %617 = vmatpush.msra.mxu0 0.0
    %618 = vmatpush.msra.mxu0 0.0
    %619 = vmatpush.msra.mxu0 0.0
    %620 = vmatpush.msra.mxu0 0.0
    %621 = vmatpush.msra.mxu0 %v608
    %622 = vmatpush.msra.mxu0 %v607
    %623 = vmatpush.msra.mxu0 %v606
    %624 = vmatpush.msra.mxu0 %v605
    %625 = vmatmul.f32.gmra.mxu0 %v545
    %v626 = vpop.f32.mrf.mxu0
    %v627 = vadd.f32 0.0, %v626
    %628 = vdwg.mxu0
    %629 = vmatpush.msra.mxu0 0.0
    %630 = vmatpush.msra.mxu0 0.0
    %631 = vmatpush.msra.mxu0 0.0
    %632 = vmatpush.msra.mxu0 0.0
    %633 = vmatpush.msra.mxu0 0.0
    %634 = vmatpush.msra.mxu0 0.0
    %635 = vmatpush.msra.mxu0 0.0
    %636 = vmatpush.msra.mxu0 0.0
    %637 = vmatpush.msra.mxu0 0.0
    %638 = vmatpush.msra.mxu0 0.0
    %639 = vmatpush.msra.mxu0 0.0
    %640 = vmatpush.msra.mxu0 0.0
    %641 = vmatpush.msra.mxu0 0.0
    %642 = vmatpush.msra.mxu0 0.0
    %643 = vmatpush.msra.mxu0 %v603
    %644 = vmatpush.msra.mxu0 %v602
    %645 = vmatmul.f32.gmra.mxu0 %v569
    %v646 = vpop.f32.mrf.mxu0
    %v647 = vadd.f32 %v627, %v646
    %648 = vdwg.mxu0
    %s649 = scalar_lea.vmem %s12, 1
    %v650 = vld [vmem:[%s649] sm:$0x1]
    %v652 = vperm.slane %v650, 0
    %v654 = vadd.f32 %v647, %v652
    %v655 = vsub.f32 0.0, %v654
    %v656 = vmul.f32 %v655, 1.442695
    %v657 = vpow.pop %v656
    %v658 = vadd.f32 %v657, 1.0
    %v659 = vrcp.pop %v658
    %s660 = scalar_lea.vmem [#allocation12], 32
    %v661 = vld [vmem:[%s660] sm:$0xff]
    %v662 = vld [vmem:[%s660 + $0x8] sm:$0xff]
    %s663 = scalar_lea.vmem %s11, 64
    %v664 = vld [vmem:[%s663] sm:$0xff]
    %v665 = vld [vmem:[%s663 + $0x8] sm:$0xff]
    %v666 = vld [vmem:[%s663 + $0x10] sm:$0xff]
    %v667 = vld [vmem:[%s663 + $0x18] sm:$0xff]
    %668 = vmatpush.msra.mxu0 0.0
    %669 = vmatpush.msra.mxu0 0.0
    %670 = vmatpush.msra.mxu0 0.0
    %671 = vmatpush.msra.mxu0 0.0
    %672 = vmatpush.msra.mxu0 0.0
    %673 = vmatpush.msra.mxu0 0.0
    %674 = vmatpush.msra.mxu0 0.0
    %675 = vmatpush.msra.mxu0 0.0
    %676 = vmatpush.msra.mxu0 0.0
    %677 = vmatpush.msra.mxu0 0.0
    %678 = vmatpush.msra.mxu0 0.0
    %679 = vmatpush.msra.mxu0 0.0
    %680 = vmatpush.msra.mxu0 %v667
    %681 = vmatpush.msra.mxu0 %v666
    %682 = vmatpush.msra.mxu0 %v665
    %683 = vmatpush.msra.mxu0 %v664
    %684 = vmatmul.f32.gmra.mxu0 %v545
    %v685 = vpop.f32.mrf.mxu0
    %v686 = vadd.f32 0.0, %v685
    %687 = vdwg.mxu0
    %688 = vmatpush.msra.mxu0 0.0
    %689 = vmatpush.msra.mxu0 0.0
    %690 = vmatpush.msra.mxu0 0.0
    %691 = vmatpush.msra.mxu0 0.0
    %692 = vmatpush.msra.mxu0 0.0
    %693 = vmatpush.msra.mxu0 0.0
    %694 = vmatpush.msra.mxu0 0.0
    %695 = vmatpush.msra.mxu0 0.0
    %696 = vmatpush.msra.mxu0 0.0
    %697 = vmatpush.msra.mxu0 0.0
    %698 = vmatpush.msra.mxu0 0.0
    %699 = vmatpush.msra.mxu0 0.0
    %700 = vmatpush.msra.mxu0 0.0
    %701 = vmatpush.msra.mxu0 0.0
    %702 = vmatpush.msra.mxu0 %v662
    %703 = vmatpush.msra.mxu0 %v661
    %704 = vmatmul.f32.gmra.mxu0 %v569
    %v705 = vpop.f32.mrf.mxu0
    %v706 = vadd.f32 %v686, %v705
    %707 = vdwg.mxu0
    %s708 = scalar_lea.vmem %s12, 2
    %v709 = vld [vmem:[%s708] sm:$0x1]
    %v711 = vperm.slane %v709, 0
    %v713 = vadd.f32 %v706, %v711
    %v714 = vtanh.pop %v713
    %s715 = scalar_lea.vmem [#allocation12], 48
    %v716 = vld [vmem:[%s715] sm:$0xff]
    %v717 = vld [vmem:[%s715 + $0x8] sm:$0xff]
    %s718 = scalar_lea.vmem %s11, 96
    %v719 = vld [vmem:[%s718] sm:$0xff]
    %v720 = vld [vmem:[%s718 + $0x8] sm:$0xff]
    %v721 = vld [vmem:[%s718 + $0x10] sm:$0xff]
    %v722 = vld [vmem:[%s718 + $0x18] sm:$0xff]
    %723 = vmatpush.msra.mxu0 0.0
    %724 = vmatpush.msra.mxu0 0.0
    %725 = vmatpush.msra.mxu0 0.0
    %726 = vmatpush.msra.mxu0 0.0
    %727 = vmatpush.msra.mxu0 0.0
    %728 = vmatpush.msra.mxu0 0.0
    %729 = vmatpush.msra.mxu0 0.0
    %730 = vmatpush.msra.mxu0 0.0
    %731 = vmatpush.msra.mxu0 0.0
    %732 = vmatpush.msra.mxu0 0.0
    %733 = vmatpush.msra.mxu0 0.0
    %734 = vmatpush.msra.mxu0 0.0
    %735 = vmatpush.msra.mxu0 %v722
    %736 = vmatpush.msra.mxu0 %v721
    %737 = vmatpush.msra.mxu0 %v720
    %738 = vmatpush.msra.mxu0 %v719
    %739 = vmatmul.f32.gmra.mxu0 %v545
    %v740 = vpop.f32.mrf.mxu0
    %v741 = vadd.f32 0.0, %v740
    %742 = vdwg.mxu0
    %743 = vmatpush.msra.mxu0 0.0
    %744 = vmatpush.msra.mxu0 0.0
    %745 = vmatpush.msra.mxu0 0.0
    %746 = vmatpush.msra.mxu0 0.0
    %747 = vmatpush.msra.mxu0 0.0
    %748 = vmatpush.msra.mxu0 0.0
    %749 = vmatpush.msra.mxu0 0.0
    %750 = vmatpush.msra.mxu0 0.0
    %751 = vmatpush.msra.mxu0 0.0
    %752 = vmatpush.msra.mxu0 0.0
    %753 = vmatpush.msra.mxu0 0.0
    %754 = vmatpush.msra.mxu0 0.0
    %755 = vmatpush.msra.mxu0 0.0
    %756 = vmatpush.msra.mxu0 0.0
    %757 = vmatpush.msra.mxu0 %v717
    %758 = vmatpush.msra.mxu0 %v716
    %759 = vmatmul.f32.gmra.mxu0 %v569
    %v760 = vpop.f32.mrf.mxu0
    %v761 = vadd.f32 %v741, %v760
    %762 = vdwg.mxu0
    %s763 = scalar_lea.vmem %s12, 3
    %v764 = vld [vmem:[%s763] sm:$0x1]
    %v766 = vperm.slane %v764, 0
    %v768 = vadd.f32 %v761, %v766
    %v769 = vsub.f32 0.0, %v768
    %v770 = vmul.f32 %v769, 1.442695
    %v771 = vpow.pop %v770
    %v772 = vadd.f32 %v771, 1.0
    %v773 = vrcp.pop %v772
    %v774 = vmul.f32 %v659, 0.0
    %v775 = vmul.f32 %v600, %v714
    %v776 = vadd.f32 %v774, %v775
    %v777 = vtanh.pop %v776
    %v778 = vmul.f32 %v773, %v777
    %v779 = vld [vmem:[#allocation14] sm:$0xff]
    %v780 = vld [vmem:[#allocation14 + $0x8] sm:$0xff]
    %v781 = vld [vmem:[#allocation14 + $0x10] sm:$0xff]
    %v782 = vld [vmem:[#allocation14 + $0x18] sm:$0xff]
    %v783 = vld [vmem:[#allocation15] sm:$0xff]
    %v784 = vld [vmem:[#allocation15 + $0x8] sm:$0xff]
    %v785 = vld [vmem:[#allocation15 + $0x10] sm:$0xff]
    %v786 = vld [vmem:[#allocation15 + $0x18] sm:$0xff]
    %787 = vmatpush.msra.mxu0 0.0
    %788 = vmatpush.msra.mxu0 0.0
    %789 = vmatpush.msra.mxu0 0.0
    %790 = vmatpush.msra.mxu0 0.0
    %791 = vmatpush.msra.mxu0 0.0
    %792 = vmatpush.msra.mxu0 0.0
    %793 = vmatpush.msra.mxu0 0.0
    %794 = vmatpush.msra.mxu0 0.0
    %795 = vmatpush.msra.mxu0 0.0
    %796 = vmatpush.msra.mxu0 0.0
    %797 = vmatpush.msra.mxu0 0.0
    %798 = vmatpush.msra.mxu0 0.0
    %799 = vmatpush.msra.mxu0 %v786
    %800 = vmatpush.msra.mxu0 %v785
    %801 = vmatpush.msra.mxu0 %v784
    %802 = vmatpush.msra.mxu0 %v783
    %803 = vmatmul.f32.gmra.mxu0 %v545
    %v804 = vpop.f32.mrf.mxu0
    %v805 = vadd.f32 0.0, %v804
    %806 = vdwg.mxu0
    %v808 = vsel %vm543, %v778, 0
    %810 = vmatpush.msra.mxu0 0.0
    %811 = vmatpush.msra.mxu0 0.0
    %812 = vmatpush.msra.mxu0 0.0
    %813 = vmatpush.msra.mxu0 0.0
    %814 = vmatpush.msra.mxu0 0.0
    %815 = vmatpush.msra.mxu0 0.0
    %816 = vmatpush.msra.mxu0 0.0
    %817 = vmatpush.msra.mxu0 0.0
    %818 = vmatpush.msra.mxu0 0.0
    %819 = vmatpush.msra.mxu0 0.0
    %820 = vmatpush.msra.mxu0 0.0
    %821 = vmatpush.msra.mxu0 0.0
    %822 = vmatpush.msra.mxu0 %v782
    %823 = vmatpush.msra.mxu0 %v781
    %824 = vmatpush.msra.mxu0 %v780
    %825 = vmatpush.msra.mxu0 %v779
    %826 = vmatmul.f32.gmra.mxu0 %v808
    %v827 = vpop.f32.mrf.mxu0
    %v828 = vadd.f32 %v805, %v827
    %829 = vdwg.mxu0
    %v830 = vld [vmem:[#allocation17] sm:$0x1]
    %v832 = vperm.slane %v830, 0
    %v834 = vadd.f32 %v828, %v832
    %v835 = vsub.f32 0.0, %v834
    %v836 = vmul.f32 %v835, 1.442695
    %v837 = vpow.pop %v836
    %v838 = vadd.f32 %v837, 1.0
    %v839 = vrcp.pop %v838
    %s840 = scalar_lea.vmem [#allocation14], 32
    %v841 = vld [vmem:[%s840] sm:$0xff]
    %v842 = vld [vmem:[%s840 + $0x8] sm:$0xff]
    %v843 = vld [vmem:[%s840 + $0x10] sm:$0xff]
    %v844 = vld [vmem:[%s840 + $0x18] sm:$0xff]
    %s845 = scalar_lea.vmem [#allocation15], 32
    %v846 = vld [vmem:[%s845] sm:$0xff]
    %v847 = vld [vmem:[%s845 + $0x8] sm:$0xff]
    %v848 = vld [vmem:[%s845 + $0x10] sm:$0xff]
    %v849 = vld [vmem:[%s845 + $0x18] sm:$0xff]
    %850 = vmatpush.msra.mxu0 0.0
    %851 = vmatpush.msra.mxu0 0.0
    %852 = vmatpush.msra.mxu0 0.0
    %853 = vmatpush.msra.mxu0 0.0
    %854 = vmatpush.msra.mxu0 0.0
    %855 = vmatpush.msra.mxu0 0.0
    %856 = vmatpush.msra.mxu0 0.0
    %857 = vmatpush.msra.mxu0 0.0
    %858 = vmatpush.msra.mxu0 0.0
    %859 = vmatpush.msra.mxu0 0.0
    %860 = vmatpush.msra.mxu0 0.0
    %861 = vmatpush.msra.mxu0 0.0
    %862 = vmatpush.msra.mxu0 %v849
    %863 = vmatpush.msra.mxu0 %v848
    %864 = vmatpush.msra.mxu0 %v847
    %865 = vmatpush.msra.mxu0 %v846
    %866 = vmatmul.f32.gmra.mxu0 %v545
    %v867 = vpop.f32.mrf.mxu0
    %v868 = vadd.f32 0.0, %v867
    %869 = vdwg.mxu0
    %870 = vmatpush.msra.mxu0 0.0
    %871 = vmatpush.msra.mxu0 0.0
    %872 = vmatpush.msra.mxu0 0.0
    %873 = vmatpush.msra.mxu0 0.0
    %874 = vmatpush.msra.mxu0 0.0
    %875 = vmatpush.msra.mxu0 0.0
    %876 = vmatpush.msra.mxu0 0.0
    %877 = vmatpush.msra.mxu0 0.0
    %878 = vmatpush.msra.mxu0 0.0
    %879 = vmatpush.msra.mxu0 0.0
    %880 = vmatpush.msra.mxu0 0.0
    %881 = vmatpush.msra.mxu0 0.0
    %882 = vmatpush.msra.mxu0 %v844
    %883 = vmatpush.msra.mxu0 %v843
    %884 = vmatpush.msra.mxu0 %v842
    %885 = vmatpush.msra.mxu0 %v841
    %886 = vmatmul.f32.gmra.mxu0 %v808
    %v887 = vpop.f32.mrf.mxu0
    %v888 = vadd.f32 %v868, %v887
    %889 = vdwg.mxu0
    %s890 = scalar_lea.vmem [#allocation17], 1
    %v891 = vld [vmem:[%s890] sm:$0x1]
    %v893 = vperm.slane %v891, 0
    %v895 = vadd.f32 %v888, %v893
    %v896 = vsub.f32 0.0, %v895
    %v897 = vmul.f32 %v896, 1.442695
    %v898 = vpow.pop %v897
    %v899 = vadd.f32 %v898, 1.0
    %v900 = vrcp.pop %v899
    %s901 = scalar_lea.vmem [#allocation14], 64
    %v902 = vld [vmem:[%s901] sm:$0xff]
    %v903 = vld [vmem:[%s901 + $0x8] sm:$0xff]
    %v904 = vld [vmem:[%s901 + $0x10] sm:$0xff]
    %v905 = vld [vmem:[%s901 + $0x18] sm:$0xff]
    %s906 = scalar_lea.vmem [#allocation15], 64
    %v907 = vld [vmem:[%s906] sm:$0xff]
    %v908 = vld [vmem:[%s906 + $0x8] sm:$0xff]
    %v909 = vld [vmem:[%s906 + $0x10] sm:$0xff]
    %v910 = vld [vmem:[%s906 + $0x18] sm:$0xff]
    %911 = vmatpush.msra.mxu0 0.0
    %912 = vmatpush.msra.mxu0 0.0
    %913 = vmatpush.msra.mxu0 0.0
    %914 = vmatpush.msra.mxu0 0.0
    %915 = vmatpush.msra.mxu0 0.0
    %916 = vmatpush.msra.mxu0 0.0
    %917 = vmatpush.msra.mxu0 0.0
    %918 = vmatpush.msra.mxu0 0.0
    %919 = vmatpush.msra.mxu0 0.0
    %920 = vmatpush.msra.mxu0 0.0
    %921 = vmatpush.msra.mxu0 0.0
    %922 = vmatpush.msra.mxu0 0.0
    %923 = vmatpush.msra.mxu0 %v910
    %924 = vmatpush.msra.mxu0 %v909
    %925 = vmatpush.msra.mxu0 %v908
    %926 = vmatpush.msra.mxu0 %v907
    %927 = vmatmul.f32.gmra.mxu0 %v545
    %v928 = vpop.f32.mrf.mxu0
    %v929 = vadd.f32 0.0, %v928
    %930 = vdwg.mxu0
    %931 = vmatpush.msra.mxu0 0.0
    %932 = vmatpush.msra.mxu0 0.0
    %933 = vmatpush.msra.mxu0 0.0
    %934 = vmatpush.msra.mxu0 0.0
    %935 = vmatpush.msra.mxu0 0.0
    %936 = vmatpush.msra.mxu0 0.0
    %937 = vmatpush.msra.mxu0 0.0
    %938 = vmatpush.msra.mxu0 0.0
    %939 = vmatpush.msra.mxu0 0.0
    %940 = vmatpush.msra.mxu0 0.0
    %941 = vmatpush.msra.mxu0 0.0
    %942 = vmatpush.msra.mxu0 0.0
    %943 = vmatpush.msra.mxu0 %v905
    %944 = vmatpush.msra.mxu0 %v904
    %945 = vmatpush.msra.mxu0 %v903
    %946 = vmatpush.msra.mxu0 %v902
    %947 = vmatmul.f32.gmra.mxu0 %v808
    %v948 = vpop.f32.mrf.mxu0
    %v949 = vadd.f32 %v929, %v948
    %950 = vdwg.mxu0
    %s951 = scalar_lea.vmem [#allocation17], 2
    %v952 = vld [vmem:[%s951] sm:$0x1]
    %v954 = vperm.slane %v952, 0
    %v956 = vadd.f32 %v949, %v954
    %v957 = vtanh.pop %v956
    %s958 = scalar_lea.vmem [#allocation14], 96
    %v959 = vld [vmem:[%s958] sm:$0xff]
    %v960 = vld [vmem:[%s958 + $0x8] sm:$0xff]
    %v961 = vld [vmem:[%s958 + $0x10] sm:$0xff]
    %v962 = vld [vmem:[%s958 + $0x18] sm:$0xff]
    %s963 = scalar_lea.vmem [#allocation15], 96
    %v964 = vld [vmem:[%s963] sm:$0xff]
    %v965 = vld [vmem:[%s963 + $0x8] sm:$0xff]
    %v966 = vld [vmem:[%s963 + $0x10] sm:$0xff]
    %v967 = vld [vmem:[%s963 + $0x18] sm:$0xff]
    %968 = vmatpush.msra.mxu0 0.0
    %969 = vmatpush.msra.mxu0 0.0
    %970 = vmatpush.msra.mxu0 0.0
    %971 = vmatpush.msra.mxu0 0.0
    %972 = vmatpush.msra.mxu0 0.0
    %973 = vmatpush.msra.mxu0 0.0
    %974 = vmatpush.msra.mxu0 0.0
    %975 = vmatpush.msra.mxu0 0.0
    %976 = vmatpush.msra.mxu0 0.0
    %977 = vmatpush.msra.mxu0 0.0
    %978 = vmatpush.msra.mxu0 0.0
    %979 = vmatpush.msra.mxu0 0.0
    %980 = vmatpush.msra.mxu0 %v967
    %981 = vmatpush.msra.mxu0 %v966
    %982 = vmatpush.msra.mxu0 %v965
    %983 = vmatpush.msra.mxu0 %v964
    %984 = vmatmul.f32.gmra.mxu0 %v545
    %v985 = vpop.f32.mrf.mxu0
    %v986 = vadd.f32 0.0, %v985
    %987 = vdwg.mxu0
    %988 = vmatpush.msra.mxu0 0.0
    %989 = vmatpush.msra.mxu0 0.0
    %990 = vmatpush.msra.mxu0 0.0
    %991 = vmatpush.msra.mxu0 0.0
    %992 = vmatpush.msra.mxu0 0.0
    %993 = vmatpush.msra.mxu0 0.0
    %994 = vmatpush.msra.mxu0 0.0
    %995 = vmatpush.msra.mxu0 0.0
    %996 = vmatpush.msra.mxu0 0.0
    %997 = vmatpush.msra.mxu0 0.0
    %998 = vmatpush.msra.mxu0 0.0
    %999 = vmatpush.msra.mxu0 0.0
    %1000 = vmatpush.msra.mxu0 %v962
    %1001 = vmatpush.msra.mxu0 %v961
    %1002 = vmatpush.msra.mxu0 %v960
    %1003 = vmatpush.msra.mxu0 %v959
    %1004 = vmatmul.f32.gmra.mxu0 %v808
    %v1005 = vpop.f32.mrf.mxu0
    %v1006 = vadd.f32 %v986, %v1005
    %1007 = vdwg.mxu0
    %s1008 = scalar_lea.vmem [#allocation17], 3
    %v1009 = vld [vmem:[%s1008] sm:$0x1]
    %v1011 = vperm.slane %v1009, 0
    %v1013 = vadd.f32 %v1006, %v1011
    %v1014 = vsub.f32 0.0, %v1013
    %v1015 = vmul.f32 %v1014, 1.442695
    %v1016 = vpow.pop %v1015
    %v1017 = vadd.f32 %v1016, 1.0
    %v1018 = vrcp.pop %v1017
    %v1019 = vmul.f32 %v900, 0.0
    %v1020 = vmul.f32 %v839, %v957
    %v1021 = vadd.f32 %v1019, %v1020
    %v1022 = vtanh.pop %v1021
    %v1023 = vmul.f32 %v1018, %v1022
    %vm1024 = vcmp.eq.s32.totalorder %v497, 1
    %v1025 = vsel %vm1024, 1, 0
    %1026 = vset.pattern.permute.xlu0 0
    %1027 = vperm.xlu0 %1026, %v1025
    %v1028 = vpop.permute.xlu0 %1027
    %vm1029 = vcmp.eq.s32.totalorder %v1028, 1
    %v1030 = vsel %vm1029, %v1023, 0.0
    %1031 = vset.pattern.permute.xlu0 1
    %1032 = vperm.xlu0 %1031, %v496
    %v1033 = vpop.permute.xlu0 %1032
    %vm1034 = vcmp.eq.s32.totalorder %v502, %v1033
    %v1035 = vsel %vm1034, 1, 0
    %v1036 = vcvt.s32.f32 %v1035
    %v1038 = vsel %vm509, %v1036, 0
    %1040 = vmatpush.msra.mxu0 0.0
    %1041 = vmatpush.msra.mxu0 0.0
    %1042 = vmatpush.msra.mxu0 0.0
    %1043 = vmatpush.msra.mxu0 0.0
    %1044 = vmatpush.msra.mxu0 0.0
    %1045 = vmatpush.msra.mxu0 0.0
    %1046 = vmatpush.msra.mxu0 0.0
    %1047 = vmatpush.msra.mxu0 0.0
    %1048 = vmatpush.msra.mxu0 0.0
    %1049 = vmatpush.msra.mxu0 0.0
    %1050 = vmatpush.msra.mxu0 0.0
    %1051 = vmatpush.msra.mxu0 0.0
    %1052 = vmatpush.msra.mxu0 0.0
    %1053 = vmatpush.msra.mxu0 %v515
    %1054 = vmatpush.msra.mxu0 %v499
    %1055 = vmatpush.msra.mxu0 %v498
    %1056 = vmatmul.f32.gmra.mxu0 %v1038
    %v1057 = vpop.f32.mrf.mxu0
    %v1058 = vadd.f32 0.0, %v1057
    %1059 = vdwg.mxu0
    %1060 = vmatpush.msra.mxu0 0.0
    %1061 = vmatpush.msra.mxu0 0.0
    %1062 = vmatpush.msra.mxu0 0.0
    %1063 = vmatpush.msra.mxu0 0.0
    %1064 = vmatpush.msra.mxu0 0.0
    %1065 = vmatpush.msra.mxu0 0.0
    %1066 = vmatpush.msra.mxu0 0.0
    %1067 = vmatpush.msra.mxu0 0.0
    %1068 = vmatpush.msra.mxu0 0.0
    %1069 = vmatpush.msra.mxu0 0.0
    %1070 = vmatpush.msra.mxu0 0.0
    %1071 = vmatpush.msra.mxu0 0.0
    %1072 = vmatpush.msra.mxu0 %v542
    %1073 = vmatpush.msra.mxu0 %v541
    %1074 = vmatpush.msra.mxu0 %v540
    %1075 = vmatpush.msra.mxu0 %v539
    %1076 = vmatmul.f32.gmra.mxu0 %v808
    %v1077 = vpop.f32.mrf.mxu0
    %v1078 = vadd.f32 0.0, %v1077
    %1079 = vdwg.mxu0
    %v1081 = vsel %vm567, %v1058, 0
    %1083 = vmatpush.msra.mxu0 0.0
    %1084 = vmatpush.msra.mxu0 0.0
    %1085 = vmatpush.msra.mxu0 0.0
    %1086 = vmatpush.msra.mxu0 0.0
    %1087 = vmatpush.msra.mxu0 0.0
    %1088 = vmatpush.msra.mxu0 0.0
    %1089 = vmatpush.msra.mxu0 0.0
    %1090 = vmatpush.msra.mxu0 0.0
    %1091 = vmatpush.msra.mxu0 0.0
    %1092 = vmatpush.msra.mxu0 0.0
    %1093 = vmatpush.msra.mxu0 0.0
    %1094 = vmatpush.msra.mxu0 0.0
    %1095 = vmatpush.msra.mxu0 0.0
    %1096 = vmatpush.msra.mxu0 0.0
    %1097 = vmatpush.msra.mxu0 %v538
    %1098 = vmatpush.msra.mxu0 %v537
    %1099 = vmatmul.f32.gmra.mxu0 %v1081
    %v1100 = vpop.f32.mrf.mxu0
    %v1101 = vadd.f32 %v1078, %v1100
    %1102 = vdwg.mxu0
    %v1103 = vadd.f32 %v1101, %v593
    %v1104 = vsub.f32 0.0, %v1103
    %v1105 = vmul.f32 %v1104, 1.442695
    %v1106 = vpow.pop %v1105
    %v1107 = vadd.f32 %v1106, 1.0
    %v1108 = vrcp.pop %v1107
    %1109 = vmatpush.msra.mxu0 0.0
    %1110 = vmatpush.msra.mxu0 0.0
    %1111 = vmatpush.msra.mxu0 0.0
    %1112 = vmatpush.msra.mxu0 0.0
    %1113 = vmatpush.msra.mxu0 0.0
    %1114 = vmatpush.msra.mxu0 0.0
    %1115 = vmatpush.msra.mxu0 0.0
    %1116 = vmatpush.msra.mxu0 0.0
    %1117 = vmatpush.msra.mxu0 0.0
    %1118 = vmatpush.msra.mxu0 0.0
    %1119 = vmatpush.msra.mxu0 0.0
    %1120 = vmatpush.msra.mxu0 0.0
    %1121 = vmatpush.msra.mxu0 %v608
    %1122 = vmatpush.msra.mxu0 %v607
    %1123 = vmatpush.msra.mxu0 %v606
    %1124 = vmatpush.msra.mxu0 %v605
    %1125 = vmatmul.f32.gmra.mxu0 %v808
    %v1126 = vpop.f32.mrf.mxu0
    %v1127 = vadd.f32 0.0, %v1126
    %1128 = vdwg.mxu0
    %1129 = vmatpush.msra.mxu0 0.0
    %1130 = vmatpush.msra.mxu0 0.0
    %1131 = vmatpush.msra.mxu0 0.0
    %1132 = vmatpush.msra.mxu0 0.0
    %1133 = vmatpush.msra.mxu0 0.0
    %1134 = vmatpush.msra.mxu0 0.0
    %1135 = vmatpush.msra.mxu0 0.0
    %1136 = vmatpush.msra.mxu0 0.0
    %1137 = vmatpush.msra.mxu0 0.0
    %1138 = vmatpush.msra.mxu0 0.0
    %1139 = vmatpush.msra.mxu0 0.0
    %1140 = vmatpush.msra.mxu0 0.0
    %1141 = vmatpush.msra.mxu0 0.0
    %1142 = vmatpush.msra.mxu0 0.0
    %1143 = vmatpush.msra.mxu0 %v603
    %1144 = vmatpush.msra.mxu0 %v602
    %1145 = vmatmul.f32.gmra.mxu0 %v1081
    %v1146 = vpop.f32.mrf.mxu0
    %v1147 = vadd.f32 %v1127, %v1146
    %1148 = vdwg.mxu0
    %v1149 = vadd.f32 %v1147, %v652
    %v1150 = vsub.f32 0.0, %v1149
    %v1151 = vmul.f32 %v1150, 1.442695
    %v1152 = vpow.pop %v1151
    %v1153 = vadd.f32 %v1152, 1.0
    %v1154 = vrcp.pop %v1153
    %1155 = vmatpush.msra.mxu0 0.0
    %1156 = vmatpush.msra.mxu0 0.0
    %1157 = vmatpush.msra.mxu0 0.0
    %1158 = vmatpush.msra.mxu0 0.0
    %1159 = vmatpush.msra.mxu0 0.0
    %1160 = vmatpush.msra.mxu0 0.0
    %1161 = vmatpush.msra.mxu0 0.0
    %1162 = vmatpush.msra.mxu0 0.0
    %1163 = vmatpush.msra.mxu0 0.0
    %1164 = vmatpush.msra.mxu0 0.0
    %1165 = vmatpush.msra.mxu0 0.0
    %1166 = vmatpush.msra.mxu0 0.0
    %1167 = vmatpush.msra.mxu0 %v667
    %1168 = vmatpush.msra.mxu0 %v666
    %1169 = vmatpush.msra.mxu0 %v665
    %1170 = vmatpush.msra.mxu0 %v664
    %1171 = vmatmul.f32.gmra.mxu0 %v808
    %v1172 = vpop.f32.mrf.mxu0
    %v1173 = vadd.f32 0.0, %v1172
    %1174 = vdwg.mxu0
    %1175 = vmatpush.msra.mxu0 0.0
    %1176 = vmatpush.msra.mxu0 0.0
    %1177 = vmatpush.msra.mxu0 0.0
    %1178 = vmatpush.msra.mxu0 0.0
    %1179 = vmatpush.msra.mxu0 0.0
    %1180 = vmatpush.msra.mxu0 0.0
    %1181 = vmatpush.msra.mxu0 0.0
    %1182 = vmatpush.msra.mxu0 0.0
    %1183 = vmatpush.msra.mxu0 0.0
    %1184 = vmatpush.msra.mxu0 0.0
    %1185 = vmatpush.msra.mxu0 0.0
    %1186 = vmatpush.msra.mxu0 0.0
    %1187 = vmatpush.msra.mxu0 0.0
    %1188 = vmatpush.msra.mxu0 0.0
    %1189 = vmatpush.msra.mxu0 %v662
    %1190 = vmatpush.msra.mxu0 %v661
    %1191 = vmatmul.f32.gmra.mxu0 %v1081
    %v1192 = vpop.f32.mrf.mxu0
    %v1193 = vadd.f32 %v1173, %v1192
    %1194 = vdwg.mxu0
    %v1195 = vadd.f32 %v1193, %v711
    %v1196 = vtanh.pop %v1195
    %1197 = vmatpush.msra.mxu0 0.0
    %1198 = vmatpush.msra.mxu0 0.0
    %1199 = vmatpush.msra.mxu0 0.0
    %1200 = vmatpush.msra.mxu0 0.0
    %1201 = vmatpush.msra.mxu0 0.0
    %1202 = vmatpush.msra.mxu0 0.0
    %1203 = vmatpush.msra.mxu0 0.0
    %1204 = vmatpush.msra.mxu0 0.0
    %1205 = vmatpush.msra.mxu0 0.0
    %1206 = vmatpush.msra.mxu0 0.0
    %1207 = vmatpush.msra.mxu0 0.0
    %1208 = vmatpush.msra.mxu0 0.0
    %1209 = vmatpush.msra.mxu0 %v722
    %1210 = vmatpush.msra.mxu0 %v721
    %1211 = vmatpush.msra.mxu0 %v720
    %1212 = vmatpush.msra.mxu0 %v719
    %1213 = vmatmul.f32.gmra.mxu0 %v808
    %v1214 = vpop.f32.mrf.mxu0
    %v1215 = vadd.f32 0.0, %v1214
    %1216 = vdwg.mxu0
    %1217 = vmatpush.msra.mxu0 0.0
    %1218 = vmatpush.msra.mxu0 0.0
    %1219 = vmatpush.msra.mxu0 0.0
    %1220 = vmatpush.msra.mxu0 0.0
    %1221 = vmatpush.msra.mxu0 0.0
    %1222 = vmatpush.msra.mxu0 0.0
    %1223 = vmatpush.msra.mxu0 0.0
    %1224 = vmatpush.msra.mxu0 0.0
    %1225 = vmatpush.msra.mxu0 0.0
    %1226 = vmatpush.msra.mxu0 0.0
    %1227 = vmatpush.msra.mxu0 0.0
    %1228 = vmatpush.msra.mxu0 0.0
    %1229 = vmatpush.msra.mxu0 0.0
    %1230 = vmatpush.msra.mxu0 0.0
    %1231 = vmatpush.msra.mxu0 %v717
    %1232 = vmatpush.msra.mxu0 %v716
    %1233 = vmatmul.f32.gmra.mxu0 %v1081
    %v1234 = vpop.f32.mrf.mxu0
    %v1235 = vadd.f32 %v1215, %v1234
    %1236 = vdwg.mxu0
    %v1237 = vadd.f32 %v1235, %v766
    %v1238 = vsub.f32 0.0, %v1237
    %v1239 = vmul.f32 %v1238, 1.442695
    %v1240 = vpow.pop %v1239
    %v1241 = vadd.f32 %v1240, 1.0
    %v1242 = vrcp.pop %v1241
    %v1243 = vmul.f32 %v1154, %v776
    %v1244 = vmul.f32 %v1108, %v1196
    %v1245 = vadd.f32 %v1243, %v1244
    %v1246 = vtanh.pop %v1245
    %v1247 = vmul.f32 %v1242, %v1246
    %v1249 = vsel %vm543, %v1023, 0
    %1251 = vmatpush.msra.mxu0 0.0
    %1252 = vmatpush.msra.mxu0 0.0
    %1253 = vmatpush.msra.mxu0 0.0
    %1254 = vmatpush.msra.mxu0 0.0
    %1255 = vmatpush.msra.mxu0 0.0
    %1256 = vmatpush.msra.mxu0 0.0
    %1257 = vmatpush.msra.mxu0 0.0
    %1258 = vmatpush.msra.mxu0 0.0
    %1259 = vmatpush.msra.mxu0 0.0
    %1260 = vmatpush.msra.mxu0 0.0
    %1261 = vmatpush.msra.mxu0 0.0
    %1262 = vmatpush.msra.mxu0 0.0
    %1263 = vmatpush.msra.mxu0 %v786
    %1264 = vmatpush.msra.mxu0 %v785
    %1265 = vmatpush.msra.mxu0 %v784
    %1266 = vmatpush.msra.mxu0 %v783
    %1267 = vmatmul.f32.gmra.mxu0 %v1249
    %v1268 = vpop.f32.mrf.mxu0
    %v1269 = vadd.f32 0.0, %v1268
    %1270 = vdwg.mxu0
    %v1272 = vsel %vm543, %v1247, 0
    %1274 = vmatpush.msra.mxu0 0.0
    %1275 = vmatpush.msra.mxu0 0.0
    %1276 = vmatpush.msra.mxu0 0.0
    %1277 = vmatpush.msra.mxu0 0.0
    %1278 = vmatpush.msra.mxu0 0.0
    %1279 = vmatpush.msra.mxu0 0.0
    %1280 = vmatpush.msra.mxu0 0.0
    %1281 = vmatpush.msra.mxu0 0.0
    %1282 = vmatpush.msra.mxu0 0.0
    %1283 = vmatpush.msra.mxu0 0.0
    %1284 = vmatpush.msra.mxu0 0.0
    %1285 = vmatpush.msra.mxu0 0.0
    %1286 = vmatpush.msra.mxu0 %v782
    %1287 = vmatpush.msra.mxu0 %v781
    %1288 = vmatpush.msra.mxu0 %v780
    %1289 = vmatpush.msra.mxu0 %v779
    %1290 = vmatmul.f32.gmra.mxu0 %v1272
    %v1291 = vpop.f32.mrf.mxu0
    %v1292 = vadd.f32 %v1269, %v1291
    %1293 = vdwg.mxu0
    %v1294 = vadd.f32 %v1292, %v832
    %v1295 = vsub.f32 0.0, %v1294
    %v1296 = vmul.f32 %v1295, 1.442695
    %v1297 = vpow.pop %v1296
    %v1298 = vadd.f32 %v1297, 1.0
    %v1299 = vrcp.pop %v1298
    %1300 = vmatpush.msra.mxu0 0.0
    %1301 = vmatpush.msra.mxu0 0.0
    %1302 = vmatpush.msra.mxu0 0.0
    %1303 = vmatpush.msra.mxu0 0.0
    %1304 = vmatpush.msra.mxu0 0.0
    %1305 = vmatpush.msra.mxu0 0.0
    %1306 = vmatpush.msra.mxu0 0.0
    %1307 = vmatpush.msra.mxu0 0.0
    %1308 = vmatpush.msra.mxu0 0.0
    %1309 = vmatpush.msra.mxu0 0.0
    %1310 = vmatpush.msra.mxu0 0.0
    %1311 = vmatpush.msra.mxu0 0.0
    %1312 = vmatpush.msra.mxu0 %v849
    %1313 = vmatpush.msra.mxu0 %v848
    %1314 = vmatpush.msra.mxu0 %v847
    %1315 = vmatpush.msra.mxu0 %v846
    %1316 = vmatmul.f32.gmra.mxu0 %v1249
    %v1317 = vpop.f32.mrf.mxu0
    %v1318 = vadd.f32 0.0, %v1317
    %1319 = vdwg.mxu0
    %1320 = vmatpush.msra.mxu0 0.0
    %1321 = vmatpush.msra.mxu0 0.0
    %1322 = vmatpush.msra.mxu0 0.0
    %1323 = vmatpush.msra.mxu0 0.0
    %1324 = vmatpush.msra.mxu0 0.0
    %1325 = vmatpush.msra.mxu0 0.0
    %1326 = vmatpush.msra.mxu0 0.0
    %1327 = vmatpush.msra.mxu0 0.0
    %1328 = vmatpush.msra.mxu0 0.0
    %1329 = vmatpush.msra.mxu0 0.0
    %1330 = vmatpush.msra.mxu0 0.0
    %1331 = vmatpush.msra.mxu0 0.0
    %1332 = vmatpush.msra.mxu0 %v844
    %1333 = vmatpush.msra.mxu0 %v843
    %1334 = vmatpush.msra.mxu0 %v842
    %1335 = vmatpush.msra.mxu0 %v841
    %1336 = vmatmul.f32.gmra.mxu0 %v1272
    %v1337 = vpop.f32.mrf.mxu0
    %v1338 = vadd.f32 %v1318, %v1337
    %1339 = vdwg.mxu0
    %v1340 = vadd.f32 %v1338, %v893
    %v1341 = vsub.f32 0.0, %v1340
    %v1342 = vmul.f32 %v1341, 1.442695
    %v1343 = vpow.pop %v1342
    %v1344 = vadd.f32 %v1343, 1.0
    %v1345 = vrcp.pop %v1344
    %1346 = vmatpush.msra.mxu0 0.0
    %1347 = vmatpush.msra.mxu0 0.0
    %1348 = vmatpush.msra.mxu0 0.0
    %1349 = vmatpush.msra.mxu0 0.0
    %1350 = vmatpush.msra.mxu0 0.0
    %1351 = vmatpush.msra.mxu0 0.0
    %1352 = vmatpush.msra.mxu0 0.0
    %1353 = vmatpush.msra.mxu0 0.0
    %1354 = vmatpush.msra.mxu0 0.0
    %1355 = vmatpush.msra.mxu0 0.0
    %1356 = vmatpush.msra.mxu0 0.0
    %1357 = vmatpush.msra.mxu0 0.0
    %1358 = vmatpush.msra.mxu0 %v910
    %1359 = vmatpush.msra.mxu0 %v909
    %1360 = vmatpush.msra.mxu0 %v908
    %1361 = vmatpush.msra.mxu0 %v907
    %1362 = vmatmul.f32.gmra.mxu0 %v1249
    %v1363 = vpop.f32.mrf.mxu0
    %v1364 = vadd.f32 0.0, %v1363
    %1365 = vdwg.mxu0
    %1366 = vmatpush.msra.mxu0 0.0
    %1367 = vmatpush.msra.mxu0 0.0
    %1368 = vmatpush.msra.mxu0 0.0
    %1369 = vmatpush.msra.mxu0 0.0
    %1370 = vmatpush.msra.mxu0 0.0
    %1371 = vmatpush.msra.mxu0 0.0
    %1372 = vmatpush.msra.mxu0 0.0
    %1373 = vmatpush.msra.mxu0 0.0
    %1374 = vmatpush.msra.mxu0 0.0
    %1375 = vmatpush.msra.mxu0 0.0
    %1376 = vmatpush.msra.mxu0 0.0
    %1377 = vmatpush.msra.mxu0 0.0
    %1378 = vmatpush.msra.mxu0 %v905
    %1379 = vmatpush.msra.mxu0 %v904
    %1380 = vmatpush.msra.mxu0 %v903
    %1381 = vmatpush.msra.mxu0 %v902
    %1382 = vmatmul.f32.gmra.mxu0 %v1272
    %v1383 = vpop.f32.mrf.mxu0
    %v1384 = vadd.f32 %v1364, %v1383
    %1385 = vdwg.mxu0
    %v1386 = vadd.f32 %v1384, %v954
    %v1387 = vtanh.pop %v1386
    %1388 = vmatpush.msra.mxu0 0.0
    %1389 = vmatpush.msra.mxu0 0.0
    %1390 = vmatpush.msra.mxu0 0.0
    %1391 = vmatpush.msra.mxu0 0.0
    %1392 = vmatpush.msra.mxu0 0.0
    %1393 = vmatpush.msra.mxu0 0.0
    %1394 = vmatpush.msra.mxu0 0.0
    %1395 = vmatpush.msra.mxu0 0.0
    %1396 = vmatpush.msra.mxu0 0.0
    %1397 = vmatpush.msra.mxu0 0.0
    %1398 = vmatpush.msra.mxu0 0.0
    %1399 = vmatpush.msra.mxu0 0.0
    %1400 = vmatpush.msra.mxu0 %v967
    %1401 = vmatpush.msra.mxu0 %v966
    %1402 = vmatpush.msra.mxu0 %v965
    %1403 = vmatpush.msra.mxu0 %v964
    %1404 = vmatmul.f32.gmra.mxu0 %v1249
    %v1405 = vpop.f32.mrf.mxu0
    %v1406 = vadd.f32 0.0, %v1405
    %1407 = vdwg.mxu0
    %1408 = vmatpush.msra.mxu0 0.0
    %1409 = vmatpush.msra.mxu0 0.0
    %1410 = vmatpush.msra.mxu0 0.0
    %1411 = vmatpush.msra.mxu0 0.0
    %1412 = vmatpush.msra.mxu0 0.0
    %1413 = vmatpush.msra.mxu0 0.0
    %1414 = vmatpush.msra.mxu0 0.0
    %1415 = vmatpush.msra.mxu0 0.0
    %1416 = vmatpush.msra.mxu0 0.0
    %1417 = vmatpush.msra.mxu0 0.0
    %1418 = vmatpush.msra.mxu0 0.0
    %1419 = vmatpush.msra.mxu0 0.0
    %1420 = vmatpush.msra.mxu0 %v962
    %1421 = vmatpush.msra.mxu0 %v961
    %1422 = vmatpush.msra.mxu0 %v960
    %1423 = vmatpush.msra.mxu0 %v959
    %1424 = vmatmul.f32.gmra.mxu0 %v1272
    %v1425 = vpop.f32.mrf.mxu0
    %v1426 = vadd.f32 %v1406, %v1425
    %1427 = vdwg.mxu0
    %v1428 = vadd.f32 %v1426, %v1011
    %v1429 = vsub.f32 0.0, %v1428
    %v1430 = vmul.f32 %v1429, 1.442695
    %v1431 = vpow.pop %v1430
    %v1432 = vadd.f32 %v1431, 1.0
    %v1433 = vrcp.pop %v1432
    %v1434 = vmul.f32 %v1345, %v1021
    %v1435 = vmul.f32 %v1299, %v1387
    %v1436 = vadd.f32 %v1434, %v1435
    %v1437 = vtanh.pop %v1436
    %v1438 = vmul.f32 %v1433, %v1437
    %vm1439 = vcmp.eq.s32.totalorder %v497, 2
    %v1440 = vsel %vm1439, 1, 0
    %1441 = vset.pattern.permute.xlu0 0
    %1442 = vperm.xlu0 %1441, %v1440
    %v1443 = vpop.permute.xlu0 %1442
    %vm1444 = vcmp.eq.s32.totalorder %v1443, 1
    %v1445 = vsel %vm1444, %v1438, %v1030
    %1446 = vset.pattern.permute.xlu0 2
    %1447 = vperm.xlu0 %1446, %v496
    %v1448 = vpop.permute.xlu0 %1447
    %vm1449 = vcmp.eq.s32.totalorder %v502, %v1448
    %v1450 = vsel %vm1449, 1, 0
    %v1451 = vcvt.s32.f32 %v1450
    %v1453 = vsel %vm509, %v1451, 0
    %1455 = vmatpush.msra.mxu0 0.0
    %1456 = vmatpush.msra.mxu0 0.0
    %1457 = vmatpush.msra.mxu0 0.0
    %1458 = vmatpush.msra.mxu0 0.0
    %1459 = vmatpush.msra.mxu0 0.0
    %1460 = vmatpush.msra.mxu0 0.0
    %1461 = vmatpush.msra.mxu0 0.0
    %1462 = vmatpush.msra.mxu0 0.0
    %1463 = vmatpush.msra.mxu0 0.0
    %1464 = vmatpush.msra.mxu0 0.0
    %1465 = vmatpush.msra.mxu0 0.0
    %1466 = vmatpush.msra.mxu0 0.0
    %1467 = vmatpush.msra.mxu0 0.0
    %1468 = vmatpush.msra.mxu0 %v515
    %1469 = vmatpush.msra.mxu0 %v499
    %1470 = vmatpush.msra.mxu0 %v498
    %1471 = vmatmul.f32.gmra.mxu0 %v1453
    %v1472 = vpop.f32.mrf.mxu0
    %v1473 = vadd.f32 0.0, %v1472
    %1474 = vdwg.mxu0
    %1475 = vmatpush.msra.mxu0 0.0
    %1476 = vmatpush.msra.mxu0 0.0
    %1477 = vmatpush.msra.mxu0 0.0
    %1478 = vmatpush.msra.mxu0 0.0
    %1479 = vmatpush.msra.mxu0 0.0
    %1480 = vmatpush.msra.mxu0 0.0
    %1481 = vmatpush.msra.mxu0 0.0
    %1482 = vmatpush.msra.mxu0 0.0
    %1483 = vmatpush.msra.mxu0 0.0
    %1484 = vmatpush.msra.mxu0 0.0
    %1485 = vmatpush.msra.mxu0 0.0
    %1486 = vmatpush.msra.mxu0 0.0
    %1487 = vmatpush.msra.mxu0 %v542
    %1488 = vmatpush.msra.mxu0 %v541
    %1489 = vmatpush.msra.mxu0 %v540
    %1490 = vmatpush.msra.mxu0 %v539
    %1491 = vmatmul.f32.gmra.mxu0 %v1272
    %v1492 = vpop.f32.mrf.mxu0
    %v1493 = vadd.f32 0.0, %v1492
    %1494 = vdwg.mxu0
    %v1496 = vsel %vm567, %v1473, 0
    %1498 = vmatpush.msra.mxu0 0.0
    %1499 = vmatpush.msra.mxu0 0.0
    %1500 = vmatpush.msra.mxu0 0.0
    %1501 = vmatpush.msra.mxu0 0.0
    %1502 = vmatpush.msra.mxu0 0.0
    %1503 = vmatpush.msra.mxu0 0.0
    %1504 = vmatpush.msra.mxu0 0.0
    %1505 = vmatpush.msra.mxu0 0.0
    %1506 = vmatpush.msra.mxu0 0.0
    %1507 = vmatpush.msra.mxu0 0.0
    %1508 = vmatpush.msra.mxu0 0.0
    %1509 = vmatpush.msra.mxu0 0.0
    %1510 = vmatpush.msra.mxu0 0.0
    %1511 = vmatpush.msra.mxu0 0.0
    %1512 = vmatpush.msra.mxu0 %v538
    %1513 = vmatpush.msra.mxu0 %v537
    %1514 = vmatmul.f32.gmra.mxu0 %v1496
    %v1515 = vpop.f32.mrf.mxu0
    %v1516 = vadd.f32 %v1493, %v1515
    %1517 = vdwg.mxu0
    %v1518 = vadd.f32 %v1516, %v593
    %v1519 = vsub.f32 0.0, %v1518
    %v1520 = vmul.f32 %v1519, 1.442695
    %v1521 = vpow.pop %v1520
    %v1522 = vadd.f32 %v1521, 1.0
    %v1523 = vrcp.pop %v1522
    %1524 = vmatpush.msra.mxu0 0.0
    %1525 = vmatpush.msra.mxu0 0.0
    %1526 = vmatpush.msra.mxu0 0.0
    %1527 = vmatpush.msra.mxu0 0.0
    %1528 = vmatpush.msra.mxu0 0.0
    %1529 = vmatpush.msra.mxu0 0.0
    %1530 = vmatpush.msra.mxu0 0.0
    %1531 = vmatpush.msra.mxu0 0.0
    %1532 = vmatpush.msra.mxu0 0.0
    %1533 = vmatpush.msra.mxu0 0.0
    %1534 = vmatpush.msra.mxu0 0.0
    %1535 = vmatpush.msra.mxu0 0.0
    %1536 = vmatpush.msra.mxu0 %v608
    %1537 = vmatpush.msra.mxu0 %v607
    %1538 = vmatpush.msra.mxu0 %v606
    %1539 = vmatpush.msra.mxu0 %v605
    %1540 = vmatmul.f32.gmra.mxu0 %v1272
    %v1541 = vpop.f32.mrf.mxu0
    %v1542 = vadd.f32 0.0, %v1541
    %1543 = vdwg.mxu0
    %1544 = vmatpush.msra.mxu0 0.0
    %1545 = vmatpush.msra.mxu0 0.0
    %1546 = vmatpush.msra.mxu0 0.0
    %1547 = vmatpush.msra.mxu0 0.0
    %1548 = vmatpush.msra.mxu0 0.0
    %1549 = vmatpush.msra.mxu0 0.0
    %1550 = vmatpush.msra.mxu0 0.0
    %1551 = vmatpush.msra.mxu0 0.0
    %1552 = vmatpush.msra.mxu0 0.0
    %1553 = vmatpush.msra.mxu0 0.0
    %1554 = vmatpush.msra.mxu0 0.0
    %1555 = vmatpush.msra.mxu0 0.0
    %1556 = vmatpush.msra.mxu0 0.0
    %1557 = vmatpush.msra.mxu0 0.0
    %1558 = vmatpush.msra.mxu0 %v603
    %1559 = vmatpush.msra.mxu0 %v602
    %1560 = vmatmul.f32.gmra.mxu0 %v1496
    %v1561 = vpop.f32.mrf.mxu0
    %v1562 = vadd.f32 %v1542, %v1561
    %1563 = vdwg.mxu0
    %v1564 = vadd.f32 %v1562, %v652
    %v1565 = vsub.f32 0.0, %v1564
    %v1566 = vmul.f32 %v1565, 1.442695
    %v1567 = vpow.pop %v1566
    %v1568 = vadd.f32 %v1567, 1.0
    %v1569 = vrcp.pop %v1568
    %1570 = vmatpush.msra.mxu0 0.0
    %1571 = vmatpush.msra.mxu0 0.0
    %1572 = vmatpush.msra.mxu0 0.0
    %1573 = vmatpush.msra.mxu0 0.0
    %1574 = vmatpush.msra.mxu0 0.0
    %1575 = vmatpush.msra.mxu0 0.0
    %1576 = vmatpush.msra.mxu0 0.0
    %1577 = vmatpush.msra.mxu0 0.0
    %1578 = vmatpush.msra.mxu0 0.0
    %1579 = vmatpush.msra.mxu0 0.0
    %1580 = vmatpush.msra.mxu0 0.0
    %1581 = vmatpush.msra.mxu0 0.0
    %1582 = vmatpush.msra.mxu0 %v667
    %1583 = vmatpush.msra.mxu0 %v666
    %1584 = vmatpush.msra.mxu0 %v665
    %1585 = vmatpush.msra.mxu0 %v664
    %1586 = vmatmul.f32.gmra.mxu0 %v1272
    %v1587 = vpop.f32.mrf.mxu0
    %v1588 = vadd.f32 0.0, %v1587
    %1589 = vdwg.mxu0
    %1590 = vmatpush.msra.mxu0 0.0
    %1591 = vmatpush.msra.mxu0 0.0
    %1592 = vmatpush.msra.mxu0 0.0
    %1593 = vmatpush.msra.mxu0 0.0
    %1594 = vmatpush.msra.mxu0 0.0
    %1595 = vmatpush.msra.mxu0 0.0
    %1596 = vmatpush.msra.mxu0 0.0
    %1597 = vmatpush.msra.mxu0 0.0
    %1598 = vmatpush.msra.mxu0 0.0
    %1599 = vmatpush.msra.mxu0 0.0
    %1600 = vmatpush.msra.mxu0 0.0
    %1601 = vmatpush.msra.mxu0 0.0
    %1602 = vmatpush.msra.mxu0 0.0
    %1603 = vmatpush.msra.mxu0 0.0
    %1604 = vmatpush.msra.mxu0 %v662
    %1605 = vmatpush.msra.mxu0 %v661
    %1606 = vmatmul.f32.gmra.mxu0 %v1496
    %v1607 = vpop.f32.mrf.mxu0
    %v1608 = vadd.f32 %v1588, %v1607
    %1609 = vdwg.mxu0
    %v1610 = vadd.f32 %v1608, %v711
    %v1611 = vtanh.pop %v1610
    %1612 = vmatpush.msra.mxu0 0.0
    %1613 = vmatpush.msra.mxu0 0.0
    %1614 = vmatpush.msra.mxu0 0.0
    %1615 = vmatpush.msra.mxu0 0.0
    %1616 = vmatpush.msra.mxu0 0.0
    %1617 = vmatpush.msra.mxu0 0.0
    %1618 = vmatpush.msra.mxu0 0.0
    %1619 = vmatpush.msra.mxu0 0.0
    %1620 = vmatpush.msra.mxu0 0.0
    %1621 = vmatpush.msra.mxu0 0.0
    %1622 = vmatpush.msra.mxu0 0.0
    %1623 = vmatpush.msra.mxu0 0.0
    %1624 = vmatpush.msra.mxu0 %v722
    %1625 = vmatpush.msra.mxu0 %v721
    %1626 = vmatpush.msra.mxu0 %v720
    %1627 = vmatpush.msra.mxu0 %v719
    %1628 = vmatmul.f32.gmra.mxu0 %v1272
    %v1629 = vpop.f32.mrf.mxu0
    %v1630 = vadd.f32 0.0, %v1629
    %1631 = vdwg.mxu0
    %1632 = vmatpush.msra.mxu0 0.0
    %1633 = vmatpush.msra.mxu0 0.0
    %1634 = vmatpush.msra.mxu0 0.0
    %1635 = vmatpush.msra.mxu0 0.0
    %1636 = vmatpush.msra.mxu0 0.0
    %1637 = vmatpush.msra.mxu0 0.0
    %1638 = vmatpush.msra.mxu0 0.0
    %1639 = vmatpush.msra.mxu0 0.0
    %1640 = vmatpush.msra.mxu0 0.0
    %1641 = vmatpush.msra.mxu0 0.0
    %1642 = vmatpush.msra.mxu0 0.0
    %1643 = vmatpush.msra.mxu0 0.0
    %1644 = vmatpush.msra.mxu0 0.0
    %1645 = vmatpush.msra.mxu0 0.0
    %1646 = vmatpush.msra.mxu0 %v717
    %1647 = vmatpush.msra.mxu0 %v716
    %1648 = vmatmul.f32.gmra.mxu0 %v1496
    %v1649 = vpop.f32.mrf.mxu0
    %v1650 = vadd.f32 %v1630, %v1649
    %1651 = vdwg.mxu0
    %v1652 = vadd.f32 %v1650, %v766
    %v1653 = vsub.f32 0.0, %v1652
    %v1654 = vmul.f32 %v1653, 1.442695
    %v1655 = vpow.pop %v1654
    %v1656 = vadd.f32 %v1655, 1.0
    %v1657 = vrcp.pop %v1656
    %v1658 = vmul.f32 %v1569, %v1245
    %v1659 = vmul.f32 %v1523, %v1611
    %v1660 = vadd.f32 %v1658, %v1659
    %v1661 = vtanh.pop %v1660
    %v1662 = vmul.f32 %v1657, %v1661
    %v1664 = vsel %vm543, %v1438, 0
    %1666 = vmatpush.msra.mxu0 0.0
    %1667 = vmatpush.msra.mxu0 0.0
    %1668 = vmatpush.msra.mxu0 0.0
    %1669 = vmatpush.msra.mxu0 0.0
    %1670 = vmatpush.msra.mxu0 0.0
    %1671 = vmatpush.msra.mxu0 0.0
    %1672 = vmatpush.msra.mxu0 0.0
    %1673 = vmatpush.msra.mxu0 0.0
    %1674 = vmatpush.msra.mxu0 0.0
    %1675 = vmatpush.msra.mxu0 0.0
    %1676 = vmatpush.msra.mxu0 0.0
    %1677 = vmatpush.msra.mxu0 0.0
    %1678 = vmatpush.msra.mxu0 %v786
    %1679 = vmatpush.msra.mxu0 %v785
    %1680 = vmatpush.msra.mxu0 %v784
    %1681 = vmatpush.msra.mxu0 %v783
    %1682 = vmatmul.f32.gmra.mxu0 %v1664
    %v1683 = vpop.f32.mrf.mxu0
    %v1684 = vadd.f32 0.0, %v1683
    %1685 = vdwg.mxu0
    %v1687 = vsel %vm543, %v1662, 0
    %1689 = vmatpush.msra.mxu0 0.0
    %1690 = vmatpush.msra.mxu0 0.0
    %1691 = vmatpush.msra.mxu0 0.0
    %1692 = vmatpush.msra.mxu0 0.0
    %1693 = vmatpush.msra.mxu0 0.0
    %1694 = vmatpush.msra.mxu0 0.0
    %1695 = vmatpush.msra.mxu0 0.0
    %1696 = vmatpush.msra.mxu0 0.0
    %1697 = vmatpush.msra.mxu0 0.0
    %1698 = vmatpush.msra.mxu0 0.0
    %1699 = vmatpush.msra.mxu0 0.0
    %1700 = vmatpush.msra.mxu0 0.0
    %1701 = vmatpush.msra.mxu0 %v782
    %1702 = vmatpush.msra.mxu0 %v781
    %1703 = vmatpush.msra.mxu0 %v780
    %1704 = vmatpush.msra.mxu0 %v779
    %1705 = vmatmul.f32.gmra.mxu0 %v1687
    %v1706 = vpop.f32.mrf.mxu0
    %v1707 = vadd.f32 %v1684, %v1706
    %1708 = vdwg.mxu0
    %v1709 = vadd.f32 %v1707, %v832
    %v1710 = vsub.f32 0.0, %v1709
    %v1711 = vmul.f32 %v1710, 1.442695
    %v1712 = vpow.pop %v1711
    %v1713 = vadd.f32 %v1712, 1.0
    %v1714 = vrcp.pop %v1713
    %1715 = vmatpush.msra.mxu0 0.0
    %1716 = vmatpush.msra.mxu0 0.0
    %1717 = vmatpush.msra.mxu0 0.0
    %1718 = vmatpush.msra.mxu0 0.0
    %1719 = vmatpush.msra.mxu0 0.0
    %1720 = vmatpush.msra.mxu0 0.0
    %1721 = vmatpush.msra.mxu0 0.0
    %1722 = vmatpush.msra.mxu0 0.0
    %1723 = vmatpush.msra.mxu0 0.0
    %1724 = vmatpush.msra.mxu0 0.0
    %1725 = vmatpush.msra.mxu0 0.0
    %1726 = vmatpush.msra.mxu0 0.0
    %1727 = vmatpush.msra.mxu0 %v849
    %1728 = vmatpush.msra.mxu0 %v848
    %1729 = vmatpush.msra.mxu0 %v847
    %1730 = vmatpush.msra.mxu0 %v846
    %1731 = vmatmul.f32.gmra.mxu0 %v1664
    %v1732 = vpop.f32.mrf.mxu0
    %v1733 = vadd.f32 0.0, %v1732
    %1734 = vdwg.mxu0
    %1735 = vmatpush.msra.mxu0 0.0
    %1736 = vmatpush.msra.mxu0 0.0
    %1737 = vmatpush.msra.mxu0 0.0
    %1738 = vmatpush.msra.mxu0 0.0
    %1739 = vmatpush.msra.mxu0 0.0
    %1740 = vmatpush.msra.mxu0 0.0
    %1741 = vmatpush.msra.mxu0 0.0
    %1742 = vmatpush.msra.mxu0 0.0
    %1743 = vmatpush.msra.mxu0 0.0
    %1744 = vmatpush.msra.mxu0 0.0
    %1745 = vmatpush.msra.mxu0 0.0
    %1746 = vmatpush.msra.mxu0 0.0
    %1747 = vmatpush.msra.mxu0 %v844
    %1748 = vmatpush.msra.mxu0 %v843
    %1749 = vmatpush.msra.mxu0 %v842
    %1750 = vmatpush.msra.mxu0 %v841
    %1751 = vmatmul.f32.gmra.mxu0 %v1687
    %v1752 = vpop.f32.mrf.mxu0
    %v1753 = vadd.f32 %v1733, %v1752
    %1754 = vdwg.mxu0
    %v1755 = vadd.f32 %v1753, %v893
    %v1756 = vsub.f32 0.0, %v1755
    %v1757 = vmul.f32 %v1756, 1.442695
    %v1758 = vpow.pop %v1757
    %v1759 = vadd.f32 %v1758, 1.0
    %v1760 = vrcp.pop %v1759
    %1761 = vmatpush.msra.mxu0 0.0
    %1762 = vmatpush.msra.mxu0 0.0
    %1763 = vmatpush.msra.mxu0 0.0
    %1764 = vmatpush.msra.mxu0 0.0
    %1765 = vmatpush.msra.mxu0 0.0
    %1766 = vmatpush.msra.mxu0 0.0
    %1767 = vmatpush.msra.mxu0 0.0
    %1768 = vmatpush.msra.mxu0 0.0
    %1769 = vmatpush.msra.mxu0 0.0
    %1770 = vmatpush.msra.mxu0 0.0
    %1771 = vmatpush.msra.mxu0 0.0
    %1772 = vmatpush.msra.mxu0 0.0
    %1773 = vmatpush.msra.mxu0 %v910
    %1774 = vmatpush.msra.mxu0 %v909
    %1775 = vmatpush.msra.mxu0 %v908
    %1776 = vmatpush.msra.mxu0 %v907
    %1777 = vmatmul.f32.gmra.mxu0 %v1664
    %v1778 = vpop.f32.mrf.mxu0
    %v1779 = vadd.f32 0.0, %v1778
    %1780 = vdwg.mxu0
    %1781 = vmatpush.msra.mxu0 0.0
    %1782 = vmatpush.msra.mxu0 0.0
    %1783 = vmatpush.msra.mxu0 0.0
    %1784 = vmatpush.msra.mxu0 0.0
    %1785 = vmatpush.msra.mxu0 0.0
    %1786 = vmatpush.msra.mxu0 0.0
    %1787 = vmatpush.msra.mxu0 0.0
    %1788 = vmatpush.msra.mxu0 0.0
    %1789 = vmatpush.msra.mxu0 0.0
    %1790 = vmatpush.msra.mxu0 0.0
    %1791 = vmatpush.msra.mxu0 0.0
    %1792 = vmatpush.msra.mxu0 0.0
    %1793 = vmatpush.msra.mxu0 %v905
    %1794 = vmatpush.msra.mxu0 %v904
    %1795 = vmatpush.msra.mxu0 %v903
    %1796 = vmatpush.msra.mxu0 %v902
    %1797 = vmatmul.f32.gmra.mxu0 %v1687
    %v1798 = vpop.f32.mrf.mxu0
    %v1799 = vadd.f32 %v1779, %v1798
    %1800 = vdwg.mxu0
    %v1801 = vadd.f32 %v1799, %v954
    %v1802 = vtanh.pop %v1801
    %1803 = vmatpush.msra.mxu0 0.0
    %1804 = vmatpush.msra.mxu0 0.0
    %1805 = vmatpush.msra.mxu0 0.0
    %1806 = vmatpush.msra.mxu0 0.0
    %1807 = vmatpush.msra.mxu0 0.0
    %1808 = vmatpush.msra.mxu0 0.0
    %1809 = vmatpush.msra.mxu0 0.0
    %1810 = vmatpush.msra.mxu0 0.0
    %1811 = vmatpush.msra.mxu0 0.0
    %1812 = vmatpush.msra.mxu0 0.0
    %1813 = vmatpush.msra.mxu0 0.0
    %1814 = vmatpush.msra.mxu0 0.0
    %1815 = vmatpush.msra.mxu0 %v967
    %1816 = vmatpush.msra.mxu0 %v966
    %1817 = vmatpush.msra.mxu0 %v965
    %1818 = vmatpush.msra.mxu0 %v964
    %1819 = vmatmul.f32.gmra.mxu0 %v1664
    %v1820 = vpop.f32.mrf.mxu0
    %v1821 = vadd.f32 0.0, %v1820
    %1822 = vdwg.mxu0
    %1823 = vmatpush.msra.mxu0 0.0
    %1824 = vmatpush.msra.mxu0 0.0
    %1825 = vmatpush.msra.mxu0 0.0
    %1826 = vmatpush.msra.mxu0 0.0
    %1827 = vmatpush.msra.mxu0 0.0
    %1828 = vmatpush.msra.mxu0 0.0
    %1829 = vmatpush.msra.mxu0 0.0
    %1830 = vmatpush.msra.mxu0 0.0
    %1831 = vmatpush.msra.mxu0 0.0
    %1832 = vmatpush.msra.mxu0 0.0
    %1833 = vmatpush.msra.mxu0 0.0
    %1834 = vmatpush.msra.mxu0 0.0
    %1835 = vmatpush.msra.mxu0 %v962
    %1836 = vmatpush.msra.mxu0 %v961
    %1837 = vmatpush.msra.mxu0 %v960
    %1838 = vmatpush.msra.mxu0 %v959
    %1839 = vmatmul.f32.gmra.mxu0 %v1687
    %v1840 = vpop.f32.mrf.mxu0
    %v1841 = vadd.f32 %v1821, %v1840
    %1842 = vdwg.mxu0
    %v1843 = vadd.f32 %v1841, %v1011
    %v1844 = vsub.f32 0.0, %v1843
    %v1845 = vmul.f32 %v1844, 1.442695
    %v1846 = vpow.pop %v1845
    %v1847 = vadd.f32 %v1846, 1.0
    %v1848 = vrcp.pop %v1847
    %v1849 = vmul.f32 %v1760, %v1436
    %v1850 = vmul.f32 %v1714, %v1802
    %v1851 = vadd.f32 %v1849, %v1850
    %v1852 = vtanh.pop %v1851
    %v1853 = vmul.f32 %v1848, %v1852
    %vm1854 = vcmp.eq.s32.totalorder %v497, 3
    %v1855 = vsel %vm1854, 1, 0
    %1856 = vset.pattern.permute.xlu0 0
    %1857 = vperm.xlu0 %1856, %v1855
    %v1858 = vpop.permute.xlu0 %1857
    %vm1859 = vcmp.eq.s32.totalorder %v1858, 1
    %v1860 = vsel %vm1859, %v1853, %v1445
    %1861 = vset.pattern.permute.xlu0 3
    %1862 = vperm.xlu0 %1861, %v496
    %v1863 = vpop.permute.xlu0 %1862
    %vm1864 = vcmp.eq.s32.totalorder %v502, %v1863
    %v1865 = vsel %vm1864, 1, 0
    %v1866 = vcvt.s32.f32 %v1865
    %v1868 = vsel %vm509, %v1866, 0
    %1870 = vmatpush.msra.mxu0 0.0
    %1871 = vmatpush.msra.mxu0 0.0
    %1872 = vmatpush.msra.mxu0 0.0
    %1873 = vmatpush.msra.mxu0 0.0
    %1874 = vmatpush.msra.mxu0 0.0
    %1875 = vmatpush.msra.mxu0 0.0
    %1876 = vmatpush.msra.mxu0 0.0
    %1877 = vmatpush.msra.mxu0 0.0
    %1878 = vmatpush.msra.mxu0 0.0
    %1879 = vmatpush.msra.mxu0 0.0
    %1880 = vmatpush.msra.mxu0 0.0
    %1881 = vmatpush.msra.mxu0 0.0
    %1882 = vmatpush.msra.mxu0 0.0
    %1883 = vmatpush.msra.mxu0 %v515
    %1884 = vmatpush.msra.mxu0 %v499
    %1885 = vmatpush.msra.mxu0 %v498
    %1886 = vmatmul.f32.gmra.mxu0 %v1868
    %v1887 = vpop.f32.mrf.mxu0
    %v1888 = vadd.f32 0.0, %v1887
    %1889 = vdwg.mxu0
    %1890 = vmatpush.msra.mxu0 0.0
    %1891 = vmatpush.msra.mxu0 0.0
    %1892 = vmatpush.msra.mxu0 0.0
    %1893 = vmatpush.msra.mxu0 0.0
    %1894 = vmatpush.msra.mxu0 0.0
    %1895 = vmatpush.msra.mxu0 0.0
    %1896 = vmatpush.msra.mxu0 0.0
    %1897 = vmatpush.msra.mxu0 0.0
    %1898 = vmatpush.msra.mxu0 0.0
    %1899 = vmatpush.msra.mxu0 0.0
    %1900 = vmatpush.msra.mxu0 0.0
    %1901 = vmatpush.msra.mxu0 0.0
    %1902 = vmatpush.msra.mxu0 %v542
    %1903 = vmatpush.msra.mxu0 %v541
    %1904 = vmatpush.msra.mxu0 %v540
    %1905 = vmatpush.msra.mxu0 %v539
    %1906 = vmatmul.f32.gmra.mxu0 %v1687
    %v1907 = vpop.f32.mrf.mxu0
    %v1908 = vadd.f32 0.0, %v1907
    %1909 = vdwg.mxu0
    %v1911 = vsel %vm567, %v1888, 0
    %1913 = vmatpush.msra.mxu0 0.0
    %1914 = vmatpush.msra.mxu0 0.0
    %1915 = vmatpush.msra.mxu0 0.0
    %1916 = vmatpush.msra.mxu0 0.0
    %1917 = vmatpush.msra.mxu0 0.0
    %1918 = vmatpush.msra.mxu0 0.0
    %1919 = vmatpush.msra.mxu0 0.0
    %1920 = vmatpush.msra.mxu0 0.0
    %1921 = vmatpush.msra.mxu0 0.0
    %1922 = vmatpush.msra.mxu0 0.0
    %1923 = vmatpush.msra.mxu0 0.0
    %1924 = vmatpush.msra.mxu0 0.0
    %1925 = vmatpush.msra.mxu0 0.0
    %1926 = vmatpush.msra.mxu0 0.0
    %1927 = vmatpush.msra.mxu0 %v538
    %1928 = vmatpush.msra.mxu0 %v537
    %1929 = vmatmul.f32.gmra.mxu0 %v1911
    %v1930 = vpop.f32.mrf.mxu0
    %v1931 = vadd.f32 %v1908, %v1930
    %1932 = vdwg.mxu0
    %v1933 = vadd.f32 %v1931, %v593
    %v1934 = vsub.f32 0.0, %v1933
    %v1935 = vmul.f32 %v1934, 1.442695
    %v1936 = vpow.pop %v1935
    %v1937 = vadd.f32 %v1936, 1.0
    %v1938 = vrcp.pop %v1937
    %1939 = vmatpush.msra.mxu0 0.0
    %1940 = vmatpush.msra.mxu0 0.0
    %1941 = vmatpush.msra.mxu0 0.0
    %1942 = vmatpush.msra.mxu0 0.0
    %1943 = vmatpush.msra.mxu0 0.0
    %1944 = vmatpush.msra.mxu0 0.0
    %1945 = vmatpush.msra.mxu0 0.0
    %1946 = vmatpush.msra.mxu0 0.0
    %1947 = vmatpush.msra.mxu0 0.0
    %1948 = vmatpush.msra.mxu0 0.0
    %1949 = vmatpush.msra.mxu0 0.0
    %1950 = vmatpush.msra.mxu0 0.0
    %1951 = vmatpush.msra.mxu0 %v608
    %1952 = vmatpush.msra.mxu0 %v607
    %1953 = vmatpush.msra.mxu0 %v606
    %1954 = vmatpush.msra.mxu0 %v605
    %1955 = vmatmul.f32.gmra.mxu0 %v1687
    %v1956 = vpop.f32.mrf.mxu0
    %v1957 = vadd.f32 0.0, %v1956
    %1958 = vdwg.mxu0
    %1959 = vmatpush.msra.mxu0 0.0
    %1960 = vmatpush.msra.mxu0 0.0
    %1961 = vmatpush.msra.mxu0 0.0
    %1962 = vmatpush.msra.mxu0 0.0
    %1963 = vmatpush.msra.mxu0 0.0
    %1964 = vmatpush.msra.mxu0 0.0
    %1965 = vmatpush.msra.mxu0 0.0
    %1966 = vmatpush.msra.mxu0 0.0
    %1967 = vmatpush.msra.mxu0 0.0
    %1968 = vmatpush.msra.mxu0 0.0
    %1969 = vmatpush.msra.mxu0 0.0
    %1970 = vmatpush.msra.mxu0 0.0
    %1971 = vmatpush.msra.mxu0 0.0
    %1972 = vmatpush.msra.mxu0 0.0
    %1973 = vmatpush.msra.mxu0 %v603
    %1974 = vmatpush.msra.mxu0 %v602
    %1975 = vmatmul.f32.gmra.mxu0 %v1911
    %v1976 = vpop.f32.mrf.mxu0
    %v1977 = vadd.f32 %v1957, %v1976
    %1978 = vdwg.mxu0
    %v1979 = vadd.f32 %v1977, %v652
    %v1980 = vsub.f32 0.0, %v1979
    %v1981 = vmul.f32 %v1980, 1.442695
    %v1982 = vpow.pop %v1981
    %v1983 = vadd.f32 %v1982, 1.0
    %v1984 = vrcp.pop %v1983
    %1985 = vmatpush.msra.mxu0 0.0
    %1986 = vmatpush.msra.mxu0 0.0
    %1987 = vmatpush.msra.mxu0 0.0
    %1988 = vmatpush.msra.mxu0 0.0
    %1989 = vmatpush.msra.mxu0 0.0
    %1990 = vmatpush.msra.mxu0 0.0
    %1991 = vmatpush.msra.mxu0 0.0
    %1992 = vmatpush.msra.mxu0 0.0
    %1993 = vmatpush.msra.mxu0 0.0
    %1994 = vmatpush.msra.mxu0 0.0
    %1995 = vmatpush.msra.mxu0 0.0
    %1996 = vmatpush.msra.mxu0 0.0
    %1997 = vmatpush.msra.mxu0 %v667
    %1998 = vmatpush.msra.mxu0 %v666
    %1999 = vmatpush.msra.mxu0 %v665
    %2000 = vmatpush.msra.mxu0 %v664
    %2001 = vmatmul.f32.gmra.mxu0 %v1687
    %v2002 = vpop.f32.mrf.mxu0
    %v2003 = vadd.f32 0.0, %v2002
    %2004 = vdwg.mxu0
    %2005 = vmatpush.msra.mxu0 0.0
    %2006 = vmatpush.msra.mxu0 0.0
    %2007 = vmatpush.msra.mxu0 0.0
    %2008 = vmatpush.msra.mxu0 0.0
    %2009 = vmatpush.msra.mxu0 0.0
    %2010 = vmatpush.msra.mxu0 0.0
    %2011 = vmatpush.msra.mxu0 0.0
    %2012 = vmatpush.msra.mxu0 0.0
    %2013 = vmatpush.msra.mxu0 0.0
    %2014 = vmatpush.msra.mxu0 0.0
    %2015 = vmatpush.msra.mxu0 0.0
    %2016 = vmatpush.msra.mxu0 0.0
    %2017 = vmatpush.msra.mxu0 0.0
    %2018 = vmatpush.msra.mxu0 0.0
    %2019 = vmatpush.msra.mxu0 %v662
    %2020 = vmatpush.msra.mxu0 %v661
    %2021 = vmatmul.f32.gmra.mxu0 %v1911
    %v2022 = vpop.f32.mrf.mxu0
    %v2023 = vadd.f32 %v2003, %v2022
    %2024 = vdwg.mxu0
    %v2025 = vadd.f32 %v2023, %v711
    %v2026 = vtanh.pop %v2025
    %2027 = vmatpush.msra.mxu0 0.0
    %2028 = vmatpush.msra.mxu0 0.0
    %2029 = vmatpush.msra.mxu0 0.0
    %2030 = vmatpush.msra.mxu0 0.0
    %2031 = vmatpush.msra.mxu0 0.0
    %2032 = vmatpush.msra.mxu0 0.0
    %2033 = vmatpush.msra.mxu0 0.0
    %2034 = vmatpush.msra.mxu0 0.0
    %2035 = vmatpush.msra.mxu0 0.0
    %2036 = vmatpush.msra.mxu0 0.0
    %2037 = vmatpush.msra.mxu0 0.0
    %2038 = vmatpush.msra.mxu0 0.0
    %2039 = vmatpush.msra.mxu0 %v722
    %2040 = vmatpush.msra.mxu0 %v721
    %2041 = vmatpush.msra.mxu0 %v720
    %2042 = vmatpush.msra.mxu0 %v719
    %2043 = vmatmul.f32.gmra.mxu0 %v1687
    %v2044 = vpop.f32.mrf.mxu0
    %v2045 = vadd.f32 0.0, %v2044
    %2046 = vdwg.mxu0
    %2047 = vmatpush.msra.mxu0 0.0
    %2048 = vmatpush.msra.mxu0 0.0
    %2049 = vmatpush.msra.mxu0 0.0
    %2050 = vmatpush.msra.mxu0 0.0
    %2051 = vmatpush.msra.mxu0 0.0
    %2052 = vmatpush.msra.mxu0 0.0
    %2053 = vmatpush.msra.mxu0 0.0
    %2054 = vmatpush.msra.mxu0 0.0
    %2055 = vmatpush.msra.mxu0 0.0
    %2056 = vmatpush.msra.mxu0 0.0
    %2057 = vmatpush.msra.mxu0 0.0
    %2058 = vmatpush.msra.mxu0 0.0
    %2059 = vmatpush.msra.mxu0 0.0
    %2060 = vmatpush.msra.mxu0 0.0
    %2061 = vmatpush.msra.mxu0 %v717
    %2062 = vmatpush.msra.mxu0 %v716
    %2063 = vmatmul.f32.gmra.mxu0 %v1911
    %v2064 = vpop.f32.mrf.mxu0
    %v2065 = vadd.f32 %v2045, %v2064
    %2066 = vdwg.mxu0
    %v2067 = vadd.f32 %v2065, %v766
    %v2068 = vsub.f32 0.0, %v2067
    %v2069 = vmul.f32 %v2068, 1.442695
    %v2070 = vpow.pop %v2069
    %v2071 = vadd.f32 %v2070, 1.0
    %v2072 = vrcp.pop %v2071
    %v2073 = vmul.f32 %v1984, %v1660
    %v2074 = vmul.f32 %v1938, %v2026
    %v2075 = vadd.f32 %v2073, %v2074
    %v2076 = vtanh.pop %v2075
    %v2077 = vmul.f32 %v2072, %v2076
    %v2079 = vsel %vm543, %v1853, 0
    %2081 = vmatpush.msra.mxu0 0.0
    %2082 = vmatpush.msra.mxu0 0.0
    %2083 = vmatpush.msra.mxu0 0.0
    %2084 = vmatpush.msra.mxu0 0.0
    %2085 = vmatpush.msra.mxu0 0.0
    %2086 = vmatpush.msra.mxu0 0.0
    %2087 = vmatpush.msra.mxu0 0.0
    %2088 = vmatpush.msra.mxu0 0.0
    %2089 = vmatpush.msra.mxu0 0.0
    %2090 = vmatpush.msra.mxu0 0.0
    %2091 = vmatpush.msra.mxu0 0.0
    %2092 = vmatpush.msra.mxu0 0.0
    %2093 = vmatpush.msra.mxu0 %v786
    %2094 = vmatpush.msra.mxu0 %v785
    %2095 = vmatpush.msra.mxu0 %v784
    %2096 = vmatpush.msra.mxu0 %v783
    %2097 = vmatmul.f32.gmra.mxu0 %v2079
    %v2098 = vpop.f32.mrf.mxu0
    %v2099 = vadd.f32 0.0, %v2098
    %2100 = vdwg.mxu0
    %v2102 = vsel %vm543, %v2077, 0
    %2104 = vmatpush.msra.mxu0 0.0
    %2105 = vmatpush.msra.mxu0 0.0
    %2106 = vmatpush.msra.mxu0 0.0
    %2107 = vmatpush.msra.mxu0 0.0
    %2108 = vmatpush.msra.mxu0 0.0
    %2109 = vmatpush.msra.mxu0 0.0
    %2110 = vmatpush.msra.mxu0 0.0
    %2111 = vmatpush.msra.mxu0 0.0
    %2112 = vmatpush.msra.mxu0 0.0
    %2113 = vmatpush.msra.mxu0 0.0
    %2114 = vmatpush.msra.mxu0 0.0
    %2115 = vmatpush.msra.mxu0 0.0
    %2116 = vmatpush.msra.mxu0 %v782
    %2117 = vmatpush.msra.mxu0 %v781
    %2118 = vmatpush.msra.mxu0 %v780
    %2119 = vmatpush.msra.mxu0 %v779
    %2120 = vmatmul.f32.gmra.mxu0 %v2102
    %v2121 = vpop.f32.mrf.mxu0
    %v2122 = vadd.f32 %v2099, %v2121
    %2123 = vdwg.mxu0
    %v2124 = vadd.f32 %v2122, %v832
    %v2125 = vsub.f32 0.0, %v2124
    %v2126 = vmul.f32 %v2125, 1.442695
    %v2127 = vpow.pop %v2126
    %v2128 = vadd.f32 %v2127, 1.0
    %v2129 = vrcp.pop %v2128
    %2130 = vmatpush.msra.mxu0 0.0
    %2131 = vmatpush.msra.mxu0 0.0
    %2132 = vmatpush.msra.mxu0 0.0
    %2133 = vmatpush.msra.mxu0 0.0
    %2134 = vmatpush.msra.mxu0 0.0
    %2135 = vmatpush.msra.mxu0 0.0
    %2136 = vmatpush.msra.mxu0 0.0
    %2137 = vmatpush.msra.mxu0 0.0
    %2138 = vmatpush.msra.mxu0 0.0
    %2139 = vmatpush.msra.mxu0 0.0
    %2140 = vmatpush.msra.mxu0 0.0
    %2141 = vmatpush.msra.mxu0 0.0
    %2142 = vmatpush.msra.mxu0 %v849
    %2143 = vmatpush.msra.mxu0 %v848
    %2144 = vmatpush.msra.mxu0 %v847
    %2145 = vmatpush.msra.mxu0 %v846
    %2146 = vmatmul.f32.gmra.mxu0 %v2079
    %v2147 = vpop.f32.mrf.mxu0
    %v2148 = vadd.f32 0.0, %v2147
    %2149 = vdwg.mxu0
    %2150 = vmatpush.msra.mxu0 0.0
    %2151 = vmatpush.msra.mxu0 0.0
    %2152 = vmatpush.msra.mxu0 0.0
    %2153 = vmatpush.msra.mxu0 0.0
    %2154 = vmatpush.msra.mxu0 0.0
    %2155 = vmatpush.msra.mxu0 0.0
    %2156 = vmatpush.msra.mxu0 0.0
    %2157 = vmatpush.msra.mxu0 0.0
    %2158 = vmatpush.msra.mxu0 0.0
    %2159 = vmatpush.msra.mxu0 0.0
    %2160 = vmatpush.msra.mxu0 0.0
    %2161 = vmatpush.msra.mxu0 0.0
    %2162 = vmatpush.msra.mxu0 %v844
    %2163 = vmatpush.msra.mxu0 %v843
    %2164 = vmatpush.msra.mxu0 %v842
    %2165 = vmatpush.msra.mxu0 %v841
    %2166 = vmatmul.f32.gmra.mxu0 %v2102
    %v2167 = vpop.f32.mrf.mxu0
    %v2168 = vadd.f32 %v2148, %v2167
    %2169 = vdwg.mxu0
    %v2170 = vadd.f32 %v2168, %v893
    %v2171 = vsub.f32 0.0, %v2170
    %v2172 = vmul.f32 %v2171, 1.442695
    %v2173 = vpow.pop %v2172
    %v2174 = vadd.f32 %v2173, 1.0
    %v2175 = vrcp.pop %v2174
    %2176 = vmatpush.msra.mxu0 0.0
    %2177 = vmatpush.msra.mxu0 0.0
    %2178 = vmatpush.msra.mxu0 0.0
    %2179 = vmatpush.msra.mxu0 0.0
    %2180 = vmatpush.msra.mxu0 0.0
    %2181 = vmatpush.msra.mxu0 0.0
    %2182 = vmatpush.msra.mxu0 0.0
    %2183 = vmatpush.msra.mxu0 0.0
    %2184 = vmatpush.msra.mxu0 0.0
    %2185 = vmatpush.msra.mxu0 0.0
    %2186 = vmatpush.msra.mxu0 0.0
    %2187 = vmatpush.msra.mxu0 0.0
    %2188 = vmatpush.msra.mxu0 %v910
    %2189 = vmatpush.msra.mxu0 %v909
    %2190 = vmatpush.msra.mxu0 %v908
    %2191 = vmatpush.msra.mxu0 %v907
    %2192 = vmatmul.f32.gmra.mxu0 %v2079
    %v2193 = vpop.f32.mrf.mxu0
    %v2194 = vadd.f32 0.0, %v2193
    %2195 = vdwg.mxu0
    %2196 = vmatpush.msra.mxu0 0.0
    %2197 = vmatpush.msra.mxu0 0.0
    %2198 = vmatpush.msra.mxu0 0.0
    %2199 = vmatpush.msra.mxu0 0.0
    %2200 = vmatpush.msra.mxu0 0.0
    %2201 = vmatpush.msra.mxu0 0.0
    %2202 = vmatpush.msra.mxu0 0.0
    %2203 = vmatpush.msra.mxu0 0.0
    %2204 = vmatpush.msra.mxu0 0.0
    %2205 = vmatpush.msra.mxu0 0.0
    %2206 = vmatpush.msra.mxu0 0.0
    %2207 = vmatpush.msra.mxu0 0.0
    %2208 = vmatpush.msra.mxu0 %v905
    %2209 = vmatpush.msra.mxu0 %v904
    %2210 = vmatpush.msra.mxu0 %v903
    %2211 = vmatpush.msra.mxu0 %v902
    %2212 = vmatmul.f32.gmra.mxu0 %v2102
    %v2213 = vpop.f32.mrf.mxu0
    %v2214 = vadd.f32 %v2194, %v2213
    %2215 = vdwg.mxu0
    %v2216 = vadd.f32 %v2214, %v954
    %v2217 = vtanh.pop %v2216
    %2218 = vmatpush.msra.mxu0 0.0
    %2219 = vmatpush.msra.mxu0 0.0
    %2220 = vmatpush.msra.mxu0 0.0
    %2221 = vmatpush.msra.mxu0 0.0
    %2222 = vmatpush.msra.mxu0 0.0
    %2223 = vmatpush.msra.mxu0 0.0
    %2224 = vmatpush.msra.mxu0 0.0
    %2225 = vmatpush.msra.mxu0 0.0
    %2226 = vmatpush.msra.mxu0 0.0
    %2227 = vmatpush.msra.mxu0 0.0
    %2228 = vmatpush.msra.mxu0 0.0
    %2229 = vmatpush.msra.mxu0 0.0
    %2230 = vmatpush.msra.mxu0 %v967
    %2231 = vmatpush.msra.mxu0 %v966
    %2232 = vmatpush.msra.mxu0 %v965
    %2233 = vmatpush.msra.mxu0 %v964
    %2234 = vmatmul.f32.gmra.mxu0 %v2079
    %v2235 = vpop.f32.mrf.mxu0
    %v2236 = vadd.f32 0.0, %v2235
    %2237 = vdwg.mxu0
    %2238 = vmatpush.msra.mxu0 0.0
    %2239 = vmatpush.msra.mxu0 0.0
    %2240 = vmatpush.msra.mxu0 0.0
    %2241 = vmatpush.msra.mxu0 0.0
    %2242 = vmatpush.msra.mxu0 0.0
    %2243 = vmatpush.msra.mxu0 0.0
    %2244 = vmatpush.msra.mxu0 0.0
    %2245 = vmatpush.msra.mxu0 0.0
    %2246 = vmatpush.msra.mxu0 0.0
    %2247 = vmatpush.msra.mxu0 0.0
    %2248 = vmatpush.msra.mxu0 0.0
    %2249 = vmatpush.msra.mxu0 0.0
    %2250 = vmatpush.msra.mxu0 %v962
    %2251 = vmatpush.msra.mxu0 %v961
    %2252 = vmatpush.msra.mxu0 %v960
    %2253 = vmatpush.msra.mxu0 %v959
    %2254 = vmatmul.f32.gmra.mxu0 %v2102
    %v2255 = vpop.f32.mrf.mxu0
    %v2256 = vadd.f32 %v2236, %v2255
    %2257 = vdwg.mxu0
    %v2258 = vadd.f32 %v2256, %v1011
    %v2259 = vsub.f32 0.0, %v2258
    %v2260 = vmul.f32 %v2259, 1.442695
    %v2261 = vpow.pop %v2260
    %v2262 = vadd.f32 %v2261, 1.0
    %v2263 = vrcp.pop %v2262
    %v2264 = vmul.f32 %v2175, %v1851
    %v2265 = vmul.f32 %v2129, %v2217
    %v2266 = vadd.f32 %v2264, %v2265
    %v2267 = vtanh.pop %v2266
    %v2268 = vmul.f32 %v2263, %v2267
    %vm2269 = vcmp.eq.s32.totalorder %v497, 4
    %v2270 = vsel %vm2269, 1, 0
    %2271 = vset.pattern.permute.xlu0 0
    %2272 = vperm.xlu0 %2271, %v2270
    %v2273 = vpop.permute.xlu0 %2272
    %vm2274 = vcmp.eq.s32.totalorder %v2273, 1
    %v2275 = vsel %vm2274, %v2268, %v1860
    %2276 = vset.pattern.permute.xlu0 4
    %2277 = vperm.xlu0 %2276, %v496
    %v2278 = vpop.permute.xlu0 %2277
    %vm2279 = vcmp.eq.s32.totalorder %v502, %v2278
    %v2280 = vsel %vm2279, 1, 0
    %v2281 = vcvt.s32.f32 %v2280
    %v2283 = vsel %vm509, %v2281, 0
    %2285 = vmatpush.msra.mxu0 0.0
    %2286 = vmatpush.msra.mxu0 0.0
    %2287 = vmatpush.msra.mxu0 0.0
    %2288 = vmatpush.msra.mxu0 0.0
    %2289 = vmatpush.msra.mxu0 0.0
    %2290 = vmatpush.msra.mxu0 0.0
    %2291 = vmatpush.msra.mxu0 0.0
    %2292 = vmatpush.msra.mxu0 0.0
    %2293 = vmatpush.msra.mxu0 0.0
    %2294 = vmatpush.msra.mxu0 0.0
    %2295 = vmatpush.msra.mxu0 0.0
    %2296 = vmatpush.msra.mxu0 0.0
    %2297 = vmatpush.msra.mxu0 0.0
    %2298 = vmatpush.msra.mxu0 %v515
    %2299 = vmatpush.msra.mxu0 %v499
    %2300 = vmatpush.msra.mxu0 %v498
    %2301 = vmatmul.f32.gmra.mxu0 %v2283
    %v2302 = vpop.f32.mrf.mxu0
    %v2303 = vadd.f32 0.0, %v2302
    %2304 = vdwg.mxu0
    %2305 = vmatpush.msra.mxu0 0.0
    %2306 = vmatpush.msra.mxu0 0.0
    %2307 = vmatpush.msra.mxu0 0.0
    %2308 = vmatpush.msra.mxu0 0.0
    %2309 = vmatpush.msra.mxu0 0.0
    %2310 = vmatpush.msra.mxu0 0.0
    %2311 = vmatpush.msra.mxu0 0.0
    %2312 = vmatpush.msra.mxu0 0.0
    %2313 = vmatpush.msra.mxu0 0.0
    %2314 = vmatpush.msra.mxu0 0.0
    %2315 = vmatpush.msra.mxu0 0.0
    %2316 = vmatpush.msra.mxu0 0.0
    %2317 = vmatpush.msra.mxu0 %v542
    %2318 = vmatpush.msra.mxu0 %v541
    %2319 = vmatpush.msra.mxu0 %v540
    %2320 = vmatpush.msra.mxu0 %v539
    %2321 = vmatmul.f32.gmra.mxu0 %v2102
    %v2322 = vpop.f32.mrf.mxu0
    %v2323 = vadd.f32 0.0, %v2322
    %2324 = vdwg.mxu0
    %v2326 = vsel %vm567, %v2303, 0
    %2328 = vmatpush.msra.mxu0 0.0
    %2329 = vmatpush.msra.mxu0 0.0
    %2330 = vmatpush.msra.mxu0 0.0
    %2331 = vmatpush.msra.mxu0 0.0
    %2332 = vmatpush.msra.mxu0 0.0
    %2333 = vmatpush.msra.mxu0 0.0
    %2334 = vmatpush.msra.mxu0 0.0
    %2335 = vmatpush.msra.mxu0 0.0
    %2336 = vmatpush.msra.mxu0 0.0
    %2337 = vmatpush.msra.mxu0 0.0
    %2338 = vmatpush.msra.mxu0 0.0
    %2339 = vmatpush.msra.mxu0 0.0
    %2340 = vmatpush.msra.mxu0 0.0
    %2341 = vmatpush.msra.mxu0 0.0
    %2342 = vmatpush.msra.mxu0 %v538
    %2343 = vmatpush.msra.mxu0 %v537
    %2344 = vmatmul.f32.gmra.mxu0 %v2326
    %v2345 = vpop.f32.mrf.mxu0
    %v2346 = vadd.f32 %v2323, %v2345
    %2347 = vdwg.mxu0
    %v2348 = vadd.f32 %v2346, %v593
    %v2349 = vsub.f32 0.0, %v2348
    %v2350 = vmul.f32 %v2349, 1.442695
    %v2351 = vpow.pop %v2350
    %v2352 = vadd.f32 %v2351, 1.0
    %v2353 = vrcp.pop %v2352
    %2354 = vmatpush.msra.mxu0 0.0
    %2355 = vmatpush.msra.mxu0 0.0
    %2356 = vmatpush.msra.mxu0 0.0
    %2357 = vmatpush.msra.mxu0 0.0
    %2358 = vmatpush.msra.mxu0 0.0
    %2359 = vmatpush.msra.mxu0 0.0
    %2360 = vmatpush.msra.mxu0 0.0
    %2361 = vmatpush.msra.mxu0 0.0
    %2362 = vmatpush.msra.mxu0 0.0
    %2363 = vmatpush.msra.mxu0 0.0
    %2364 = vmatpush.msra.mxu0 0.0
    %2365 = vmatpush.msra.mxu0 0.0
    %2366 = vmatpush.msra.mxu0 %v608
    %2367 = vmatpush.msra.mxu0 %v607
    %2368 = vmatpush.msra.mxu0 %v606
    %2369 = vmatpush.msra.mxu0 %v605
    %2370 = vmatmul.f32.gmra.mxu0 %v2102
    %v2371 = vpop.f32.mrf.mxu0
    %v2372 = vadd.f32 0.0, %v2371
    %2373 = vdwg.mxu0
    %2374 = vmatpush.msra.mxu0 0.0
    %2375 = vmatpush.msra.mxu0 0.0
    %2376 = vmatpush.msra.mxu0 0.0
    %2377 = vmatpush.msra.mxu0 0.0
    %2378 = vmatpush.msra.mxu0 0.0
    %2379 = vmatpush.msra.mxu0 0.0
    %2380 = vmatpush.msra.mxu0 0.0
    %2381 = vmatpush.msra.mxu0 0.0
    %2382 = vmatpush.msra.mxu0 0.0
    %2383 = vmatpush.msra.mxu0 0.0
    %2384 = vmatpush.msra.mxu0 0.0
    %2385 = vmatpush.msra.mxu0 0.0
    %2386 = vmatpush.msra.mxu0 0.0
    %2387 = vmatpush.msra.mxu0 0.0
    %2388 = vmatpush.msra.mxu0 %v603
    %2389 = vmatpush.msra.mxu0 %v602
    %2390 = vmatmul.f32.gmra.mxu0 %v2326
    %v2391 = vpop.f32.mrf.mxu0
    %v2392 = vadd.f32 %v2372, %v2391
    %2393 = vdwg.mxu0
    %v2394 = vadd.f32 %v2392, %v652
    %v2395 = vsub.f32 0.0, %v2394
    %v2396 = vmul.f32 %v2395, 1.442695
    %v2397 = vpow.pop %v2396
    %v2398 = vadd.f32 %v2397, 1.0
    %v2399 = vrcp.pop %v2398
    %2400 = vmatpush.msra.mxu0 0.0
    %2401 = vmatpush.msra.mxu0 0.0
    %2402 = vmatpush.msra.mxu0 0.0
    %2403 = vmatpush.msra.mxu0 0.0
    %2404 = vmatpush.msra.mxu0 0.0
    %2405 = vmatpush.msra.mxu0 0.0
    %2406 = vmatpush.msra.mxu0 0.0
    %2407 = vmatpush.msra.mxu0 0.0
    %2408 = vmatpush.msra.mxu0 0.0
    %2409 = vmatpush.msra.mxu0 0.0
    %2410 = vmatpush.msra.mxu0 0.0
    %2411 = vmatpush.msra.mxu0 0.0
    %2412 = vmatpush.msra.mxu0 %v667
    %2413 = vmatpush.msra.mxu0 %v666
    %2414 = vmatpush.msra.mxu0 %v665
    %2415 = vmatpush.msra.mxu0 %v664
    %2416 = vmatmul.f32.gmra.mxu0 %v2102
    %v2417 = vpop.f32.mrf.mxu0
    %v2418 = vadd.f32 0.0, %v2417
    %2419 = vdwg.mxu0
    %2420 = vmatpush.msra.mxu0 0.0
    %2421 = vmatpush.msra.mxu0 0.0
    %2422 = vmatpush.msra.mxu0 0.0
    %2423 = vmatpush.msra.mxu0 0.0
    %2424 = vmatpush.msra.mxu0 0.0
    %2425 = vmatpush.msra.mxu0 0.0
    %2426 = vmatpush.msra.mxu0 0.0
    %2427 = vmatpush.msra.mxu0 0.0
    %2428 = vmatpush.msra.mxu0 0.0
    %2429 = vmatpush.msra.mxu0 0.0
    %2430 = vmatpush.msra.mxu0 0.0
    %2431 = vmatpush.msra.mxu0 0.0
    %2432 = vmatpush.msra.mxu0 0.0
    %2433 = vmatpush.msra.mxu0 0.0
    %2434 = vmatpush.msra.mxu0 %v662
    %2435 = vmatpush.msra.mxu0 %v661
    %2436 = vmatmul.f32.gmra.mxu0 %v2326
    %v2437 = vpop.f32.mrf.mxu0
    %v2438 = vadd.f32 %v2418, %v2437
    %2439 = vdwg.mxu0
    %v2440 = vadd.f32 %v2438, %v711
    %v2441 = vtanh.pop %v2440
    %2442 = vmatpush.msra.mxu0 0.0
    %2443 = vmatpush.msra.mxu0 0.0
    %2444 = vmatpush.msra.mxu0 0.0
    %2445 = vmatpush.msra.mxu0 0.0
    %2446 = vmatpush.msra.mxu0 0.0
    %2447 = vmatpush.msra.mxu0 0.0
    %2448 = vmatpush.msra.mxu0 0.0
    %2449 = vmatpush.msra.mxu0 0.0
    %2450 = vmatpush.msra.mxu0 0.0
    %2451 = vmatpush.msra.mxu0 0.0
    %2452 = vmatpush.msra.mxu0 0.0
    %2453 = vmatpush.msra.mxu0 0.0
    %2454 = vmatpush.msra.mxu0 %v722
    %2455 = vmatpush.msra.mxu0 %v721
    %2456 = vmatpush.msra.mxu0 %v720
    %2457 = vmatpush.msra.mxu0 %v719
    %2458 = vmatmul.f32.gmra.mxu0 %v2102
    %v2459 = vpop.f32.mrf.mxu0
    %v2460 = vadd.f32 0.0, %v2459
    %2461 = vdwg.mxu0
    %2462 = vmatpush.msra.mxu0 0.0
    %2463 = vmatpush.msra.mxu0 0.0
    %2464 = vmatpush.msra.mxu0 0.0
    %2465 = vmatpush.msra.mxu0 0.0
    %2466 = vmatpush.msra.mxu0 0.0
    %2467 = vmatpush.msra.mxu0 0.0
    %2468 = vmatpush.msra.mxu0 0.0
    %2469 = vmatpush.msra.mxu0 0.0
    %2470 = vmatpush.msra.mxu0 0.0
    %2471 = vmatpush.msra.mxu0 0.0
    %2472 = vmatpush.msra.mxu0 0.0
    %2473 = vmatpush.msra.mxu0 0.0
    %2474 = vmatpush.msra.mxu0 0.0
    %2475 = vmatpush.msra.mxu0 0.0
    %2476 = vmatpush.msra.mxu0 %v717
    %2477 = vmatpush.msra.mxu0 %v716
    %2478 = vmatmul.f32.gmra.mxu0 %v2326
    %v2479 = vpop.f32.mrf.mxu0
    %v2480 = vadd.f32 %v2460, %v2479
    %2481 = vdwg.mxu0
    %v2482 = vadd.f32 %v2480, %v766
    %v2483 = vsub.f32 0.0, %v2482
    %v2484 = vmul.f32 %v2483, 1.442695
    %v2485 = vpow.pop %v2484
    %v2486 = vadd.f32 %v2485, 1.0
    %v2487 = vrcp.pop %v2486
    %v2488 = vmul.f32 %v2399, %v2075
    %v2489 = vmul.f32 %v2353, %v2441
    %v2490 = vadd.f32 %v2488, %v2489
    %v2491 = vtanh.pop %v2490
    %v2492 = vmul.f32 %v2487, %v2491
    %v2494 = vsel %vm543, %v2268, 0
    %2496 = vmatpush.msra.mxu0 0.0
    %2497 = vmatpush.msra.mxu0 0.0
    %2498 = vmatpush.msra.mxu0 0.0
    %2499 = vmatpush.msra.mxu0 0.0
    %2500 = vmatpush.msra.mxu0 0.0
    %2501 = vmatpush.msra.mxu0 0.0
    %2502 = vmatpush.msra.mxu0 0.0
    %2503 = vmatpush.msra.mxu0 0.0
    %2504 = vmatpush.msra.mxu0 0.0
    %2505 = vmatpush.msra.mxu0 0.0
    %2506 = vmatpush.msra.mxu0 0.0
    %2507 = vmatpush.msra.mxu0 0.0
    %2508 = vmatpush.msra.mxu0 %v786
    %2509 = vmatpush.msra.mxu0 %v785
    %2510 = vmatpush.msra.mxu0 %v784
    %2511 = vmatpush.msra.mxu0 %v783
    %2512 = vmatmul.f32.gmra.mxu0 %v2494
    %v2513 = vpop.f32.mrf.mxu0
    %v2514 = vadd.f32 0.0, %v2513
    %2515 = vdwg.mxu0
    %v2517 = vsel %vm543, %v2492, 0
    %2519 = vmatpush.msra.mxu0 0.0
    %2520 = vmatpush.msra.mxu0 0.0
    %2521 = vmatpush.msra.mxu0 0.0
    %2522 = vmatpush.msra.mxu0 0.0
    %2523 = vmatpush.msra.mxu0 0.0
    %2524 = vmatpush.msra.mxu0 0.0
    %2525 = vmatpush.msra.mxu0 0.0
    %2526 = vmatpush.msra.mxu0 0.0
    %2527 = vmatpush.msra.mxu0 0.0
    %2528 = vmatpush.msra.mxu0 0.0
    %2529 = vmatpush.msra.mxu0 0.0
    %2530 = vmatpush.msra.mxu0 0.0
    %2531 = vmatpush.msra.mxu0 %v782
    %2532 = vmatpush.msra.mxu0 %v781
    %2533 = vmatpush.msra.mxu0 %v780
    %2534 = vmatpush.msra.mxu0 %v779
    %2535 = vmatmul.f32.gmra.mxu0 %v2517
    %v2536 = vpop.f32.mrf.mxu0
    %v2537 = vadd.f32 %v2514, %v2536
    %2538 = vdwg.mxu0
    %v2539 = vadd.f32 %v2537, %v832
    %v2540 = vsub.f32 0.0, %v2539
    %v2541 = vmul.f32 %v2540, 1.442695
    %v2542 = vpow.pop %v2541
    %v2543 = vadd.f32 %v2542, 1.0
    %v2544 = vrcp.pop %v2543
    %2545 = vmatpush.msra.mxu0 0.0
    %2546 = vmatpush.msra.mxu0 0.0
    %2547 = vmatpush.msra.mxu0 0.0
    %2548 = vmatpush.msra.mxu0 0.0
    %2549 = vmatpush.msra.mxu0 0.0
    %2550 = vmatpush.msra.mxu0 0.0
    %2551 = vmatpush.msra.mxu0 0.0
    %2552 = vmatpush.msra.mxu0 0.0
    %2553 = vmatpush.msra.mxu0 0.0
    %2554 = vmatpush.msra.mxu0 0.0
    %2555 = vmatpush.msra.mxu0 0.0
    %2556 = vmatpush.msra.mxu0 0.0
    %2557 = vmatpush.msra.mxu0 %v849
    %2558 = vmatpush.msra.mxu0 %v848
    %2559 = vmatpush.msra.mxu0 %v847
    %2560 = vmatpush.msra.mxu0 %v846
    %2561 = vmatmul.f32.gmra.mxu0 %v2494
    %v2562 = vpop.f32.mrf.mxu0
    %v2563 = vadd.f32 0.0, %v2562
    %2564 = vdwg.mxu0
    %2565 = vmatpush.msra.mxu0 0.0
    %2566 = vmatpush.msra.mxu0 0.0
    %2567 = vmatpush.msra.mxu0 0.0
    %2568 = vmatpush.msra.mxu0 0.0
    %2569 = vmatpush.msra.mxu0 0.0
    %2570 = vmatpush.msra.mxu0 0.0
    %2571 = vmatpush.msra.mxu0 0.0
    %2572 = vmatpush.msra.mxu0 0.0
    %2573 = vmatpush.msra.mxu0 0.0
    %2574 = vmatpush.msra.mxu0 0.0
    %2575 = vmatpush.msra.mxu0 0.0
    %2576 = vmatpush.msra.mxu0 0.0
    %2577 = vmatpush.msra.mxu0 %v844
    %2578 = vmatpush.msra.mxu0 %v843
    %2579 = vmatpush.msra.mxu0 %v842
    %2580 = vmatpush.msra.mxu0 %v841
    %2581 = vmatmul.f32.gmra.mxu0 %v2517
    %v2582 = vpop.f32.mrf.mxu0
    %v2583 = vadd.f32 %v2563, %v2582
    %2584 = vdwg.mxu0
    %v2585 = vadd.f32 %v2583, %v893
    %v2586 = vsub.f32 0.0, %v2585
    %v2587 = vmul.f32 %v2586, 1.442695
    %v2588 = vpow.pop %v2587
    %v2589 = vadd.f32 %v2588, 1.0
    %v2590 = vrcp.pop %v2589
    %2591 = vmatpush.msra.mxu0 0.0
    %2592 = vmatpush.msra.mxu0 0.0
    %2593 = vmatpush.msra.mxu0 0.0
    %2594 = vmatpush.msra.mxu0 0.0
    %2595 = vmatpush.msra.mxu0 0.0
    %2596 = vmatpush.msra.mxu0 0.0
    %2597 = vmatpush.msra.mxu0 0.0
    %2598 = vmatpush.msra.mxu0 0.0
    %2599 = vmatpush.msra.mxu0 0.0
    %2600 = vmatpush.msra.mxu0 0.0
    %2601 = vmatpush.msra.mxu0 0.0
    %2602 = vmatpush.msra.mxu0 0.0
    %2603 = vmatpush.msra.mxu0 %v910
    %2604 = vmatpush.msra.mxu0 %v909
    %2605 = vmatpush.msra.mxu0 %v908
    %2606 = vmatpush.msra.mxu0 %v907
    %2607 = vmatmul.f32.gmra.mxu0 %v2494
    %v2608 = vpop.f32.mrf.mxu0
    %v2609 = vadd.f32 0.0, %v2608
    %2610 = vdwg.mxu0
    %2611 = vmatpush.msra.mxu0 0.0
    %2612 = vmatpush.msra.mxu0 0.0
    %2613 = vmatpush.msra.mxu0 0.0
    %2614 = vmatpush.msra.mxu0 0.0
    %2615 = vmatpush.msra.mxu0 0.0
    %2616 = vmatpush.msra.mxu0 0.0
    %2617 = vmatpush.msra.mxu0 0.0
    %2618 = vmatpush.msra.mxu0 0.0
    %2619 = vmatpush.msra.mxu0 0.0
    %2620 = vmatpush.msra.mxu0 0.0
    %2621 = vmatpush.msra.mxu0 0.0
    %2622 = vmatpush.msra.mxu0 0.0
    %2623 = vmatpush.msra.mxu0 %v905
    %2624 = vmatpush.msra.mxu0 %v904
    %2625 = vmatpush.msra.mxu0 %v903
    %2626 = vmatpush.msra.mxu0 %v902
    %2627 = vmatmul.f32.gmra.mxu0 %v2517
    %v2628 = vpop.f32.mrf.mxu0
    %v2629 = vadd.f32 %v2609, %v2628
    %2630 = vdwg.mxu0
    %v2631 = vadd.f32 %v2629, %v954
    %v2632 = vtanh.pop %v2631
    %2633 = vmatpush.msra.mxu0 0.0
    %2634 = vmatpush.msra.mxu0 0.0
    %2635 = vmatpush.msra.mxu0 0.0
    %2636 = vmatpush.msra.mxu0 0.0
    %2637 = vmatpush.msra.mxu0 0.0
    %2638 = vmatpush.msra.mxu0 0.0
    %2639 = vmatpush.msra.mxu0 0.0
    %2640 = vmatpush.msra.mxu0 0.0
    %2641 = vmatpush.msra.mxu0 0.0
    %2642 = vmatpush.msra.mxu0 0.0
    %2643 = vmatpush.msra.mxu0 0.0
    %2644 = vmatpush.msra.mxu0 0.0
    %2645 = vmatpush.msra.mxu0 %v967
    %2646 = vmatpush.msra.mxu0 %v966
    %2647 = vmatpush.msra.mxu0 %v965
    %2648 = vmatpush.msra.mxu0 %v964
    %2649 = vmatmul.f32.gmra.mxu0 %v2494
    %v2650 = vpop.f32.mrf.mxu0
    %v2651 = vadd.f32 0.0, %v2650
    %2652 = vdwg.mxu0
    %2653 = vmatpush.msra.mxu0 0.0
    %2654 = vmatpush.msra.mxu0 0.0
    %2655 = vmatpush.msra.mxu0 0.0
    %2656 = vmatpush.msra.mxu0 0.0
    %2657 = vmatpush.msra.mxu0 0.0
    %2658 = vmatpush.msra.mxu0 0.0
    %2659 = vmatpush.msra.mxu0 0.0
    %2660 = vmatpush.msra.mxu0 0.0
    %2661 = vmatpush.msra.mxu0 0.0
    %2662 = vmatpush.msra.mxu0 0.0
    %2663 = vmatpush.msra.mxu0 0.0
    %2664 = vmatpush.msra.mxu0 0.0
    %2665 = vmatpush.msra.mxu0 %v962
    %2666 = vmatpush.msra.mxu0 %v961
    %2667 = vmatpush.msra.mxu0 %v960
    %2668 = vmatpush.msra.mxu0 %v959
    %2669 = vmatmul.f32.gmra.mxu0 %v2517
    %v2670 = vpop.f32.mrf.mxu0
    %v2671 = vadd.f32 %v2651, %v2670
    %2672 = vdwg.mxu0
    %v2673 = vadd.f32 %v2671, %v1011
    %v2674 = vsub.f32 0.0, %v2673
    %v2675 = vmul.f32 %v2674, 1.442695
    %v2676 = vpow.pop %v2675
    %v2677 = vadd.f32 %v2676, 1.0
    %v2678 = vrcp.pop %v2677
    %v2679 = vmul.f32 %v2590, %v2266
    %v2680 = vmul.f32 %v2544, %v2632
    %v2681 = vadd.f32 %v2679, %v2680
    %v2682 = vtanh.pop %v2681
    %v2683 = vmul.f32 %v2678, %v2682
    %vm2684 = vcmp.eq.s32.totalorder %v497, 5
    %v2685 = vsel %vm2684, 1, 0
    %2686 = vset.pattern.permute.xlu0 0
    %2687 = vperm.xlu0 %2686, %v2685
    %v2688 = vpop.permute.xlu0 %2687
    %vm2689 = vcmp.eq.s32.totalorder %v2688, 1
    %v2690 = vsel %vm2689, %v2683, %v2275
    %2691 = vset.pattern.permute.xlu0 5
    %2692 = vperm.xlu0 %2691, %v496
    %v2693 = vpop.permute.xlu0 %2692
    %vm2694 = vcmp.eq.s32.totalorder %v502, %v2693
    %v2695 = vsel %vm2694, 1, 0
    %v2696 = vcvt.s32.f32 %v2695
    %v2698 = vsel %vm509, %v2696, 0
    %2700 = vmatpush.msra.mxu0 0.0
    %2701 = vmatpush.msra.mxu0 0.0
    %2702 = vmatpush.msra.mxu0 0.0
    %2703 = vmatpush.msra.mxu0 0.0
    %2704 = vmatpush.msra.mxu0 0.0
    %2705 = vmatpush.msra.mxu0 0.0
    %2706 = vmatpush.msra.mxu0 0.0
    %2707 = vmatpush.msra.mxu0 0.0
    %2708 = vmatpush.msra.mxu0 0.0
    %2709 = vmatpush.msra.mxu0 0.0
    %2710 = vmatpush.msra.mxu0 0.0
    %2711 = vmatpush.msra.mxu0 0.0
    %2712 = vmatpush.msra.mxu0 0.0
    %2713 = vmatpush.msra.mxu0 %v515
    %2714 = vmatpush.msra.mxu0 %v499
    %2715 = vmatpush.msra.mxu0 %v498
    %2716 = vmatmul.f32.gmra.mxu0 %v2698
    %v2717 = vpop.f32.mrf.mxu0
    %v2718 = vadd.f32 0.0, %v2717
    %2719 = vdwg.mxu0
    %2720 = vmatpush.msra.mxu0 0.0
    %2721 = vmatpush.msra.mxu0 0.0
    %2722 = vmatpush.msra.mxu0 0.0
    %2723 = vmatpush.msra.mxu0 0.0
    %2724 = vmatpush.msra.mxu0 0.0
    %2725 = vmatpush.msra.mxu0 0.0
    %2726 = vmatpush.msra.mxu0 0.0
    %2727 = vmatpush.msra.mxu0 0.0
    %2728 = vmatpush.msra.mxu0 0.0
    %2729 = vmatpush.msra.mxu0 0.0
    %2730 = vmatpush.msra.mxu0 0.0
    %2731 = vmatpush.msra.mxu0 0.0
    %2732 = vmatpush.msra.mxu0 %v542
    %2733 = vmatpush.msra.mxu0 %v541
    %2734 = vmatpush.msra.mxu0 %v540
    %2735 = vmatpush.msra.mxu0 %v539
    %2736 = vmatmul.f32.gmra.mxu0 %v2517
    %v2737 = vpop.f32.mrf.mxu0
    %v2738 = vadd.f32 0.0, %v2737
    %2739 = vdwg.mxu0
    %v2741 = vsel %vm567, %v2718, 0
    %2743 = vmatpush.msra.mxu0 0.0
    %2744 = vmatpush.msra.mxu0 0.0
    %2745 = vmatpush.msra.mxu0 0.0
    %2746 = vmatpush.msra.mxu0 0.0
    %2747 = vmatpush.msra.mxu0 0.0
    %2748 = vmatpush.msra.mxu0 0.0
    %2749 = vmatpush.msra.mxu0 0.0
    %2750 = vmatpush.msra.mxu0 0.0
    %2751 = vmatpush.msra.mxu0 0.0
    %2752 = vmatpush.msra.mxu0 0.0
    %2753 = vmatpush.msra.mxu0 0.0
    %2754 = vmatpush.msra.mxu0 0.0
    %2755 = vmatpush.msra.mxu0 0.0
    %2756 = vmatpush.msra.mxu0 0.0
    %2757 = vmatpush.msra.mxu0 %v538
    %2758 = vmatpush.msra.mxu0 %v537
    %2759 = vmatmul.f32.gmra.mxu0 %v2741
    %v2760 = vpop.f32.mrf.mxu0
    %v2761 = vadd.f32 %v2738, %v2760
    %2762 = vdwg.mxu0
    %v2763 = vadd.f32 %v2761, %v593
    %v2764 = vsub.f32 0.0, %v2763
    %v2765 = vmul.f32 %v2764, 1.442695
    %v2766 = vpow.pop %v2765
    %v2767 = vadd.f32 %v2766, 1.0
    %v2768 = vrcp.pop %v2767
    %2769 = vmatpush.msra.mxu0 0.0
    %2770 = vmatpush.msra.mxu0 0.0
    %2771 = vmatpush.msra.mxu0 0.0
    %2772 = vmatpush.msra.mxu0 0.0
    %2773 = vmatpush.msra.mxu0 0.0
    %2774 = vmatpush.msra.mxu0 0.0
    %2775 = vmatpush.msra.mxu0 0.0
    %2776 = vmatpush.msra.mxu0 0.0
    %2777 = vmatpush.msra.mxu0 0.0
    %2778 = vmatpush.msra.mxu0 0.0
    %2779 = vmatpush.msra.mxu0 0.0
    %2780 = vmatpush.msra.mxu0 0.0
    %2781 = vmatpush.msra.mxu0 %v608
    %2782 = vmatpush.msra.mxu0 %v607
    %2783 = vmatpush.msra.mxu0 %v606
    %2784 = vmatpush.msra.mxu0 %v605
    %2785 = vmatmul.f32.gmra.mxu0 %v2517
    %v2786 = vpop.f32.mrf.mxu0
    %v2787 = vadd.f32 0.0, %v2786
    %2788 = vdwg.mxu0
    %2789 = vmatpush.msra.mxu0 0.0
    %2790 = vmatpush.msra.mxu0 0.0
    %2791 = vmatpush.msra.mxu0 0.0
    %2792 = vmatpush.msra.mxu0 0.0
    %2793 = vmatpush.msra.mxu0 0.0
    %2794 = vmatpush.msra.mxu0 0.0
    %2795 = vmatpush.msra.mxu0 0.0
    %2796 = vmatpush.msra.mxu0 0.0
    %2797 = vmatpush.msra.mxu0 0.0
    %2798 = vmatpush.msra.mxu0 0.0
    %2799 = vmatpush.msra.mxu0 0.0
    %2800 = vmatpush.msra.mxu0 0.0
    %2801 = vmatpush.msra.mxu0 0.0
    %2802 = vmatpush.msra.mxu0 0.0
    %2803 = vmatpush.msra.mxu0 %v603
    %2804 = vmatpush.msra.mxu0 %v602
    %2805 = vmatmul.f32.gmra.mxu0 %v2741
    %v2806 = vpop.f32.mrf.mxu0
    %v2807 = vadd.f32 %v2787, %v2806
    %2808 = vdwg.mxu0
    %v2809 = vadd.f32 %v2807, %v652
    %v2810 = vsub.f32 0.0, %v2809
    %v2811 = vmul.f32 %v2810, 1.442695
    %v2812 = vpow.pop %v2811
    %v2813 = vadd.f32 %v2812, 1.0
    %v2814 = vrcp.pop %v2813
    %2815 = vmatpush.msra.mxu0 0.0
    %2816 = vmatpush.msra.mxu0 0.0
    %2817 = vmatpush.msra.mxu0 0.0
    %2818 = vmatpush.msra.mxu0 0.0
    %2819 = vmatpush.msra.mxu0 0.0
    %2820 = vmatpush.msra.mxu0 0.0
    %2821 = vmatpush.msra.mxu0 0.0
    %2822 = vmatpush.msra.mxu0 0.0
    %2823 = vmatpush.msra.mxu0 0.0
    %2824 = vmatpush.msra.mxu0 0.0
    %2825 = vmatpush.msra.mxu0 0.0
    %2826 = vmatpush.msra.mxu0 0.0
    %2827 = vmatpush.msra.mxu0 %v667
    %2828 = vmatpush.msra.mxu0 %v666
    %2829 = vmatpush.msra.mxu0 %v665
    %2830 = vmatpush.msra.mxu0 %v664
    %2831 = vmatmul.f32.gmra.mxu0 %v2517
    %v2832 = vpop.f32.mrf.mxu0
    %v2833 = vadd.f32 0.0, %v2832
    %2834 = vdwg.mxu0
    %2835 = vmatpush.msra.mxu0 0.0
    %2836 = vmatpush.msra.mxu0 0.0
    %2837 = vmatpush.msra.mxu0 0.0
    %2838 = vmatpush.msra.mxu0 0.0
    %2839 = vmatpush.msra.mxu0 0.0
    %2840 = vmatpush.msra.mxu0 0.0
    %2841 = vmatpush.msra.mxu0 0.0
    %2842 = vmatpush.msra.mxu0 0.0
    %2843 = vmatpush.msra.mxu0 0.0
    %2844 = vmatpush.msra.mxu0 0.0
    %2845 = vmatpush.msra.mxu0 0.0
    %2846 = vmatpush.msra.mxu0 0.0
    %2847 = vmatpush.msra.mxu0 0.0
    %2848 = vmatpush.msra.mxu0 0.0
    %2849 = vmatpush.msra.mxu0 %v662
    %2850 = vmatpush.msra.mxu0 %v661
    %2851 = vmatmul.f32.gmra.mxu0 %v2741
    %v2852 = vpop.f32.mrf.mxu0
    %v2853 = vadd.f32 %v2833, %v2852
    %2854 = vdwg.mxu0
    %v2855 = vadd.f32 %v2853, %v711
    %v2856 = vtanh.pop %v2855
    %2857 = vmatpush.msra.mxu0 0.0
    %2858 = vmatpush.msra.mxu0 0.0
    %2859 = vmatpush.msra.mxu0 0.0
    %2860 = vmatpush.msra.mxu0 0.0
    %2861 = vmatpush.msra.mxu0 0.0
    %2862 = vmatpush.msra.mxu0 0.0
    %2863 = vmatpush.msra.mxu0 0.0
    %2864 = vmatpush.msra.mxu0 0.0
    %2865 = vmatpush.msra.mxu0 0.0
    %2866 = vmatpush.msra.mxu0 0.0
    %2867 = vmatpush.msra.mxu0 0.0
    %2868 = vmatpush.msra.mxu0 0.0
    %2869 = vmatpush.msra.mxu0 %v722
    %2870 = vmatpush.msra.mxu0 %v721
    %2871 = vmatpush.msra.mxu0 %v720
    %2872 = vmatpush.msra.mxu0 %v719
    %2873 = vmatmul.f32.gmra.mxu0 %v2517
    %v2874 = vpop.f32.mrf.mxu0
    %v2875 = vadd.f32 0.0, %v2874
    %2876 = vdwg.mxu0
    %2877 = vmatpush.msra.mxu0 0.0
    %2878 = vmatpush.msra.mxu0 0.0
    %2879 = vmatpush.msra.mxu0 0.0
    %2880 = vmatpush.msra.mxu0 0.0
    %2881 = vmatpush.msra.mxu0 0.0
    %2882 = vmatpush.msra.mxu0 0.0
    %2883 = vmatpush.msra.mxu0 0.0
    %2884 = vmatpush.msra.mxu0 0.0
    %2885 = vmatpush.msra.mxu0 0.0
    %2886 = vmatpush.msra.mxu0 0.0
    %2887 = vmatpush.msra.mxu0 0.0
    %2888 = vmatpush.msra.mxu0 0.0
    %2889 = vmatpush.msra.mxu0 0.0
    %2890 = vmatpush.msra.mxu0 0.0
    %2891 = vmatpush.msra.mxu0 %v717
    %2892 = vmatpush.msra.mxu0 %v716
    %2893 = vmatmul.f32.gmra.mxu0 %v2741
    %v2894 = vpop.f32.mrf.mxu0
    %v2895 = vadd.f32 %v2875, %v2894
    %2896 = vdwg.mxu0
    %v2897 = vadd.f32 %v2895, %v766
    %v2898 = vsub.f32 0.0, %v2897
    %v2899 = vmul.f32 %v2898, 1.442695
    %v2900 = vpow.pop %v2899
    %v2901 = vadd.f32 %v2900, 1.0
    %v2902 = vrcp.pop %v2901
    %v2903 = vmul.f32 %v2814, %v2490
    %v2904 = vmul.f32 %v2768, %v2856
    %v2905 = vadd.f32 %v2903, %v2904
    %v2906 = vtanh.pop %v2905
    %v2907 = vmul.f32 %v2902, %v2906
    %v2909 = vsel %vm543, %v2683, 0
    %2911 = vmatpush.msra.mxu0 0.0
    %2912 = vmatpush.msra.mxu0 0.0
    %2913 = vmatpush.msra.mxu0 0.0
    %2914 = vmatpush.msra.mxu0 0.0
    %2915 = vmatpush.msra.mxu0 0.0
    %2916 = vmatpush.msra.mxu0 0.0
    %2917 = vmatpush.msra.mxu0 0.0
    %2918 = vmatpush.msra.mxu0 0.0
    %2919 = vmatpush.msra.mxu0 0.0
    %2920 = vmatpush.msra.mxu0 0.0
    %2921 = vmatpush.msra.mxu0 0.0
    %2922 = vmatpush.msra.mxu0 0.0
    %2923 = vmatpush.msra.mxu0 %v786
    %2924 = vmatpush.msra.mxu0 %v785
    %2925 = vmatpush.msra.mxu0 %v784
    %2926 = vmatpush.msra.mxu0 %v783
    %2927 = vmatmul.f32.gmra.mxu0 %v2909
    %v2928 = vpop.f32.mrf.mxu0
    %v2929 = vadd.f32 0.0, %v2928
    %2930 = vdwg.mxu0
    %v2932 = vsel %vm543, %v2907, 0
    %2934 = vmatpush.msra.mxu0 0.0
    %2935 = vmatpush.msra.mxu0 0.0
    %2936 = vmatpush.msra.mxu0 0.0
    %2937 = vmatpush.msra.mxu0 0.0
    %2938 = vmatpush.msra.mxu0 0.0
    %2939 = vmatpush.msra.mxu0 0.0
    %2940 = vmatpush.msra.mxu0 0.0
    %2941 = vmatpush.msra.mxu0 0.0
    %2942 = vmatpush.msra.mxu0 0.0
    %2943 = vmatpush.msra.mxu0 0.0
    %2944 = vmatpush.msra.mxu0 0.0
    %2945 = vmatpush.msra.mxu0 0.0
    %2946 = vmatpush.msra.mxu0 %v782
    %2947 = vmatpush.msra.mxu0 %v781
    %2948 = vmatpush.msra.mxu0 %v780
    %2949 = vmatpush.msra.mxu0 %v779
    %2950 = vmatmul.f32.gmra.mxu0 %v2932
    %v2951 = vpop.f32.mrf.mxu0
    %v2952 = vadd.f32 %v2929, %v2951
    %2953 = vdwg.mxu0
    %v2954 = vadd.f32 %v2952, %v832
    %v2955 = vsub.f32 0.0, %v2954
    %v2956 = vmul.f32 %v2955, 1.442695
    %v2957 = vpow.pop %v2956
    %v2958 = vadd.f32 %v2957, 1.0
    %v2959 = vrcp.pop %v2958
    %2960 = vmatpush.msra.mxu0 0.0
    %2961 = vmatpush.msra.mxu0 0.0
    %2962 = vmatpush.msra.mxu0 0.0
    %2963 = vmatpush.msra.mxu0 0.0
    %2964 = vmatpush.msra.mxu0 0.0
    %2965 = vmatpush.msra.mxu0 0.0
    %2966 = vmatpush.msra.mxu0 0.0
    %2967 = vmatpush.msra.mxu0 0.0
    %2968 = vmatpush.msra.mxu0 0.0
    %2969 = vmatpush.msra.mxu0 0.0
    %2970 = vmatpush.msra.mxu0 0.0
    %2971 = vmatpush.msra.mxu0 0.0
    %2972 = vmatpush.msra.mxu0 %v849
    %2973 = vmatpush.msra.mxu0 %v848
    %2974 = vmatpush.msra.mxu0 %v847
    %2975 = vmatpush.msra.mxu0 %v846
    %2976 = vmatmul.f32.gmra.mxu0 %v2909
    %v2977 = vpop.f32.mrf.mxu0
    %v2978 = vadd.f32 0.0, %v2977
    %2979 = vdwg.mxu0
    %2980 = vmatpush.msra.mxu0 0.0
    %2981 = vmatpush.msra.mxu0 0.0
    %2982 = vmatpush.msra.mxu0 0.0
    %2983 = vmatpush.msra.mxu0 0.0
    %2984 = vmatpush.msra.mxu0 0.0
    %2985 = vmatpush.msra.mxu0 0.0
    %2986 = vmatpush.msra.mxu0 0.0
    %2987 = vmatpush.msra.mxu0 0.0
    %2988 = vmatpush.msra.mxu0 0.0
    %2989 = vmatpush.msra.mxu0 0.0
    %2990 = vmatpush.msra.mxu0 0.0
    %2991 = vmatpush.msra.mxu0 0.0
    %2992 = vmatpush.msra.mxu0 %v844
    %2993 = vmatpush.msra.mxu0 %v843
    %2994 = vmatpush.msra.mxu0 %v842
    %2995 = vmatpush.msra.mxu0 %v841
    %2996 = vmatmul.f32.gmra.mxu0 %v2932
    %v2997 = vpop.f32.mrf.mxu0
    %v2998 = vadd.f32 %v2978, %v2997
    %2999 = vdwg.mxu0
    %v3000 = vadd.f32 %v2998, %v893
    %v3001 = vsub.f32 0.0, %v3000
    %v3002 = vmul.f32 %v3001, 1.442695
    %v3003 = vpow.pop %v3002
    %v3004 = vadd.f32 %v3003, 1.0
    %v3005 = vrcp.pop %v3004
    %3006 = vmatpush.msra.mxu0 0.0
    %3007 = vmatpush.msra.mxu0 0.0
    %3008 = vmatpush.msra.mxu0 0.0
    %3009 = vmatpush.msra.mxu0 0.0
    %3010 = vmatpush.msra.mxu0 0.0
    %3011 = vmatpush.msra.mxu0 0.0
    %3012 = vmatpush.msra.mxu0 0.0
    %3013 = vmatpush.msra.mxu0 0.0
    %3014 = vmatpush.msra.mxu0 0.0
    %3015 = vmatpush.msra.mxu0 0.0
    %3016 = vmatpush.msra.mxu0 0.0
    %3017 = vmatpush.msra.mxu0 0.0
    %3018 = vmatpush.msra.mxu0 %v910
    %3019 = vmatpush.msra.mxu0 %v909
    %3020 = vmatpush.msra.mxu0 %v908
    %3021 = vmatpush.msra.mxu0 %v907
    %3022 = vmatmul.f32.gmra.mxu0 %v2909
    %v3023 = vpop.f32.mrf.mxu0
    %v3024 = vadd.f32 0.0, %v3023
    %3025 = vdwg.mxu0
    %3026 = vmatpush.msra.mxu0 0.0
    %3027 = vmatpush.msra.mxu0 0.0
    %3028 = vmatpush.msra.mxu0 0.0
    %3029 = vmatpush.msra.mxu0 0.0
    %3030 = vmatpush.msra.mxu0 0.0
    %3031 = vmatpush.msra.mxu0 0.0
    %3032 = vmatpush.msra.mxu0 0.0
    %3033 = vmatpush.msra.mxu0 0.0
    %3034 = vmatpush.msra.mxu0 0.0
    %3035 = vmatpush.msra.mxu0 0.0
    %3036 = vmatpush.msra.mxu0 0.0
    %3037 = vmatpush.msra.mxu0 0.0
    %3038 = vmatpush.msra.mxu0 %v905
    %3039 = vmatpush.msra.mxu0 %v904
    %3040 = vmatpush.msra.mxu0 %v903
    %3041 = vmatpush.msra.mxu0 %v902
    %3042 = vmatmul.f32.gmra.mxu0 %v2932
    %v3043 = vpop.f32.mrf.mxu0
    %v3044 = vadd.f32 %v3024, %v3043
    %3045 = vdwg.mxu0
    %v3046 = vadd.f32 %v3044, %v954
    %v3047 = vtanh.pop %v3046
    %3048 = vmatpush.msra.mxu0 0.0
    %3049 = vmatpush.msra.mxu0 0.0
    %3050 = vmatpush.msra.mxu0 0.0
    %3051 = vmatpush.msra.mxu0 0.0
    %3052 = vmatpush.msra.mxu0 0.0
    %3053 = vmatpush.msra.mxu0 0.0
    %3054 = vmatpush.msra.mxu0 0.0
    %3055 = vmatpush.msra.mxu0 0.0
    %3056 = vmatpush.msra.mxu0 0.0
    %3057 = vmatpush.msra.mxu0 0.0
    %3058 = vmatpush.msra.mxu0 0.0
    %3059 = vmatpush.msra.mxu0 0.0
    %3060 = vmatpush.msra.mxu0 %v967
    %3061 = vmatpush.msra.mxu0 %v966
    %3062 = vmatpush.msra.mxu0 %v965
    %3063 = vmatpush.msra.mxu0 %v964
    %3064 = vmatmul.f32.gmra.mxu0 %v2909
    %v3065 = vpop.f32.mrf.mxu0
    %v3066 = vadd.f32 0.0, %v3065
    %3067 = vdwg.mxu0
    %3068 = vmatpush.msra.mxu0 0.0
    %3069 = vmatpush.msra.mxu0 0.0
    %3070 = vmatpush.msra.mxu0 0.0
    %3071 = vmatpush.msra.mxu0 0.0
    %3072 = vmatpush.msra.mxu0 0.0
    %3073 = vmatpush.msra.mxu0 0.0
    %3074 = vmatpush.msra.mxu0 0.0
    %3075 = vmatpush.msra.mxu0 0.0
    %3076 = vmatpush.msra.mxu0 0.0
    %3077 = vmatpush.msra.mxu0 0.0
    %3078 = vmatpush.msra.mxu0 0.0
    %3079 = vmatpush.msra.mxu0 0.0
    %3080 = vmatpush.msra.mxu0 %v962
    %3081 = vmatpush.msra.mxu0 %v961
    %3082 = vmatpush.msra.mxu0 %v960
    %3083 = vmatpush.msra.mxu0 %v959
    %3084 = vmatmul.f32.gmra.mxu0 %v2932
    %v3085 = vpop.f32.mrf.mxu0
    %v3086 = vadd.f32 %v3066, %v3085
    %3087 = vdwg.mxu0
    %v3088 = vadd.f32 %v3086, %v1011
    %v3089 = vsub.f32 0.0, %v3088
    %v3090 = vmul.f32 %v3089, 1.442695
    %v3091 = vpow.pop %v3090
    %v3092 = vadd.f32 %v3091, 1.0
    %v3093 = vrcp.pop %v3092
    %v3094 = vmul.f32 %v3005, %v2681
    %v3095 = vmul.f32 %v2959, %v3047
    %v3096 = vadd.f32 %v3094, %v3095
    %v3097 = vtanh.pop %v3096
    %v3098 = vmul.f32 %v3093, %v3097
    %vm3099 = vcmp.eq.s32.totalorder %v497, 6
    %v3100 = vsel %vm3099, 1, 0
    %3101 = vset.pattern.permute.xlu0 0
    %3102 = vperm.xlu0 %3101, %v3100
    %v3103 = vpop.permute.xlu0 %3102
    %vm3104 = vcmp.eq.s32.totalorder %v3103, 1
    %v3105 = vsel %vm3104, %v3098, %v2690
    %3106 = vset.pattern.permute.xlu0 6
    %3107 = vperm.xlu0 %3106, %v496
    %v3108 = vpop.permute.xlu0 %3107
    %vm3109 = vcmp.eq.s32.totalorder %v502, %v3108
    %v3110 = vsel %vm3109, 1, 0
    %v3111 = vcvt.s32.f32 %v3110
    %v3113 = vsel %vm509, %v3111, 0
    %3115 = vmatpush.msra.mxu0 0.0
    %3116 = vmatpush.msra.mxu0 0.0
    %3117 = vmatpush.msra.mxu0 0.0
    %3118 = vmatpush.msra.mxu0 0.0
    %3119 = vmatpush.msra.mxu0 0.0
    %3120 = vmatpush.msra.mxu0 0.0
    %3121 = vmatpush.msra.mxu0 0.0
    %3122 = vmatpush.msra.mxu0 0.0
    %3123 = vmatpush.msra.mxu0 0.0
    %3124 = vmatpush.msra.mxu0 0.0
    %3125 = vmatpush.msra.mxu0 0.0
    %3126 = vmatpush.msra.mxu0 0.0
    %3127 = vmatpush.msra.mxu0 0.0
    %3128 = vmatpush.msra.mxu0 %v515
    %3129 = vmatpush.msra.mxu0 %v499
    %3130 = vmatpush.msra.mxu0 %v498
    %3131 = vmatmul.f32.gmra.mxu0 %v3113
    %v3132 = vpop.f32.mrf.mxu0
    %v3133 = vadd.f32 0.0, %v3132
    %3134 = vdwg.mxu0
    %3135 = vmatpush.msra.mxu0 0.0
    %3136 = vmatpush.msra.mxu0 0.0
    %3137 = vmatpush.msra.mxu0 0.0
    %3138 = vmatpush.msra.mxu0 0.0
    %3139 = vmatpush.msra.mxu0 0.0
    %3140 = vmatpush.msra.mxu0 0.0
    %3141 = vmatpush.msra.mxu0 0.0
    %3142 = vmatpush.msra.mxu0 0.0
    %3143 = vmatpush.msra.mxu0 0.0
    %3144 = vmatpush.msra.mxu0 0.0
    %3145 = vmatpush.msra.mxu0 0.0
    %3146 = vmatpush.msra.mxu0 0.0
    %3147 = vmatpush.msra.mxu0 %v542
    %3148 = vmatpush.msra.mxu0 %v541
    %3149 = vmatpush.msra.mxu0 %v540
    %3150 = vmatpush.msra.mxu0 %v539
    %3151 = vmatmul.f32.gmra.mxu0 %v2932
    %v3152 = vpop.f32.mrf.mxu0
    %v3153 = vadd.f32 0.0, %v3152
    %3154 = vdwg.mxu0
    %v3156 = vsel %vm567, %v3133, 0
    %3158 = vmatpush.msra.mxu0 0.0
    %3159 = vmatpush.msra.mxu0 0.0
    %3160 = vmatpush.msra.mxu0 0.0
    %3161 = vmatpush.msra.mxu0 0.0
    %3162 = vmatpush.msra.mxu0 0.0
    %3163 = vmatpush.msra.mxu0 0.0
    %3164 = vmatpush.msra.mxu0 0.0
    %3165 = vmatpush.msra.mxu0 0.0
    %3166 = vmatpush.msra.mxu0 0.0
    %3167 = vmatpush.msra.mxu0 0.0
    %3168 = vmatpush.msra.mxu0 0.0
    %3169 = vmatpush.msra.mxu0 0.0
    %3170 = vmatpush.msra.mxu0 0.0
    %3171 = vmatpush.msra.mxu0 0.0
    %3172 = vmatpush.msra.mxu0 %v538
    %3173 = vmatpush.msra.mxu0 %v537
    %3174 = vmatmul.f32.gmra.mxu0 %v3156
    %v3175 = vpop.f32.mrf.mxu0
    %v3176 = vadd.f32 %v3153, %v3175
    %3177 = vdwg.mxu0
    %v3178 = vadd.f32 %v3176, %v593
    %v3179 = vsub.f32 0.0, %v3178
    %v3180 = vmul.f32 %v3179, 1.442695
    %v3181 = vpow.pop %v3180
    %v3182 = vadd.f32 %v3181, 1.0
    %v3183 = vrcp.pop %v3182
    %3184 = vmatpush.msra.mxu0 0.0
    %3185 = vmatpush.msra.mxu0 0.0
    %3186 = vmatpush.msra.mxu0 0.0
    %3187 = vmatpush.msra.mxu0 0.0
    %3188 = vmatpush.msra.mxu0 0.0
    %3189 = vmatpush.msra.mxu0 0.0
    %3190 = vmatpush.msra.mxu0 0.0
    %3191 = vmatpush.msra.mxu0 0.0
    %3192 = vmatpush.msra.mxu0 0.0
    %3193 = vmatpush.msra.mxu0 0.0
    %3194 = vmatpush.msra.mxu0 0.0
    %3195 = vmatpush.msra.mxu0 0.0
    %3196 = vmatpush.msra.mxu0 %v608
    %3197 = vmatpush.msra.mxu0 %v607
    %3198 = vmatpush.msra.mxu0 %v606
    %3199 = vmatpush.msra.mxu0 %v605
    %3200 = vmatmul.f32.gmra.mxu0 %v2932
    %v3201 = vpop.f32.mrf.mxu0
    %v3202 = vadd.f32 0.0, %v3201
    %3203 = vdwg.mxu0
    %3204 = vmatpush.msra.mxu0 0.0
    %3205 = vmatpush.msra.mxu0 0.0
    %3206 = vmatpush.msra.mxu0 0.0
    %3207 = vmatpush.msra.mxu0 0.0
    %3208 = vmatpush.msra.mxu0 0.0
    %3209 = vmatpush.msra.mxu0 0.0
    %3210 = vmatpush.msra.mxu0 0.0
    %3211 = vmatpush.msra.mxu0 0.0
    %3212 = vmatpush.msra.mxu0 0.0
    %3213 = vmatpush.msra.mxu0 0.0
    %3214 = vmatpush.msra.mxu0 0.0
    %3215 = vmatpush.msra.mxu0 0.0
    %3216 = vmatpush.msra.mxu0 0.0
    %3217 = vmatpush.msra.mxu0 0.0
    %3218 = vmatpush.msra.mxu0 %v603
    %3219 = vmatpush.msra.mxu0 %v602
    %3220 = vmatmul.f32.gmra.mxu0 %v3156
    %v3221 = vpop.f32.mrf.mxu0
    %v3222 = vadd.f32 %v3202, %v3221
    %3223 = vdwg.mxu0
    %v3224 = vadd.f32 %v3222, %v652
    %v3225 = vsub.f32 0.0, %v3224
    %v3226 = vmul.f32 %v3225, 1.442695
    %v3227 = vpow.pop %v3226
    %v3228 = vadd.f32 %v3227, 1.0
    %v3229 = vrcp.pop %v3228
    %3230 = vmatpush.msra.mxu0 0.0
    %3231 = vmatpush.msra.mxu0 0.0
    %3232 = vmatpush.msra.mxu0 0.0
    %3233 = vmatpush.msra.mxu0 0.0
    %3234 = vmatpush.msra.mxu0 0.0
    %3235 = vmatpush.msra.mxu0 0.0
    %3236 = vmatpush.msra.mxu0 0.0
    %3237 = vmatpush.msra.mxu0 0.0
    %3238 = vmatpush.msra.mxu0 0.0
    %3239 = vmatpush.msra.mxu0 0.0
    %3240 = vmatpush.msra.mxu0 0.0
    %3241 = vmatpush.msra.mxu0 0.0
    %3242 = vmatpush.msra.mxu0 %v667
    %3243 = vmatpush.msra.mxu0 %v666
    %3244 = vmatpush.msra.mxu0 %v665
    %3245 = vmatpush.msra.mxu0 %v664
    %3246 = vmatmul.f32.gmra.mxu0 %v2932
    %v3247 = vpop.f32.mrf.mxu0
    %v3248 = vadd.f32 0.0, %v3247
    %3249 = vdwg.mxu0
    %3250 = vmatpush.msra.mxu0 0.0
    %3251 = vmatpush.msra.mxu0 0.0
    %3252 = vmatpush.msra.mxu0 0.0
    %3253 = vmatpush.msra.mxu0 0.0
    %3254 = vmatpush.msra.mxu0 0.0
    %3255 = vmatpush.msra.mxu0 0.0
    %3256 = vmatpush.msra.mxu0 0.0
    %3257 = vmatpush.msra.mxu0 0.0
    %3258 = vmatpush.msra.mxu0 0.0
    %3259 = vmatpush.msra.mxu0 0.0
    %3260 = vmatpush.msra.mxu0 0.0
    %3261 = vmatpush.msra.mxu0 0.0
    %3262 = vmatpush.msra.mxu0 0.0
    %3263 = vmatpush.msra.mxu0 0.0
    %3264 = vmatpush.msra.mxu0 %v662
    %3265 = vmatpush.msra.mxu0 %v661
    %3266 = vmatmul.f32.gmra.mxu0 %v3156
    %v3267 = vpop.f32.mrf.mxu0
    %v3268 = vadd.f32 %v3248, %v3267
    %3269 = vdwg.mxu0
    %v3270 = vadd.f32 %v3268, %v711
    %v3271 = vtanh.pop %v3270
    %3272 = vmatpush.msra.mxu0 0.0
    %3273 = vmatpush.msra.mxu0 0.0
    %3274 = vmatpush.msra.mxu0 0.0
    %3275 = vmatpush.msra.mxu0 0.0
    %3276 = vmatpush.msra.mxu0 0.0
    %3277 = vmatpush.msra.mxu0 0.0
    %3278 = vmatpush.msra.mxu0 0.0
    %3279 = vmatpush.msra.mxu0 0.0
    %3280 = vmatpush.msra.mxu0 0.0
    %3281 = vmatpush.msra.mxu0 0.0
    %3282 = vmatpush.msra.mxu0 0.0
    %3283 = vmatpush.msra.mxu0 0.0
    %3284 = vmatpush.msra.mxu0 %v722
    %3285 = vmatpush.msra.mxu0 %v721
    %3286 = vmatpush.msra.mxu0 %v720
    %3287 = vmatpush.msra.mxu0 %v719
    %3288 = vmatmul.f32.gmra.mxu0 %v2932
    %v3289 = vpop.f32.mrf.mxu0
    %v3290 = vadd.f32 0.0, %v3289
    %3291 = vdwg.mxu0
    %3292 = vmatpush.msra.mxu0 0.0
    %3293 = vmatpush.msra.mxu0 0.0
    %3294 = vmatpush.msra.mxu0 0.0
    %3295 = vmatpush.msra.mxu0 0.0
    %3296 = vmatpush.msra.mxu0 0.0
    %3297 = vmatpush.msra.mxu0 0.0
    %3298 = vmatpush.msra.mxu0 0.0
    %3299 = vmatpush.msra.mxu0 0.0
    %3300 = vmatpush.msra.mxu0 0.0
    %3301 = vmatpush.msra.mxu0 0.0
    %3302 = vmatpush.msra.mxu0 0.0
    %3303 = vmatpush.msra.mxu0 0.0
    %3304 = vmatpush.msra.mxu0 0.0
    %3305 = vmatpush.msra.mxu0 0.0
    %3306 = vmatpush.msra.mxu0 %v717
    %3307 = vmatpush.msra.mxu0 %v716
    %3308 = vmatmul.f32.gmra.mxu0 %v3156
    %v3309 = vpop.f32.mrf.mxu0
    %v3310 = vadd.f32 %v3290, %v3309
    %3311 = vdwg.mxu0
    %v3312 = vadd.f32 %v3310, %v766
    %v3313 = vsub.f32 0.0, %v3312
    %v3314 = vmul.f32 %v3313, 1.442695
    %v3315 = vpow.pop %v3314
    %v3316 = vadd.f32 %v3315, 1.0
    %v3317 = vrcp.pop %v3316
    %v3318 = vmul.f32 %v3229, %v2905
    %v3319 = vmul.f32 %v3183, %v3271
    %v3320 = vadd.f32 %v3318, %v3319
    %v3321 = vtanh.pop %v3320
    %v3322 = vmul.f32 %v3317, %v3321
    %v3324 = vsel %vm543, %v3098, 0
    %3326 = vmatpush.msra.mxu0 0.0
    %3327 = vmatpush.msra.mxu0 0.0
    %3328 = vmatpush.msra.mxu0 0.0
    %3329 = vmatpush.msra.mxu0 0.0
    %3330 = vmatpush.msra.mxu0 0.0
    %3331 = vmatpush.msra.mxu0 0.0
    %3332 = vmatpush.msra.mxu0 0.0
    %3333 = vmatpush.msra.mxu0 0.0
    %3334 = vmatpush.msra.mxu0 0.0
    %3335 = vmatpush.msra.mxu0 0.0
    %3336 = vmatpush.msra.mxu0 0.0
    %3337 = vmatpush.msra.mxu0 0.0
    %3338 = vmatpush.msra.mxu0 %v786
    %3339 = vmatpush.msra.mxu0 %v785
    %3340 = vmatpush.msra.mxu0 %v784
    %3341 = vmatpush.msra.mxu0 %v783
    %3342 = vmatmul.f32.gmra.mxu0 %v3324
    %v3343 = vpop.f32.mrf.mxu0
    %v3344 = vadd.f32 0.0, %v3343
    %3345 = vdwg.mxu0
    %v3347 = vsel %vm543, %v3322, 0
    %3349 = vmatpush.msra.mxu0 0.0
    %3350 = vmatpush.msra.mxu0 0.0
    %3351 = vmatpush.msra.mxu0 0.0
    %3352 = vmatpush.msra.mxu0 0.0
    %3353 = vmatpush.msra.mxu0 0.0
    %3354 = vmatpush.msra.mxu0 0.0
    %3355 = vmatpush.msra.mxu0 0.0
    %3356 = vmatpush.msra.mxu0 0.0
    %3357 = vmatpush.msra.mxu0 0.0
    %3358 = vmatpush.msra.mxu0 0.0
    %3359 = vmatpush.msra.mxu0 0.0
    %3360 = vmatpush.msra.mxu0 0.0
    %3361 = vmatpush.msra.mxu0 %v782
    %3362 = vmatpush.msra.mxu0 %v781
    %3363 = vmatpush.msra.mxu0 %v780
    %3364 = vmatpush.msra.mxu0 %v779
    %3365 = vmatmul.f32.gmra.mxu0 %v3347
    %v3366 = vpop.f32.mrf.mxu0
    %v3367 = vadd.f32 %v3344, %v3366
    %3368 = vdwg.mxu0
    %v3369 = vadd.f32 %v3367, %v832
    %v3370 = vsub.f32 0.0, %v3369
    %v3371 = vmul.f32 %v3370, 1.442695
    %v3372 = vpow.pop %v3371
    %v3373 = vadd.f32 %v3372, 1.0
    %v3374 = vrcp.pop %v3373
    %3375 = vmatpush.msra.mxu0 0.0
    %3376 = vmatpush.msra.mxu0 0.0
    %3377 = vmatpush.msra.mxu0 0.0
    %3378 = vmatpush.msra.mxu0 0.0
    %3379 = vmatpush.msra.mxu0 0.0
    %3380 = vmatpush.msra.mxu0 0.0
    %3381 = vmatpush.msra.mxu0 0.0
    %3382 = vmatpush.msra.mxu0 0.0
    %3383 = vmatpush.msra.mxu0 0.0
    %3384 = vmatpush.msra.mxu0 0.0
    %3385 = vmatpush.msra.mxu0 0.0
    %3386 = vmatpush.msra.mxu0 0.0
    %3387 = vmatpush.msra.mxu0 %v849
    %3388 = vmatpush.msra.mxu0 %v848
    %3389 = vmatpush.msra.mxu0 %v847
    %3390 = vmatpush.msra.mxu0 %v846
    %3391 = vmatmul.f32.gmra.mxu0 %v3324
    %v3392 = vpop.f32.mrf.mxu0
    %v3393 = vadd.f32 0.0, %v3392
    %3394 = vdwg.mxu0
    %3395 = vmatpush.msra.mxu0 0.0
    %3396 = vmatpush.msra.mxu0 0.0
    %3397 = vmatpush.msra.mxu0 0.0
    %3398 = vmatpush.msra.mxu0 0.0
    %3399 = vmatpush.msra.mxu0 0.0
    %3400 = vmatpush.msra.mxu0 0.0
    %3401 = vmatpush.msra.mxu0 0.0
    %3402 = vmatpush.msra.mxu0 0.0
    %3403 = vmatpush.msra.mxu0 0.0
    %3404 = vmatpush.msra.mxu0 0.0
    %3405 = vmatpush.msra.mxu0 0.0
    %3406 = vmatpush.msra.mxu0 0.0
    %3407 = vmatpush.msra.mxu0 %v844
    %3408 = vmatpush.msra.mxu0 %v843
    %3409 = vmatpush.msra.mxu0 %v842
    %3410 = vmatpush.msra.mxu0 %v841
    %3411 = vmatmul.f32.gmra.mxu0 %v3347
    %v3412 = vpop.f32.mrf.mxu0
    %v3413 = vadd.f32 %v3393, %v3412
    %3414 = vdwg.mxu0
    %v3415 = vadd.f32 %v3413, %v893
    %v3416 = vsub.f32 0.0, %v3415
    %v3417 = vmul.f32 %v3416, 1.442695
    %v3418 = vpow.pop %v3417
    %v3419 = vadd.f32 %v3418, 1.0
    %v3420 = vrcp.pop %v3419
    %3421 = vmatpush.msra.mxu0 0.0
    %3422 = vmatpush.msra.mxu0 0.0
    %3423 = vmatpush.msra.mxu0 0.0
    %3424 = vmatpush.msra.mxu0 0.0
    %3425 = vmatpush.msra.mxu0 0.0
    %3426 = vmatpush.msra.mxu0 0.0
    %3427 = vmatpush.msra.mxu0 0.0
    %3428 = vmatpush.msra.mxu0 0.0
    %3429 = vmatpush.msra.mxu0 0.0
    %3430 = vmatpush.msra.mxu0 0.0
    %3431 = vmatpush.msra.mxu0 0.0
    %3432 = vmatpush.msra.mxu0 0.0
    %3433 = vmatpush.msra.mxu0 %v910
    %3434 = vmatpush.msra.mxu0 %v909
    %3435 = vmatpush.msra.mxu0 %v908
    %3436 = vmatpush.msra.mxu0 %v907
    %3437 = vmatmul.f32.gmra.mxu0 %v3324
    %v3438 = vpop.f32.mrf.mxu0
    %v3439 = vadd.f32 0.0, %v3438
    %3440 = vdwg.mxu0
    %3441 = vmatpush.msra.mxu0 0.0
    %3442 = vmatpush.msra.mxu0 0.0
    %3443 = vmatpush.msra.mxu0 0.0
    %3444 = vmatpush.msra.mxu0 0.0
    %3445 = vmatpush.msra.mxu0 0.0
    %3446 = vmatpush.msra.mxu0 0.0
    %3447 = vmatpush.msra.mxu0 0.0
    %3448 = vmatpush.msra.mxu0 0.0
    %3449 = vmatpush.msra.mxu0 0.0
    %3450 = vmatpush.msra.mxu0 0.0
    %3451 = vmatpush.msra.mxu0 0.0
    %3452 = vmatpush.msra.mxu0 0.0
    %3453 = vmatpush.msra.mxu0 %v905
    %3454 = vmatpush.msra.mxu0 %v904
    %3455 = vmatpush.msra.mxu0 %v903
    %3456 = vmatpush.msra.mxu0 %v902
    %3457 = vmatmul.f32.gmra.mxu0 %v3347
    %v3458 = vpop.f32.mrf.mxu0
    %v3459 = vadd.f32 %v3439, %v3458
    %3460 = vdwg.mxu0
    %v3461 = vadd.f32 %v3459, %v954
    %v3462 = vtanh.pop %v3461
    %3463 = vmatpush.msra.mxu0 0.0
    %3464 = vmatpush.msra.mxu0 0.0
    %3465 = vmatpush.msra.mxu0 0.0
    %3466 = vmatpush.msra.mxu0 0.0
    %3467 = vmatpush.msra.mxu0 0.0
    %3468 = vmatpush.msra.mxu0 0.0
    %3469 = vmatpush.msra.mxu0 0.0
    %3470 = vmatpush.msra.mxu0 0.0
    %3471 = vmatpush.msra.mxu0 0.0
    %3472 = vmatpush.msra.mxu0 0.0
    %3473 = vmatpush.msra.mxu0 0.0
    %3474 = vmatpush.msra.mxu0 0.0
    %3475 = vmatpush.msra.mxu0 %v967
    %3476 = vmatpush.msra.mxu0 %v966
    %3477 = vmatpush.msra.mxu0 %v965
    %3478 = vmatpush.msra.mxu0 %v964
    %3479 = vmatmul.f32.gmra.mxu0 %v3324
    %v3480 = vpop.f32.mrf.mxu0
    %v3481 = vadd.f32 0.0, %v3480
    %3482 = vdwg.mxu0
    %3483 = vmatpush.msra.mxu0 0.0
    %3484 = vmatpush.msra.mxu0 0.0
    %3485 = vmatpush.msra.mxu0 0.0
    %3486 = vmatpush.msra.mxu0 0.0
    %3487 = vmatpush.msra.mxu0 0.0
    %3488 = vmatpush.msra.mxu0 0.0
    %3489 = vmatpush.msra.mxu0 0.0
    %3490 = vmatpush.msra.mxu0 0.0
    %3491 = vmatpush.msra.mxu0 0.0
    %3492 = vmatpush.msra.mxu0 0.0
    %3493 = vmatpush.msra.mxu0 0.0
    %3494 = vmatpush.msra.mxu0 0.0
    %3495 = vmatpush.msra.mxu0 %v962
    %3496 = vmatpush.msra.mxu0 %v961
    %3497 = vmatpush.msra.mxu0 %v960
    %3498 = vmatpush.msra.mxu0 %v959
    %3499 = vmatmul.f32.gmra.mxu0 %v3347
    %v3500 = vpop.f32.mrf.mxu0
    %v3501 = vadd.f32 %v3481, %v3500
    %3502 = vdwg.mxu0
    %v3503 = vadd.f32 %v3501, %v1011
    %v3504 = vsub.f32 0.0, %v3503
    %v3505 = vmul.f32 %v3504, 1.442695
    %v3506 = vpow.pop %v3505
    %v3507 = vadd.f32 %v3506, 1.0
    %v3508 = vrcp.pop %v3507
    %v3509 = vmul.f32 %v3420, %v3096
    %v3510 = vmul.f32 %v3374, %v3462
    %v3511 = vadd.f32 %v3509, %v3510
    %v3512 = vtanh.pop %v3511
    %v3513 = vmul.f32 %v3508, %v3512
    %vm3514 = vcmp.eq.s32.totalorder %v497, 7
    %v3515 = vsel %vm3514, 1, 0
    %3516 = vset.pattern.permute.xlu0 0
    %3517 = vperm.xlu0 %3516, %v3515
    %v3518 = vpop.permute.xlu0 %3517
    %vm3519 = vcmp.eq.s32.totalorder %v3518, 1
    %v3520 = vsel %vm3519, %v3513, %v3105
    %3521 = vset.pattern.permute.xlu0 7
    %3522 = vperm.xlu0 %3521, %v496
    %v3523 = vpop.permute.xlu0 %3522
    %vm3524 = vcmp.eq.s32.totalorder %v502, %v3523
    %v3525 = vsel %vm3524, 1, 0
    %v3526 = vcvt.s32.f32 %v3525
    %v3528 = vsel %vm509, %v3526, 0
    %3530 = vmatpush.msra.mxu0 0.0
    %3531 = vmatpush.msra.mxu0 0.0
    %3532 = vmatpush.msra.mxu0 0.0
    %3533 = vmatpush.msra.mxu0 0.0
    %3534 = vmatpush.msra.mxu0 0.0
    %3535 = vmatpush.msra.mxu0 0.0
    %3536 = vmatpush.msra.mxu0 0.0
    %3537 = vmatpush.msra.mxu0 0.0
    %3538 = vmatpush.msra.mxu0 0.0
    %3539 = vmatpush.msra.mxu0 0.0
    %3540 = vmatpush.msra.mxu0 0.0
    %3541 = vmatpush.msra.mxu0 0.0
    %3542 = vmatpush.msra.mxu0 0.0
    %3543 = vmatpush.msra.mxu0 %v515
    %3544 = vmatpush.msra.mxu0 %v499
    %3545 = vmatpush.msra.mxu0 %v498
    %3546 = vmatmul.f32.gmra.mxu0 %v3528
    %v3547 = vpop.f32.mrf.mxu0
    %v3548 = vadd.f32 0.0, %v3547
    %3549 = vdwg.mxu0
    %3550 = vmatpush.msra.mxu0 0.0
    %3551 = vmatpush.msra.mxu0 0.0
    %3552 = vmatpush.msra.mxu0 0.0
    %3553 = vmatpush.msra.mxu0 0.0
    %3554 = vmatpush.msra.mxu0 0.0
    %3555 = vmatpush.msra.mxu0 0.0
    %3556 = vmatpush.msra.mxu0 0.0
    %3557 = vmatpush.msra.mxu0 0.0
    %3558 = vmatpush.msra.mxu0 0.0
    %3559 = vmatpush.msra.mxu0 0.0
    %3560 = vmatpush.msra.mxu0 0.0
    %3561 = vmatpush.msra.mxu0 0.0
    %3562 = vmatpush.msra.mxu0 %v542
    %3563 = vmatpush.msra.mxu0 %v541
    %3564 = vmatpush.msra.mxu0 %v540
    %3565 = vmatpush.msra.mxu0 %v539
    %3566 = vmatmul.f32.gmra.mxu0 %v3347
    %v3567 = vpop.f32.mrf.mxu0
    %v3568 = vadd.f32 0.0, %v3567
    %3569 = vdwg.mxu0
    %v3571 = vsel %vm567, %v3548, 0
    %3573 = vmatpush.msra.mxu0 0.0
    %3574 = vmatpush.msra.mxu0 0.0
    %3575 = vmatpush.msra.mxu0 0.0
    %3576 = vmatpush.msra.mxu0 0.0
    %3577 = vmatpush.msra.mxu0 0.0
    %3578 = vmatpush.msra.mxu0 0.0
    %3579 = vmatpush.msra.mxu0 0.0
    %3580 = vmatpush.msra.mxu0 0.0
    %3581 = vmatpush.msra.mxu0 0.0
    %3582 = vmatpush.msra.mxu0 0.0
    %3583 = vmatpush.msra.mxu0 0.0
    %3584 = vmatpush.msra.mxu0 0.0
    %3585 = vmatpush.msra.mxu0 0.0
    %3586 = vmatpush.msra.mxu0 0.0
    %3587 = vmatpush.msra.mxu0 %v538
    %3588 = vmatpush.msra.mxu0 %v537
    %3589 = vmatmul.f32.gmra.mxu0 %v3571
    %v3590 = vpop.f32.mrf.mxu0
    %v3591 = vadd.f32 %v3568, %v3590
    %3592 = vdwg.mxu0
    %v3593 = vadd.f32 %v3591, %v593
    %v3594 = vsub.f32 0.0, %v3593
    %v3595 = vmul.f32 %v3594, 1.442695
    %v3596 = vpow.pop %v3595
    %v3597 = vadd.f32 %v3596, 1.0
    %v3598 = vrcp.pop %v3597
    %3599 = vmatpush.msra.mxu0 0.0
    %3600 = vmatpush.msra.mxu0 0.0
    %3601 = vmatpush.msra.mxu0 0.0
    %3602 = vmatpush.msra.mxu0 0.0
    %3603 = vmatpush.msra.mxu0 0.0
    %3604 = vmatpush.msra.mxu0 0.0
    %3605 = vmatpush.msra.mxu0 0.0
    %3606 = vmatpush.msra.mxu0 0.0
    %3607 = vmatpush.msra.mxu0 0.0
    %3608 = vmatpush.msra.mxu0 0.0
    %3609 = vmatpush.msra.mxu0 0.0
    %3610 = vmatpush.msra.mxu0 0.0
    %3611 = vmatpush.msra.mxu0 %v608
    %3612 = vmatpush.msra.mxu0 %v607
    %3613 = vmatpush.msra.mxu0 %v606
    %3614 = vmatpush.msra.mxu0 %v605
    %3615 = vmatmul.f32.gmra.mxu0 %v3347
    %v3616 = vpop.f32.mrf.mxu0
    %v3617 = vadd.f32 0.0, %v3616
    %3618 = vdwg.mxu0
    %3619 = vmatpush.msra.mxu0 0.0
    %3620 = vmatpush.msra.mxu0 0.0
    %3621 = vmatpush.msra.mxu0 0.0
    %3622 = vmatpush.msra.mxu0 0.0
    %3623 = vmatpush.msra.mxu0 0.0
    %3624 = vmatpush.msra.mxu0 0.0
    %3625 = vmatpush.msra.mxu0 0.0
    %3626 = vmatpush.msra.mxu0 0.0
    %3627 = vmatpush.msra.mxu0 0.0
    %3628 = vmatpush.msra.mxu0 0.0
    %3629 = vmatpush.msra.mxu0 0.0
    %3630 = vmatpush.msra.mxu0 0.0
    %3631 = vmatpush.msra.mxu0 0.0
    %3632 = vmatpush.msra.mxu0 0.0
    %3633 = vmatpush.msra.mxu0 %v603
    %3634 = vmatpush.msra.mxu0 %v602
    %3635 = vmatmul.f32.gmra.mxu0 %v3571
    %v3636 = vpop.f32.mrf.mxu0
    %v3637 = vadd.f32 %v3617, %v3636
    %3638 = vdwg.mxu0
    %v3639 = vadd.f32 %v3637, %v652
    %v3640 = vsub.f32 0.0, %v3639
    %v3641 = vmul.f32 %v3640, 1.442695
    %v3642 = vpow.pop %v3641
    %v3643 = vadd.f32 %v3642, 1.0
    %v3644 = vrcp.pop %v3643
    %3645 = vmatpush.msra.mxu0 0.0
    %3646 = vmatpush.msra.mxu0 0.0
    %3647 = vmatpush.msra.mxu0 0.0
    %3648 = vmatpush.msra.mxu0 0.0
    %3649 = vmatpush.msra.mxu0 0.0
    %3650 = vmatpush.msra.mxu0 0.0
    %3651 = vmatpush.msra.mxu0 0.0
    %3652 = vmatpush.msra.mxu0 0.0
    %3653 = vmatpush.msra.mxu0 0.0
    %3654 = vmatpush.msra.mxu0 0.0
    %3655 = vmatpush.msra.mxu0 0.0
    %3656 = vmatpush.msra.mxu0 0.0
    %3657 = vmatpush.msra.mxu0 %v667
    %3658 = vmatpush.msra.mxu0 %v666
    %3659 = vmatpush.msra.mxu0 %v665
    %3660 = vmatpush.msra.mxu0 %v664
    %3661 = vmatmul.f32.gmra.mxu0 %v3347
    %v3662 = vpop.f32.mrf.mxu0
    %v3663 = vadd.f32 0.0, %v3662
    %3664 = vdwg.mxu0
    %3665 = vmatpush.msra.mxu0 0.0
    %3666 = vmatpush.msra.mxu0 0.0
    %3667 = vmatpush.msra.mxu0 0.0
    %3668 = vmatpush.msra.mxu0 0.0
    %3669 = vmatpush.msra.mxu0 0.0
    %3670 = vmatpush.msra.mxu0 0.0
    %3671 = vmatpush.msra.mxu0 0.0
    %3672 = vmatpush.msra.mxu0 0.0
    %3673 = vmatpush.msra.mxu0 0.0
    %3674 = vmatpush.msra.mxu0 0.0
    %3675 = vmatpush.msra.mxu0 0.0
    %3676 = vmatpush.msra.mxu0 0.0
    %3677 = vmatpush.msra.mxu0 0.0
    %3678 = vmatpush.msra.mxu0 0.0
    %3679 = vmatpush.msra.mxu0 %v662
    %3680 = vmatpush.msra.mxu0 %v661
    %3681 = vmatmul.f32.gmra.mxu0 %v3571
    %v3682 = vpop.f32.mrf.mxu0
    %v3683 = vadd.f32 %v3663, %v3682
    %3684 = vdwg.mxu0
    %v3685 = vadd.f32 %v3683, %v711
    %v3686 = vtanh.pop %v3685
    %3687 = vmatpush.msra.mxu0 0.0
    %3688 = vmatpush.msra.mxu0 0.0
    %3689 = vmatpush.msra.mxu0 0.0
    %3690 = vmatpush.msra.mxu0 0.0
    %3691 = vmatpush.msra.mxu0 0.0
    %3692 = vmatpush.msra.mxu0 0.0
    %3693 = vmatpush.msra.mxu0 0.0
    %3694 = vmatpush.msra.mxu0 0.0
    %3695 = vmatpush.msra.mxu0 0.0
    %3696 = vmatpush.msra.mxu0 0.0
    %3697 = vmatpush.msra.mxu0 0.0
    %3698 = vmatpush.msra.mxu0 0.0
    %3699 = vmatpush.msra.mxu0 %v722
    %3700 = vmatpush.msra.mxu0 %v721
    %3701 = vmatpush.msra.mxu0 %v720
    %3702 = vmatpush.msra.mxu0 %v719
    %3703 = vmatmul.f32.gmra.mxu0 %v3347
    %v3704 = vpop.f32.mrf.mxu0
    %v3705 = vadd.f32 0.0, %v3704
    %3706 = vdwg.mxu0
    %3707 = vmatpush.msra.mxu0 0.0
    %3708 = vmatpush.msra.mxu0 0.0
    %3709 = vmatpush.msra.mxu0 0.0
    %3710 = vmatpush.msra.mxu0 0.0
    %3711 = vmatpush.msra.mxu0 0.0
    %3712 = vmatpush.msra.mxu0 0.0
    %3713 = vmatpush.msra.mxu0 0.0
    %3714 = vmatpush.msra.mxu0 0.0
    %3715 = vmatpush.msra.mxu0 0.0
    %3716 = vmatpush.msra.mxu0 0.0
    %3717 = vmatpush.msra.mxu0 0.0
    %3718 = vmatpush.msra.mxu0 0.0
    %3719 = vmatpush.msra.mxu0 0.0
    %3720 = vmatpush.msra.mxu0 0.0
    %3721 = vmatpush.msra.mxu0 %v717
    %3722 = vmatpush.msra.mxu0 %v716
    %3723 = vmatmul.f32.gmra.mxu0 %v3571
    %v3724 = vpop.f32.mrf.mxu0
    %v3725 = vadd.f32 %v3705, %v3724
    %3726 = vdwg.mxu0
    %v3727 = vadd.f32 %v3725, %v766
    %v3728 = vsub.f32 0.0, %v3727
    %v3729 = vmul.f32 %v3728, 1.442695
    %v3730 = vpow.pop %v3729
    %v3731 = vadd.f32 %v3730, 1.0
    %v3732 = vrcp.pop %v3731
    %v3733 = vmul.f32 %v3644, %v3320
    %v3734 = vmul.f32 %v3598, %v3686
    %v3735 = vadd.f32 %v3733, %v3734
    %v3736 = vtanh.pop %v3735
    %v3737 = vmul.f32 %v3732, %v3736
    %v3739 = vsel %vm543, %v3513, 0
    %3741 = vmatpush.msra.mxu0 0.0
    %3742 = vmatpush.msra.mxu0 0.0
    %3743 = vmatpush.msra.mxu0 0.0
    %3744 = vmatpush.msra.mxu0 0.0
    %3745 = vmatpush.msra.mxu0 0.0
    %3746 = vmatpush.msra.mxu0 0.0
    %3747 = vmatpush.msra.mxu0 0.0
    %3748 = vmatpush.msra.mxu0 0.0
    %3749 = vmatpush.msra.mxu0 0.0
    %3750 = vmatpush.msra.mxu0 0.0
    %3751 = vmatpush.msra.mxu0 0.0
    %3752 = vmatpush.msra.mxu0 0.0
    %3753 = vmatpush.msra.mxu0 %v786
    %3754 = vmatpush.msra.mxu0 %v785
    %3755 = vmatpush.msra.mxu0 %v784
    %3756 = vmatpush.msra.mxu0 %v783
    %3757 = vmatmul.f32.gmra.mxu0 %v3739
    %v3758 = vpop.f32.mrf.mxu0
    %v3759 = vadd.f32 0.0, %v3758
    %3760 = vdwg.mxu0
    %v3762 = vsel %vm543, %v3737, 0
    %3764 = vmatpush.msra.mxu0 0.0
    %3765 = vmatpush.msra.mxu0 0.0
    %3766 = vmatpush.msra.mxu0 0.0
    %3767 = vmatpush.msra.mxu0 0.0
    %3768 = vmatpush.msra.mxu0 0.0
    %3769 = vmatpush.msra.mxu0 0.0
    %3770 = vmatpush.msra.mxu0 0.0
    %3771 = vmatpush.msra.mxu0 0.0
    %3772 = vmatpush.msra.mxu0 0.0
    %3773 = vmatpush.msra.mxu0 0.0
    %3774 = vmatpush.msra.mxu0 0.0
    %3775 = vmatpush.msra.mxu0 0.0
    %3776 = vmatpush.msra.mxu0 %v782
    %3777 = vmatpush.msra.mxu0 %v781
    %3778 = vmatpush.msra.mxu0 %v780
    %3779 = vmatpush.msra.mxu0 %v779
    %3780 = vmatmul.f32.gmra.mxu0 %v3762
    %v3781 = vpop.f32.mrf.mxu0
    %v3782 = vadd.f32 %v3759, %v3781
    %3783 = vdwg.mxu0
    %v3784 = vadd.f32 %v3782, %v832
    %v3785 = vsub.f32 0.0, %v3784
    %v3786 = vmul.f32 %v3785, 1.442695
    %v3787 = vpow.pop %v3786
    %v3788 = vadd.f32 %v3787, 1.0
    %v3789 = vrcp.pop %v3788
    %3790 = vmatpush.msra.mxu0 0.0
    %3791 = vmatpush.msra.mxu0 0.0
    %3792 = vmatpush.msra.mxu0 0.0
    %3793 = vmatpush.msra.mxu0 0.0
    %3794 = vmatpush.msra.mxu0 0.0
    %3795 = vmatpush.msra.mxu0 0.0
    %3796 = vmatpush.msra.mxu0 0.0
    %3797 = vmatpush.msra.mxu0 0.0
    %3798 = vmatpush.msra.mxu0 0.0
    %3799 = vmatpush.msra.mxu0 0.0
    %3800 = vmatpush.msra.mxu0 0.0
    %3801 = vmatpush.msra.mxu0 0.0
    %3802 = vmatpush.msra.mxu0 %v849
    %3803 = vmatpush.msra.mxu0 %v848
    %3804 = vmatpush.msra.mxu0 %v847
    %3805 = vmatpush.msra.mxu0 %v846
    %3806 = vmatmul.f32.gmra.mxu0 %v3739
    %v3807 = vpop.f32.mrf.mxu0
    %v3808 = vadd.f32 0.0, %v3807
    %3809 = vdwg.mxu0
    %3810 = vmatpush.msra.mxu0 0.0
    %3811 = vmatpush.msra.mxu0 0.0
    %3812 = vmatpush.msra.mxu0 0.0
    %3813 = vmatpush.msra.mxu0 0.0
    %3814 = vmatpush.msra.mxu0 0.0
    %3815 = vmatpush.msra.mxu0 0.0
    %3816 = vmatpush.msra.mxu0 0.0
    %3817 = vmatpush.msra.mxu0 0.0
    %3818 = vmatpush.msra.mxu0 0.0
    %3819 = vmatpush.msra.mxu0 0.0
    %3820 = vmatpush.msra.mxu0 0.0
    %3821 = vmatpush.msra.mxu0 0.0
    %3822 = vmatpush.msra.mxu0 %v844
    %3823 = vmatpush.msra.mxu0 %v843
    %3824 = vmatpush.msra.mxu0 %v842
    %3825 = vmatpush.msra.mxu0 %v841
    %3826 = vmatmul.f32.gmra.mxu0 %v3762
    %v3827 = vpop.f32.mrf.mxu0
    %v3828 = vadd.f32 %v3808, %v3827
    %3829 = vdwg.mxu0
    %v3830 = vadd.f32 %v3828, %v893
    %v3831 = vsub.f32 0.0, %v3830
    %v3832 = vmul.f32 %v3831, 1.442695
    %v3833 = vpow.pop %v3832
    %v3834 = vadd.f32 %v3833, 1.0
    %v3835 = vrcp.pop %v3834
    %3836 = vmatpush.msra.mxu0 0.0
    %3837 = vmatpush.msra.mxu0 0.0
    %3838 = vmatpush.msra.mxu0 0.0
    %3839 = vmatpush.msra.mxu0 0.0
    %3840 = vmatpush.msra.mxu0 0.0
    %3841 = vmatpush.msra.mxu0 0.0
    %3842 = vmatpush.msra.mxu0 0.0
    %3843 = vmatpush.msra.mxu0 0.0
    %3844 = vmatpush.msra.mxu0 0.0
    %3845 = vmatpush.msra.mxu0 0.0
    %3846 = vmatpush.msra.mxu0 0.0
    %3847 = vmatpush.msra.mxu0 0.0
    %3848 = vmatpush.msra.mxu0 %v910
    %3849 = vmatpush.msra.mxu0 %v909
    %3850 = vmatpush.msra.mxu0 %v908
    %3851 = vmatpush.msra.mxu0 %v907
    %3852 = vmatmul.f32.gmra.mxu0 %v3739
    %v3853 = vpop.f32.mrf.mxu0
    %v3854 = vadd.f32 0.0, %v3853
    %3855 = vdwg.mxu0
    %3856 = vmatpush.msra.mxu0 0.0
    %3857 = vmatpush.msra.mxu0 0.0
    %3858 = vmatpush.msra.mxu0 0.0
    %3859 = vmatpush.msra.mxu0 0.0
    %3860 = vmatpush.msra.mxu0 0.0
    %3861 = vmatpush.msra.mxu0 0.0
    %3862 = vmatpush.msra.mxu0 0.0
    %3863 = vmatpush.msra.mxu0 0.0
    %3864 = vmatpush.msra.mxu0 0.0
    %3865 = vmatpush.msra.mxu0 0.0
    %3866 = vmatpush.msra.mxu0 0.0
    %3867 = vmatpush.msra.mxu0 0.0
    %3868 = vmatpush.msra.mxu0 %v905
    %3869 = vmatpush.msra.mxu0 %v904
    %3870 = vmatpush.msra.mxu0 %v903
    %3871 = vmatpush.msra.mxu0 %v902
    %3872 = vmatmul.f32.gmra.mxu0 %v3762
    %v3873 = vpop.f32.mrf.mxu0
    %v3874 = vadd.f32 %v3854, %v3873
    %3875 = vdwg.mxu0
    %v3876 = vadd.f32 %v3874, %v954
    %v3877 = vtanh.pop %v3876
    %3878 = vmatpush.msra.mxu0 0.0
    %3879 = vmatpush.msra.mxu0 0.0
    %3880 = vmatpush.msra.mxu0 0.0
    %3881 = vmatpush.msra.mxu0 0.0
    %3882 = vmatpush.msra.mxu0 0.0
    %3883 = vmatpush.msra.mxu0 0.0
    %3884 = vmatpush.msra.mxu0 0.0
    %3885 = vmatpush.msra.mxu0 0.0
    %3886 = vmatpush.msra.mxu0 0.0
    %3887 = vmatpush.msra.mxu0 0.0
    %3888 = vmatpush.msra.mxu0 0.0
    %3889 = vmatpush.msra.mxu0 0.0
    %3890 = vmatpush.msra.mxu0 %v967
    %3891 = vmatpush.msra.mxu0 %v966
    %3892 = vmatpush.msra.mxu0 %v965
    %3893 = vmatpush.msra.mxu0 %v964
    %3894 = vmatmul.f32.gmra.mxu0 %v3739
    %v3895 = vpop.f32.mrf.mxu0
    %v3896 = vadd.f32 0.0, %v3895
    %3897 = vdwg.mxu0
    %3898 = vmatpush.msra.mxu0 0.0
    %3899 = vmatpush.msra.mxu0 0.0
    %3900 = vmatpush.msra.mxu0 0.0
    %3901 = vmatpush.msra.mxu0 0.0
    %3902 = vmatpush.msra.mxu0 0.0
    %3903 = vmatpush.msra.mxu0 0.0
    %3904 = vmatpush.msra.mxu0 0.0
    %3905 = vmatpush.msra.mxu0 0.0
    %3906 = vmatpush.msra.mxu0 0.0
    %3907 = vmatpush.msra.mxu0 0.0
    %3908 = vmatpush.msra.mxu0 0.0
    %3909 = vmatpush.msra.mxu0 0.0
    %3910 = vmatpush.msra.mxu0 %v962
    %3911 = vmatpush.msra.mxu0 %v961
    %3912 = vmatpush.msra.mxu0 %v960
    %3913 = vmatpush.msra.mxu0 %v959
    %3914 = vmatmul.f32.gmra.mxu0 %v3762
    %v3915 = vpop.f32.mrf.mxu0
    %v3916 = vadd.f32 %v3896, %v3915
    %3917 = vdwg.mxu0
    %v3918 = vadd.f32 %v3916, %v1011
    %v3919 = vsub.f32 0.0, %v3918
    %v3920 = vmul.f32 %v3919, 1.442695
    %v3921 = vpow.pop %v3920
    %v3922 = vadd.f32 %v3921, 1.0
    %v3923 = vrcp.pop %v3922
    %v3924 = vmul.f32 %v3835, %v3511
    %v3925 = vmul.f32 %v3789, %v3877
    %v3926 = vadd.f32 %v3924, %v3925
    %v3927 = vtanh.pop %v3926
    %v3928 = vmul.f32 %v3923, %v3927
    %vm3929 = vcmp.eq.s32.totalorder %v497, 8
    %v3930 = vsel %vm3929, 1, 0
    %3931 = vset.pattern.permute.xlu0 0
    %3932 = vperm.xlu0 %3931, %v3930
    %v3933 = vpop.permute.xlu0 %3932
    %vm3934 = vcmp.eq.s32.totalorder %v3933, 1
    %v3935 = vsel %vm3934, %v3928, %v3520
    %v3936 = vld [vmem:[%s16] sm:$0xff]
    %v3937 = vld [vmem:[%s16 + $0x8] sm:$0xff]
    %v3938 = vld [vmem:[%s16 + $0x10] sm:$0xff]
    %v3939 = vld [vmem:[%s16 + $0x18] sm:$0xff]
    %v3940 = vld [vmem:[#allocation18] sm:$0xff]
    %v3941 = vld [vmem:[#allocation18 + $0x8] sm:$0xff]
    %v3942 = vld [vmem:[#allocation18 + $0x10] sm:$0xff]
    %v3943 = vld [vmem:[#allocation18 + $0x18] sm:$0xff]
    %v3945 = vsel %vm543, %v3935, 0
    %3947 = vmatpush.msra.mxu0 0.0
    %3948 = vmatpush.msra.mxu0 0.0
    %3949 = vmatpush.msra.mxu0 0.0
    %3950 = vmatpush.msra.mxu0 0.0
    %3951 = vmatpush.msra.mxu0 0.0
    %3952 = vmatpush.msra.mxu0 0.0
    %3953 = vmatpush.msra.mxu0 0.0
    %3954 = vmatpush.msra.mxu0 0.0
    %3955 = vmatpush.msra.mxu0 0.0
    %3956 = vmatpush.msra.mxu0 0.0
    %3957 = vmatpush.msra.mxu0 0.0
    %3958 = vmatpush.msra.mxu0 0.0
    %3959 = vmatpush.msra.mxu0 %v3943
    %3960 = vmatpush.msra.mxu0 %v3942
    %3961 = vmatpush.msra.mxu0 %v3941
    %3962 = vmatpush.msra.mxu0 %v3940
    %3963 = vmatmul.f32.gmra.mxu0 %v3945
    %v3964 = vpop.f32.mrf.mxu0
    %v3965 = vadd.f32 0.0, %v3964
    %3966 = vdwg.mxu0
    %v3968 = vsel %vm543, %v494, 0
    %3970 = vmatpush.msra.mxu0 0.0
    %3971 = vmatpush.msra.mxu0 0.0
    %3972 = vmatpush.msra.mxu0 0.0
    %3973 = vmatpush.msra.mxu0 0.0
    %3974 = vmatpush.msra.mxu0 0.0
    %3975 = vmatpush.msra.mxu0 0.0
    %3976 = vmatpush.msra.mxu0 0.0
    %3977 = vmatpush.msra.mxu0 0.0
    %3978 = vmatpush.msra.mxu0 0.0
    %3979 = vmatpush.msra.mxu0 0.0
    %3980 = vmatpush.msra.mxu0 0.0
    %3981 = vmatpush.msra.mxu0 0.0
    %3982 = vmatpush.msra.mxu0 %v3939
    %3983 = vmatpush.msra.mxu0 %v3938
    %3984 = vmatpush.msra.mxu0 %v3937
    %3985 = vmatpush.msra.mxu0 %v3936
    %3986 = vmatmul.f32.gmra.mxu0 %v3968
    %v3987 = vpop.f32.mrf.mxu0
    %v3988 = vadd.f32 %v3965, %v3987
    %3989 = vdwg.mxu0
    %v3990 = vld [vmem:[%s18] sm:$0x1]
    %v3992 = vperm.slane %v3990, 0
    %v3994 = vadd.f32 %v3988, %v3992
    %vm3995 = vcmp.gt.f32.partialorder %v3994, 0.0
    %v3996 = vmul.f32 %v3994, 0.01
    %v3997 = vsel %vm3995, %v3994, %v3996
    %v3998 = vld [vmem:[%s19] sm:$0xff]
    %v3999 = vld [vmem:[%s19 + $0x8] sm:$0xff]
    %v4000 = vld [vmem:[%s19 + $0x10] sm:$0xff]
    %v4001 = vld [vmem:[%s19 + $0x18] sm:$0xff]
    %v4002 = vld [vmem:[#allocation2] sm:$0x1]
    %v4004 = vperm.slane %v4002, 0
    %v4007 = vsel %vm543, %v3997, 0
    %4009 = vmatpush.msra.mxu0 0.0
    %4010 = vmatpush.msra.mxu0 0.0
    %4011 = vmatpush.msra.mxu0 0.0
    %4012 = vmatpush.msra.mxu0 0.0
    %4013 = vmatpush.msra.mxu0 0.0
    %4014 = vmatpush.msra.mxu0 0.0
    %4015 = vmatpush.msra.mxu0 0.0
    %4016 = vmatpush.msra.mxu0 0.0
    %4017 = vmatpush.msra.mxu0 0.0
    %4018 = vmatpush.msra.mxu0 0.0
    %4019 = vmatpush.msra.mxu0 0.0
    %4020 = vmatpush.msra.mxu0 0.0
    %4021 = vmatpush.msra.mxu0 %v4001
    %4022 = vmatpush.msra.mxu0 %v4000
    %4023 = vmatpush.msra.mxu0 %v3999
    %4024 = vmatpush.msra.mxu0 %v3998
    %4025 = vmatmul.f32.gmra.mxu0 %v4007
    %v4026 = vpop.f32.mrf.mxu0
    %v4027 = vadd.f32 %v4004, %v4026
    %4028 = vdwg.mxu0
    %v4029 = vsub.f32 0.0, %v4027
    %v4030 = vmul.f32 %v4029, 1.442695
    %v4031 = vpow.pop %v4030
    %v4032 = vadd.f32 %v4031, 1.0
    %v4033 = vrcp.pop %v4032
    %v4034 = vmul.f32 %v4032, %v4033
    %v4035 = vsub.f32 1.0, %v4034
    %v4036 = vmul.f32 %v4033, %v4035
    %v4037 = vadd.f32 %v4033, %v4036
    %vm4038 = vweird.f32 %v4032
    %vm4039 = vweird.f32 %v4033
    %vm4040 = vmor %vm4038, %vm4039
    %v4041 = vsel %vm4040, %v4033, %v4037
    %v4042 = vand.u32 2147483647, %v4032
    %vm4043 = vcmp.eq.f32.partialorder %v4042, 8.507059e+37
    %v4044 = vand.u32 %v4032, 2147483648
    %v4045 = vor.u32 1.1754944e-38, %v4044
    %v4046 = vsel %vm4043, %v4045, %v4041
    %v4047 = vmul.f32 1.0, %v4046
    %4049 = vset.pattern.permute.xlu0 0
    %4050 = vperm.xlu0 %4049, %v4047
    %v4051 = vpop.permute.xlu0 %4050
    %4053 = vst [vmem:[#allocation20] sm:$0xff] %v4051
    // Predicated region
    $region126: #{tpu_custom_call.1} parent=1 // pred_check
      _
    $region127: #{tpu_custom_call.1} parent=1 // pred_check_branch
      %4055 = sbr.rel (0) target = $region129
    $region128: #{tpu_custom_call.1} parent=1 // pred_region
      %4057 = vsyncadd [#allocation5], 0
      %s4059 = sshll.u32 [#allocation20], 4
      %s4060 = int_to_ptr.vmem [resolvable:$true] %s4059
      %s4061 = sshll.u32 %s21, 4
      %s4062 = int_to_ptr.hbm [resolvable:$true] %s4061
      %4064 = dma.vmem_to_hbm [thread:$0]  %s4060, 128, %s4062, [#allocation5]
    $region129: #{tpu_custom_call.1} parent=1 // pred_fallthru
      _
    // Predicated region
    $region130: #{tpu_custom_call.1} parent=1 // pred_check
      _
    $region131: #{tpu_custom_call.1} parent=1 // pred_check_branch
      %4066 = sbr.rel (0) target = $region133
    $region132: #{tpu_custom_call.1} parent=1 // pred_region
      %4068 = dma.done [#allocation5], 128
    $region133: #{tpu_custom_call.1} parent=1 // pred_fallthru
      _
    %4069 = vsyncpa [#allocation4], 1
    %4070 = vsyncpa [#allocation7], 1
    %4071 = vsyncpa [#allocation10], 1
    %4072 = vsyncpa [#allocation13], 1
    %4073 = vsyncpa [#allocation16], 1
    %4074 = vsyncpa [#allocation19], 1
    %4075 = vsyncpa [#allocation5], 1

</llo_original>
